<compile_context>
chip_gen: v6e
topology: v6e:2x2x1
jax: 0.10.0
libtpu: 0.0.40
codegen_flags: <defaults>
</compile_context>

<pallas_src>
import functools

import jax
import jax.numpy as jnp
from jax import lax
from jax.experimental import pallas as pl
from jax.experimental.pallas import tpu as pltpu

LANE = 128                      # TPU lane width: all kernel output channels padded to this.
CONV_TILE_M = 4096              # pooled-position rows per conv1 grid step (patch tile ~0.8 MiB bf16)
MLP_TILE_B = 128                # batch rows per fused conv2+MLP grid step (patch tile ~3.8 MiB bf16)
VMEM_LIMIT = 32 * 1024 * 1024   # v7x-safe (64 MiB physical); harmless headroom on v5e/v6e


def _round_up(x, m):
    return (x + m - 1) // m * m


def _pick_tile(m, max_tile):
    """Tile size (multiple of 8) + padded extent with >= 2 grid steps.

    >= 2 steps keeps both v7x TensorCores busy via dimension_semantics="parallel";
    the cap (max_tile) keeps the per-step VMEM footprint bounded.
    """
    m = max(int(m), 1)
    steps = max(2, -(-m // max_tile))        # cdiv, at least 2
    tile = _round_up(-(-m // steps), 8)
    m_pad = _round_up(m, tile)
    if m_pad // tile < 2:                    # rounding collapsed it -> pad to 2 tiles
        m_pad = 2 * tile
    return tile, m_pad


# ----------------------------------------------------------------------------
# Pallas kernels
# ----------------------------------------------------------------------------

def _conv_relu_pool_kernel(p_ref, w_ref, b_ref, o_ref):
    """conv(as GEMM) + bias + ReLU + 2x2 max-pool for one pooled-position tile.

    p_ref : (4, TILE_M, Kf) bf16  im2col patches, one group per pool-window offset
    w_ref : (Kf, 128)       bf16  conv weights, real Cout columns zero-padded
    b_ref : (1, 128)        f32   bias (zero-padded)
    o_ref : (TILE_M, 128)   bf16  pooled activations (lane-dense)
    """
    # Incremental max over the 4 pool offsets: 4 small dots sharing the same RHS
    # (weight-stationary), no (4*TILE_M,128) intermediate to spill.
    acc = jnp.dot(p_ref[0], w_ref[...], preferred_element_type=jnp.float32)
    for g in range(1, p_ref.shape[0]):
        acc = jnp.maximum(
            acc, jnp.dot(p_ref[g], w_ref[...], preferred_element_type=jnp.float32))
    # Bias + ReLU once after the max (exact: +b and ReLU are monotone, commute with max).
    o_ref[...] = jnp.maximum(acc + b_ref[...], 0.0).astype(o_ref.dtype)


def _conv2_mlp_kernel(p2_ref, w2_ref, b2_ref, w1_ref, b1_ref,
                      wf2_ref, bf2_ref, wf3_ref, bf3_ref, o_ref):
    """Fused conv2 + bias + ReLU + pool + flatten + fc1/fc2/fc3 for one batch tile.

    p2_ref : (4, NPOS*TB, Kf) bf16  conv2 patches, rows ordered pos-major (p*TB + b)
    w2_ref : (Kf, 128)        bf16  conv2 weights (padded)
    w1_ref : (NPOS*128, 128)  bf16  fc1 weights in position-block layout
    wf2/wf3: (128, 128)/(128, OUT_PAD) bf16
    biases : f32, lane-padded
    o_ref  : (TB, OUT_PAD)    f32   logits (lane-dense)
    """
    tb = o_ref.shape[0]
    npos = p2_ref.shape[1] // tb

    # conv2 as GEMM with incremental pool-max (weight-stationary RHS).
    acc = jnp.dot(p2_ref[0], w2_ref[...], preferred_element_type=jnp.float32)
    for g in range(1, p2_ref.shape[0]):
        acc = jnp.maximum(
            acc, jnp.dot(p2_ref[g], w2_ref[...], preferred_element_type=jnp.float32))
    h2 = jnp.maximum(acc + b2_ref[...], 0.0)                      # (npos*tb, 128) f32

    # Flatten without leaving VMEM: rows are position-major, so the per-image
    # 400-feature vector is the lane-concat of npos aligned (tb,128) blocks.
    flat = jnp.concatenate(
        [h2[i * tb:(i + 1) * tb, :] for i in range(npos)], axis=1
    ).astype(jnp.bfloat16)                                        # (tb, npos*128)

    a1 = jnp.dot(flat, w1_ref[...], preferred_element_type=jnp.float32)
    h3 = jnp.maximum(a1 + b1_ref[...], 0.0).astype(jnp.bfloat16)
    a2 = jnp.dot(h3, wf2_ref[...], preferred_element_type=jnp.float32)
    h4 = jnp.maximum(a2 + bf2_ref[...], 0.0).astype(jnp.bfloat16)
    o_ref[...] = (jnp.dot(h4, wf3_ref[...], preferred_element_type=jnp.float32)
                  + bf3_ref[...])


# ----------------------------------------------------------------------------
# pallas_call wrappers (grid + BlockSpec tiling)
# ----------------------------------------------------------------------------

_INVARIANT = dict(pipeline_mode=pl.Buffered(1))   # single-buffer grid-invariant operands


def conv_relu_pool(p_groups, w_pad, b_pad, tile_m):
    g, m_pad, kf = p_groups.shape
    cout = w_pad.shape[1]
    cost = pl.CostEstimate(
        flops=2 * g * m_pad * kf * cout,
        transcendentals=0,
        bytes_accessed=int(p_groups.size * p_groups.dtype.itemsize
                           + w_pad.size * w_pad.dtype.itemsize
                           + b_pad.size * b_pad.dtype.itemsize
                           + m_pad * cout * 2),
    )
    return pl.pallas_call(
        _conv_relu_pool_kernel,
        out_shape=jax.ShapeDtypeStruct((m_pad, cout), jnp.bfloat16),
        grid=(m_pad // tile_m,),
        in_specs=[
            pl.BlockSpec((g, tile_m, kf), lambda i: (0, i, 0)),
            pl.BlockSpec((kf, cout), lambda i: (0, 0), **_INVARIANT),
            pl.BlockSpec((1, cout), lambda i: (0, 0), **_INVARIANT),
        ],
        out_specs=pl.BlockSpec((tile_m, cout), lambda i: (i, 0)),
        compiler_params=pltpu.CompilerParams(
            dimension_semantics=("parallel",),
            vmem_limit_bytes=VMEM_LIMIT,
        ),
        cost_estimate=cost,
    )(p_groups, w_pad, b_pad)


def conv2_mlp_call(p_groups, tb, npos, w2, b2, w1, b1, wf2, bf2, wf3, bf3):
    g, rows, kf = p_groups.shape
    n_pad = rows // npos
    out_pad = wf3.shape[1]
    flops = (2 * g * rows * kf * LANE            # conv2
             + 2 * n_pad * (npos * LANE) * LANE  # fc1
             + 2 * n_pad * LANE * LANE           # fc2
             + 2 * n_pad * LANE * out_pad)       # fc3
    bytes_accessed = int(sum(a.size * a.dtype.itemsize
                             for a in (p_groups, w2, b2, w1, b1, wf2, bf2, wf3, bf3))
                         + n_pad * out_pad * 4)
    cost = pl.CostEstimate(flops=flops, transcendentals=0, bytes_accessed=bytes_accessed)
    return pl.pallas_call(
        _conv2_mlp_kernel,
        out_shape=jax.ShapeDtypeStruct((n_pad, out_pad), jnp.float32),
        grid=(n_pad // tb,),
        in_specs=[
            pl.BlockSpec((g, npos * tb, kf), lambda i: (0, i, 0)),
            pl.BlockSpec(w2.shape, lambda i: (0, 0), **_INVARIANT),
            pl.BlockSpec(b2.shape, lambda i: (0, 0), **_INVARIANT),
            pl.BlockSpec(w1.shape, lambda i: (0, 0), **_INVARIANT),
            pl.BlockSpec(b1.shape, lambda i: (0, 0), **_INVARIANT),
            pl.BlockSpec(wf2.shape, lambda i: (0, 0), **_INVARIANT),
            pl.BlockSpec(bf2.shape, lambda i: (0, 0), **_INVARIANT),
            pl.BlockSpec(wf3.shape, lambda i: (0, 0), **_INVARIANT),
            pl.BlockSpec(bf3.shape, lambda i: (0, 0), **_INVARIANT),
        ],
        out_specs=pl.BlockSpec((tb, out_pad), lambda i: (i, 0)),
        compiler_params=pltpu.CompilerParams(
            dimension_semantics=("parallel",),
            vmem_limit_bytes=VMEM_LIMIT,
        ),
        cost_estimate=cost,
    )(p_groups, w2, b2, w1, b1, wf2, bf2, wf3, bf3)


# ----------------------------------------------------------------------------
# Plain-JAX layout glue (im2col with pool-offset grouping)
# ----------------------------------------------------------------------------
# TODO(synk): move this patch construction in-kernel from a VMEM-resident NHWC
# tile (review item 1) to remove the remaining patch HBM traffic.

def im2col_pooled(x_nhwc, ksize, pool):
    """im2col patches grouped by 2x2 pool-window offset.

    Returns (patches, (N, PH, PW)) with patches of shape (pool*pool, N, PH, PW, Kf),
      patches[di*pool+dj, n, i, j, c*K*K + kh*K + kw]
        = x[n, pool*i + di + kh, pool*j + dj + kw, c]
    (feature ordering matches PyTorch's (Cin, KH, KW) weight flattening).
    """
    n, h, w, c = x_nhwc.shape
    oh, ow = h - ksize + 1, w - ksize + 1
    ph, pw = oh // pool, ow // pool
    cols = []
    for kh in range(ksize):
        for kw in range(ksize):
            cols.append(x_nhwc[:, kh:kh + oh, kw:kw + ow, :])     # (N, OH, OW, C)
    patches = jnp.stack(cols, axis=-1)                            # (N, OH, OW, C, K*K)
    patches = patches.reshape(n, oh, ow, c * ksize * ksize)       # feature = c*K*K + kh*K + kw
    groups = []
    for di in range(pool):
        for dj in range(pool):
            groups.append(patches[:, di::pool, dj::pool, :])      # (N, PH, PW, Kf)
    return jnp.stack(groups, axis=0), (n, ph, pw)


def conv1_stage(x_nhwc, w_pad, b_pad, cout_real):
    """conv1(k=5) + ReLU + maxpool(2,2) via the fused Pallas kernel."""
    p, (n, ph, pw) = im2col_pooled(x_nhwc, 5, 2)                  # (4, N, 14, 14, Kf)
    kf = p.shape[-1]
    m = n * ph * pw
    p = p.reshape(4, m, kf)
    tile_m, m_pad = _pick_tile(m, CONV_TILE_M)
    if m_pad != m:
        p = jnp.pad(p, ((0, 0), (0, m_pad - m), (0, 0)))
    y = conv_relu_pool(p, w_pad, b_pad, tile_m)                   # (M_pad, 128) bf16
    return y[:m, :cout_real].reshape(n, ph, pw, cout_real)


def conv2_mlp_stage(h1, kp):
    """conv2 + ReLU + pool + flatten + fc1/fc2/fc3, fused in one pallas_call."""
    n = h1.shape[0]
    p, (_, ph, pw) = im2col_pooled(h1, 5, 2)                      # (4, N, 5, 5, 150)
    npos = ph * pw
    kf = p.shape[-1]

    tb, n_pad = _pick_tile(n, MLP_TILE_B)
    if n_pad != n:
        p = jnp.pad(p, ((0, 0), (0, n_pad - n), (0, 0), (0, 0), (0, 0)))
    nt = n_pad // tb
    # Position-major row order within each batch tile: row = tile*(npos*tb) + pos*tb + local_b.
    p = (p.reshape(4, nt, tb, npos, kf)
          .transpose(0, 1, 3, 2, 4)
          .reshape(4, n_pad * npos, kf))

    out = conv2_mlp_call(p, tb, npos,
                         kp["conv2_w"], kp["conv2_b"],
                         kp["fc1_w"], kp["fc1_b"],
                         kp["fc2_w"], kp["fc2_b"],
                         kp["fc3_w"], kp["fc3_b"])                # (N_pad, out_pad) f32
    return out[:n]


# ----------------------------------------------------------------------------
# Model: parameters + forward
# ----------------------------------------------------------------------------

def init_params(key, output_size, num_input_channels=1):
    """PyTorch-layout parameters (same init scheme as nn.Conv2d / nn.Linear)."""
    def uniform(k, shape, fan_in):
        bound = 1.0 / jnp.sqrt(jnp.float32(fan_in))
        return jax.random.uniform(k, shape, jnp.float32, -bound, bound)

    ks = jax.random.split(key, 10)
    p = {}
    p["conv1_w"] = uniform(ks[0], (6, num_input_channels, 5, 5), num_input_channels * 25)
    p["conv1_b"] = uniform(ks[1], (6,), num_input_channels * 25)
    p["conv2_w"] = uniform(ks[2], (16, 6, 5, 5), 6 * 25)
    p["conv2_b"] = uniform(ks[3], (16,), 6 * 25)
    p["fc1_w"] = uniform(ks[4], (120, 16 * 5 * 5), 400)
    p["fc1_b"] = uniform(ks[5], (120,), 400)
    p["fc2_w"] = uniform(ks[6], (84, 120), 120)
    p["fc2_b"] = uniform(ks[7], (84,), 120)
    p["fc3_w"] = uniform(ks[8], (output_size, 84), 84)
    p["fc3_b"] = uniform(ks[9], (output_size,), 84)
    return p


def prepare_params(p, output_size):
    """One-time conversion of PyTorch-layout params into kernel-ready layout:
    bf16 (in, out) matrices, output channels zero-padded to 128 lanes, and
    fc1 reorganized into the position-block layout the fused kernel expects."""
    def pad2(a, rows, cols):
        return jnp.pad(a, ((0, rows - a.shape[0]), (0, cols - a.shape[1])))

    def pad_bias(b, width):
        return jnp.pad(b, (0, width - b.shape[0]))[None, :].astype(jnp.float32)

    out_pad = _round_up(max(output_size, 1), LANE)
    kp = {}
    # conv weights -> (Cin*25, 128): row order ci*25 + kh*5 + kw (matches im2col).
    w1c = p["conv1_w"].reshape(p["conv1_w"].shape[0], -1).T
    kp["conv1_w"] = pad2(w1c, w1c.shape[0], LANE).astype(jnp.bfloat16)
    kp["conv1_b"] = pad_bias(p["conv1_b"], LANE)
    w2c = p["conv2_w"].reshape(16, -1).T                               # (150, 16)
    kp["conv2_w"] = pad2(w2c, w2c.shape[0], LANE).astype(jnp.bfloat16)
    kp["conv2_b"] = pad_bias(p["conv2_b"], LANE)
    # fc1 -> position-block layout: w[p*128 + c, d] = fc1_w[d, c*25 + p], others zero.
    f1 = p["fc1_w"].reshape(120, 16, 25).transpose(2, 1, 0)            # (25, 16, 120)
    f1 = jnp.pad(f1, ((0, 0), (0, LANE - 16), (0, LANE - 120)))        # (25, 128, 128)
    kp["fc1_w"] = f1.reshape(25 * LANE, LANE).astype(jnp.bfloat16)     # (3200, 128)
    kp["fc1_b"] = pad_bias(p["fc1_b"], LANE)
    kp["fc2_w"] = pad2(p["fc2_w"].T, LANE, LANE).astype(jnp.bfloat16)  # (128, 128)
    kp["fc2_b"] = pad_bias(p["fc2_b"], LANE)
    kp["fc3_w"] = pad2(p["fc3_w"].T, LANE, out_pad).astype(jnp.bfloat16)
    kp["fc3_b"] = pad_bias(p["fc3_b"], out_pad)
    return kp


def cnn_net_32_forward(x_nchw, kp, *, output_size):
    # layout: x_nchw is (N, Cin, 32, 32) float32 (PyTorch NCHW); NHWC bf16 internally.
    x = jnp.transpose(x_nchw, (0, 2, 3, 1)).astype(jnp.bfloat16)  # (N, 32, 32, Cin)
    n = x.shape[0]

    h1 = conv1_stage(x, kp["conv1_w"], kp["conv1_b"], 6)          # (N, 14, 14, 6) bf16
    out = conv2_mlp_stage(h1, kp)                                 # (N, out_pad)   f32
    return out[:, :output_size]


# ----------------------------------------------------------------------------
# Pure-JAX reference (correctness sanity check against PyTorch semantics)
# ----------------------------------------------------------------------------

def reference_forward(x_nchw, p):
    def conv(x, w, b):
        y = lax.conv_general_dilated(x, w, (1, 1), "VALID",
                                     dimension_numbers=("NCHW", "OIHW", "NCHW"))
        return y + b[None, :, None, None]

    def pool(x):
        return lax.reduce_window(x, -jnp.inf, lax.max, (1, 1, 2, 2), (1, 1, 2, 2), "VALID")

    y = pool(jnp.maximum(conv(x_nchw, p["conv1_w"], p["conv1_b"]), 0.0))
    y = pool(jnp.maximum(conv(y, p["conv2_w"], p["conv2_b"]), 0.0))
    y = y.reshape(y.shape[0], -1)
    y = jnp.maximum(y @ p["fc1_w"].T + p["fc1_b"], 0.0)
    y = jnp.maximum(y @ p["fc2_w"].T + p["fc2_b"], 0.0)
    return y @ p["fc3_w"].T + p["fc3_b"]


# ----------------------------------------------------------------------------

if __name__ == "__main__":
    key = jax.random.PRNGKey(0)
    k_x, k_p = jax.random.split(key)

    output_size = 10
    num_input_channels = 1
    x = jax.random.normal(k_x, (2, num_input_channels, 32, 32), jnp.float32)  # NCHW
    params = init_params(k_p, output_size, num_input_channels)
    kparams = prepare_params(params, output_size)   # kernel-ready layout, done once

    fwd = jax.jit(functools.partial(cnn_net_32_forward, output_size=output_size))
    out = jax.block_until_ready(fwd(x, kparams))
    assert out.shape == (2, output_size), out.shape

    ref = jax.block_until_ready(reference_forward(x, params))
    # bf16 GEMM operands with f32 accumulation: tolerance loosened slightly vs f32.
    assert jnp.allclose(out, ref, rtol=2e-2, atol=2e-2), (out, ref)

    print("KERNEL_OK")
</pallas_src>

<mosaic_0001>
module attributes {stable_mosaic.version = 11 : i64} {
  func.func @_conv_relu_pool_kernel(%arg0: i32, %arg1: memref<4x200x25xbf16, #tpu.memory_space<vmem>>, %arg2: memref<25x128xbf16, #tpu.memory_space<vmem>>, %arg3: memref<1x128xf32, #tpu.memory_space<vmem>>, %arg4: memref<200x128xbf16, #tpu.memory_space<vmem>>) attributes {dimension_semantics = [#tpu.dimension_semantics<parallel>], iteration_bounds = array<i64: 2>, scalar_prefetch = 0 : i64, scratch_operands = 0 : i64, tpu.core_type = #tpu.core_type<tc>, window_params = [{transform_indices = @transform_0, window_bounds = array<i64: 4, 200, 25>}, {pipeline_mode = #tpu.pipeline_mode<synchronous>, transform_indices = @transform_1, window_bounds = array<i64: 25, 128>}, {pipeline_mode = #tpu.pipeline_mode<synchronous>, transform_indices = @transform_2, window_bounds = array<i64: 1, 128>}, {transform_indices = @transform_3, window_bounds = array<i64: 200, 128>}]} {
    %c0 = arith.constant 0 : index
    %c0_0 = arith.constant 0 : index
    %c0_1 = arith.constant 0 : index
    %0 = vector.load %arg1[%c0, %c0_0, %c0_1] : memref<4x200x25xbf16, #tpu.memory_space<vmem>>, vector<1x200x25xbf16>
    %1 = vector.shape_cast %0 : vector<1x200x25xbf16> to vector<200x25xbf16>
    %c0_2 = arith.constant 0 : index
    %c0_3 = arith.constant 0 : index
    %2 = vector.load %arg2[%c0_2, %c0_3] : memref<25x128xbf16, #tpu.memory_space<vmem>>, vector<25x128xbf16>
    %cst = arith.constant dense<0.000000e+00> : vector<200x128xf32>
    %3 = tpu.matmul %1, %2, %cst {dimension_numbers = #tpu.dot_dimension_numbers<[1], [0], [0], [1], [0, 0, 1, 1], [], []>} : vector<200x25xbf16>, vector<25x128xbf16>, vector<200x128xf32> -> vector<200x128xf32>
    %c1 = arith.constant 1 : index
    %c0_4 = arith.constant 0 : index
    %c0_5 = arith.constant 0 : index
    %4 = vector.load %arg1[%c1, %c0_4, %c0_5] : memref<4x200x25xbf16, #tpu.memory_space<vmem>>, vector<1x200x25xbf16>
    %5 = vector.shape_cast %4 : vector<1x200x25xbf16> to vector<200x25xbf16>
    %c0_6 = arith.constant 0 : index
    %c0_7 = arith.constant 0 : index
    %6 = vector.load %arg2[%c0_6, %c0_7] : memref<25x128xbf16, #tpu.memory_space<vmem>>, vector<25x128xbf16>
    %cst_8 = arith.constant dense<0.000000e+00> : vector<200x128xf32>
    %7 = tpu.matmul %5, %6, %cst_8 {dimension_numbers = #tpu.dot_dimension_numbers<[1], [0], [0], [1], [0, 0, 1, 1], [], []>} : vector<200x25xbf16>, vector<25x128xbf16>, vector<200x128xf32> -> vector<200x128xf32>
    %8 = arith.maximumf %3, %7 : vector<200x128xf32>
    %c2 = arith.constant 2 : index
    %c0_9 = arith.constant 0 : index
    %c0_10 = arith.constant 0 : index
    %9 = vector.load %arg1[%c2, %c0_9, %c0_10] : memref<4x200x25xbf16, #tpu.memory_space<vmem>>, vector<1x200x25xbf16>
    %10 = vector.shape_cast %9 : vector<1x200x25xbf16> to vector<200x25xbf16>
    %c0_11 = arith.constant 0 : index
    %c0_12 = arith.constant 0 : index
    %11 = vector.load %arg2[%c0_11, %c0_12] : memref<25x128xbf16, #tpu.memory_space<vmem>>, vector<25x128xbf16>
    %cst_13 = arith.constant dense<0.000000e+00> : vector<200x128xf32>
    %12 = tpu.matmul %10, %11, %cst_13 {dimension_numbers = #tpu.dot_dimension_numbers<[1], [0], [0], [1], [0, 0, 1, 1], [], []>} : vector<200x25xbf16>, vector<25x128xbf16>, vector<200x128xf32> -> vector<200x128xf32>
    %13 = arith.maximumf %8, %12 : vector<200x128xf32>
    %c3 = arith.constant 3 : index
    %c0_14 = arith.constant 0 : index
    %c0_15 = arith.constant 0 : index
    %14 = vector.load %arg1[%c3, %c0_14, %c0_15] : memref<4x200x25xbf16, #tpu.memory_space<vmem>>, vector<1x200x25xbf16>
    %15 = vector.shape_cast %14 : vector<1x200x25xbf16> to vector<200x25xbf16>
    %c0_16 = arith.constant 0 : index
    %c0_17 = arith.constant 0 : index
    %16 = vector.load %arg2[%c0_16, %c0_17] : memref<25x128xbf16, #tpu.memory_space<vmem>>, vector<25x128xbf16>
    %cst_18 = arith.constant dense<0.000000e+00> : vector<200x128xf32>
    %17 = tpu.matmul %15, %16, %cst_18 {dimension_numbers = #tpu.dot_dimension_numbers<[1], [0], [0], [1], [0, 0, 1, 1], [], []>} : vector<200x25xbf16>, vector<25x128xbf16>, vector<200x128xf32> -> vector<200x128xf32>
    %18 = arith.maximumf %13, %17 : vector<200x128xf32>
    %c0_19 = arith.constant 0 : index
    %c0_20 = arith.constant 0 : index
    %19 = vector.load %arg3[%c0_19, %c0_20] : memref<1x128xf32, #tpu.memory_space<vmem>>, vector<1x128xf32>
    %20 = vector.broadcast %19 : vector<1x128xf32> to vector<200x128xf32>
    %21 = arith.addf %18, %20 : vector<200x128xf32>
    %cst_21 = arith.constant 0.000000e+00 : f32
    %22 = vector.broadcast %cst_21 : f32 to vector<200x128xf32>
    %23 = arith.maximumf %21, %22 : vector<200x128xf32>
    %24 = arith.truncf %23 : vector<200x128xf32> to vector<200x128xbf16>
    %c0_22 = arith.constant 0 : index
    %c0_23 = arith.constant 0 : index
    %25 = vector.load %arg4[%c0_22, %c0_23] : memref<200x128xbf16, #tpu.memory_space<vmem>>, vector<200x128xbf16>
    tpu.vector_store %arg4[%c0_22, %c0_23], %24 {strides = array<i32>} : memref<200x128xbf16, #tpu.memory_space<vmem>>, vector<200x128xbf16>,
    return
  }
  func.func @transform_0(%arg0: i32) -> (i32, i32, i32) {
    %c0_i32 = arith.constant 0 : i32
    %c0_i32_0 = arith.constant 0 : i32
    %c0_i32_1 = arith.constant 0 : i32
    return %c0_i32, %arg0, %c0_i32_0 : i32, i32, i32
  }
  func.func @transform_1(%arg0: i32) -> (i32, i32) {
    %c0_i32 = arith.constant 0 : i32
    %c0_i32_0 = arith.constant 0 : i32
    %c0_i32_1 = arith.constant 0 : i32
    return %c0_i32, %c0_i32_0 : i32, i32
  }
  func.func @transform_2(%arg0: i32) -> (i32, i32) {
    %c0_i32 = arith.constant 0 : i32
    %c0_i32_0 = arith.constant 0 : i32
    %c0_i32_1 = arith.constant 0 : i32
    return %c0_i32, %c0_i32_0 : i32, i32
  }
  func.func @transform_3(%arg0: i32) -> (i32, i32) {
    %c0_i32 = arith.constant 0 : i32
    %c0_i32_0 = arith.constant 0 : i32
    return %arg0, %c0_i32 : i32, i32
  }
}

module attributes {stable_mosaic.version = 11 : i64} {
  func.func @_conv2_mlp_kernel(%arg0: i32, %arg1: memref<4x200x150xbf16, #tpu.memory_space<vmem>>, %arg2: memref<150x128xbf16, #tpu.memory_space<vmem>>, %arg3: memref<1x128xf32, #tpu.memory_space<vmem>>, %arg4: memref<3200x128xbf16, #tpu.memory_space<vmem>>, %arg5: memref<1x128xf32, #tpu.memory_space<vmem>>, %arg6: memref<128x128xbf16, #tpu.memory_space<vmem>>, %arg7: memref<1x128xf32, #tpu.memory_space<vmem>>, %arg8: memref<128x128xbf16, #tpu.memory_space<vmem>>, %arg9: memref<1x128xf32, #tpu.memory_space<vmem>>, %arg10: memref<8x128xf32, #tpu.memory_space<vmem>>) attributes {dimension_semantics = [#tpu.dimension_semantics<parallel>], iteration_bounds = array<i64: 2>, scalar_prefetch = 0 : i64, scratch_operands = 0 : i64, tpu.core_type = #tpu.core_type<tc>, window_params = [{transform_indices = @transform_0, window_bounds = array<i64: 4, 200, 150>}, {pipeline_mode = #tpu.pipeline_mode<synchronous>, transform_indices = @transform_1, window_bounds = array<i64: 150, 128>}, {pipeline_mode = #tpu.pipeline_mode<synchronous>, transform_indices = @transform_2, window_bounds = array<i64: 1, 128>}, {pipeline_mode = #tpu.pipeline_mode<synchronous>, transform_indices = @transform_3, window_bounds = array<i64: 3200, 128>}, {pipeline_mode = #tpu.pipeline_mode<synchronous>, transform_indices = @transform_4, window_bounds = array<i64: 1, 128>}, {pipeline_mode = #tpu.pipeline_mode<synchronous>, transform_indices = @transform_5, window_bounds = array<i64: 128, 128>}, {pipeline_mode = #tpu.pipeline_mode<synchronous>, transform_indices = @transform_6, window_bounds = array<i64: 1, 128>}, {pipeline_mode = #tpu.pipeline_mode<synchronous>, transform_indices = @transform_7, window_bounds = array<i64: 128, 128>}, {pipeline_mode = #tpu.pipeline_mode<synchronous>, transform_indices = @transform_8, window_bounds = array<i64: 1, 128>}, {transform_indices = @transform_9, window_bounds = array<i64: 8, 128>}]} {
    %c0 = arith.constant 0 : index
    %c0_0 = arith.constant 0 : index
    %c0_1 = arith.constant 0 : index
    %0 = vector.load %arg1[%c0, %c0_0, %c0_1] : memref<4x200x150xbf16, #tpu.memory_space<vmem>>, vector<1x200x150xbf16>
    %1 = vector.shape_cast %0 : vector<1x200x150xbf16> to vector<200x150xbf16>
    %c0_2 = arith.constant 0 : index
    %c0_3 = arith.constant 0 : index
    %2 = vector.load %arg2[%c0_2, %c0_3] : memref<150x128xbf16, #tpu.memory_space<vmem>>, vector<150x128xbf16>
    %cst = arith.constant dense<0.000000e+00> : vector<200x128xf32>
    %3 = tpu.matmul %1, %2, %cst {dimension_numbers = #tpu.dot_dimension_numbers<[1], [0], [0], [1], [0, 0, 1, 1], [], []>} : vector<200x150xbf16>, vector<150x128xbf16>, vector<200x128xf32> -> vector<200x128xf32>
    %c1 = arith.constant 1 : index
    %c0_4 = arith.constant 0 : index
    %c0_5 = arith.constant 0 : index
    %4 = vector.load %arg1[%c1, %c0_4, %c0_5] : memref<4x200x150xbf16, #tpu.memory_space<vmem>>, vector<1x200x150xbf16>
    %5 = vector.shape_cast %4 : vector<1x200x150xbf16> to vector<200x150xbf16>
    %c0_6 = arith.constant 0 : index
    %c0_7 = arith.constant 0 : index
    %6 = vector.load %arg2[%c0_6, %c0_7] : memref<150x128xbf16, #tpu.memory_space<vmem>>, vector<150x128xbf16>
    %cst_8 = arith.constant dense<0.000000e+00> : vector<200x128xf32>
    %7 = tpu.matmul %5, %6, %cst_8 {dimension_numbers = #tpu.dot_dimension_numbers<[1], [0], [0], [1], [0, 0, 1, 1], [], []>} : vector<200x150xbf16>, vector<150x128xbf16>, vector<200x128xf32> -> vector<200x128xf32>
    %8 = arith.maximumf %3, %7 : vector<200x128xf32>
    %c2 = arith.constant 2 : index
    %c0_9 = arith.constant 0 : index
    %c0_10 = arith.constant 0 : index
    %9 = vector.load %arg1[%c2, %c0_9, %c0_10] : memref<4x200x150xbf16, #tpu.memory_space<vmem>>, vector<1x200x150xbf16>
    %10 = vector.shape_cast %9 : vector<1x200x150xbf16> to vector<200x150xbf16>
    %c0_11 = arith.constant 0 : index
    %c0_12 = arith.constant 0 : index
    %11 = vector.load %arg2[%c0_11, %c0_12] : memref<150x128xbf16, #tpu.memory_space<vmem>>, vector<150x128xbf16>
    %cst_13 = arith.constant dense<0.000000e+00> : vector<200x128xf32>
    %12 = tpu.matmul %10, %11, %cst_13 {dimension_numbers = #tpu.dot_dimension_numbers<[1], [0], [0], [1], [0, 0, 1, 1], [], []>} : vector<200x150xbf16>, vector<150x128xbf16>, vector<200x128xf32> -> vector<200x128xf32>
    %13 = arith.maximumf %8, %12 : vector<200x128xf32>
    %c3 = arith.constant 3 : index
    %c0_14 = arith.constant 0 : index
    %c0_15 = arith.constant 0 : index
    %14 = vector.load %arg1[%c3, %c0_14, %c0_15] : memref<4x200x150xbf16, #tpu.memory_space<vmem>>, vector<1x200x150xbf16>
    %15 = vector.shape_cast %14 : vector<1x200x150xbf16> to vector<200x150xbf16>
    %c0_16 = arith.constant 0 : index
    %c0_17 = arith.constant 0 : index
    %16 = vector.load %arg2[%c0_16, %c0_17] : memref<150x128xbf16, #tpu.memory_space<vmem>>, vector<150x128xbf16>
    %cst_18 = arith.constant dense<0.000000e+00> : vector<200x128xf32>
    %17 = tpu.matmul %15, %16, %cst_18 {dimension_numbers = #tpu.dot_dimension_numbers<[1], [0], [0], [1], [0, 0, 1, 1], [], []>} : vector<200x150xbf16>, vector<150x128xbf16>, vector<200x128xf32> -> vector<200x128xf32>
    %18 = arith.maximumf %13, %17 : vector<200x128xf32>
    %c0_19 = arith.constant 0 : index
    %c0_20 = arith.constant 0 : index
    %19 = vector.load %arg3[%c0_19, %c0_20] : memref<1x128xf32, #tpu.memory_space<vmem>>, vector<1x128xf32>
    %20 = vector.broadcast %19 : vector<1x128xf32> to vector<200x128xf32>
    %21 = arith.addf %18, %20 : vector<200x128xf32>
    %cst_21 = arith.constant 0.000000e+00 : f32
    %22 = vector.broadcast %cst_21 : f32 to vector<200x128xf32>
    %23 = arith.maximumf %21, %22 : vector<200x128xf32>
    %24 = vector.extract_strided_slice %23 {offsets = [0, 0], sizes = [8, 128], strides = [1, 1]} : vector<200x128xf32> to vector<8x128xf32>
    %25 = vector.extract_strided_slice %23 {offsets = [8, 0], sizes = [8, 128], strides = [1, 1]} : vector<200x128xf32> to vector<8x128xf32>
    %26 = vector.extract_strided_slice %23 {offsets = [16, 0], sizes = [8, 128], strides = [1, 1]} : vector<200x128xf32> to vector<8x128xf32>
    %27 = vector.extract_strided_slice %23 {offsets = [24, 0], sizes = [8, 128], strides = [1, 1]} : vector<200x128xf32> to vector<8x128xf32>
    %28 = vector.extract_strided_slice %23 {offsets = [32, 0], sizes = [8, 128], strides = [1, 1]} : vector<200x128xf32> to vector<8x128xf32>
    %29 = vector.extract_strided_slice %23 {offsets = [40, 0], sizes = [8, 128], strides = [1, 1]} : vector<200x128xf32> to vector<8x128xf32>
    %30 = vector.extract_strided_slice %23 {offsets = [48, 0], sizes = [8, 128], strides = [1, 1]} : vector<200x128xf32> to vector<8x128xf32>
    %31 = vector.extract_strided_slice %23 {offsets = [56, 0], sizes = [8, 128], strides = [1, 1]} : vector<200x128xf32> to vector<8x128xf32>
    %32 = vector.extract_strided_slice %23 {offsets = [64, 0], sizes = [8, 128], strides = [1, 1]} : vector<200x128xf32> to vector<8x128xf32>
    %33 = vector.extract_strided_slice %23 {offsets = [72, 0], sizes = [8, 128], strides = [1, 1]} : vector<200x128xf32> to vector<8x128xf32>
    %34 = vector.extract_strided_slice %23 {offsets = [80, 0], sizes = [8, 128], strides = [1, 1]} : vector<200x128xf32> to vector<8x128xf32>
    %35 = vector.extract_strided_slice %23 {offsets = [88, 0], sizes = [8, 128], strides = [1, 1]} : vector<200x128xf32> to vector<8x128xf32>
    %36 = vector.extract_strided_slice %23 {offsets = [96, 0], sizes = [8, 128], strides = [1, 1]} : vector<200x128xf32> to vector<8x128xf32>
    %37 = vector.extract_strided_slice %23 {offsets = [104, 0], sizes = [8, 128], strides = [1, 1]} : vector<200x128xf32> to vector<8x128xf32>
    %38 = vector.extract_strided_slice %23 {offsets = [112, 0], sizes = [8, 128], strides = [1, 1]} : vector<200x128xf32> to vector<8x128xf32>
    %39 = vector.extract_strided_slice %23 {offsets = [120, 0], sizes = [8, 128], strides = [1, 1]} : vector<200x128xf32> to vector<8x128xf32>
    %40 = vector.extract_strided_slice %23 {offsets = [128, 0], sizes = [8, 128], strides = [1, 1]} : vector<200x128xf32> to vector<8x128xf32>
    %41 = vector.extract_strided_slice %23 {offsets = [136, 0], sizes = [8, 128], strides = [1, 1]} : vector<200x128xf32> to vector<8x128xf32>
    %42 = vector.extract_strided_slice %23 {offsets = [144, 0], sizes = [8, 128], strides = [1, 1]} : vector<200x128xf32> to vector<8x128xf32>
    %43 = vector.extract_strided_slice %23 {offsets = [152, 0], sizes = [8, 128], strides = [1, 1]} : vector<200x128xf32> to vector<8x128xf32>
    %44 = vector.extract_strided_slice %23 {offsets = [160, 0], sizes = [8, 128], strides = [1, 1]} : vector<200x128xf32> to vector<8x128xf32>
    %45 = vector.extract_strided_slice %23 {offsets = [168, 0], sizes = [8, 128], strides = [1, 1]} : vector<200x128xf32> to vector<8x128xf32>
    %46 = vector.extract_strided_slice %23 {offsets = [176, 0], sizes = [8, 128], strides = [1, 1]} : vector<200x128xf32> to vector<8x128xf32>
    %47 = vector.extract_strided_slice %23 {offsets = [184, 0], sizes = [8, 128], strides = [1, 1]} : vector<200x128xf32> to vector<8x128xf32>
    %48 = vector.extract_strided_slice %23 {offsets = [192, 0], sizes = [8, 128], strides = [1, 1]} : vector<200x128xf32> to vector<8x128xf32>
    %49 = tpu.concatenate %24, %25, %26, %27, %28, %29, %30, %31, %32, %33, %34, %35, %36, %37, %38, %39 in 1 : vector<8x128xf32>, vector<8x128xf32>, vector<8x128xf32>, vector<8x128xf32>, vector<8x128xf32>, vector<8x128xf32>, vector<8x128xf32>, vector<8x128xf32>, vector<8x128xf32>, vector<8x128xf32>, vector<8x128xf32>, vector<8x128xf32>, vector<8x128xf32>, vector<8x128xf32>, vector<8x128xf32>, vector<8x128xf32> -> vector<8x2048xf32>
    %50 = tpu.concatenate %40, %41, %42, %43, %44, %45, %46, %47, %48 in 1 : vector<8x128xf32>, vector<8x128xf32>, vector<8x128xf32>, vector<8x128xf32>, vector<8x128xf32>, vector<8x128xf32>, vector<8x128xf32>, vector<8x128xf32>, vector<8x128xf32> -> vector<8x1152xf32>
    %51 = tpu.concatenate %49, %50 in 1 : vector<8x2048xf32>, vector<8x1152xf32> -> vector<8x3200xf32>
    %52 = arith.truncf %51 : vector<8x3200xf32> to vector<8x3200xbf16>
    %c0_22 = arith.constant 0 : index
    %c0_23 = arith.constant 0 : index
    %53 = vector.load %arg4[%c0_22, %c0_23] : memref<3200x128xbf16, #tpu.memory_space<vmem>>, vector<3200x128xbf16>
    %cst_24 = arith.constant dense<0.000000e+00> : vector<8x128xf32>
    %54 = tpu.matmul %52, %53, %cst_24 {dimension_numbers = #tpu.dot_dimension_numbers<[1], [0], [0], [1], [0, 0, 1, 1], [], []>} : vector<8x3200xbf16>, vector<3200x128xbf16>, vector<8x128xf32> -> vector<8x128xf32>
    %c0_25 = arith.constant 0 : index
    %c0_26 = arith.constant 0 : index
    %55 = vector.load %arg5[%c0_25, %c0_26] : memref<1x128xf32, #tpu.memory_space<vmem>>, vector<1x128xf32>
    %56 = vector.broadcast %55 : vector<1x128xf32> to vector<8x128xf32>
    %57 = arith.addf %54, %56 : vector<8x128xf32>
    %cst_27 = arith.constant 0.000000e+00 : f32
    %58 = vector.broadcast %cst_27 : f32 to vector<8x128xf32>
    %59 = arith.maximumf %57, %58 : vector<8x128xf32>
    %60 = arith.truncf %59 : vector<8x128xf32> to vector<8x128xbf16>
    %c0_28 = arith.constant 0 : index
    %c0_29 = arith.constant 0 : index
    %61 = vector.load %arg6[%c0_28, %c0_29] : memref<128x128xbf16, #tpu.memory_space<vmem>>, vector<128x128xbf16>
    %cst_30 = arith.constant dense<0.000000e+00> : vector<8x128xf32>
    %62 = tpu.matmul %60, %61, %cst_30 {dimension_numbers = #tpu.dot_dimension_numbers<[1], [0], [0], [1], [0, 0, 1, 1], [], []>} : vector<8x128xbf16>, vector<128x128xbf16>, vector<8x128xf32> -> vector<8x128xf32>
    %c0_31 = arith.constant 0 : index
    %c0_32 = arith.constant 0 : index
    %63 = vector.load %arg7[%c0_31, %c0_32] : memref<1x128xf32, #tpu.memory_space<vmem>>, vector<1x128xf32>
    %64 = vector.broadcast %63 : vector<1x128xf32> to vector<8x128xf32>
    %65 = arith.addf %62, %64 : vector<8x128xf32>
    %cst_33 = arith.constant 0.000000e+00 : f32
    %66 = vector.broadcast %cst_33 : f32 to vector<8x128xf32>
    %67 = arith.maximumf %65, %66 : vector<8x128xf32>
    %68 = arith.truncf %67 : vector<8x128xf32> to vector<8x128xbf16>
    %c0_34 = arith.constant 0 : index
    %c0_35 = arith.constant 0 : index
    %69 = vector.load %arg8[%c0_34, %c0_35] : memref<128x128xbf16, #tpu.memory_space<vmem>>, vector<128x128xbf16>
    %cst_36 = arith.constant dense<0.000000e+00> : vector<8x128xf32>
    %70 = tpu.matmul %68, %69, %cst_36 {dimension_numbers = #tpu.dot_dimension_numbers<[1], [0], [0], [1], [0, 0, 1, 1], [], []>} : vector<8x128xbf16>, vector<128x128xbf16>, vector<8x128xf32> -> vector<8x128xf32>
    %c0_37 = arith.constant 0 : index
    %c0_38 = arith.constant 0 : index
    %71 = vector.load %arg9[%c0_37, %c0_38] : memref<1x128xf32, #tpu.memory_space<vmem>>, vector<1x128xf32>
    %72 = vector.broadcast %71 : vector<1x128xf32> to vector<8x128xf32>
    %73 = arith.addf %70, %72 : vector<8x128xf32>
    %c0_39 = arith.constant 0 : index
    %c0_40 = arith.constant 0 : index
    %74 = vector.load %arg10[%c0_39, %c0_40] : memref<8x128xf32, #tpu.memory_space<vmem>>, vector<8x128xf32>
    tpu.vector_store %arg10[%c0_39, %c0_40], %73 {strides = array<i32>} : memref<8x128xf32, #tpu.memory_space<vmem>>, vector<8x128xf32>,
    return
  }
  func.func @transform_0(%arg0: i32) -> (i32, i32, i32) {
    %c0_i32 = arith.constant 0 : i32
    %c0_i32_0 = arith.constant 0 : i32
    %c0_i32_1 = arith.constant 0 : i32
    return %c0_i32, %arg0, %c0_i32_0 : i32, i32, i32
  }
  func.func @transform_1(%arg0: i32) -> (i32, i32) {
    %c0_i32 = arith.constant 0 : i32
    %c0_i32_0 = arith.constant 0 : i32
    %c0_i32_1 = arith.constant 0 : i32
    return %c0_i32, %c0_i32_0 : i32, i32
  }
  func.func @transform_2(%arg0: i32) -> (i32, i32) {
    %c0_i32 = arith.constant 0 : i32
    %c0_i32_0 = arith.constant 0 : i32
    %c0_i32_1 = arith.constant 0 : i32
    return %c0_i32, %c0_i32_0 : i32, i32
  }
  func.func @transform_3(%arg0: i32) -> (i32, i32) {
    %c0_i32 = arith.constant 0 : i32
    %c0_i32_0 = arith.constant 0 : i32
    %c0_i32_1 = arith.constant 0 : i32
    return %c0_i32, %c0_i32_0 : i32, i32
  }
  func.func @transform_4(%arg0: i32) -> (i32, i32) {
    %c0_i32 = arith.constant 0 : i32
    %c0_i32_0 = arith.constant 0 : i32
    %c0_i32_1 = arith.constant 0 : i32
    return %c0_i32, %c0_i32_0 : i32, i32
  }
  func.func @transform_5(%arg0: i32) -> (i32, i32) {
    %c0_i32 = arith.constant 0 : i32
    %c0_i32_0 = arith.constant 0 : i32
    %c0_i32_1 = arith.constant 0 : i32
    return %c0_i32, %c0_i32_0 : i32, i32
  }
  func.func @transform_6(%arg0: i32) -> (i32, i32) {
    %c0_i32 = arith.constant 0 : i32
    %c0_i32_0 = arith.constant 0 : i32
    %c0_i32_1 = arith.constant 0 : i32
    return %c0_i32, %c0_i32_0 : i32, i32
  }
  func.func @transform_7(%arg0: i32) -> (i32, i32) {
    %c0_i32 = arith.constant 0 : i32
    %c0_i32_0 = arith.constant 0 : i32
    %c0_i32_1 = arith.constant 0 : i32
    return %c0_i32, %c0_i32_0 : i32, i32
  }
  func.func @transform_8(%arg0: i32) -> (i32, i32) {
    %c0_i32 = arith.constant 0 : i32
    %c0_i32_0 = arith.constant 0 : i32
    %c0_i32_1 = arith.constant 0 : i32
    return %c0_i32, %c0_i32_0 : i32, i32
  }
  func.func @transform_9(%arg0: i32) -> (i32, i32) {
    %c0_i32 = arith.constant 0 : i32
    %c0_i32_0 = arith.constant 0 : i32
    return %arg0, %c0_i32 : i32, i32
  }
}

</mosaic_0001>

<llo_original>
// kernel: cnn_net_32_forward.2
$region0: #{cnn_net_32_forward.2}
  #allocation0 [shape = 'u32[]', space=smem, size = 0x4, offset = 0x4, fixed_abs, tag = 'smem constant byte address 0x4 - core index']
  #allocation1 [shape = 'u32[144,128]{1,0:T(1,128)}', space=vmem, size = 0x12000, scoped, tag = 'internal scratch']
  %s0 = inlined_call_operand.vmem [shape: bf16[4,400,25], index: 0, kind: input, shape index: {}]
  %s1 = inlined_call_operand.vmem [shape: bf16[25,128], index: 1, kind: input, shape index: {}]
  %s2 = inlined_call_operand.vmem [shape: f32[1,128], index: 2, kind: input, shape index: {}]
  %s3 = inlined_call_operand.vmem [shape: bf16[400,128], index: 3, kind: output, shape index: {}]
  %s4 = sld [smem:[#allocation0]]
  $region86: #{cnn_net_32_forward.2} parent=0
    _
  %s6 = ssub.s32 1, %s4
  %s7 = scalar_select 0, %s6, %s4
  $region1: #{cnn_net_32_forward.2} parent=0
    #allocation2 [shape = 'u8[409600]{0}', space=vmem, size = 0x64000, scoped, tag = 'input window, operand 0']
    loop: start=0, step=1, limit=4
    $region2: #{cnn_net_32_forward.2} parent=1 // loop_pre_header
      _
    $region3: #{cnn_net_32_forward.2} parent=1 // loop_header
      %s9 = sphi 0, %s13
      %p10 = scmp.ge.s32.totalorder %s9, 4
      %s19 = sphi 0, %s21
      %s22 = sphi 0, %s19
      %s23 = sphi 0, %s22
      %s39 = sphi 0, %s23
      %s43 = sphi 0, %s43
      %s45 = sphi 0, %s43
      %s46 = sphi 0, %s45
      %s60 = sphi 0, %s46
      %s64 = sphi 0, %s64
      %s66 = sphi 0, %s64
      %s67 = sphi 0, %s66
      %s81 = sphi 0, %s67
      %s87 = sphi 0, %s89
      %s90 = sphi 0, %s87
      %s91 = sphi 0, %s90
      %s107 = sphi 0, %s91
    $region4: #{cnn_net_32_forward.2} parent=1 // loop_header_branch
      %12 = sbr.rel (%p10) target = $region8
    $region5: #{cnn_net_32_forward.2} parent=1 // loop_body
      %s14 = ssub.s32 %s9, 1
      %s15 = ssub.s32 %s9, 2
      %s16 = sadd.s32 %s9, 1
      %s17 = ssub.s32 %s9, %s16
      %p18 = scmp.eq.s32.totalorder %s17, 0
      %s20 = sadd.s32 %s19, 1
      %s21 = scalar_select %p18, %s19, %s20
      %p24 = pneg %p18
      %p25 = scmp.eq.s32.totalorder %s9, 1
      %p26 = por %p24, %p25
      %p27 = scmp.ne.s32.totalorder %s19, %s22
      %p28 = scmp.eq.s32.totalorder %s9, 0
      %p29 = por %p27, %p28
      %p30 = scmp.ne.s32.totalorder %s19, %s22
      %p31 = scmp.eq.s32.totalorder %s14, 1
      %p32 = por %p30, %p31
      %p33 = scmp.ne.s32.totalorder %s22, %s23
      %p34 = scmp.eq.s32.totalorder %s14, 0
      %p35 = por %p33, %p34
      %p36 = scmp.ne.s32.totalorder %s22, %s23
      %p37 = scmp.eq.s32.totalorder %s15, 1
      %p38 = por %p36, %p37
      %p40 = scmp.ne.s32.totalorder %s23, %s39
      %p41 = scmp.eq.s32.totalorder %s15, 0
      %p42 = por %p40, %p41
      %s44 = sadd.s32 %s43, 1
      %p47 = scmp.eq.s32.totalorder %s9, 1
      %p48 = scmp.ne.s32.totalorder %s43, %s45
      %p49 = scmp.eq.s32.totalorder %s9, 0
      %p50 = por %p48, %p49
      %p51 = scmp.ne.s32.totalorder %s43, %s45
      %p52 = scmp.eq.s32.totalorder %s14, 1
      %p53 = por %p51, %p52
      %p54 = scmp.ne.s32.totalorder %s45, %s46
      %p55 = scmp.eq.s32.totalorder %s14, 0
      %p56 = por %p54, %p55
      %p57 = scmp.ne.s32.totalorder %s45, %s46
      %p58 = scmp.eq.s32.totalorder %s15, 1
      %p59 = por %p57, %p58
      %p61 = scmp.ne.s32.totalorder %s46, %s60
      %p62 = scmp.eq.s32.totalorder %s15, 0
      %p63 = por %p61, %p62
      %s65 = sadd.s32 %s64, 1
      %p68 = scmp.eq.s32.totalorder %s9, 1
      %p69 = scmp.ne.s32.totalorder %s64, %s66
      %p70 = scmp.eq.s32.totalorder %s9, 0
      %p71 = por %p69, %p70
      %p72 = scmp.ne.s32.totalorder %s64, %s66
      %p73 = scmp.eq.s32.totalorder %s14, 1
      %p74 = por %p72, %p73
      %p75 = scmp.ne.s32.totalorder %s66, %s67
      %p76 = scmp.eq.s32.totalorder %s14, 0
      %p77 = por %p75, %p76
      %p78 = scmp.ne.s32.totalorder %s66, %s67
      %p79 = scmp.eq.s32.totalorder %s15, 1
      %p80 = por %p78, %p79
      %p82 = scmp.ne.s32.totalorder %s67, %s81
      %p83 = scmp.eq.s32.totalorder %s15, 0
      %p84 = por %p82, %p83
      %s85 = ssub.s32 %s9, %s16
      %p86 = scmp.eq.s32.totalorder %s85, 0
      %s88 = sadd.s32 %s87, 1
      %s89 = scalar_select %p86, %s87, %s88
      %p92 = pneg %p86
      %p93 = scmp.eq.s32.totalorder %s9, 1
      %p94 = por %p92, %p93
      %p95 = scmp.ne.s32.totalorder %s87, %s90
      %p96 = scmp.eq.s32.totalorder %s9, 0
      %p97 = por %p95, %p96
      %p98 = scmp.ne.s32.totalorder %s87, %s90
      %p99 = scmp.eq.s32.totalorder %s14, 1
      %p100 = por %p98, %p99
      %p101 = scmp.ne.s32.totalorder %s90, %s91
      %p102 = scmp.eq.s32.totalorder %s14, 0
      %p103 = por %p101, %p102
      %p104 = scmp.ne.s32.totalorder %s90, %s91
      %p105 = scmp.eq.s32.totalorder %s15, 1
      %p106 = por %p104, %p105
      %p108 = scmp.ne.s32.totalorder %s91, %s107
      %p109 = scmp.eq.s32.totalorder %s15, 0
      %p110 = por %p108, %p109
      %p111 = scmp.le.s32.totalorder 1, %s9
      %p112 = scmp.lt.s32.totalorder %s9, 3
      %p113 = pnand %p111, %p112
      %p114 = pneg %p113
      // Predicated region
      $region9: #{cnn_net_32_forward.2} parent=5 // pred_check
        _
      $region10: #{cnn_net_32_forward.2} parent=5 // pred_check_branch
        %116 = sbr.rel (%p113) target = $region12
      $region11: #{cnn_net_32_forward.2} parent=5 // pred_region
        %s117 = ssub.s32 %s9, 1
        // Predicated region
        $region13: #{cnn_net_32_forward.2} parent=11 // pred_check
          %p118 = pneg %p56
        $region14: #{cnn_net_32_forward.2} parent=11 // pred_check_branch
          %120 = sbr.rel (%p118) target = $region16
        $region15: #{cnn_net_32_forward.2} parent=11 // pred_region
          _
        $region16: #{cnn_net_32_forward.2} parent=11 // pred_fallthru
          _
        // Predicated region
        $region17: #{cnn_net_32_forward.2} parent=11 // pred_check
          %p121 = pneg %p77
        $region18: #{cnn_net_32_forward.2} parent=11 // pred_check_branch
          %123 = sbr.rel (%p121) target = $region20
        $region19: #{cnn_net_32_forward.2} parent=11 // pred_region
          _
        $region20: #{cnn_net_32_forward.2} parent=11 // pred_fallthru
          _
      $region12: #{cnn_net_32_forward.2} parent=5 // pred_fallthru
        _
      %p124 = scmp.lt.s32.totalorder %s9, 2
      // Predicated region
      $region21: #{cnn_net_32_forward.2} parent=5 // pred_check
        %p125 = pneg %p124
      $region22: #{cnn_net_32_forward.2} parent=5 // pred_check_branch
        %127 = sbr.rel (%p125) target = $region24
      $region23: #{cnn_net_32_forward.2} parent=5 // pred_region
        // Predicated region
        $region25: #{cnn_net_32_forward.2} parent=23 // pred_check
          %p128 = pneg %p29
        $region26: #{cnn_net_32_forward.2} parent=23 // pred_check_branch
          %130 = sbr.rel (%p128) target = $region28
        $region27: #{cnn_net_32_forward.2} parent=23 // pred_region
          %s131 = sand.u32 %s19, 1
          %s132 = sand.u32 %s19, 1
          %s133 = smul.addr %s132, 400
          %s134 = scalar_lea.vmem [#allocation2], %s133
          %s135 = smul.u32 25, %s9
          %s136 = smul.addr %s135, 4
          %s137 = scalar_lea.vmem %s0, %s136
          // Predicated region
          $region29: #{cnn_net_32_forward.2} parent=27 // pred_check
            _
          $region30: #{cnn_net_32_forward.2} parent=27 // pred_check_branch
            %139 = sbr.rel (0) target = $region32
          $region31: #{cnn_net_32_forward.2} parent=27 // pred_region
            // Predicated region
            $region33: #{cnn_net_32_forward.2} parent=31 // pred_check
              _
            $region34: #{cnn_net_32_forward.2} parent=31 // pred_check_branch
              %141 = sbr.rel target = $region36
            $region35: #{cnn_net_32_forward.2} parent=31 // pred_region
              // Predicated region
              $region48: #{cnn_net_32_forward.2} parent=35 // pred_check
                _
              $region49: #{cnn_net_32_forward.2} parent=35 // pred_check_branch
                %355 = sbr.rel (0) target = $region51
              $region50: #{cnn_net_32_forward.2} parent=35 // pred_region
                loop: start=0, step=1, limit=1
                $region52: #{cnn_net_32_forward.2} parent=50 // loop_pre_header
                  _
                $region53: #{cnn_net_32_forward.2} parent=50 // loop_header
                  %s357 = sphi 0, %s361
                  %p358 = scmp.ge.s32.totalorder %s357, 1
                  %s362 = sphi %s137, %s137
                  %s363 = sphi %s134, %s134
                $region54: #{cnn_net_32_forward.2} parent=50 // loop_header_branch
                  %360 = sbr.rel (%p358) target = $region58
                $region55: #{cnn_net_32_forward.2} parent=50 // loop_body
                  _
                $region56: #{cnn_net_32_forward.2} parent=50 // loop_footer
                  %s361 = sadd.s32 1, %s357
                $region57: #{cnn_net_32_forward.2} parent=50 // loop_footer_branch
                  %356 = sbr.rel target = $region53
                $region58: #{cnn_net_32_forward.2} parent=50 // loop_exit
                  _
                %s365 = ssub.s32 16, 1
                loop: start=0, step=1, limit=1
                $region59: #{cnn_net_32_forward.2} parent=50 // loop_pre_header
                  _
                $region60: #{cnn_net_32_forward.2} parent=50 // loop_header
                  %s367 = sphi 0, %s371
                  %p368 = scmp.ge.s32.totalorder %s367, 1
                  %s372 = sphi %s137, %s137
                  %s373 = sphi %s134, %s134
                $region61: #{cnn_net_32_forward.2} parent=50 // loop_header_branch
                  %370 = sbr.rel (%p368) target = $region65
                $region62: #{cnn_net_32_forward.2} parent=50 // loop_body
                  %v374 = vld [vmem:[%s372] sm:%s365]
                  %375 = vst [vmem:[%s373] sm:%s365] %v374
                  %v376 = vld [vmem:[%s372 + $0x4] sm:%s365]
                  %377 = vst [vmem:[%s373 + $0x4] sm:%s365] %v376
                  %v378 = vld [vmem:[%s372 + $0x8] sm:%s365]
                  %379 = vst [vmem:[%s373 + $0x8] sm:%s365] %v378
                  %v380 = vld [vmem:[%s372 + $0xc] sm:%s365]
                  %381 = vst [vmem:[%s373 + $0xc] sm:%s365] %v380
                  %v382 = vld [vmem:[%s372 + $0x10] sm:%s365]
                  %383 = vst [vmem:[%s373 + $0x10] sm:%s365] %v382
                  %v384 = vld [vmem:[%s372 + $0x14] sm:%s365]
                  %385 = vst [vmem:[%s373 + $0x14] sm:%s365] %v384
                  %v386 = vld [vmem:[%s372 + $0x18] sm:%s365]
                  %387 = vst [vmem:[%s373 + $0x18] sm:%s365] %v386
                  %v388 = vld [vmem:[%s372 + $0x1c] sm:%s365]
                  %389 = vst [vmem:[%s373 + $0x1c] sm:%s365] %v388
                  %v390 = vld [vmem:[%s372 + $0x20] sm:%s365]
                  %391 = vst [vmem:[%s373 + $0x20] sm:%s365] %v390
                  %v392 = vld [vmem:[%s372 + $0x24] sm:%s365]
                  %393 = vst [vmem:[%s373 + $0x24] sm:%s365] %v392
                  %v394 = vld [vmem:[%s372 + $0x28] sm:%s365]
                  %395 = vst [vmem:[%s373 + $0x28] sm:%s365] %v394
                  %v396 = vld [vmem:[%s372 + $0x2c] sm:%s365]
                  %397 = vst [vmem:[%s373 + $0x2c] sm:%s365] %v396
                  %v398 = vld [vmem:[%s372 + $0x30] sm:%s365]
                  %399 = vst [vmem:[%s373 + $0x30] sm:%s365] %v398
                  %v400 = vld [vmem:[%s372 + $0x34] sm:%s365]
                  %401 = vst [vmem:[%s373 + $0x34] sm:%s365] %v400
                  %v402 = vld [vmem:[%s372 + $0x38] sm:%s365]
                  %403 = vst [vmem:[%s373 + $0x38] sm:%s365] %v402
                  %v404 = vld [vmem:[%s372 + $0x3c] sm:%s365]
                  %405 = vst [vmem:[%s373 + $0x3c] sm:%s365] %v404
                  %v406 = vld [vmem:[%s372 + $0x40] sm:%s365]
                  %407 = vst [vmem:[%s373 + $0x40] sm:%s365] %v406
                  %v408 = vld [vmem:[%s372 + $0x44] sm:%s365]
                  %409 = vst [vmem:[%s373 + $0x44] sm:%s365] %v408
                  %v410 = vld [vmem:[%s372 + $0x48] sm:%s365]
                  %411 = vst [vmem:[%s373 + $0x48] sm:%s365] %v410
                  %v412 = vld [vmem:[%s372 + $0x4c] sm:%s365]
                  %413 = vst [vmem:[%s373 + $0x4c] sm:%s365] %v412
                  %v414 = vld [vmem:[%s372 + $0x50] sm:%s365]
                  %415 = vst [vmem:[%s373 + $0x50] sm:%s365] %v414
                  %v416 = vld [vmem:[%s372 + $0x54] sm:%s365]
                  %417 = vst [vmem:[%s373 + $0x54] sm:%s365] %v416
                  %v418 = vld [vmem:[%s372 + $0x58] sm:%s365]
                  %419 = vst [vmem:[%s373 + $0x58] sm:%s365] %v418
                  %v420 = vld [vmem:[%s372 + $0x5c] sm:%s365]
                  %421 = vst [vmem:[%s373 + $0x5c] sm:%s365] %v420
                  %v422 = vld [vmem:[%s372 + $0x60] sm:%s365]
                  %423 = vst [vmem:[%s373 + $0x60] sm:%s365] %v422
                  %v424 = vld [vmem:[%s372 + $0xc8] sm:%s365]
                  %425 = vst [vmem:[%s373 + $0x64] sm:%s365] %v424
                  %v426 = vld [vmem:[%s372 + $0xcc] sm:%s365]
                  %427 = vst [vmem:[%s373 + $0x68] sm:%s365] %v426
                  %v428 = vld [vmem:[%s372 + $0xd0] sm:%s365]
                  %429 = vst [vmem:[%s373 + $0x6c] sm:%s365] %v428
                  %v430 = vld [vmem:[%s372 + $0xd4] sm:%s365]
                  %431 = vst [vmem:[%s373 + $0x70] sm:%s365] %v430
                  %v432 = vld [vmem:[%s372 + $0xd8] sm:%s365]
                  %433 = vst [vmem:[%s373 + $0x74] sm:%s365] %v432
                  %v434 = vld [vmem:[%s372 + $0xdc] sm:%s365]
                  %435 = vst [vmem:[%s373 + $0x78] sm:%s365] %v434
                  %v436 = vld [vmem:[%s372 + $0xe0] sm:%s365]
                  %437 = vst [vmem:[%s373 + $0x7c] sm:%s365] %v436
                  %v438 = vld [vmem:[%s372 + $0xe4] sm:%s365]
                  %439 = vst [vmem:[%s373 + $0x80] sm:%s365] %v438
                  %v440 = vld [vmem:[%s372 + $0xe8] sm:%s365]
                  %441 = vst [vmem:[%s373 + $0x84] sm:%s365] %v440
                  %v442 = vld [vmem:[%s372 + $0xec] sm:%s365]
                  %443 = vst [vmem:[%s373 + $0x88] sm:%s365] %v442
                  %v444 = vld [vmem:[%s372 + $0xf0] sm:%s365]
                  %445 = vst [vmem:[%s373 + $0x8c] sm:%s365] %v444
                  %v446 = vld [vmem:[%s372 + $0xf4] sm:%s365]
                  %447 = vst [vmem:[%s373 + $0x90] sm:%s365] %v446
                  %v448 = vld [vmem:[%s372 + $0xf8] sm:%s365]
                  %449 = vst [vmem:[%s373 + $0x94] sm:%s365] %v448
                  %v450 = vld [vmem:[%s372 + $0xfc] sm:%s365]
                  %451 = vst [vmem:[%s373 + $0x98] sm:%s365] %v450
                  %v452 = vld [vmem:[%s372 + $0x100] sm:%s365]
                  %453 = vst [vmem:[%s373 + $0x9c] sm:%s365] %v452
                  %v454 = vld [vmem:[%s372 + $0x104] sm:%s365]
                  %455 = vst [vmem:[%s373 + $0xa0] sm:%s365] %v454
                  %v456 = vld [vmem:[%s372 + $0x108] sm:%s365]
                  %457 = vst [vmem:[%s373 + $0xa4] sm:%s365] %v456
                  %v458 = vld [vmem:[%s372 + $0x10c] sm:%s365]
                  %459 = vst [vmem:[%s373 + $0xa8] sm:%s365] %v458
                  %v460 = vld [vmem:[%s372 + $0x110] sm:%s365]
                  %461 = vst [vmem:[%s373 + $0xac] sm:%s365] %v460
                  %v462 = vld [vmem:[%s372 + $0x114] sm:%s365]
                  %463 = vst [vmem:[%s373 + $0xb0] sm:%s365] %v462
                  %v464 = vld [vmem:[%s372 + $0x118] sm:%s365]
                  %465 = vst [vmem:[%s373 + $0xb4] sm:%s365] %v464
                  %v466 = vld [vmem:[%s372 + $0x11c] sm:%s365]
                  %467 = vst [vmem:[%s373 + $0xb8] sm:%s365] %v466
                  %v468 = vld [vmem:[%s372 + $0x120] sm:%s365]
                  %469 = vst [vmem:[%s373 + $0xbc] sm:%s365] %v468
                  %v470 = vld [vmem:[%s372 + $0x124] sm:%s365]
                  %471 = vst [vmem:[%s373 + $0xc0] sm:%s365] %v470
                  %v472 = vld [vmem:[%s372 + $0x128] sm:%s365]
                  %473 = vst [vmem:[%s373 + $0xc4] sm:%s365] %v472
                  %v474 = vld [vmem:[%s372 + $0x190] sm:%s365]
                  %475 = vst [vmem:[%s373 + $0xc8] sm:%s365] %v474
                  %v476 = vld [vmem:[%s372 + $0x194] sm:%s365]
                  %477 = vst [vmem:[%s373 + $0xcc] sm:%s365] %v476
                  %v478 = vld [vmem:[%s372 + $0x198] sm:%s365]
                  %479 = vst [vmem:[%s373 + $0xd0] sm:%s365] %v478
                  %v480 = vld [vmem:[%s372 + $0x19c] sm:%s365]
                  %481 = vst [vmem:[%s373 + $0xd4] sm:%s365] %v480
                  %v482 = vld [vmem:[%s372 + $0x1a0] sm:%s365]
                  %483 = vst [vmem:[%s373 + $0xd8] sm:%s365] %v482
                  %v484 = vld [vmem:[%s372 + $0x1a4] sm:%s365]
                  %485 = vst [vmem:[%s373 + $0xdc] sm:%s365] %v484
                  %v486 = vld [vmem:[%s372 + $0x1a8] sm:%s365]
                  %487 = vst [vmem:[%s373 + $0xe0] sm:%s365] %v486
                  %v488 = vld [vmem:[%s372 + $0x1ac] sm:%s365]
                  %489 = vst [vmem:[%s373 + $0xe4] sm:%s365] %v488
                  %v490 = vld [vmem:[%s372 + $0x1b0] sm:%s365]
                  %491 = vst [vmem:[%s373 + $0xe8] sm:%s365] %v490
                  %v492 = vld [vmem:[%s372 + $0x1b4] sm:%s365]
                  %493 = vst [vmem:[%s373 + $0xec] sm:%s365] %v492
                  %v494 = vld [vmem:[%s372 + $0x1b8] sm:%s365]
                  %495 = vst [vmem:[%s373 + $0xf0] sm:%s365] %v494
                  %v496 = vld [vmem:[%s372 + $0x1bc] sm:%s365]
                  %497 = vst [vmem:[%s373 + $0xf4] sm:%s365] %v496
                  %v498 = vld [vmem:[%s372 + $0x1c0] sm:%s365]
                  %499 = vst [vmem:[%s373 + $0xf8] sm:%s365] %v498
                  %v500 = vld [vmem:[%s372 + $0x1c4] sm:%s365]
                  %501 = vst [vmem:[%s373 + $0xfc] sm:%s365] %v500
                  %v502 = vld [vmem:[%s372 + $0x1c8] sm:%s365]
                  %503 = vst [vmem:[%s373 + $0x100] sm:%s365] %v502
                  %v504 = vld [vmem:[%s372 + $0x1cc] sm:%s365]
                  %505 = vst [vmem:[%s373 + $0x104] sm:%s365] %v504
                  %v506 = vld [vmem:[%s372 + $0x1d0] sm:%s365]
                  %507 = vst [vmem:[%s373 + $0x108] sm:%s365] %v506
                  %v508 = vld [vmem:[%s372 + $0x1d4] sm:%s365]
                  %509 = vst [vmem:[%s373 + $0x10c] sm:%s365] %v508
                  %v510 = vld [vmem:[%s372 + $0x1d8] sm:%s365]
                  %511 = vst [vmem:[%s373 + $0x110] sm:%s365] %v510
                  %v512 = vld [vmem:[%s372 + $0x1dc] sm:%s365]
                  %513 = vst [vmem:[%s373 + $0x114] sm:%s365] %v512
                  %v514 = vld [vmem:[%s372 + $0x1e0] sm:%s365]
                  %515 = vst [vmem:[%s373 + $0x118] sm:%s365] %v514
                  %v516 = vld [vmem:[%s372 + $0x1e4] sm:%s365]
                  %517 = vst [vmem:[%s373 + $0x11c] sm:%s365] %v516
                  %v518 = vld [vmem:[%s372 + $0x1e8] sm:%s365]
                  %519 = vst [vmem:[%s373 + $0x120] sm:%s365] %v518
                  %v520 = vld [vmem:[%s372 + $0x1ec] sm:%s365]
                  %521 = vst [vmem:[%s373 + $0x124] sm:%s365] %v520
                  %v522 = vld [vmem:[%s372 + $0x1f0] sm:%s365]
                  %523 = vst [vmem:[%s373 + $0x128] sm:%s365] %v522
                  %v524 = vld [vmem:[%s372 + $0x258] sm:%s365]
                  %525 = vst [vmem:[%s373 + $0x12c] sm:%s365] %v524
                  %v526 = vld [vmem:[%s372 + $0x25c] sm:%s365]
                  %527 = vst [vmem:[%s373 + $0x130] sm:%s365] %v526
                  %v528 = vld [vmem:[%s372 + $0x260] sm:%s365]
                  %529 = vst [vmem:[%s373 + $0x134] sm:%s365] %v528
                  %v530 = vld [vmem:[%s372 + $0x264] sm:%s365]
                  %531 = vst [vmem:[%s373 + $0x138] sm:%s365] %v530
                  %v532 = vld [vmem:[%s372 + $0x268] sm:%s365]
                  %533 = vst [vmem:[%s373 + $0x13c] sm:%s365] %v532
                  %v534 = vld [vmem:[%s372 + $0x26c] sm:%s365]
                  %535 = vst [vmem:[%s373 + $0x140] sm:%s365] %v534
                  %v536 = vld [vmem:[%s372 + $0x270] sm:%s365]
                  %537 = vst [vmem:[%s373 + $0x144] sm:%s365] %v536
                  %v538 = vld [vmem:[%s372 + $0x274] sm:%s365]
                  %539 = vst [vmem:[%s373 + $0x148] sm:%s365] %v538
                  %v540 = vld [vmem:[%s372 + $0x278] sm:%s365]
                  %541 = vst [vmem:[%s373 + $0x14c] sm:%s365] %v540
                  %v542 = vld [vmem:[%s372 + $0x27c] sm:%s365]
                  %543 = vst [vmem:[%s373 + $0x150] sm:%s365] %v542
                  %v544 = vld [vmem:[%s372 + $0x280] sm:%s365]
                  %545 = vst [vmem:[%s373 + $0x154] sm:%s365] %v544
                  %v546 = vld [vmem:[%s372 + $0x284] sm:%s365]
                  %547 = vst [vmem:[%s373 + $0x158] sm:%s365] %v546
                  %v548 = vld [vmem:[%s372 + $0x288] sm:%s365]
                  %549 = vst [vmem:[%s373 + $0x15c] sm:%s365] %v548
                  %v550 = vld [vmem:[%s372 + $0x28c] sm:%s365]
                  %551 = vst [vmem:[%s373 + $0x160] sm:%s365] %v550
                  %v552 = vld [vmem:[%s372 + $0x290] sm:%s365]
                  %553 = vst [vmem:[%s373 + $0x164] sm:%s365] %v552
                  %v554 = vld [vmem:[%s372 + $0x294] sm:%s365]
                  %555 = vst [vmem:[%s373 + $0x168] sm:%s365] %v554
                  %v556 = vld [vmem:[%s372 + $0x298] sm:%s365]
                  %557 = vst [vmem:[%s373 + $0x16c] sm:%s365] %v556
                  %v558 = vld [vmem:[%s372 + $0x29c] sm:%s365]
                  %559 = vst [vmem:[%s373 + $0x170] sm:%s365] %v558
                  %v560 = vld [vmem:[%s372 + $0x2a0] sm:%s365]
                  %561 = vst [vmem:[%s373 + $0x174] sm:%s365] %v560
                  %v562 = vld [vmem:[%s372 + $0x2a4] sm:%s365]
                  %563 = vst [vmem:[%s373 + $0x178] sm:%s365] %v562
                  %v564 = vld [vmem:[%s372 + $0x2a8] sm:%s365]
                  %565 = vst [vmem:[%s373 + $0x17c] sm:%s365] %v564
                  %v566 = vld [vmem:[%s372 + $0x2ac] sm:%s365]
                  %567 = vst [vmem:[%s373 + $0x180] sm:%s365] %v566
                  %v568 = vld [vmem:[%s372 + $0x2b0] sm:%s365]
                  %569 = vst [vmem:[%s373 + $0x184] sm:%s365] %v568
                  %v570 = vld [vmem:[%s372 + $0x2b4] sm:%s365]
                  %571 = vst [vmem:[%s373 + $0x188] sm:%s365] %v570
                  %v572 = vld [vmem:[%s372 + $0x2b8] sm:%s365]
                  %573 = vst [vmem:[%s373 + $0x18c] sm:%s365] %v572
                $region63: #{cnn_net_32_forward.2} parent=50 // loop_footer
                  %s371 = sadd.s32 1, %s367
                $region64: #{cnn_net_32_forward.2} parent=50 // loop_footer_branch
                  %366 = sbr.rel target = $region60
                $region65: #{cnn_net_32_forward.2} parent=50 // loop_exit
                  _
              $region51: #{cnn_net_32_forward.2} parent=35 // pred_fallthru
                _
            $region36: #{cnn_net_32_forward.2} parent=31 // pred_fallthru
              _
            // Predicated region
            $region37: #{cnn_net_32_forward.2} parent=31 // pred_check
              _
            $region38: #{cnn_net_32_forward.2} parent=31 // pred_check_branch
              %143 = sbr.rel (0) target = $region40
            $region39: #{cnn_net_32_forward.2} parent=31 // pred_region
              %s145 = ssub.s32 16, 1
              loop: start=0, step=1, limit=1
              $region41: #{cnn_net_32_forward.2} parent=39 // loop_pre_header
                _
              $region42: #{cnn_net_32_forward.2} parent=39 // loop_header
                %s147 = sphi 0, %s151
                %p148 = scmp.ge.s32.totalorder %s147, 1
                %s152 = sphi %s137, %s137
                %s153 = sphi %s134, %s134
              $region43: #{cnn_net_32_forward.2} parent=39 // loop_header_branch
                %150 = sbr.rel (%p148) target = $region47
              $region44: #{cnn_net_32_forward.2} parent=39 // loop_body
                %v154 = vld [vmem:[%s152] sm:%s145]
                %155 = vst [vmem:[%s153] sm:%s145] %v154
                %v156 = vld [vmem:[%s152 + $0x4] sm:%s145]
                %157 = vst [vmem:[%s153 + $0x4] sm:%s145] %v156
                %v158 = vld [vmem:[%s152 + $0x8] sm:%s145]
                %159 = vst [vmem:[%s153 + $0x8] sm:%s145] %v158
                %v160 = vld [vmem:[%s152 + $0xc] sm:%s145]
                %161 = vst [vmem:[%s153 + $0xc] sm:%s145] %v160
                %v162 = vld [vmem:[%s152 + $0x10] sm:%s145]
                %163 = vst [vmem:[%s153 + $0x10] sm:%s145] %v162
                %v164 = vld [vmem:[%s152 + $0x14] sm:%s145]
                %165 = vst [vmem:[%s153 + $0x14] sm:%s145] %v164
                %v166 = vld [vmem:[%s152 + $0x18] sm:%s145]
                %167 = vst [vmem:[%s153 + $0x18] sm:%s145] %v166
                %v168 = vld [vmem:[%s152 + $0x1c] sm:%s145]
                %169 = vst [vmem:[%s153 + $0x1c] sm:%s145] %v168
                %v170 = vld [vmem:[%s152 + $0x20] sm:%s145]
                %171 = vst [vmem:[%s153 + $0x20] sm:%s145] %v170
                %v172 = vld [vmem:[%s152 + $0x24] sm:%s145]
                %173 = vst [vmem:[%s153 + $0x24] sm:%s145] %v172
                %v174 = vld [vmem:[%s152 + $0x28] sm:%s145]
                %175 = vst [vmem:[%s153 + $0x28] sm:%s145] %v174
                %v176 = vld [vmem:[%s152 + $0x2c] sm:%s145]
                %177 = vst [vmem:[%s153 + $0x2c] sm:%s145] %v176
                %v178 = vld [vmem:[%s152 + $0x30] sm:%s145]
                %179 = vst [vmem:[%s153 + $0x30] sm:%s145] %v178
                %v180 = vld [vmem:[%s152 + $0x34] sm:%s145]
                %181 = vst [vmem:[%s153 + $0x34] sm:%s145] %v180
                %v182 = vld [vmem:[%s152 + $0x38] sm:%s145]
                %183 = vst [vmem:[%s153 + $0x38] sm:%s145] %v182
                %v184 = vld [vmem:[%s152 + $0x3c] sm:%s145]
                %185 = vst [vmem:[%s153 + $0x3c] sm:%s145] %v184
                %v186 = vld [vmem:[%s152 + $0x40] sm:%s145]
                %187 = vst [vmem:[%s153 + $0x40] sm:%s145] %v186
                %v188 = vld [vmem:[%s152 + $0x44] sm:%s145]
                %189 = vst [vmem:[%s153 + $0x44] sm:%s145] %v188
                %v190 = vld [vmem:[%s152 + $0x48] sm:%s145]
                %191 = vst [vmem:[%s153 + $0x48] sm:%s145] %v190
                %v192 = vld [vmem:[%s152 + $0x4c] sm:%s145]
                %193 = vst [vmem:[%s153 + $0x4c] sm:%s145] %v192
                %v194 = vld [vmem:[%s152 + $0x50] sm:%s145]
                %195 = vst [vmem:[%s153 + $0x50] sm:%s145] %v194
                %v196 = vld [vmem:[%s152 + $0x54] sm:%s145]
                %197 = vst [vmem:[%s153 + $0x54] sm:%s145] %v196
                %v198 = vld [vmem:[%s152 + $0x58] sm:%s145]
                %199 = vst [vmem:[%s153 + $0x58] sm:%s145] %v198
                %v200 = vld [vmem:[%s152 + $0x5c] sm:%s145]
                %201 = vst [vmem:[%s153 + $0x5c] sm:%s145] %v200
                %v202 = vld [vmem:[%s152 + $0x60] sm:%s145]
                %203 = vst [vmem:[%s153 + $0x60] sm:%s145] %v202
                %v204 = vld [vmem:[%s152 + $0xc8] sm:%s145]
                %205 = vst [vmem:[%s153 + $0x64] sm:%s145] %v204
                %v206 = vld [vmem:[%s152 + $0xcc] sm:%s145]
                %207 = vst [vmem:[%s153 + $0x68] sm:%s145] %v206
                %v208 = vld [vmem:[%s152 + $0xd0] sm:%s145]
                %209 = vst [vmem:[%s153 + $0x6c] sm:%s145] %v208
                %v210 = vld [vmem:[%s152 + $0xd4] sm:%s145]
                %211 = vst [vmem:[%s153 + $0x70] sm:%s145] %v210
                %v212 = vld [vmem:[%s152 + $0xd8] sm:%s145]
                %213 = vst [vmem:[%s153 + $0x74] sm:%s145] %v212
                %v214 = vld [vmem:[%s152 + $0xdc] sm:%s145]
                %215 = vst [vmem:[%s153 + $0x78] sm:%s145] %v214
                %v216 = vld [vmem:[%s152 + $0xe0] sm:%s145]
                %217 = vst [vmem:[%s153 + $0x7c] sm:%s145] %v216
                %v218 = vld [vmem:[%s152 + $0xe4] sm:%s145]
                %219 = vst [vmem:[%s153 + $0x80] sm:%s145] %v218
                %v220 = vld [vmem:[%s152 + $0xe8] sm:%s145]
                %221 = vst [vmem:[%s153 + $0x84] sm:%s145] %v220
                %v222 = vld [vmem:[%s152 + $0xec] sm:%s145]
                %223 = vst [vmem:[%s153 + $0x88] sm:%s145] %v222
                %v224 = vld [vmem:[%s152 + $0xf0] sm:%s145]
                %225 = vst [vmem:[%s153 + $0x8c] sm:%s145] %v224
                %v226 = vld [vmem:[%s152 + $0xf4] sm:%s145]
                %227 = vst [vmem:[%s153 + $0x90] sm:%s145] %v226
                %v228 = vld [vmem:[%s152 + $0xf8] sm:%s145]
                %229 = vst [vmem:[%s153 + $0x94] sm:%s145] %v228
                %v230 = vld [vmem:[%s152 + $0xfc] sm:%s145]
                %231 = vst [vmem:[%s153 + $0x98] sm:%s145] %v230
                %v232 = vld [vmem:[%s152 + $0x100] sm:%s145]
                %233 = vst [vmem:[%s153 + $0x9c] sm:%s145] %v232
                %v234 = vld [vmem:[%s152 + $0x104] sm:%s145]
                %235 = vst [vmem:[%s153 + $0xa0] sm:%s145] %v234
                %v236 = vld [vmem:[%s152 + $0x108] sm:%s145]
                %237 = vst [vmem:[%s153 + $0xa4] sm:%s145] %v236
                %v238 = vld [vmem:[%s152 + $0x10c] sm:%s145]
                %239 = vst [vmem:[%s153 + $0xa8] sm:%s145] %v238
                %v240 = vld [vmem:[%s152 + $0x110] sm:%s145]
                %241 = vst [vmem:[%s153 + $0xac] sm:%s145] %v240
                %v242 = vld [vmem:[%s152 + $0x114] sm:%s145]
                %243 = vst [vmem:[%s153 + $0xb0] sm:%s145] %v242
                %v244 = vld [vmem:[%s152 + $0x118] sm:%s145]
                %245 = vst [vmem:[%s153 + $0xb4] sm:%s145] %v244
                %v246 = vld [vmem:[%s152 + $0x11c] sm:%s145]
                %247 = vst [vmem:[%s153 + $0xb8] sm:%s145] %v246
                %v248 = vld [vmem:[%s152 + $0x120] sm:%s145]
                %249 = vst [vmem:[%s153 + $0xbc] sm:%s145] %v248
                %v250 = vld [vmem:[%s152 + $0x124] sm:%s145]
                %251 = vst [vmem:[%s153 + $0xc0] sm:%s145] %v250
                %v252 = vld [vmem:[%s152 + $0x128] sm:%s145]
                %253 = vst [vmem:[%s153 + $0xc4] sm:%s145] %v252
                %v254 = vld [vmem:[%s152 + $0x190] sm:%s145]
                %255 = vst [vmem:[%s153 + $0xc8] sm:%s145] %v254
                %v256 = vld [vmem:[%s152 + $0x194] sm:%s145]
                %257 = vst [vmem:[%s153 + $0xcc] sm:%s145] %v256
                %v258 = vld [vmem:[%s152 + $0x198] sm:%s145]
                %259 = vst [vmem:[%s153 + $0xd0] sm:%s145] %v258
                %v260 = vld [vmem:[%s152 + $0x19c] sm:%s145]
                %261 = vst [vmem:[%s153 + $0xd4] sm:%s145] %v260
                %v262 = vld [vmem:[%s152 + $0x1a0] sm:%s145]
                %263 = vst [vmem:[%s153 + $0xd8] sm:%s145] %v262
                %v264 = vld [vmem:[%s152 + $0x1a4] sm:%s145]
                %265 = vst [vmem:[%s153 + $0xdc] sm:%s145] %v264
                %v266 = vld [vmem:[%s152 + $0x1a8] sm:%s145]
                %267 = vst [vmem:[%s153 + $0xe0] sm:%s145] %v266
                %v268 = vld [vmem:[%s152 + $0x1ac] sm:%s145]
                %269 = vst [vmem:[%s153 + $0xe4] sm:%s145] %v268
                %v270 = vld [vmem:[%s152 + $0x1b0] sm:%s145]
                %271 = vst [vmem:[%s153 + $0xe8] sm:%s145] %v270
                %v272 = vld [vmem:[%s152 + $0x1b4] sm:%s145]
                %273 = vst [vmem:[%s153 + $0xec] sm:%s145] %v272
                %v274 = vld [vmem:[%s152 + $0x1b8] sm:%s145]
                %275 = vst [vmem:[%s153 + $0xf0] sm:%s145] %v274
                %v276 = vld [vmem:[%s152 + $0x1bc] sm:%s145]
                %277 = vst [vmem:[%s153 + $0xf4] sm:%s145] %v276
                %v278 = vld [vmem:[%s152 + $0x1c0] sm:%s145]
                %279 = vst [vmem:[%s153 + $0xf8] sm:%s145] %v278
                %v280 = vld [vmem:[%s152 + $0x1c4] sm:%s145]
                %281 = vst [vmem:[%s153 + $0xfc] sm:%s145] %v280
                %v282 = vld [vmem:[%s152 + $0x1c8] sm:%s145]
                %283 = vst [vmem:[%s153 + $0x100] sm:%s145] %v282
                %v284 = vld [vmem:[%s152 + $0x1cc] sm:%s145]
                %285 = vst [vmem:[%s153 + $0x104] sm:%s145] %v284
                %v286 = vld [vmem:[%s152 + $0x1d0] sm:%s145]
                %287 = vst [vmem:[%s153 + $0x108] sm:%s145] %v286
                %v288 = vld [vmem:[%s152 + $0x1d4] sm:%s145]
                %289 = vst [vmem:[%s153 + $0x10c] sm:%s145] %v288
                %v290 = vld [vmem:[%s152 + $0x1d8] sm:%s145]
                %291 = vst [vmem:[%s153 + $0x110] sm:%s145] %v290
                %v292 = vld [vmem:[%s152 + $0x1dc] sm:%s145]
                %293 = vst [vmem:[%s153 + $0x114] sm:%s145] %v292
                %v294 = vld [vmem:[%s152 + $0x1e0] sm:%s145]
                %295 = vst [vmem:[%s153 + $0x118] sm:%s145] %v294
                %v296 = vld [vmem:[%s152 + $0x1e4] sm:%s145]
                %297 = vst [vmem:[%s153 + $0x11c] sm:%s145] %v296
                %v298 = vld [vmem:[%s152 + $0x1e8] sm:%s145]
                %299 = vst [vmem:[%s153 + $0x120] sm:%s145] %v298
                %v300 = vld [vmem:[%s152 + $0x1ec] sm:%s145]
                %301 = vst [vmem:[%s153 + $0x124] sm:%s145] %v300
                %v302 = vld [vmem:[%s152 + $0x1f0] sm:%s145]
                %303 = vst [vmem:[%s153 + $0x128] sm:%s145] %v302
                %v304 = vld [vmem:[%s152 + $0x258] sm:%s145]
                %305 = vst [vmem:[%s153 + $0x12c] sm:%s145] %v304
                %v306 = vld [vmem:[%s152 + $0x25c] sm:%s145]
                %307 = vst [vmem:[%s153 + $0x130] sm:%s145] %v306
                %v308 = vld [vmem:[%s152 + $0x260] sm:%s145]
                %309 = vst [vmem:[%s153 + $0x134] sm:%s145] %v308
                %v310 = vld [vmem:[%s152 + $0x264] sm:%s145]
                %311 = vst [vmem:[%s153 + $0x138] sm:%s145] %v310
                %v312 = vld [vmem:[%s152 + $0x268] sm:%s145]
                %313 = vst [vmem:[%s153 + $0x13c] sm:%s145] %v312
                %v314 = vld [vmem:[%s152 + $0x26c] sm:%s145]
                %315 = vst [vmem:[%s153 + $0x140] sm:%s145] %v314
                %v316 = vld [vmem:[%s152 + $0x270] sm:%s145]
                %317 = vst [vmem:[%s153 + $0x144] sm:%s145] %v316
                %v318 = vld [vmem:[%s152 + $0x274] sm:%s145]
                %319 = vst [vmem:[%s153 + $0x148] sm:%s145] %v318
                %v320 = vld [vmem:[%s152 + $0x278] sm:%s145]
                %321 = vst [vmem:[%s153 + $0x14c] sm:%s145] %v320
                %v322 = vld [vmem:[%s152 + $0x27c] sm:%s145]
                %323 = vst [vmem:[%s153 + $0x150] sm:%s145] %v322
                %v324 = vld [vmem:[%s152 + $0x280] sm:%s145]
                %325 = vst [vmem:[%s153 + $0x154] sm:%s145] %v324
                %v326 = vld [vmem:[%s152 + $0x284] sm:%s145]
                %327 = vst [vmem:[%s153 + $0x158] sm:%s145] %v326
                %v328 = vld [vmem:[%s152 + $0x288] sm:%s145]
                %329 = vst [vmem:[%s153 + $0x15c] sm:%s145] %v328
                %v330 = vld [vmem:[%s152 + $0x28c] sm:%s145]
                %331 = vst [vmem:[%s153 + $0x160] sm:%s145] %v330
                %v332 = vld [vmem:[%s152 + $0x290] sm:%s145]
                %333 = vst [vmem:[%s153 + $0x164] sm:%s145] %v332
                %v334 = vld [vmem:[%s152 + $0x294] sm:%s145]
                %335 = vst [vmem:[%s153 + $0x168] sm:%s145] %v334
                %v336 = vld [vmem:[%s152 + $0x298] sm:%s145]
                %337 = vst [vmem:[%s153 + $0x16c] sm:%s145] %v336
                %v338 = vld [vmem:[%s152 + $0x29c] sm:%s145]
                %339 = vst [vmem:[%s153 + $0x170] sm:%s145] %v338
                %v340 = vld [vmem:[%s152 + $0x2a0] sm:%s145]
                %341 = vst [vmem:[%s153 + $0x174] sm:%s145] %v340
                %v342 = vld [vmem:[%s152 + $0x2a4] sm:%s145]
                %343 = vst [vmem:[%s153 + $0x178] sm:%s145] %v342
                %v344 = vld [vmem:[%s152 + $0x2a8] sm:%s145]
                %345 = vst [vmem:[%s153 + $0x17c] sm:%s145] %v344
                %v346 = vld [vmem:[%s152 + $0x2ac] sm:%s145]
                %347 = vst [vmem:[%s153 + $0x180] sm:%s145] %v346
                %v348 = vld [vmem:[%s152 + $0x2b0] sm:%s145]
                %349 = vst [vmem:[%s153 + $0x184] sm:%s145] %v348
                %v350 = vld [vmem:[%s152 + $0x2b4] sm:%s145]
                %351 = vst [vmem:[%s153 + $0x188] sm:%s145] %v350
                %v352 = vld [vmem:[%s152 + $0x2b8] sm:%s145]
                %353 = vst [vmem:[%s153 + $0x18c] sm:%s145] %v352
              $region45: #{cnn_net_32_forward.2} parent=39 // loop_footer
                %s151 = sadd.s32 1, %s147
              $region46: #{cnn_net_32_forward.2} parent=39 // loop_footer_branch
                %146 = sbr.rel target = $region42
              $region47: #{cnn_net_32_forward.2} parent=39 // loop_exit
                _
            $region40: #{cnn_net_32_forward.2} parent=31 // pred_fallthru
              _
          $region32: #{cnn_net_32_forward.2} parent=27 // pred_fallthru
            _
          %574 = vnop
        $region28: #{cnn_net_32_forward.2} parent=23 // pred_fallthru
          _
      $region24: #{cnn_net_32_forward.2} parent=5 // pred_fallthru
        _
      %p575 = scmp.le.s32.totalorder 1, %s9
      %p576 = scmp.lt.s32.totalorder %s9, 3
      %p577 = pnand %p575, %p576
      %p578 = pneg %p577
      // Predicated region
      $region66: #{cnn_net_32_forward.2} parent=5 // pred_check
        _
      $region67: #{cnn_net_32_forward.2} parent=5 // pred_check_branch
        %580 = sbr.rel (%p577) target = $region69
      $region68: #{cnn_net_32_forward.2} parent=5 // pred_region
        %s581 = ssub.s32 %s9, 1
        %s582 = sand.u32 %s22, 1
        %s583 = sand.u32 %s22, 1
        %s584 = smul.addr %s583, 400
        %s585 = scalar_lea.vmem [#allocation2], %s584
        // Predicated region
        $region70: #{cnn_net_32_forward.2} parent=68 // pred_check
          %p586 = pneg %p35
        $region71: #{cnn_net_32_forward.2} parent=68 // pred_check_branch
          %588 = sbr.rel (%p586) target = $region73
        $region72: #{cnn_net_32_forward.2} parent=68 // pred_region
          _
        $region73: #{cnn_net_32_forward.2} parent=68 // pred_fallthru
          _
        %s589 = sand.u32 %s22, 1
        %s590 = sand.u32 %s22, 1
        %s591 = smul.addr %s590, 400
        %s592 = scalar_lea.vmem [#allocation2], %s591
        %p593 = pneg %p35
        %p594 = pneg %p32
        %p595 = pneg %p56
        %p596 = pneg %p53
        %p597 = pneg %p77
        %p598 = pneg %p74
        %p599 = pneg %p103
        %p600 = pneg %p100
        %s601 = smul.u32 25, %s14
        %p602 = scmp.lt.s32.totalorder %s601, 49
        %s603 = scalar_select %p602, %s601, 49
        %s604 = smul.addr %s603, 4
        %s605 = scalar_lea.vmem %s3, %s604
        %s606 = smul.u32 25, %s14
        %s607 = smul.u32 25, %s14
        %p608 = scmp.lt.s32.totalorder %s607, 49
        %s609 = scalar_select %p608, %s607, 49
        %s610 = smul.addr %s609, 4
        %s611 = scalar_lea.vmem %s3, %s610
        %s612 = smul.u32 25, %s14
        %v614 = vld [vmem:[%s585] sm:$0xf]
        %v615 = vld [vmem:[%s585 + $0x4] sm:$0xf]
        %v616 = vld [vmem:[%s585 + $0x8] sm:$0xf]
        %v617 = vld [vmem:[%s585 + $0xc] sm:$0xf]
        %v618 = vld [vmem:[%s585 + $0x10] sm:$0xf]
        %v619 = vld [vmem:[%s585 + $0x14] sm:$0xf]
        %v620 = vld [vmem:[%s585 + $0x18] sm:$0xf]
        %v621 = vld [vmem:[%s585 + $0x1c] sm:$0xf]
        %v622 = vld [vmem:[%s585 + $0x20] sm:$0xf]
        %v623 = vld [vmem:[%s585 + $0x24] sm:$0xf]
        %v624 = vld [vmem:[%s585 + $0x28] sm:$0xf]
        %v625 = vld [vmem:[%s585 + $0x2c] sm:$0xf]
        %v626 = vld [vmem:[%s585 + $0x30] sm:$0xf]
        %v627 = vld [vmem:[%s585 + $0x34] sm:$0xf]
        %v628 = vld [vmem:[%s585 + $0x38] sm:$0xf]
        %v629 = vld [vmem:[%s585 + $0x3c] sm:$0xf]
        %v630 = vld [vmem:[%s585 + $0x40] sm:$0xf]
        %v631 = vld [vmem:[%s585 + $0x44] sm:$0xf]
        %v632 = vld [vmem:[%s585 + $0x48] sm:$0xf]
        %v633 = vld [vmem:[%s585 + $0x4c] sm:$0xf]
        %v634 = vld [vmem:[%s585 + $0x50] sm:$0xf]
        %v635 = vld [vmem:[%s585 + $0x54] sm:$0xf]
        %v636 = vld [vmem:[%s585 + $0x58] sm:$0xf]
        %v637 = vld [vmem:[%s585 + $0x5c] sm:$0xf]
        %v638 = vld [vmem:[%s585 + $0x60] sm:$0xf]
        %v639 = vld [vmem:[%s1] sm:$0xf]
        %v640 = vld [vmem:[%s1 + $0x4] sm:$0xf]
        %v641 = vld [vmem:[%s1 + $0x8] sm:$0xf]
        %v642 = vld [vmem:[%s1 + $0xc] sm:$0x1]
        %v668 = vunpack.c.l.b16 %v614
        %v669 = vunpack.c.l.b16 %v615
        %v670 = vunpack.c.l.b16 %v616
        %v671 = vunpack.c.l.b16 %v617
        %v672 = vunpack.c.l.b16 %v618
        %v673 = vunpack.c.l.b16 %v619
        %v674 = vunpack.c.l.b16 %v620
        %v675 = vunpack.c.l.b16 %v621
        %v676 = vunpack.c.l.b16 %v622
        %v677 = vunpack.c.l.b16 %v623
        %v678 = vunpack.c.l.b16 %v624
        %v679 = vunpack.c.l.b16 %v625
        %v680 = vunpack.c.l.b16 %v626
        %v681 = vunpack.c.l.b16 %v627
        %v682 = vunpack.c.l.b16 %v628
        %v683 = vunpack.c.l.b16 %v629
        %v684 = vunpack.c.l.b16 %v630
        %v685 = vunpack.c.l.b16 %v631
        %v686 = vunpack.c.l.b16 %v632
        %v687 = vunpack.c.l.b16 %v633
        %v688 = vunpack.c.l.b16 %v634
        %v689 = vunpack.c.l.b16 %v635
        %v690 = vunpack.c.l.b16 %v636
        %v691 = vunpack.c.l.b16 %v637
        %v692 = vunpack.c.l.b16 %v638
        %v693 = vpack.c.b16 %v669, %v668
        %v694 = vpack.c.b16 %v671, %v670
        %v695 = vpack.c.b16 %v673, %v672
        %v696 = vpack.c.b16 %v675, %v674
        %v697 = vpack.c.b16 %v677, %v676
        %v698 = vpack.c.b16 %v679, %v678
        %v699 = vpack.c.b16 %v681, %v680
        %v700 = vpack.c.b16 %v683, %v682
        %v701 = vpack.c.b16 %v685, %v684
        %v702 = vpack.c.b16 %v687, %v686
        %v703 = vpack.c.b16 %v689, %v688
        %v704 = vpack.c.b16 %v691, %v690
        %v705 = vpack.c.b16 %v692, %v692
        %v710 = vunpack.c.l.b16 %v639
        %v711 = vunpack.c.l.b16 %v640
        %v712 = vunpack.c.l.b16 %v641
        %v713 = vunpack.c.l.b16 %v642
        %v714 = vpack.c.b16 %v711, %v710
        %v715 = vpack.c.b16 %v713, %v712
        %vm717 = vcmask 203776
        %v719 = vsel %vm717, %v693, 0
        %v722 = vsel %vm717, %v694, 0
        %v725 = vsel %vm717, %v695, 0
        %v728 = vsel %vm717, %v696, 0
        %v731 = vsel %vm717, %v697, 0
        %v734 = vsel %vm717, %v698, 0
        %v737 = vsel %vm717, %v699, 0
        %v740 = vsel %vm717, %v700, 0
        %v743 = vsel %vm717, %v701, 0
        %v746 = vsel %vm717, %v702, 0
        %v749 = vsel %vm717, %v703, 0
        %v752 = vsel %vm717, %v704, 0
        %v755 = vsel %vm717, %v705, 0
        %vm757 = vcmask 1043456
        %vm758 = vcmask 1044480
        %v759 = vsel %vm757, 4294967295, 65535
        %v760 = vsel %vm758, %v759, 0
        %v762 = vand.u32 %v715, %v760
        %764 = vmatprep.subr.bf16.mxu0 0
        %765 = vmatpush1.bf16.msra.mxu0 0
        %766 = vmatprep.subr.bf16.mxu0 0
        %767 = vmatpush1.bf16.msra.mxu0 0
        %768 = vmatprep.subr.bf16.mxu0 0
        %769 = vmatpush1.bf16.msra.mxu0 0
        %770 = vmatprep.subr.bf16.mxu0 0
        %771 = vmatpush1.bf16.msra.mxu0 0
        %772 = vmatprep.subr.bf16.mxu0 0
        %773 = vmatpush1.bf16.msra.mxu0 0
        %774 = vmatprep.subr.bf16.mxu0 0
        %775 = vmatpush1.bf16.msra.mxu0 0
        %776 = vmatprep.subr.bf16.mxu0 0
        %777 = vmatpush1.bf16.msra.mxu0 %v762
        %778 = vmatprep.subr.bf16.mxu0 0
        %779 = vmatpush1.bf16.msra.mxu0 %v714
        %780 = vmatprep.subr.bf16.mxu0 0
        %781 = vmatpush2.bf16.msra.mxu0 0
        %782 = vmatprep.subr.bf16.mxu0 0
        %783 = vmatpush2.bf16.msra.mxu0 0
        %784 = vmatprep.subr.bf16.mxu0 0
        %785 = vmatpush2.bf16.msra.mxu0 0
        %786 = vmatprep.subr.bf16.mxu0 0
        %787 = vmatpush2.bf16.msra.mxu0 0
        %788 = vmatprep.subr.bf16.mxu0 0
        %789 = vmatpush2.bf16.msra.mxu0 0
        %790 = vmatprep.subr.bf16.mxu0 0
        %791 = vmatpush2.bf16.msra.mxu0 0
        %792 = vmatprep.subr.bf16.mxu0 0
        %793 = vmatpush2.bf16.msra.mxu0 0
        %794 = vmatprep.subr.bf16.mxu0 0
        %795 = vmatpush2.bf16.msra.mxu0 0
        %796 = vmatprep.mubr.bf16.mxu0 0
        %797 = vmatmul.mubr.bf16.gmra.mxu0 %v719
        %v798 = vpop.f32.mrf.mxu0
        %v799 = vadd.f32 0.0, %v798
        %v800 = vpop.f32.mrf.mxu0
        %v801 = vpop.f32.mrf.mxu0
        %v802 = vadd.f32 0.0, %v801
        %v803 = vpop.f32.mrf.mxu0
        %804 = vmatprep.mubr.bf16.mxu0 0
        %805 = vmatmul.mubr.bf16.gmra.mxu0 %v722
        %v806 = vpop.f32.mrf.mxu0
        %v807 = vadd.f32 0.0, %v806
        %v808 = vpop.f32.mrf.mxu0
        %v809 = vpop.f32.mrf.mxu0
        %v810 = vadd.f32 0.0, %v809
        %v811 = vpop.f32.mrf.mxu0
        %812 = vmatprep.mubr.bf16.mxu0 0
        %813 = vmatmul.mubr.bf16.gmra.mxu0 %v725
        %v814 = vpop.f32.mrf.mxu0
        %v815 = vadd.f32 0.0, %v814
        %v816 = vpop.f32.mrf.mxu0
        %v817 = vpop.f32.mrf.mxu0
        %v818 = vadd.f32 0.0, %v817
        %v819 = vpop.f32.mrf.mxu0
        %820 = vmatprep.mubr.bf16.mxu0 0
        %821 = vmatmul.mubr.bf16.gmra.mxu0 %v728
        %v822 = vpop.f32.mrf.mxu0
        %v823 = vadd.f32 0.0, %v822
        %v824 = vpop.f32.mrf.mxu0
        %v825 = vpop.f32.mrf.mxu0
        %v826 = vadd.f32 0.0, %v825
        %v827 = vpop.f32.mrf.mxu0
        %828 = vmatprep.mubr.bf16.mxu0 0
        %829 = vmatmul.mubr.bf16.gmra.mxu0 %v731
        %v830 = vpop.f32.mrf.mxu0
        %v831 = vadd.f32 0.0, %v830
        %v832 = vpop.f32.mrf.mxu0
        %v833 = vpop.f32.mrf.mxu0
        %v834 = vadd.f32 0.0, %v833
        %v835 = vpop.f32.mrf.mxu0
        %836 = vmatprep.mubr.bf16.mxu0 0
        %837 = vmatmul.mubr.bf16.gmra.mxu0 %v734
        %v838 = vpop.f32.mrf.mxu0
        %v839 = vadd.f32 0.0, %v838
        %v840 = vpop.f32.mrf.mxu0
        %v841 = vpop.f32.mrf.mxu0
        %v842 = vadd.f32 0.0, %v841
        %v843 = vpop.f32.mrf.mxu0
        %844 = vmatprep.mubr.bf16.mxu0 0
        %845 = vmatmul.mubr.bf16.gmra.mxu0 %v737
        %v846 = vpop.f32.mrf.mxu0
        %v847 = vadd.f32 0.0, %v846
        %v848 = vpop.f32.mrf.mxu0
        %v849 = vpop.f32.mrf.mxu0
        %v850 = vadd.f32 0.0, %v849
        %v851 = vpop.f32.mrf.mxu0
        %852 = vmatprep.mubr.bf16.mxu0 0
        %853 = vmatmul.mubr.bf16.gmra.mxu0 %v740
        %v854 = vpop.f32.mrf.mxu0
        %v855 = vadd.f32 0.0, %v854
        %v856 = vpop.f32.mrf.mxu0
        %v857 = vpop.f32.mrf.mxu0
        %v858 = vadd.f32 0.0, %v857
        %v859 = vpop.f32.mrf.mxu0
        %860 = vmatprep.mubr.bf16.mxu0 0
        %861 = vmatmul.mubr.bf16.gmra.mxu0 %v743
        %v862 = vpop.f32.mrf.mxu0
        %v863 = vadd.f32 0.0, %v862
        %v864 = vpop.f32.mrf.mxu0
        %v865 = vpop.f32.mrf.mxu0
        %v866 = vadd.f32 0.0, %v865
        %v867 = vpop.f32.mrf.mxu0
        %868 = vmatprep.mubr.bf16.mxu0 0
        %869 = vmatmul.mubr.bf16.gmra.mxu0 %v746
        %v870 = vpop.f32.mrf.mxu0
        %v871 = vadd.f32 0.0, %v870
        %v872 = vpop.f32.mrf.mxu0
        %v873 = vpop.f32.mrf.mxu0
        %v874 = vadd.f32 0.0, %v873
        %v875 = vpop.f32.mrf.mxu0
        %876 = vmatprep.mubr.bf16.mxu0 0
        %877 = vmatmul.mubr.bf16.gmra.mxu0 %v749
        %v878 = vpop.f32.mrf.mxu0
        %v879 = vadd.f32 0.0, %v878
        %v880 = vpop.f32.mrf.mxu0
        %v881 = vpop.f32.mrf.mxu0
        %v882 = vadd.f32 0.0, %v881
        %v883 = vpop.f32.mrf.mxu0
        %884 = vmatprep.mubr.bf16.mxu0 0
        %885 = vmatmul.mubr.bf16.gmra.mxu0 %v752
        %v886 = vpop.f32.mrf.mxu0
        %v887 = vadd.f32 0.0, %v886
        %v888 = vpop.f32.mrf.mxu0
        %v889 = vpop.f32.mrf.mxu0
        %v890 = vadd.f32 0.0, %v889
        %v891 = vpop.f32.mrf.mxu0
        %892 = vmatprep.mubr.bf16.mxu0 0
        %893 = vmatmul.mubr.bf16.gmra.mxu0 %v755
        %v894 = vpop.f32.mrf.mxu0
        %v895 = vadd.f32 0.0, %v894
        %v896 = vpop.f32.mrf.mxu0
        %v897 = vpop.f32.mrf.mxu0
        %v898 = vpop.f32.mrf.mxu0
        %899 = vdwg.mxu0
        %s900 = scalar_lea.vmem %s585, 100 [#allocation2]
        %v901 = vld [vmem:[%s900] sm:$0xf]
        %v902 = vld [vmem:[%s900 + $0x4] sm:$0xf]
        %v903 = vld [vmem:[%s900 + $0x8] sm:$0xf]
        %v904 = vld [vmem:[%s900 + $0xc] sm:$0xf]
        %v905 = vld [vmem:[%s900 + $0x10] sm:$0xf]
        %v906 = vld [vmem:[%s900 + $0x14] sm:$0xf]
        %v907 = vld [vmem:[%s900 + $0x18] sm:$0xf]
        %v908 = vld [vmem:[%s900 + $0x1c] sm:$0xf]
        %v909 = vld [vmem:[%s900 + $0x20] sm:$0xf]
        %v910 = vld [vmem:[%s900 + $0x24] sm:$0xf]
        %v911 = vld [vmem:[%s900 + $0x28] sm:$0xf]
        %v912 = vld [vmem:[%s900 + $0x2c] sm:$0xf]
        %v913 = vld [vmem:[%s900 + $0x30] sm:$0xf]
        %v914 = vld [vmem:[%s900 + $0x34] sm:$0xf]
        %v915 = vld [vmem:[%s900 + $0x38] sm:$0xf]
        %v916 = vld [vmem:[%s900 + $0x3c] sm:$0xf]
        %v917 = vld [vmem:[%s900 + $0x40] sm:$0xf]
        %v918 = vld [vmem:[%s900 + $0x44] sm:$0xf]
        %v919 = vld [vmem:[%s900 + $0x48] sm:$0xf]
        %v920 = vld [vmem:[%s900 + $0x4c] sm:$0xf]
        %v921 = vld [vmem:[%s900 + $0x50] sm:$0xf]
        %v922 = vld [vmem:[%s900 + $0x54] sm:$0xf]
        %v923 = vld [vmem:[%s900 + $0x58] sm:$0xf]
        %v924 = vld [vmem:[%s900 + $0x5c] sm:$0xf]
        %v925 = vld [vmem:[%s900 + $0x60] sm:$0xf]
        %v951 = vunpack.c.l.b16 %v901
        %v952 = vunpack.c.l.b16 %v902
        %v953 = vunpack.c.l.b16 %v903
        %v954 = vunpack.c.l.b16 %v904
        %v955 = vunpack.c.l.b16 %v905
        %v956 = vunpack.c.l.b16 %v906
        %v957 = vunpack.c.l.b16 %v907
        %v958 = vunpack.c.l.b16 %v908
        %v959 = vunpack.c.l.b16 %v909
        %v960 = vunpack.c.l.b16 %v910
        %v961 = vunpack.c.l.b16 %v911
        %v962 = vunpack.c.l.b16 %v912
        %v963 = vunpack.c.l.b16 %v913
        %v964 = vunpack.c.l.b16 %v914
        %v965 = vunpack.c.l.b16 %v915
        %v966 = vunpack.c.l.b16 %v916
        %v967 = vunpack.c.l.b16 %v917
        %v968 = vunpack.c.l.b16 %v918
        %v969 = vunpack.c.l.b16 %v919
        %v970 = vunpack.c.l.b16 %v920
        %v971 = vunpack.c.l.b16 %v921
        %v972 = vunpack.c.l.b16 %v922
        %v973 = vunpack.c.l.b16 %v923
        %v974 = vunpack.c.l.b16 %v924
        %v975 = vunpack.c.l.b16 %v925
        %v976 = vpack.c.b16 %v952, %v951
        %v977 = vpack.c.b16 %v954, %v953
        %v978 = vpack.c.b16 %v956, %v955
        %v979 = vpack.c.b16 %v958, %v957
        %v980 = vpack.c.b16 %v960, %v959
        %v981 = vpack.c.b16 %v962, %v961
        %v982 = vpack.c.b16 %v964, %v963
        %v983 = vpack.c.b16 %v966, %v965
        %v984 = vpack.c.b16 %v968, %v967
        %v985 = vpack.c.b16 %v970, %v969
        %v986 = vpack.c.b16 %v972, %v971
        %v987 = vpack.c.b16 %v974, %v973
        %v988 = vpack.c.b16 %v975, %v975
        %v990 = vsel %vm717, %v976, 0
        %v993 = vsel %vm717, %v977, 0
        %v996 = vsel %vm717, %v978, 0
        %v999 = vsel %vm717, %v979, 0
        %v1002 = vsel %vm717, %v980, 0
        %v1005 = vsel %vm717, %v981, 0
        %v1008 = vsel %vm717, %v982, 0
        %v1011 = vsel %vm717, %v983, 0
        %v1014 = vsel %vm717, %v984, 0
        %v1017 = vsel %vm717, %v985, 0
        %v1020 = vsel %vm717, %v986, 0
        %v1023 = vsel %vm717, %v987, 0
        %v1026 = vsel %vm717, %v988, 0
        %1028 = vmatprep.subr.bf16.mxu0 0
        %1029 = vmatpush1.bf16.msra.mxu0 0
        %1030 = vmatprep.subr.bf16.mxu0 0
        %1031 = vmatpush1.bf16.msra.mxu0 0
        %1032 = vmatprep.subr.bf16.mxu0 0
        %1033 = vmatpush1.bf16.msra.mxu0 0
        %1034 = vmatprep.subr.bf16.mxu0 0
        %1035 = vmatpush1.bf16.msra.mxu0 0
        %1036 = vmatprep.subr.bf16.mxu0 0
        %1037 = vmatpush1.bf16.msra.mxu0 0
        %1038 = vmatprep.subr.bf16.mxu0 0
        %1039 = vmatpush1.bf16.msra.mxu0 0
        %1040 = vmatprep.subr.bf16.mxu0 0
        %1041 = vmatpush1.bf16.msra.mxu0 %v762
        %1042 = vmatprep.subr.bf16.mxu0 0
        %1043 = vmatpush1.bf16.msra.mxu0 %v714
        %1044 = vmatprep.subr.bf16.mxu0 0
        %1045 = vmatpush2.bf16.msra.mxu0 0
        %1046 = vmatprep.subr.bf16.mxu0 0
        %1047 = vmatpush2.bf16.msra.mxu0 0
        %1048 = vmatprep.subr.bf16.mxu0 0
        %1049 = vmatpush2.bf16.msra.mxu0 0
        %1050 = vmatprep.subr.bf16.mxu0 0
        %1051 = vmatpush2.bf16.msra.mxu0 0
        %1052 = vmatprep.subr.bf16.mxu0 0
        %1053 = vmatpush2.bf16.msra.mxu0 0
        %1054 = vmatprep.subr.bf16.mxu0 0
        %1055 = vmatpush2.bf16.msra.mxu0 0
        %1056 = vmatprep.subr.bf16.mxu0 0
        %1057 = vmatpush2.bf16.msra.mxu0 0
        %1058 = vmatprep.subr.bf16.mxu0 0
        %1059 = vmatpush2.bf16.msra.mxu0 0
        %1060 = vmatprep.mubr.bf16.mxu0 0
        %1061 = vmatmul.mubr.bf16.gmra.mxu0 %v990
        %v1062 = vpop.f32.mrf.mxu0
        %v1063 = vadd.f32 0.0, %v1062
        %v1064 = vpop.f32.mrf.mxu0
        %v1065 = vpop.f32.mrf.mxu0
        %v1066 = vadd.f32 0.0, %v1065
        %v1067 = vpop.f32.mrf.mxu0
        %1068 = vmatprep.mubr.bf16.mxu0 0
        %1069 = vmatmul.mubr.bf16.gmra.mxu0 %v993
        %v1070 = vpop.f32.mrf.mxu0
        %v1071 = vadd.f32 0.0, %v1070
        %v1072 = vpop.f32.mrf.mxu0
        %v1073 = vpop.f32.mrf.mxu0
        %v1074 = vadd.f32 0.0, %v1073
        %v1075 = vpop.f32.mrf.mxu0
        %1076 = vmatprep.mubr.bf16.mxu0 0
        %1077 = vmatmul.mubr.bf16.gmra.mxu0 %v996
        %v1078 = vpop.f32.mrf.mxu0
        %v1079 = vadd.f32 0.0, %v1078
        %v1080 = vpop.f32.mrf.mxu0
        %v1081 = vpop.f32.mrf.mxu0
        %v1082 = vadd.f32 0.0, %v1081
        %v1083 = vpop.f32.mrf.mxu0
        %1084 = vmatprep.mubr.bf16.mxu0 0
        %1085 = vmatmul.mubr.bf16.gmra.mxu0 %v999
        %v1086 = vpop.f32.mrf.mxu0
        %v1087 = vadd.f32 0.0, %v1086
        %v1088 = vpop.f32.mrf.mxu0
        %v1089 = vpop.f32.mrf.mxu0
        %v1090 = vadd.f32 0.0, %v1089
        %v1091 = vpop.f32.mrf.mxu0
        %1092 = vmatprep.mubr.bf16.mxu0 0
        %1093 = vmatmul.mubr.bf16.gmra.mxu0 %v1002
        %v1094 = vpop.f32.mrf.mxu0
        %v1095 = vadd.f32 0.0, %v1094
        %v1096 = vpop.f32.mrf.mxu0
        %v1097 = vpop.f32.mrf.mxu0
        %v1098 = vadd.f32 0.0, %v1097
        %v1099 = vpop.f32.mrf.mxu0
        %1100 = vmatprep.mubr.bf16.mxu0 0
        %1101 = vmatmul.mubr.bf16.gmra.mxu0 %v1005
        %v1102 = vpop.f32.mrf.mxu0
        %v1103 = vadd.f32 0.0, %v1102
        %v1104 = vpop.f32.mrf.mxu0
        %v1105 = vpop.f32.mrf.mxu0
        %v1106 = vadd.f32 0.0, %v1105
        %v1107 = vpop.f32.mrf.mxu0
        %1108 = vmatprep.mubr.bf16.mxu0 0
        %1109 = vmatmul.mubr.bf16.gmra.mxu0 %v1008
        %v1110 = vpop.f32.mrf.mxu0
        %v1111 = vadd.f32 0.0, %v1110
        %v1112 = vpop.f32.mrf.mxu0
        %v1113 = vpop.f32.mrf.mxu0
        %v1114 = vadd.f32 0.0, %v1113
        %v1115 = vpop.f32.mrf.mxu0
        %1116 = vmatprep.mubr.bf16.mxu0 0
        %1117 = vmatmul.mubr.bf16.gmra.mxu0 %v1011
        %v1118 = vpop.f32.mrf.mxu0
        %v1119 = vadd.f32 0.0, %v1118
        %v1120 = vpop.f32.mrf.mxu0
        %v1121 = vpop.f32.mrf.mxu0
        %v1122 = vadd.f32 0.0, %v1121
        %v1123 = vpop.f32.mrf.mxu0
        %1124 = vmatprep.mubr.bf16.mxu0 0
        %1125 = vmatmul.mubr.bf16.gmra.mxu0 %v1014
        %v1126 = vpop.f32.mrf.mxu0
        %v1127 = vadd.f32 0.0, %v1126
        %v1128 = vpop.f32.mrf.mxu0
        %v1129 = vpop.f32.mrf.mxu0
        %v1130 = vadd.f32 0.0, %v1129
        %v1131 = vpop.f32.mrf.mxu0
        %1132 = vmatprep.mubr.bf16.mxu0 0
        %1133 = vmatmul.mubr.bf16.gmra.mxu0 %v1017
        %v1134 = vpop.f32.mrf.mxu0
        %v1135 = vadd.f32 0.0, %v1134
        %v1136 = vpop.f32.mrf.mxu0
        %v1137 = vpop.f32.mrf.mxu0
        %v1138 = vadd.f32 0.0, %v1137
        %v1139 = vpop.f32.mrf.mxu0
        %1140 = vmatprep.mubr.bf16.mxu0 0
        %1141 = vmatmul.mubr.bf16.gmra.mxu0 %v1020
        %v1142 = vpop.f32.mrf.mxu0
        %v1143 = vadd.f32 0.0, %v1142
        %v1144 = vpop.f32.mrf.mxu0
        %v1145 = vpop.f32.mrf.mxu0
        %v1146 = vadd.f32 0.0, %v1145
        %v1147 = vpop.f32.mrf.mxu0
        %1148 = vmatprep.mubr.bf16.mxu0 0
        %1149 = vmatmul.mubr.bf16.gmra.mxu0 %v1023
        %v1150 = vpop.f32.mrf.mxu0
        %v1151 = vadd.f32 0.0, %v1150
        %v1152 = vpop.f32.mrf.mxu0
        %v1153 = vpop.f32.mrf.mxu0
        %v1154 = vadd.f32 0.0, %v1153
        %v1155 = vpop.f32.mrf.mxu0
        %1156 = vmatprep.mubr.bf16.mxu0 0
        %1157 = vmatmul.mubr.bf16.gmra.mxu0 %v1026
        %v1158 = vpop.f32.mrf.mxu0
        %v1159 = vadd.f32 0.0, %v1158
        %v1160 = vpop.f32.mrf.mxu0
        %v1161 = vpop.f32.mrf.mxu0
        %v1162 = vpop.f32.mrf.mxu0
        %1163 = vdwg.mxu0
        %v1164 = vmax.f32 %v799, %v1063
        %v1165 = vmax.f32 %v802, %v1066
        %v1166 = vmax.f32 %v807, %v1071
        %v1167 = vmax.f32 %v810, %v1074
        %v1168 = vmax.f32 %v815, %v1079
        %v1169 = vmax.f32 %v818, %v1082
        %v1170 = vmax.f32 %v823, %v1087
        %v1171 = vmax.f32 %v826, %v1090
        %v1172 = vmax.f32 %v831, %v1095
        %v1173 = vmax.f32 %v834, %v1098
        %v1174 = vmax.f32 %v839, %v1103
        %v1175 = vmax.f32 %v842, %v1106
        %v1176 = vmax.f32 %v847, %v1111
        %v1177 = vmax.f32 %v850, %v1114
        %v1178 = vmax.f32 %v855, %v1119
        %v1179 = vmax.f32 %v858, %v1122
        %v1180 = vmax.f32 %v863, %v1127
        %v1181 = vmax.f32 %v866, %v1130
        %v1182 = vmax.f32 %v871, %v1135
        %v1183 = vmax.f32 %v874, %v1138
        %v1184 = vmax.f32 %v879, %v1143
        %v1185 = vmax.f32 %v882, %v1146
        %v1186 = vmax.f32 %v887, %v1151
        %v1187 = vmax.f32 %v890, %v1154
        %v1188 = vmax.f32 %v895, %v1159
        %s1189 = scalar_lea.vmem %s585, 200 [#allocation2]
        %v1190 = vld [vmem:[%s1189] sm:$0xf]
        %v1191 = vld [vmem:[%s1189 + $0x4] sm:$0xf]
        %v1192 = vld [vmem:[%s1189 + $0x8] sm:$0xf]
        %v1193 = vld [vmem:[%s1189 + $0xc] sm:$0xf]
        %v1194 = vld [vmem:[%s1189 + $0x10] sm:$0xf]
        %v1195 = vld [vmem:[%s1189 + $0x14] sm:$0xf]
        %v1196 = vld [vmem:[%s1189 + $0x18] sm:$0xf]
        %v1197 = vld [vmem:[%s1189 + $0x1c] sm:$0xf]
        %v1198 = vld [vmem:[%s1189 + $0x20] sm:$0xf]
        %v1199 = vld [vmem:[%s1189 + $0x24] sm:$0xf]
        %v1200 = vld [vmem:[%s1189 + $0x28] sm:$0xf]
        %v1201 = vld [vmem:[%s1189 + $0x2c] sm:$0xf]
        %v1202 = vld [vmem:[%s1189 + $0x30] sm:$0xf]
        %v1203 = vld [vmem:[%s1189 + $0x34] sm:$0xf]
        %v1204 = vld [vmem:[%s1189 + $0x38] sm:$0xf]
        %v1205 = vld [vmem:[%s1189 + $0x3c] sm:$0xf]
        %v1206 = vld [vmem:[%s1189 + $0x40] sm:$0xf]
        %v1207 = vld [vmem:[%s1189 + $0x44] sm:$0xf]
        %v1208 = vld [vmem:[%s1189 + $0x48] sm:$0xf]
        %v1209 = vld [vmem:[%s1189 + $0x4c] sm:$0xf]
        %v1210 = vld [vmem:[%s1189 + $0x50] sm:$0xf]
        %v1211 = vld [vmem:[%s1189 + $0x54] sm:$0xf]
        %v1212 = vld [vmem:[%s1189 + $0x58] sm:$0xf]
        %v1213 = vld [vmem:[%s1189 + $0x5c] sm:$0xf]
        %v1214 = vld [vmem:[%s1189 + $0x60] sm:$0xf]
        %v1240 = vunpack.c.l.b16 %v1190
        %v1241 = vunpack.c.l.b16 %v1191
        %v1242 = vunpack.c.l.b16 %v1192
        %v1243 = vunpack.c.l.b16 %v1193
        %v1244 = vunpack.c.l.b16 %v1194
        %v1245 = vunpack.c.l.b16 %v1195
        %v1246 = vunpack.c.l.b16 %v1196
        %v1247 = vunpack.c.l.b16 %v1197
        %v1248 = vunpack.c.l.b16 %v1198
        %v1249 = vunpack.c.l.b16 %v1199
        %v1250 = vunpack.c.l.b16 %v1200
        %v1251 = vunpack.c.l.b16 %v1201
        %v1252 = vunpack.c.l.b16 %v1202
        %v1253 = vunpack.c.l.b16 %v1203
        %v1254 = vunpack.c.l.b16 %v1204
        %v1255 = vunpack.c.l.b16 %v1205
        %v1256 = vunpack.c.l.b16 %v1206
        %v1257 = vunpack.c.l.b16 %v1207
        %v1258 = vunpack.c.l.b16 %v1208
        %v1259 = vunpack.c.l.b16 %v1209
        %v1260 = vunpack.c.l.b16 %v1210
        %v1261 = vunpack.c.l.b16 %v1211
        %v1262 = vunpack.c.l.b16 %v1212
        %v1263 = vunpack.c.l.b16 %v1213
        %v1264 = vunpack.c.l.b16 %v1214
        %v1265 = vpack.c.b16 %v1241, %v1240
        %v1266 = vpack.c.b16 %v1243, %v1242
        %v1267 = vpack.c.b16 %v1245, %v1244
        %v1268 = vpack.c.b16 %v1247, %v1246
        %v1269 = vpack.c.b16 %v1249, %v1248
        %v1270 = vpack.c.b16 %v1251, %v1250
        %v1271 = vpack.c.b16 %v1253, %v1252
        %v1272 = vpack.c.b16 %v1255, %v1254
        %v1273 = vpack.c.b16 %v1257, %v1256
        %v1274 = vpack.c.b16 %v1259, %v1258
        %v1275 = vpack.c.b16 %v1261, %v1260
        %v1276 = vpack.c.b16 %v1263, %v1262
        %v1277 = vpack.c.b16 %v1264, %v1264
        %v1279 = vsel %vm717, %v1265, 0
        %v1282 = vsel %vm717, %v1266, 0
        %v1285 = vsel %vm717, %v1267, 0
        %v1288 = vsel %vm717, %v1268, 0
        %v1291 = vsel %vm717, %v1269, 0
        %v1294 = vsel %vm717, %v1270, 0
        %v1297 = vsel %vm717, %v1271, 0
        %v1300 = vsel %vm717, %v1272, 0
        %v1303 = vsel %vm717, %v1273, 0
        %v1306 = vsel %vm717, %v1274, 0
        %v1309 = vsel %vm717, %v1275, 0
        %v1312 = vsel %vm717, %v1276, 0
        %v1315 = vsel %vm717, %v1277, 0
        %1317 = vmatprep.subr.bf16.mxu0 0
        %1318 = vmatpush1.bf16.msra.mxu0 0
        %1319 = vmatprep.subr.bf16.mxu0 0
        %1320 = vmatpush1.bf16.msra.mxu0 0
        %1321 = vmatprep.subr.bf16.mxu0 0
        %1322 = vmatpush1.bf16.msra.mxu0 0
        %1323 = vmatprep.subr.bf16.mxu0 0
        %1324 = vmatpush1.bf16.msra.mxu0 0
        %1325 = vmatprep.subr.bf16.mxu0 0
        %1326 = vmatpush1.bf16.msra.mxu0 0
        %1327 = vmatprep.subr.bf16.mxu0 0
        %1328 = vmatpush1.bf16.msra.mxu0 0
        %1329 = vmatprep.subr.bf16.mxu0 0
        %1330 = vmatpush1.bf16.msra.mxu0 %v762
        %1331 = vmatprep.subr.bf16.mxu0 0
        %1332 = vmatpush1.bf16.msra.mxu0 %v714
        %1333 = vmatprep.subr.bf16.mxu0 0
        %1334 = vmatpush2.bf16.msra.mxu0 0
        %1335 = vmatprep.subr.bf16.mxu0 0
        %1336 = vmatpush2.bf16.msra.mxu0 0
        %1337 = vmatprep.subr.bf16.mxu0 0
        %1338 = vmatpush2.bf16.msra.mxu0 0
        %1339 = vmatprep.subr.bf16.mxu0 0
        %1340 = vmatpush2.bf16.msra.mxu0 0
        %1341 = vmatprep.subr.bf16.mxu0 0
        %1342 = vmatpush2.bf16.msra.mxu0 0
        %1343 = vmatprep.subr.bf16.mxu0 0
        %1344 = vmatpush2.bf16.msra.mxu0 0
        %1345 = vmatprep.subr.bf16.mxu0 0
        %1346 = vmatpush2.bf16.msra.mxu0 0
        %1347 = vmatprep.subr.bf16.mxu0 0
        %1348 = vmatpush2.bf16.msra.mxu0 0
        %1349 = vmatprep.mubr.bf16.mxu0 0
        %1350 = vmatmul.mubr.bf16.gmra.mxu0 %v1279
        %v1351 = vpop.f32.mrf.mxu0
        %v1352 = vadd.f32 0.0, %v1351
        %v1353 = vpop.f32.mrf.mxu0
        %v1354 = vpop.f32.mrf.mxu0
        %v1355 = vadd.f32 0.0, %v1354
        %v1356 = vpop.f32.mrf.mxu0
        %1357 = vmatprep.mubr.bf16.mxu0 0
        %1358 = vmatmul.mubr.bf16.gmra.mxu0 %v1282
        %v1359 = vpop.f32.mrf.mxu0
        %v1360 = vadd.f32 0.0, %v1359
        %v1361 = vpop.f32.mrf.mxu0
        %v1362 = vpop.f32.mrf.mxu0
        %v1363 = vadd.f32 0.0, %v1362
        %v1364 = vpop.f32.mrf.mxu0
        %1365 = vmatprep.mubr.bf16.mxu0 0
        %1366 = vmatmul.mubr.bf16.gmra.mxu0 %v1285
        %v1367 = vpop.f32.mrf.mxu0
        %v1368 = vadd.f32 0.0, %v1367
        %v1369 = vpop.f32.mrf.mxu0
        %v1370 = vpop.f32.mrf.mxu0
        %v1371 = vadd.f32 0.0, %v1370
        %v1372 = vpop.f32.mrf.mxu0
        %1373 = vmatprep.mubr.bf16.mxu0 0
        %1374 = vmatmul.mubr.bf16.gmra.mxu0 %v1288
        %v1375 = vpop.f32.mrf.mxu0
        %v1376 = vadd.f32 0.0, %v1375
        %v1377 = vpop.f32.mrf.mxu0
        %v1378 = vpop.f32.mrf.mxu0
        %v1379 = vadd.f32 0.0, %v1378
        %v1380 = vpop.f32.mrf.mxu0
        %1381 = vmatprep.mubr.bf16.mxu0 0
        %1382 = vmatmul.mubr.bf16.gmra.mxu0 %v1291
        %v1383 = vpop.f32.mrf.mxu0
        %v1384 = vadd.f32 0.0, %v1383
        %v1385 = vpop.f32.mrf.mxu0
        %v1386 = vpop.f32.mrf.mxu0
        %v1387 = vadd.f32 0.0, %v1386
        %v1388 = vpop.f32.mrf.mxu0
        %1389 = vmatprep.mubr.bf16.mxu0 0
        %1390 = vmatmul.mubr.bf16.gmra.mxu0 %v1294
        %v1391 = vpop.f32.mrf.mxu0
        %v1392 = vadd.f32 0.0, %v1391
        %v1393 = vpop.f32.mrf.mxu0
        %v1394 = vpop.f32.mrf.mxu0
        %v1395 = vadd.f32 0.0, %v1394
        %v1396 = vpop.f32.mrf.mxu0
        %1397 = vmatprep.mubr.bf16.mxu0 0
        %1398 = vmatmul.mubr.bf16.gmra.mxu0 %v1297
        %v1399 = vpop.f32.mrf.mxu0
        %v1400 = vadd.f32 0.0, %v1399
        %v1401 = vpop.f32.mrf.mxu0
        %v1402 = vpop.f32.mrf.mxu0
        %v1403 = vadd.f32 0.0, %v1402
        %v1404 = vpop.f32.mrf.mxu0
        %1405 = vmatprep.mubr.bf16.mxu0 0
        %1406 = vmatmul.mubr.bf16.gmra.mxu0 %v1300
        %v1407 = vpop.f32.mrf.mxu0
        %v1408 = vadd.f32 0.0, %v1407
        %v1409 = vpop.f32.mrf.mxu0
        %v1410 = vpop.f32.mrf.mxu0
        %v1411 = vadd.f32 0.0, %v1410
        %v1412 = vpop.f32.mrf.mxu0
        %1413 = vmatprep.mubr.bf16.mxu0 0
        %1414 = vmatmul.mubr.bf16.gmra.mxu0 %v1303
        %v1415 = vpop.f32.mrf.mxu0
        %v1416 = vadd.f32 0.0, %v1415
        %v1417 = vpop.f32.mrf.mxu0
        %v1418 = vpop.f32.mrf.mxu0
        %v1419 = vadd.f32 0.0, %v1418
        %v1420 = vpop.f32.mrf.mxu0
        %1421 = vmatprep.mubr.bf16.mxu0 0
        %1422 = vmatmul.mubr.bf16.gmra.mxu0 %v1306
        %v1423 = vpop.f32.mrf.mxu0
        %v1424 = vadd.f32 0.0, %v1423
        %v1425 = vpop.f32.mrf.mxu0
        %v1426 = vpop.f32.mrf.mxu0
        %v1427 = vadd.f32 0.0, %v1426
        %v1428 = vpop.f32.mrf.mxu0
        %1429 = vmatprep.mubr.bf16.mxu0 0
        %1430 = vmatmul.mubr.bf16.gmra.mxu0 %v1309
        %v1431 = vpop.f32.mrf.mxu0
        %v1432 = vadd.f32 0.0, %v1431
        %v1433 = vpop.f32.mrf.mxu0
        %v1434 = vpop.f32.mrf.mxu0
        %v1435 = vadd.f32 0.0, %v1434
        %v1436 = vpop.f32.mrf.mxu0
        %1437 = vmatprep.mubr.bf16.mxu0 0
        %1438 = vmatmul.mubr.bf16.gmra.mxu0 %v1312
        %v1439 = vpop.f32.mrf.mxu0
        %v1440 = vadd.f32 0.0, %v1439
        %v1441 = vpop.f32.mrf.mxu0
        %v1442 = vpop.f32.mrf.mxu0
        %v1443 = vadd.f32 0.0, %v1442
        %v1444 = vpop.f32.mrf.mxu0
        %1445 = vmatprep.mubr.bf16.mxu0 0
        %1446 = vmatmul.mubr.bf16.gmra.mxu0 %v1315
        %v1447 = vpop.f32.mrf.mxu0
        %v1448 = vadd.f32 0.0, %v1447
        %v1449 = vpop.f32.mrf.mxu0
        %v1450 = vpop.f32.mrf.mxu0
        %v1451 = vpop.f32.mrf.mxu0
        %1452 = vdwg.mxu0
        %v1453 = vmax.f32 %v1164, %v1352
        %v1454 = vmax.f32 %v1165, %v1355
        %v1455 = vmax.f32 %v1166, %v1360
        %v1456 = vmax.f32 %v1167, %v1363
        %v1457 = vmax.f32 %v1168, %v1368
        %v1458 = vmax.f32 %v1169, %v1371
        %v1459 = vmax.f32 %v1170, %v1376
        %v1460 = vmax.f32 %v1171, %v1379
        %v1461 = vmax.f32 %v1172, %v1384
        %v1462 = vmax.f32 %v1173, %v1387
        %v1463 = vmax.f32 %v1174, %v1392
        %v1464 = vmax.f32 %v1175, %v1395
        %v1465 = vmax.f32 %v1176, %v1400
        %v1466 = vmax.f32 %v1177, %v1403
        %v1467 = vmax.f32 %v1178, %v1408
        %v1468 = vmax.f32 %v1179, %v1411
        %v1469 = vmax.f32 %v1180, %v1416
        %v1470 = vmax.f32 %v1181, %v1419
        %v1471 = vmax.f32 %v1182, %v1424
        %v1472 = vmax.f32 %v1183, %v1427
        %v1473 = vmax.f32 %v1184, %v1432
        %v1474 = vmax.f32 %v1185, %v1435
        %v1475 = vmax.f32 %v1186, %v1440
        %v1476 = vmax.f32 %v1187, %v1443
        %v1477 = vmax.f32 %v1188, %v1448
        %s1478 = scalar_lea.vmem %s585, 300 [#allocation2]
        %v1479 = vld [vmem:[%s1478] sm:$0xf]
        %v1480 = vld [vmem:[%s1478 + $0x4] sm:$0xf]
        %v1481 = vld [vmem:[%s1478 + $0x8] sm:$0xf]
        %v1482 = vld [vmem:[%s1478 + $0xc] sm:$0xf]
        %v1483 = vld [vmem:[%s1478 + $0x10] sm:$0xf]
        %v1484 = vld [vmem:[%s1478 + $0x14] sm:$0xf]
        %v1485 = vld [vmem:[%s1478 + $0x18] sm:$0xf]
        %v1486 = vld [vmem:[%s1478 + $0x1c] sm:$0xf]
        %v1487 = vld [vmem:[%s1478 + $0x20] sm:$0xf]
        %v1488 = vld [vmem:[%s1478 + $0x24] sm:$0xf]
        %v1489 = vld [vmem:[%s1478 + $0x28] sm:$0xf]
        %v1490 = vld [vmem:[%s1478 + $0x2c] sm:$0xf]
        %v1491 = vld [vmem:[%s1478 + $0x30] sm:$0xf]
        %v1492 = vld [vmem:[%s1478 + $0x34] sm:$0xf]
        %v1493 = vld [vmem:[%s1478 + $0x38] sm:$0xf]
        %v1494 = vld [vmem:[%s1478 + $0x3c] sm:$0xf]
        %v1495 = vld [vmem:[%s1478 + $0x40] sm:$0xf]
        %v1496 = vld [vmem:[%s1478 + $0x44] sm:$0xf]
        %v1497 = vld [vmem:[%s1478 + $0x48] sm:$0xf]
        %v1498 = vld [vmem:[%s1478 + $0x4c] sm:$0xf]
        %v1499 = vld [vmem:[%s1478 + $0x50] sm:$0xf]
        %v1500 = vld [vmem:[%s1478 + $0x54] sm:$0xf]
        %v1501 = vld [vmem:[%s1478 + $0x58] sm:$0xf]
        %v1502 = vld [vmem:[%s1478 + $0x5c] sm:$0xf]
        %v1503 = vld [vmem:[%s1478 + $0x60] sm:$0xf]
        %v1529 = vunpack.c.l.b16 %v1479
        %v1530 = vunpack.c.l.b16 %v1480
        %v1531 = vunpack.c.l.b16 %v1481
        %v1532 = vunpack.c.l.b16 %v1482
        %v1533 = vunpack.c.l.b16 %v1483
        %v1534 = vunpack.c.l.b16 %v1484
        %v1535 = vunpack.c.l.b16 %v1485
        %v1536 = vunpack.c.l.b16 %v1486
        %v1537 = vunpack.c.l.b16 %v1487
        %v1538 = vunpack.c.l.b16 %v1488
        %v1539 = vunpack.c.l.b16 %v1489
        %v1540 = vunpack.c.l.b16 %v1490
        %v1541 = vunpack.c.l.b16 %v1491
        %v1542 = vunpack.c.l.b16 %v1492
        %v1543 = vunpack.c.l.b16 %v1493
        %v1544 = vunpack.c.l.b16 %v1494
        %v1545 = vunpack.c.l.b16 %v1495
        %v1546 = vunpack.c.l.b16 %v1496
        %v1547 = vunpack.c.l.b16 %v1497
        %v1548 = vunpack.c.l.b16 %v1498
        %v1549 = vunpack.c.l.b16 %v1499
        %v1550 = vunpack.c.l.b16 %v1500
        %v1551 = vunpack.c.l.b16 %v1501
        %v1552 = vunpack.c.l.b16 %v1502
        %v1553 = vunpack.c.l.b16 %v1503
        %v1554 = vpack.c.b16 %v1530, %v1529
        %v1555 = vpack.c.b16 %v1532, %v1531
        %v1556 = vpack.c.b16 %v1534, %v1533
        %v1557 = vpack.c.b16 %v1536, %v1535
        %v1558 = vpack.c.b16 %v1538, %v1537
        %v1559 = vpack.c.b16 %v1540, %v1539
        %v1560 = vpack.c.b16 %v1542, %v1541
        %v1561 = vpack.c.b16 %v1544, %v1543
        %v1562 = vpack.c.b16 %v1546, %v1545
        %v1563 = vpack.c.b16 %v1548, %v1547
        %v1564 = vpack.c.b16 %v1550, %v1549
        %v1565 = vpack.c.b16 %v1552, %v1551
        %v1566 = vpack.c.b16 %v1553, %v1553
        %v1568 = vsel %vm717, %v1554, 0
        %v1571 = vsel %vm717, %v1555, 0
        %v1574 = vsel %vm717, %v1556, 0
        %v1577 = vsel %vm717, %v1557, 0
        %v1580 = vsel %vm717, %v1558, 0
        %v1583 = vsel %vm717, %v1559, 0
        %v1586 = vsel %vm717, %v1560, 0
        %v1589 = vsel %vm717, %v1561, 0
        %v1592 = vsel %vm717, %v1562, 0
        %v1595 = vsel %vm717, %v1563, 0
        %v1598 = vsel %vm717, %v1564, 0
        %v1601 = vsel %vm717, %v1565, 0
        %v1604 = vsel %vm717, %v1566, 0
        %1606 = vmatprep.subr.bf16.mxu0 0
        %1607 = vmatpush1.bf16.msra.mxu0 0
        %1608 = vmatprep.subr.bf16.mxu0 0
        %1609 = vmatpush1.bf16.msra.mxu0 0
        %1610 = vmatprep.subr.bf16.mxu0 0
        %1611 = vmatpush1.bf16.msra.mxu0 0
        %1612 = vmatprep.subr.bf16.mxu0 0
        %1613 = vmatpush1.bf16.msra.mxu0 0
        %1614 = vmatprep.subr.bf16.mxu0 0
        %1615 = vmatpush1.bf16.msra.mxu0 0
        %1616 = vmatprep.subr.bf16.mxu0 0
        %1617 = vmatpush1.bf16.msra.mxu0 0
        %1618 = vmatprep.subr.bf16.mxu0 0
        %1619 = vmatpush1.bf16.msra.mxu0 %v762
        %1620 = vmatprep.subr.bf16.mxu0 0
        %1621 = vmatpush1.bf16.msra.mxu0 %v714
        %1622 = vmatprep.subr.bf16.mxu0 0
        %1623 = vmatpush2.bf16.msra.mxu0 0
        %1624 = vmatprep.subr.bf16.mxu0 0
        %1625 = vmatpush2.bf16.msra.mxu0 0
        %1626 = vmatprep.subr.bf16.mxu0 0
        %1627 = vmatpush2.bf16.msra.mxu0 0
        %1628 = vmatprep.subr.bf16.mxu0 0
        %1629 = vmatpush2.bf16.msra.mxu0 0
        %1630 = vmatprep.subr.bf16.mxu0 0
        %1631 = vmatpush2.bf16.msra.mxu0 0
        %1632 = vmatprep.subr.bf16.mxu0 0
        %1633 = vmatpush2.bf16.msra.mxu0 0
        %1634 = vmatprep.subr.bf16.mxu0 0
        %1635 = vmatpush2.bf16.msra.mxu0 0
        %1636 = vmatprep.subr.bf16.mxu0 0
        %1637 = vmatpush2.bf16.msra.mxu0 0
        %1638 = vmatprep.mubr.bf16.mxu0 0
        %1639 = vmatmul.mubr.bf16.gmra.mxu0 %v1568
        %v1640 = vpop.f32.mrf.mxu0
        %v1641 = vadd.f32 0.0, %v1640
        %v1642 = vpop.f32.mrf.mxu0
        %v1643 = vpop.f32.mrf.mxu0
        %v1644 = vadd.f32 0.0, %v1643
        %v1645 = vpop.f32.mrf.mxu0
        %1646 = vmatprep.mubr.bf16.mxu0 0
        %1647 = vmatmul.mubr.bf16.gmra.mxu0 %v1571
        %v1648 = vpop.f32.mrf.mxu0
        %v1649 = vadd.f32 0.0, %v1648
        %v1650 = vpop.f32.mrf.mxu0
        %v1651 = vpop.f32.mrf.mxu0
        %v1652 = vadd.f32 0.0, %v1651
        %v1653 = vpop.f32.mrf.mxu0
        %1654 = vmatprep.mubr.bf16.mxu0 0
        %1655 = vmatmul.mubr.bf16.gmra.mxu0 %v1574
        %v1656 = vpop.f32.mrf.mxu0
        %v1657 = vadd.f32 0.0, %v1656
        %v1658 = vpop.f32.mrf.mxu0
        %v1659 = vpop.f32.mrf.mxu0
        %v1660 = vadd.f32 0.0, %v1659
        %v1661 = vpop.f32.mrf.mxu0
        %1662 = vmatprep.mubr.bf16.mxu0 0
        %1663 = vmatmul.mubr.bf16.gmra.mxu0 %v1577
        %v1664 = vpop.f32.mrf.mxu0
        %v1665 = vadd.f32 0.0, %v1664
        %v1666 = vpop.f32.mrf.mxu0
        %v1667 = vpop.f32.mrf.mxu0
        %v1668 = vadd.f32 0.0, %v1667
        %v1669 = vpop.f32.mrf.mxu0
        %1670 = vmatprep.mubr.bf16.mxu0 0
        %1671 = vmatmul.mubr.bf16.gmra.mxu0 %v1580
        %v1672 = vpop.f32.mrf.mxu0
        %v1673 = vadd.f32 0.0, %v1672
        %v1674 = vpop.f32.mrf.mxu0
        %v1675 = vpop.f32.mrf.mxu0
        %v1676 = vadd.f32 0.0, %v1675
        %v1677 = vpop.f32.mrf.mxu0
        %1678 = vmatprep.mubr.bf16.mxu0 0
        %1679 = vmatmul.mubr.bf16.gmra.mxu0 %v1583
        %v1680 = vpop.f32.mrf.mxu0
        %v1681 = vadd.f32 0.0, %v1680
        %v1682 = vpop.f32.mrf.mxu0
        %v1683 = vpop.f32.mrf.mxu0
        %v1684 = vadd.f32 0.0, %v1683
        %v1685 = vpop.f32.mrf.mxu0
        %1686 = vmatprep.mubr.bf16.mxu0 0
        %1687 = vmatmul.mubr.bf16.gmra.mxu0 %v1586
        %v1688 = vpop.f32.mrf.mxu0
        %v1689 = vadd.f32 0.0, %v1688
        %v1690 = vpop.f32.mrf.mxu0
        %v1691 = vpop.f32.mrf.mxu0
        %v1692 = vadd.f32 0.0, %v1691
        %v1693 = vpop.f32.mrf.mxu0
        %1694 = vmatprep.mubr.bf16.mxu0 0
        %1695 = vmatmul.mubr.bf16.gmra.mxu0 %v1589
        %v1696 = vpop.f32.mrf.mxu0
        %v1697 = vadd.f32 0.0, %v1696
        %v1698 = vpop.f32.mrf.mxu0
        %v1699 = vpop.f32.mrf.mxu0
        %v1700 = vadd.f32 0.0, %v1699
        %v1701 = vpop.f32.mrf.mxu0
        %1702 = vmatprep.mubr.bf16.mxu0 0
        %1703 = vmatmul.mubr.bf16.gmra.mxu0 %v1592
        %v1704 = vpop.f32.mrf.mxu0
        %v1705 = vadd.f32 0.0, %v1704
        %v1706 = vpop.f32.mrf.mxu0
        %v1707 = vpop.f32.mrf.mxu0
        %v1708 = vadd.f32 0.0, %v1707
        %v1709 = vpop.f32.mrf.mxu0
        %1710 = vmatprep.mubr.bf16.mxu0 0
        %1711 = vmatmul.mubr.bf16.gmra.mxu0 %v1595
        %v1712 = vpop.f32.mrf.mxu0
        %v1713 = vadd.f32 0.0, %v1712
        %v1714 = vpop.f32.mrf.mxu0
        %v1715 = vpop.f32.mrf.mxu0
        %v1716 = vadd.f32 0.0, %v1715
        %v1717 = vpop.f32.mrf.mxu0
        %1718 = vmatprep.mubr.bf16.mxu0 0
        %1719 = vmatmul.mubr.bf16.gmra.mxu0 %v1598
        %v1720 = vpop.f32.mrf.mxu0
        %v1721 = vadd.f32 0.0, %v1720
        %v1722 = vpop.f32.mrf.mxu0
        %v1723 = vpop.f32.mrf.mxu0
        %v1724 = vadd.f32 0.0, %v1723
        %v1725 = vpop.f32.mrf.mxu0
        %1726 = vmatprep.mubr.bf16.mxu0 0
        %1727 = vmatmul.mubr.bf16.gmra.mxu0 %v1601
        %v1728 = vpop.f32.mrf.mxu0
        %v1729 = vadd.f32 0.0, %v1728
        %v1730 = vpop.f32.mrf.mxu0
        %v1731 = vpop.f32.mrf.mxu0
        %v1732 = vadd.f32 0.0, %v1731
        %v1733 = vpop.f32.mrf.mxu0
        %1734 = vmatprep.mubr.bf16.mxu0 0
        %1735 = vmatmul.mubr.bf16.gmra.mxu0 %v1604
        %v1736 = vpop.f32.mrf.mxu0
        %v1737 = vadd.f32 0.0, %v1736
        %v1738 = vpop.f32.mrf.mxu0
        %v1739 = vpop.f32.mrf.mxu0
        %v1740 = vpop.f32.mrf.mxu0
        %1741 = vdwg.mxu0
        %v1742 = vmax.f32 %v1453, %v1641
        %v1743 = vmax.f32 %v1454, %v1644
        %v1744 = vmax.f32 %v1455, %v1649
        %v1745 = vmax.f32 %v1456, %v1652
        %v1746 = vmax.f32 %v1457, %v1657
        %v1747 = vmax.f32 %v1458, %v1660
        %v1748 = vmax.f32 %v1459, %v1665
        %v1749 = vmax.f32 %v1460, %v1668
        %v1750 = vmax.f32 %v1461, %v1673
        %v1751 = vmax.f32 %v1462, %v1676
        %v1752 = vmax.f32 %v1463, %v1681
        %v1753 = vmax.f32 %v1464, %v1684
        %v1754 = vmax.f32 %v1465, %v1689
        %v1755 = vmax.f32 %v1466, %v1692
        %v1756 = vmax.f32 %v1467, %v1697
        %v1757 = vmax.f32 %v1468, %v1700
        %v1758 = vmax.f32 %v1469, %v1705
        %v1759 = vmax.f32 %v1470, %v1708
        %v1760 = vmax.f32 %v1471, %v1713
        %v1761 = vmax.f32 %v1472, %v1716
        %v1762 = vmax.f32 %v1473, %v1721
        %v1763 = vmax.f32 %v1474, %v1724
        %v1764 = vmax.f32 %v1475, %v1729
        %v1765 = vmax.f32 %v1476, %v1732
        %v1766 = vmax.f32 %v1477, %v1737
        %v1767 = vld [vmem:[%s2] sm:$0x1]
        %v1769 = vlaneseq
        %v1770 = vshrl.u32 %v1769, 7
        %v1771 = vsub.s32 0, %v1770
        %v1772 = vrot.slane %v1767, %v1771
        %v1774 = vadd.f32 %v1742, %v1772
        %v1775 = vadd.f32 %v1743, %v1772
        %v1776 = vadd.f32 %v1744, %v1772
        %v1777 = vadd.f32 %v1745, %v1772
        %v1778 = vadd.f32 %v1746, %v1772
        %v1779 = vadd.f32 %v1747, %v1772
        %v1780 = vadd.f32 %v1748, %v1772
        %v1781 = vadd.f32 %v1749, %v1772
        %v1782 = vadd.f32 %v1750, %v1772
        %v1783 = vadd.f32 %v1751, %v1772
        %v1784 = vadd.f32 %v1752, %v1772
        %v1785 = vadd.f32 %v1753, %v1772
        %v1786 = vadd.f32 %v1754, %v1772
        %v1787 = vadd.f32 %v1755, %v1772
        %v1788 = vadd.f32 %v1756, %v1772
        %v1789 = vadd.f32 %v1757, %v1772
        %v1790 = vadd.f32 %v1758, %v1772
        %v1791 = vadd.f32 %v1759, %v1772
        %v1792 = vadd.f32 %v1760, %v1772
        %v1793 = vadd.f32 %v1761, %v1772
        %v1794 = vadd.f32 %v1762, %v1772
        %v1795 = vadd.f32 %v1763, %v1772
        %v1796 = vadd.f32 %v1764, %v1772
        %v1797 = vadd.f32 %v1765, %v1772
        %v1798 = vadd.f32 %v1766, %v1772
        %v1799 = vmax.f32 %v1774, 0.0
        %v1800 = vmax.f32 %v1775, 0.0
        %v1801 = vmax.f32 %v1776, 0.0
        %v1802 = vmax.f32 %v1777, 0.0
        %v1803 = vmax.f32 %v1778, 0.0
        %v1804 = vmax.f32 %v1779, 0.0
        %v1805 = vmax.f32 %v1780, 0.0
        %v1806 = vmax.f32 %v1781, 0.0
        %v1807 = vmax.f32 %v1782, 0.0
        %v1808 = vmax.f32 %v1783, 0.0
        %v1809 = vmax.f32 %v1784, 0.0
        %v1810 = vmax.f32 %v1785, 0.0
        %v1811 = vmax.f32 %v1786, 0.0
        %v1812 = vmax.f32 %v1787, 0.0
        %v1813 = vmax.f32 %v1788, 0.0
        %v1814 = vmax.f32 %v1789, 0.0
        %v1815 = vmax.f32 %v1790, 0.0
        %v1816 = vmax.f32 %v1791, 0.0
        %v1817 = vmax.f32 %v1792, 0.0
        %v1818 = vmax.f32 %v1793, 0.0
        %v1819 = vmax.f32 %v1794, 0.0
        %v1820 = vmax.f32 %v1795, 0.0
        %v1821 = vmax.f32 %v1796, 0.0
        %v1822 = vmax.f32 %v1797, 0.0
        %v1823 = vmax.f32 %v1798, 0.0
        %v1824 = vpack.c.bf16 %v1800, %v1799
        %v1825 = vpack.c.bf16 %v1802, %v1801
        %v1826 = vpack.c.bf16 %v1804, %v1803
        %v1827 = vpack.c.bf16 %v1806, %v1805
        %v1828 = vpack.c.bf16 %v1808, %v1807
        %v1829 = vpack.c.bf16 %v1810, %v1809
        %v1830 = vpack.c.bf16 %v1812, %v1811
        %v1831 = vpack.c.bf16 %v1814, %v1813
        %v1832 = vpack.c.bf16 %v1816, %v1815
        %v1833 = vpack.c.bf16 %v1818, %v1817
        %v1834 = vpack.c.bf16 %v1820, %v1819
        %v1835 = vpack.c.bf16 %v1822, %v1821
        %v1836 = vpack.c.bf16 %v1823, %v1823
        %v1850 = vunpack.c.l.b16 %v1824
        %v1851 = vunpack.c.h.b16 %v1824
        %v1852 = vunpack.c.l.b16 %v1825
        %v1853 = vunpack.c.h.b16 %v1825
        %v1854 = vunpack.c.l.b16 %v1826
        %v1855 = vunpack.c.h.b16 %v1826
        %v1856 = vunpack.c.l.b16 %v1827
        %v1857 = vunpack.c.h.b16 %v1827
        %v1858 = vunpack.c.l.b16 %v1828
        %v1859 = vunpack.c.h.b16 %v1828
        %v1860 = vunpack.c.l.b16 %v1829
        %v1861 = vunpack.c.h.b16 %v1829
        %v1862 = vunpack.c.l.b16 %v1830
        %v1863 = vunpack.c.h.b16 %v1830
        %v1864 = vunpack.c.l.b16 %v1831
        %v1865 = vunpack.c.h.b16 %v1831
        %v1866 = vunpack.c.l.b16 %v1832
        %v1867 = vunpack.c.h.b16 %v1832
        %v1868 = vunpack.c.l.b16 %v1833
        %v1869 = vunpack.c.h.b16 %v1833
        %v1870 = vunpack.c.l.b16 %v1834
        %v1871 = vunpack.c.h.b16 %v1834
        %v1872 = vunpack.c.l.b16 %v1835
        %v1873 = vunpack.c.h.b16 %v1835
        %v1874 = vunpack.c.l.b16 %v1836
        %v1875 = vpack.c.b16 %v1850, %v1850
        %v1876 = vpack.c.b16 %v1851, %v1851
        %v1877 = vpack.c.b16 %v1852, %v1852
        %v1878 = vpack.c.b16 %v1853, %v1853
        %v1879 = vpack.c.b16 %v1854, %v1854
        %v1880 = vpack.c.b16 %v1855, %v1855
        %v1881 = vpack.c.b16 %v1856, %v1856
        %v1882 = vpack.c.b16 %v1857, %v1857
        %v1883 = vpack.c.b16 %v1858, %v1858
        %v1884 = vpack.c.b16 %v1859, %v1859
        %v1885 = vpack.c.b16 %v1860, %v1860
        %v1886 = vpack.c.b16 %v1861, %v1861
        %v1887 = vpack.c.b16 %v1862, %v1862
        %v1888 = vpack.c.b16 %v1863, %v1863
        %v1889 = vpack.c.b16 %v1864, %v1864
        %v1890 = vpack.c.b16 %v1865, %v1865
        %v1891 = vpack.c.b16 %v1866, %v1866
        %v1892 = vpack.c.b16 %v1867, %v1867
        %v1893 = vpack.c.b16 %v1868, %v1868
        %v1894 = vpack.c.b16 %v1869, %v1869
        %v1895 = vpack.c.b16 %v1870, %v1870
        %v1896 = vpack.c.b16 %v1871, %v1871
        %v1897 = vpack.c.b16 %v1872, %v1872
        %v1898 = vpack.c.b16 %v1873, %v1873
        %v1899 = vpack.c.b16 %v1874, %v1874
        %1925 = vst [vmem:[%s611] sm:$0xf] %v1875
        %1926 = vst [vmem:[%s611 + $0x4] sm:$0xf] %v1876
        %1927 = vst [vmem:[%s611 + $0x8] sm:$0xf] %v1877
        %1928 = vst [vmem:[%s611 + $0xc] sm:$0xf] %v1878
        %1929 = vst [vmem:[%s611 + $0x10] sm:$0xf] %v1879
        %1930 = vst [vmem:[%s611 + $0x14] sm:$0xf] %v1880
        %1931 = vst [vmem:[%s611 + $0x18] sm:$0xf] %v1881
        %1932 = vst [vmem:[%s611 + $0x1c] sm:$0xf] %v1882
        %1933 = vst [vmem:[%s611 + $0x20] sm:$0xf] %v1883
        %1934 = vst [vmem:[%s611 + $0x24] sm:$0xf] %v1884
        %1935 = vst [vmem:[%s611 + $0x28] sm:$0xf] %v1885
        %1936 = vst [vmem:[%s611 + $0x2c] sm:$0xf] %v1886
        %1937 = vst [vmem:[%s611 + $0x30] sm:$0xf] %v1887
        %1938 = vst [vmem:[%s611 + $0x34] sm:$0xf] %v1888
        %1939 = vst [vmem:[%s611 + $0x38] sm:$0xf] %v1889
        %1940 = vst [vmem:[%s611 + $0x3c] sm:$0xf] %v1890
        %1941 = vst [vmem:[%s611 + $0x40] sm:$0xf] %v1891
        %1942 = vst [vmem:[%s611 + $0x44] sm:$0xf] %v1892
        %1943 = vst [vmem:[%s611 + $0x48] sm:$0xf] %v1893
        %1944 = vst [vmem:[%s611 + $0x4c] sm:$0xf] %v1894
        %1945 = vst [vmem:[%s611 + $0x50] sm:$0xf] %v1895
        %1946 = vst [vmem:[%s611 + $0x54] sm:$0xf] %v1896
        %1947 = vst [vmem:[%s611 + $0x58] sm:$0xf] %v1897
        %1948 = vst [vmem:[%s611 + $0x5c] sm:$0xf] %v1898
        %1949 = vst [vmem:[%s611 + $0x60] sm:$0xf] %v1899
        %s1950 = smul.u32 25, %s14
        %p1951 = scmp.lt.s32.totalorder %s1950, 49
        %s1952 = scalar_select %p1951, %s1950, 49
        %s1953 = smul.addr %s1952, 4
        %s1954 = scalar_lea.vmem %s3, %s1953
        // Predicated region
        $region74: #{cnn_net_32_forward.2} parent=68 // pred_check
          %p1955 = pneg %p100
        $region75: #{cnn_net_32_forward.2} parent=68 // pred_check_branch
          %1957 = sbr.rel (%p1955) target = $region77
        $region76: #{cnn_net_32_forward.2} parent=68 // pred_region
          %s1958 = smul.u32 25, %s14
        $region77: #{cnn_net_32_forward.2} parent=68 // pred_fallthru
          _
      $region69: #{cnn_net_32_forward.2} parent=5 // pred_fallthru
        _
      %p1959 = scmp.le.s32.totalorder 2, %s9
      // Predicated region
      $region78: #{cnn_net_32_forward.2} parent=5 // pred_check
        %p1960 = pneg %p1959
      $region79: #{cnn_net_32_forward.2} parent=5 // pred_check_branch
        %1962 = sbr.rel (%p1960) target = $region81
      $region80: #{cnn_net_32_forward.2} parent=5 // pred_region
        %s1963 = ssub.s32 %s9, 2
        // Predicated region
        $region82: #{cnn_net_32_forward.2} parent=80 // pred_check
          %p1964 = pneg %p106
        $region83: #{cnn_net_32_forward.2} parent=80 // pred_check_branch
          %1966 = sbr.rel (%p1964) target = $region85
        $region84: #{cnn_net_32_forward.2} parent=80 // pred_region
          %s1967 = smul.u32 25, %s15
          %p1968 = scmp.lt.s32.totalorder %s1967, 49
          %s1969 = scalar_select %p1968, %s1967, 49
          %s1970 = smul.addr %s1969, 4
          %s1971 = scalar_lea.vmem %s3, %s1970
        $region85: #{cnn_net_32_forward.2} parent=80 // pred_fallthru
          _
      $region81: #{cnn_net_32_forward.2} parent=5 // pred_fallthru
        _
    $region6: #{cnn_net_32_forward.2} parent=1 // loop_footer
      %s13 = sadd.s32 1, %s9
    $region7: #{cnn_net_32_forward.2} parent=1 // loop_footer_branch
      %8 = sbr.rel target = $region3
    $region8: #{cnn_net_32_forward.2} parent=1 // loop_exit
      _

// kernel: cnn_net_32_forward.3
$region0: #{cnn_net_32_forward.3}
  #allocation0 [shape = 'u32[]', space=smem, size = 0x4, offset = 0x4, fixed_abs, tag = 'smem constant byte address 0x4 - core index']
  #allocation1 [shape = 'u32[144,128]{1,0:T(1,128)}', space=vmem, size = 0x12000, scoped, tag = 'internal scratch']
  %s0 = inlined_call_operand.vmem [shape: bf16[4,400,150], index: 0, kind: input, shape index: {}]
  %s1 = inlined_call_operand.vmem [shape: bf16[150,128], index: 1, kind: input, shape index: {}]
  %s2 = inlined_call_operand.vmem [shape: f32[1,128], index: 2, kind: input, shape index: {}]
  %s3 = inlined_call_operand.vmem [shape: bf16[3200,128], index: 3, kind: input, shape index: {}]
  %s4 = inlined_call_operand.vmem [shape: f32[1,128], index: 4, kind: input, shape index: {}]
  %s5 = inlined_call_operand.vmem [shape: bf16[128,128], index: 5, kind: input, shape index: {}]
  %s6 = inlined_call_operand.vmem [shape: f32[1,128], index: 6, kind: input, shape index: {}]
  %s7 = inlined_call_operand.vmem [shape: bf16[128,128], index: 7, kind: input, shape index: {}]
  %s8 = inlined_call_operand.vmem [shape: f32[1,128], index: 8, kind: input, shape index: {}]
  %s9 = inlined_call_operand.vmem [shape: f32[16,128], index: 9, kind: output, shape index: {}]
  %s10 = sld [smem:[#allocation0]]
  $region107: #{cnn_net_32_forward.3} parent=0
    _
  %s12 = ssub.s32 1, %s10
  %s13 = scalar_select 0, %s12, %s10
  $region1: #{cnn_net_32_forward.3} parent=0
    #allocation2 [shape = 'u8[819200]{0}', space=vmem, size = 0xc8000, scoped, tag = 'input window, operand 0']
    loop: start=0, step=1, limit=4
    $region2: #{cnn_net_32_forward.3} parent=1 // loop_pre_header
      _
    $region3: #{cnn_net_32_forward.3} parent=1 // loop_header
      %s15 = sphi 0, %s19
      %p16 = scmp.ge.s32.totalorder %s15, 4
      %s25 = sphi 0, %s27
      %s28 = sphi 0, %s25
      %s29 = sphi 0, %s28
      %s45 = sphi 0, %s29
      %s49 = sphi 0, %s49
      %s51 = sphi 0, %s49
      %s52 = sphi 0, %s51
      %s66 = sphi 0, %s52
      %s70 = sphi 0, %s70
      %s72 = sphi 0, %s70
      %s73 = sphi 0, %s72
      %s87 = sphi 0, %s73
      %s91 = sphi 0, %s91
      %s93 = sphi 0, %s91
      %s94 = sphi 0, %s93
      %s108 = sphi 0, %s94
      %s112 = sphi 0, %s112
      %s114 = sphi 0, %s112
      %s115 = sphi 0, %s114
      %s129 = sphi 0, %s115
      %s133 = sphi 0, %s133
      %s135 = sphi 0, %s133
      %s136 = sphi 0, %s135
      %s150 = sphi 0, %s136
      %s154 = sphi 0, %s154
      %s156 = sphi 0, %s154
      %s157 = sphi 0, %s156
      %s171 = sphi 0, %s157
      %s175 = sphi 0, %s175
      %s177 = sphi 0, %s175
      %s178 = sphi 0, %s177
      %s192 = sphi 0, %s178
      %s196 = sphi 0, %s196
      %s198 = sphi 0, %s196
      %s199 = sphi 0, %s198
      %s213 = sphi 0, %s199
      %s219 = sphi 0, %s221
      %s222 = sphi 0, %s219
      %s223 = sphi 0, %s222
      %s239 = sphi 0, %s223
    $region4: #{cnn_net_32_forward.3} parent=1 // loop_header_branch
      %18 = sbr.rel (%p16) target = $region8
    $region5: #{cnn_net_32_forward.3} parent=1 // loop_body
      %s20 = ssub.s32 %s15, 1
      %s21 = ssub.s32 %s15, 2
      %s22 = sadd.s32 %s15, 1
      %s23 = ssub.s32 %s15, %s22
      %p24 = scmp.eq.s32.totalorder %s23, 0
      %s26 = sadd.s32 %s25, 1
      %s27 = scalar_select %p24, %s25, %s26
      %p30 = pneg %p24
      %p31 = scmp.eq.s32.totalorder %s15, 1
      %p32 = por %p30, %p31
      %p33 = scmp.ne.s32.totalorder %s25, %s28
      %p34 = scmp.eq.s32.totalorder %s15, 0
      %p35 = por %p33, %p34
      %p36 = scmp.ne.s32.totalorder %s25, %s28
      %p37 = scmp.eq.s32.totalorder %s20, 1
      %p38 = por %p36, %p37
      %p39 = scmp.ne.s32.totalorder %s28, %s29
      %p40 = scmp.eq.s32.totalorder %s20, 0
      %p41 = por %p39, %p40
      %p42 = scmp.ne.s32.totalorder %s28, %s29
      %p43 = scmp.eq.s32.totalorder %s21, 1
      %p44 = por %p42, %p43
      %p46 = scmp.ne.s32.totalorder %s29, %s45
      %p47 = scmp.eq.s32.totalorder %s21, 0
      %p48 = por %p46, %p47
      %s50 = sadd.s32 %s49, 1
      %p53 = scmp.eq.s32.totalorder %s15, 1
      %p54 = scmp.ne.s32.totalorder %s49, %s51
      %p55 = scmp.eq.s32.totalorder %s15, 0
      %p56 = por %p54, %p55
      %p57 = scmp.ne.s32.totalorder %s49, %s51
      %p58 = scmp.eq.s32.totalorder %s20, 1
      %p59 = por %p57, %p58
      %p60 = scmp.ne.s32.totalorder %s51, %s52
      %p61 = scmp.eq.s32.totalorder %s20, 0
      %p62 = por %p60, %p61
      %p63 = scmp.ne.s32.totalorder %s51, %s52
      %p64 = scmp.eq.s32.totalorder %s21, 1
      %p65 = por %p63, %p64
      %p67 = scmp.ne.s32.totalorder %s52, %s66
      %p68 = scmp.eq.s32.totalorder %s21, 0
      %p69 = por %p67, %p68
      %s71 = sadd.s32 %s70, 1
      %p74 = scmp.eq.s32.totalorder %s15, 1
      %p75 = scmp.ne.s32.totalorder %s70, %s72
      %p76 = scmp.eq.s32.totalorder %s15, 0
      %p77 = por %p75, %p76
      %p78 = scmp.ne.s32.totalorder %s70, %s72
      %p79 = scmp.eq.s32.totalorder %s20, 1
      %p80 = por %p78, %p79
      %p81 = scmp.ne.s32.totalorder %s72, %s73
      %p82 = scmp.eq.s32.totalorder %s20, 0
      %p83 = por %p81, %p82
      %p84 = scmp.ne.s32.totalorder %s72, %s73
      %p85 = scmp.eq.s32.totalorder %s21, 1
      %p86 = por %p84, %p85
      %p88 = scmp.ne.s32.totalorder %s73, %s87
      %p89 = scmp.eq.s32.totalorder %s21, 0
      %p90 = por %p88, %p89
      %s92 = sadd.s32 %s91, 1
      %p95 = scmp.eq.s32.totalorder %s15, 1
      %p96 = scmp.ne.s32.totalorder %s91, %s93
      %p97 = scmp.eq.s32.totalorder %s15, 0
      %p98 = por %p96, %p97
      %p99 = scmp.ne.s32.totalorder %s91, %s93
      %p100 = scmp.eq.s32.totalorder %s20, 1
      %p101 = por %p99, %p100
      %p102 = scmp.ne.s32.totalorder %s93, %s94
      %p103 = scmp.eq.s32.totalorder %s20, 0
      %p104 = por %p102, %p103
      %p105 = scmp.ne.s32.totalorder %s93, %s94
      %p106 = scmp.eq.s32.totalorder %s21, 1
      %p107 = por %p105, %p106
      %p109 = scmp.ne.s32.totalorder %s94, %s108
      %p110 = scmp.eq.s32.totalorder %s21, 0
      %p111 = por %p109, %p110
      %s113 = sadd.s32 %s112, 1
      %p116 = scmp.eq.s32.totalorder %s15, 1
      %p117 = scmp.ne.s32.totalorder %s112, %s114
      %p118 = scmp.eq.s32.totalorder %s15, 0
      %p119 = por %p117, %p118
      %p120 = scmp.ne.s32.totalorder %s112, %s114
      %p121 = scmp.eq.s32.totalorder %s20, 1
      %p122 = por %p120, %p121
      %p123 = scmp.ne.s32.totalorder %s114, %s115
      %p124 = scmp.eq.s32.totalorder %s20, 0
      %p125 = por %p123, %p124
      %p126 = scmp.ne.s32.totalorder %s114, %s115
      %p127 = scmp.eq.s32.totalorder %s21, 1
      %p128 = por %p126, %p127
      %p130 = scmp.ne.s32.totalorder %s115, %s129
      %p131 = scmp.eq.s32.totalorder %s21, 0
      %p132 = por %p130, %p131
      %s134 = sadd.s32 %s133, 1
      %p137 = scmp.eq.s32.totalorder %s15, 1
      %p138 = scmp.ne.s32.totalorder %s133, %s135
      %p139 = scmp.eq.s32.totalorder %s15, 0
      %p140 = por %p138, %p139
      %p141 = scmp.ne.s32.totalorder %s133, %s135
      %p142 = scmp.eq.s32.totalorder %s20, 1
      %p143 = por %p141, %p142
      %p144 = scmp.ne.s32.totalorder %s135, %s136
      %p145 = scmp.eq.s32.totalorder %s20, 0
      %p146 = por %p144, %p145
      %p147 = scmp.ne.s32.totalorder %s135, %s136
      %p148 = scmp.eq.s32.totalorder %s21, 1
      %p149 = por %p147, %p148
      %p151 = scmp.ne.s32.totalorder %s136, %s150
      %p152 = scmp.eq.s32.totalorder %s21, 0
      %p153 = por %p151, %p152
      %s155 = sadd.s32 %s154, 1
      %p158 = scmp.eq.s32.totalorder %s15, 1
      %p159 = scmp.ne.s32.totalorder %s154, %s156
      %p160 = scmp.eq.s32.totalorder %s15, 0
      %p161 = por %p159, %p160
      %p162 = scmp.ne.s32.totalorder %s154, %s156
      %p163 = scmp.eq.s32.totalorder %s20, 1
      %p164 = por %p162, %p163
      %p165 = scmp.ne.s32.totalorder %s156, %s157
      %p166 = scmp.eq.s32.totalorder %s20, 0
      %p167 = por %p165, %p166
      %p168 = scmp.ne.s32.totalorder %s156, %s157
      %p169 = scmp.eq.s32.totalorder %s21, 1
      %p170 = por %p168, %p169
      %p172 = scmp.ne.s32.totalorder %s157, %s171
      %p173 = scmp.eq.s32.totalorder %s21, 0
      %p174 = por %p172, %p173
      %s176 = sadd.s32 %s175, 1
      %p179 = scmp.eq.s32.totalorder %s15, 1
      %p180 = scmp.ne.s32.totalorder %s175, %s177
      %p181 = scmp.eq.s32.totalorder %s15, 0
      %p182 = por %p180, %p181
      %p183 = scmp.ne.s32.totalorder %s175, %s177
      %p184 = scmp.eq.s32.totalorder %s20, 1
      %p185 = por %p183, %p184
      %p186 = scmp.ne.s32.totalorder %s177, %s178
      %p187 = scmp.eq.s32.totalorder %s20, 0
      %p188 = por %p186, %p187
      %p189 = scmp.ne.s32.totalorder %s177, %s178
      %p190 = scmp.eq.s32.totalorder %s21, 1
      %p191 = por %p189, %p190
      %p193 = scmp.ne.s32.totalorder %s178, %s192
      %p194 = scmp.eq.s32.totalorder %s21, 0
      %p195 = por %p193, %p194
      %s197 = sadd.s32 %s196, 1
      %p200 = scmp.eq.s32.totalorder %s15, 1
      %p201 = scmp.ne.s32.totalorder %s196, %s198
      %p202 = scmp.eq.s32.totalorder %s15, 0
      %p203 = por %p201, %p202
      %p204 = scmp.ne.s32.totalorder %s196, %s198
      %p205 = scmp.eq.s32.totalorder %s20, 1
      %p206 = por %p204, %p205
      %p207 = scmp.ne.s32.totalorder %s198, %s199
      %p208 = scmp.eq.s32.totalorder %s20, 0
      %p209 = por %p207, %p208
      %p210 = scmp.ne.s32.totalorder %s198, %s199
      %p211 = scmp.eq.s32.totalorder %s21, 1
      %p212 = por %p210, %p211
      %p214 = scmp.ne.s32.totalorder %s199, %s213
      %p215 = scmp.eq.s32.totalorder %s21, 0
      %p216 = por %p214, %p215
      %s217 = ssub.s32 %s15, %s22
      %p218 = scmp.eq.s32.totalorder %s217, 0
      %s220 = sadd.s32 %s219, 1
      %s221 = scalar_select %p218, %s219, %s220
      %p224 = pneg %p218
      %p225 = scmp.eq.s32.totalorder %s15, 1
      %p226 = por %p224, %p225
      %p227 = scmp.ne.s32.totalorder %s219, %s222
      %p228 = scmp.eq.s32.totalorder %s15, 0
      %p229 = por %p227, %p228
      %p230 = scmp.ne.s32.totalorder %s219, %s222
      %p231 = scmp.eq.s32.totalorder %s20, 1
      %p232 = por %p230, %p231
      %p233 = scmp.ne.s32.totalorder %s222, %s223
      %p234 = scmp.eq.s32.totalorder %s20, 0
      %p235 = por %p233, %p234
      %p236 = scmp.ne.s32.totalorder %s222, %s223
      %p237 = scmp.eq.s32.totalorder %s21, 1
      %p238 = por %p236, %p237
      %p240 = scmp.ne.s32.totalorder %s223, %s239
      %p241 = scmp.eq.s32.totalorder %s21, 0
      %p242 = por %p240, %p241
      %p243 = scmp.le.s32.totalorder 1, %s15
      %p244 = scmp.lt.s32.totalorder %s15, 3
      %p245 = pnand %p243, %p244
      %p246 = pneg %p245
      // Predicated region
      $region9: #{cnn_net_32_forward.3} parent=5 // pred_check
        _
      $region10: #{cnn_net_32_forward.3} parent=5 // pred_check_branch
        %248 = sbr.rel (%p245) target = $region12
      $region11: #{cnn_net_32_forward.3} parent=5 // pred_region
        %s249 = ssub.s32 %s15, 1
        // Predicated region
        $region13: #{cnn_net_32_forward.3} parent=11 // pred_check
          %p250 = pneg %p62
        $region14: #{cnn_net_32_forward.3} parent=11 // pred_check_branch
          %252 = sbr.rel (%p250) target = $region16
        $region15: #{cnn_net_32_forward.3} parent=11 // pred_region
          _
        $region16: #{cnn_net_32_forward.3} parent=11 // pred_fallthru
          _
        // Predicated region
        $region17: #{cnn_net_32_forward.3} parent=11 // pred_check
          %p253 = pneg %p83
        $region18: #{cnn_net_32_forward.3} parent=11 // pred_check_branch
          %255 = sbr.rel (%p253) target = $region20
        $region19: #{cnn_net_32_forward.3} parent=11 // pred_region
          _
        $region20: #{cnn_net_32_forward.3} parent=11 // pred_fallthru
          _
        // Predicated region
        $region21: #{cnn_net_32_forward.3} parent=11 // pred_check
          %p256 = pneg %p104
        $region22: #{cnn_net_32_forward.3} parent=11 // pred_check_branch
          %258 = sbr.rel (%p256) target = $region24
        $region23: #{cnn_net_32_forward.3} parent=11 // pred_region
          _
        $region24: #{cnn_net_32_forward.3} parent=11 // pred_fallthru
          _
        // Predicated region
        $region25: #{cnn_net_32_forward.3} parent=11 // pred_check
          %p259 = pneg %p125
        $region26: #{cnn_net_32_forward.3} parent=11 // pred_check_branch
          %261 = sbr.rel (%p259) target = $region28
        $region27: #{cnn_net_32_forward.3} parent=11 // pred_region
          _
        $region28: #{cnn_net_32_forward.3} parent=11 // pred_fallthru
          _
        // Predicated region
        $region29: #{cnn_net_32_forward.3} parent=11 // pred_check
          %p262 = pneg %p146
        $region30: #{cnn_net_32_forward.3} parent=11 // pred_check_branch
          %264 = sbr.rel (%p262) target = $region32
        $region31: #{cnn_net_32_forward.3} parent=11 // pred_region
          _
        $region32: #{cnn_net_32_forward.3} parent=11 // pred_fallthru
          _
        // Predicated region
        $region33: #{cnn_net_32_forward.3} parent=11 // pred_check
          %p265 = pneg %p167
        $region34: #{cnn_net_32_forward.3} parent=11 // pred_check_branch
          %267 = sbr.rel (%p265) target = $region36
        $region35: #{cnn_net_32_forward.3} parent=11 // pred_region
          _
        $region36: #{cnn_net_32_forward.3} parent=11 // pred_fallthru
          _
        // Predicated region
        $region37: #{cnn_net_32_forward.3} parent=11 // pred_check
          %p268 = pneg %p188
        $region38: #{cnn_net_32_forward.3} parent=11 // pred_check_branch
          %270 = sbr.rel (%p268) target = $region40
        $region39: #{cnn_net_32_forward.3} parent=11 // pred_region
          _
        $region40: #{cnn_net_32_forward.3} parent=11 // pred_fallthru
          _
        // Predicated region
        $region41: #{cnn_net_32_forward.3} parent=11 // pred_check
          %p271 = pneg %p209
        $region42: #{cnn_net_32_forward.3} parent=11 // pred_check_branch
          %273 = sbr.rel (%p271) target = $region44
        $region43: #{cnn_net_32_forward.3} parent=11 // pred_region
          _
        $region44: #{cnn_net_32_forward.3} parent=11 // pred_fallthru
          _
      $region12: #{cnn_net_32_forward.3} parent=5 // pred_fallthru
        _
      %p274 = scmp.lt.s32.totalorder %s15, 2
      // Predicated region
      $region45: #{cnn_net_32_forward.3} parent=5 // pred_check
        %p275 = pneg %p274
      $region46: #{cnn_net_32_forward.3} parent=5 // pred_check_branch
        %277 = sbr.rel (%p275) target = $region48
      $region47: #{cnn_net_32_forward.3} parent=5 // pred_region
        // Predicated region
        $region49: #{cnn_net_32_forward.3} parent=47 // pred_check
          %p278 = pneg %p35
        $region50: #{cnn_net_32_forward.3} parent=47 // pred_check_branch
          %280 = sbr.rel (%p278) target = $region52
        $region51: #{cnn_net_32_forward.3} parent=47 // pred_region
          %s281 = sand.u32 %s25, 1
          %s282 = sand.u32 %s25, 1
          %s283 = smul.addr %s282, 800
          %s284 = scalar_lea.vmem [#allocation2], %s283
          %s285 = smul.u32 25, %s15
          %s286 = smul.addr %s285, 2
          %s287 = smul.addr %s286, 4
          %s288 = scalar_lea.vmem %s0, %s287
          // Predicated region
          $region53: #{cnn_net_32_forward.3} parent=51 // pred_check
            _
          $region54: #{cnn_net_32_forward.3} parent=51 // pred_check_branch
            %290 = sbr.rel (0) target = $region56
          $region55: #{cnn_net_32_forward.3} parent=51 // pred_region
            // Predicated region
            $region57: #{cnn_net_32_forward.3} parent=55 // pred_check
              _
            $region58: #{cnn_net_32_forward.3} parent=55 // pred_check_branch
              %292 = sbr.rel (0) target = $region60
            $region59: #{cnn_net_32_forward.3} parent=55 // pred_region
              // Predicated region
              $region72: #{cnn_net_32_forward.3} parent=59 // pred_check
                _
              $region73: #{cnn_net_32_forward.3} parent=59 // pred_check_branch
                %506 = sbr.rel (0) target = $region75
              $region74: #{cnn_net_32_forward.3} parent=59 // pred_region
                loop: start=0, step=1, limit=1
                $region76: #{cnn_net_32_forward.3} parent=74 // loop_pre_header
                  _
                $region77: #{cnn_net_32_forward.3} parent=74 // loop_header
                  %s508 = sphi 0, %s512
                  %p509 = scmp.ge.s32.totalorder %s508, 1
                  %s513 = sphi %s288, %s288
                  %s514 = sphi %s284, %s284
                $region78: #{cnn_net_32_forward.3} parent=74 // loop_header_branch
                  %511 = sbr.rel (%p509) target = $region82
                $region79: #{cnn_net_32_forward.3} parent=74 // loop_body
                  %v515 = vld [vmem:[%s513] sm:$0xff]
                  %516 = vst [vmem:[%s514] sm:$0xff] %v515
                  %v517 = vld [vmem:[%s513 + $0x8] sm:$0xff]
                  %518 = vst [vmem:[%s514 + $0x8] sm:$0xff] %v517
                  %v519 = vld [vmem:[%s513 + $0x10] sm:$0xff]
                  %520 = vst [vmem:[%s514 + $0x10] sm:$0xff] %v519
                  %v521 = vld [vmem:[%s513 + $0x18] sm:$0xff]
                  %522 = vst [vmem:[%s514 + $0x18] sm:$0xff] %v521
                  %v523 = vld [vmem:[%s513 + $0x20] sm:$0xff]
                  %524 = vst [vmem:[%s514 + $0x20] sm:$0xff] %v523
                  %v525 = vld [vmem:[%s513 + $0x28] sm:$0xff]
                  %526 = vst [vmem:[%s514 + $0x28] sm:$0xff] %v525
                  %v527 = vld [vmem:[%s513 + $0x30] sm:$0xff]
                  %528 = vst [vmem:[%s514 + $0x30] sm:$0xff] %v527
                  %v529 = vld [vmem:[%s513 + $0x38] sm:$0xff]
                  %530 = vst [vmem:[%s514 + $0x38] sm:$0xff] %v529
                  %v531 = vld [vmem:[%s513 + $0x40] sm:$0xff]
                  %532 = vst [vmem:[%s514 + $0x40] sm:$0xff] %v531
                  %v533 = vld [vmem:[%s513 + $0x48] sm:$0xff]
                  %534 = vst [vmem:[%s514 + $0x48] sm:$0xff] %v533
                  %v535 = vld [vmem:[%s513 + $0x50] sm:$0xff]
                  %536 = vst [vmem:[%s514 + $0x50] sm:$0xff] %v535
                  %v537 = vld [vmem:[%s513 + $0x58] sm:$0xff]
                  %538 = vst [vmem:[%s514 + $0x58] sm:$0xff] %v537
                  %v539 = vld [vmem:[%s513 + $0x60] sm:$0xff]
                  %540 = vst [vmem:[%s514 + $0x60] sm:$0xff] %v539
                  %v541 = vld [vmem:[%s513 + $0x68] sm:$0xff]
                  %542 = vst [vmem:[%s514 + $0x68] sm:$0xff] %v541
                  %v543 = vld [vmem:[%s513 + $0x70] sm:$0xff]
                  %544 = vst [vmem:[%s514 + $0x70] sm:$0xff] %v543
                  %v545 = vld [vmem:[%s513 + $0x78] sm:$0xff]
                  %546 = vst [vmem:[%s514 + $0x78] sm:$0xff] %v545
                  %v547 = vld [vmem:[%s513 + $0x80] sm:$0xff]
                  %548 = vst [vmem:[%s514 + $0x80] sm:$0xff] %v547
                  %v549 = vld [vmem:[%s513 + $0x88] sm:$0xff]
                  %550 = vst [vmem:[%s514 + $0x88] sm:$0xff] %v549
                  %v551 = vld [vmem:[%s513 + $0x90] sm:$0xff]
                  %552 = vst [vmem:[%s514 + $0x90] sm:$0xff] %v551
                  %v553 = vld [vmem:[%s513 + $0x98] sm:$0xff]
                  %554 = vst [vmem:[%s514 + $0x98] sm:$0xff] %v553
                  %v555 = vld [vmem:[%s513 + $0xa0] sm:$0xff]
                  %556 = vst [vmem:[%s514 + $0xa0] sm:$0xff] %v555
                  %v557 = vld [vmem:[%s513 + $0xa8] sm:$0xff]
                  %558 = vst [vmem:[%s514 + $0xa8] sm:$0xff] %v557
                  %v559 = vld [vmem:[%s513 + $0xb0] sm:$0xff]
                  %560 = vst [vmem:[%s514 + $0xb0] sm:$0xff] %v559
                  %v561 = vld [vmem:[%s513 + $0xb8] sm:$0xff]
                  %562 = vst [vmem:[%s514 + $0xb8] sm:$0xff] %v561
                  %v563 = vld [vmem:[%s513 + $0xc0] sm:$0xff]
                  %564 = vst [vmem:[%s514 + $0xc0] sm:$0xff] %v563
                  %v565 = vld [vmem:[%s513 + $0x190] sm:$0xff]
                  %566 = vst [vmem:[%s514 + $0xc8] sm:$0xff] %v565
                  %v567 = vld [vmem:[%s513 + $0x198] sm:$0xff]
                  %568 = vst [vmem:[%s514 + $0xd0] sm:$0xff] %v567
                  %v569 = vld [vmem:[%s513 + $0x1a0] sm:$0xff]
                  %570 = vst [vmem:[%s514 + $0xd8] sm:$0xff] %v569
                  %v571 = vld [vmem:[%s513 + $0x1a8] sm:$0xff]
                  %572 = vst [vmem:[%s514 + $0xe0] sm:$0xff] %v571
                  %v573 = vld [vmem:[%s513 + $0x1b0] sm:$0xff]
                  %574 = vst [vmem:[%s514 + $0xe8] sm:$0xff] %v573
                  %v575 = vld [vmem:[%s513 + $0x1b8] sm:$0xff]
                  %576 = vst [vmem:[%s514 + $0xf0] sm:$0xff] %v575
                  %v577 = vld [vmem:[%s513 + $0x1c0] sm:$0xff]
                  %578 = vst [vmem:[%s514 + $0xf8] sm:$0xff] %v577
                  %v579 = vld [vmem:[%s513 + $0x1c8] sm:$0xff]
                  %580 = vst [vmem:[%s514 + $0x100] sm:$0xff] %v579
                  %v581 = vld [vmem:[%s513 + $0x1d0] sm:$0xff]
                  %582 = vst [vmem:[%s514 + $0x108] sm:$0xff] %v581
                  %v583 = vld [vmem:[%s513 + $0x1d8] sm:$0xff]
                  %584 = vst [vmem:[%s514 + $0x110] sm:$0xff] %v583
                  %v585 = vld [vmem:[%s513 + $0x1e0] sm:$0xff]
                  %586 = vst [vmem:[%s514 + $0x118] sm:$0xff] %v585
                  %v587 = vld [vmem:[%s513 + $0x1e8] sm:$0xff]
                  %588 = vst [vmem:[%s514 + $0x120] sm:$0xff] %v587
                  %v589 = vld [vmem:[%s513 + $0x1f0] sm:$0xff]
                  %590 = vst [vmem:[%s514 + $0x128] sm:$0xff] %v589
                  %v591 = vld [vmem:[%s513 + $0x1f8] sm:$0xff]
                  %592 = vst [vmem:[%s514 + $0x130] sm:$0xff] %v591
                  %v593 = vld [vmem:[%s513 + $0x200] sm:$0xff]
                  %594 = vst [vmem:[%s514 + $0x138] sm:$0xff] %v593
                  %v595 = vld [vmem:[%s513 + $0x208] sm:$0xff]
                  %596 = vst [vmem:[%s514 + $0x140] sm:$0xff] %v595
                  %v597 = vld [vmem:[%s513 + $0x210] sm:$0xff]
                  %598 = vst [vmem:[%s514 + $0x148] sm:$0xff] %v597
                  %v599 = vld [vmem:[%s513 + $0x218] sm:$0xff]
                  %600 = vst [vmem:[%s514 + $0x150] sm:$0xff] %v599
                  %v601 = vld [vmem:[%s513 + $0x220] sm:$0xff]
                  %602 = vst [vmem:[%s514 + $0x158] sm:$0xff] %v601
                  %v603 = vld [vmem:[%s513 + $0x228] sm:$0xff]
                  %604 = vst [vmem:[%s514 + $0x160] sm:$0xff] %v603
                  %v605 = vld [vmem:[%s513 + $0x230] sm:$0xff]
                  %606 = vst [vmem:[%s514 + $0x168] sm:$0xff] %v605
                  %v607 = vld [vmem:[%s513 + $0x238] sm:$0xff]
                  %608 = vst [vmem:[%s514 + $0x170] sm:$0xff] %v607
                  %v609 = vld [vmem:[%s513 + $0x240] sm:$0xff]
                  %610 = vst [vmem:[%s514 + $0x178] sm:$0xff] %v609
                  %v611 = vld [vmem:[%s513 + $0x248] sm:$0xff]
                  %612 = vst [vmem:[%s514 + $0x180] sm:$0xff] %v611
                  %v613 = vld [vmem:[%s513 + $0x250] sm:$0xff]
                  %614 = vst [vmem:[%s514 + $0x188] sm:$0xff] %v613
                  %v615 = vld [vmem:[%s513 + $0x320] sm:$0xff]
                  %616 = vst [vmem:[%s514 + $0x190] sm:$0xff] %v615
                  %v617 = vld [vmem:[%s513 + $0x328] sm:$0xff]
                  %618 = vst [vmem:[%s514 + $0x198] sm:$0xff] %v617
                  %v619 = vld [vmem:[%s513 + $0x330] sm:$0xff]
                  %620 = vst [vmem:[%s514 + $0x1a0] sm:$0xff] %v619
                  %v621 = vld [vmem:[%s513 + $0x338] sm:$0xff]
                  %622 = vst [vmem:[%s514 + $0x1a8] sm:$0xff] %v621
                  %v623 = vld [vmem:[%s513 + $0x340] sm:$0xff]
                  %624 = vst [vmem:[%s514 + $0x1b0] sm:$0xff] %v623
                  %v625 = vld [vmem:[%s513 + $0x348] sm:$0xff]
                  %626 = vst [vmem:[%s514 + $0x1b8] sm:$0xff] %v625
                  %v627 = vld [vmem:[%s513 + $0x350] sm:$0xff]
                  %628 = vst [vmem:[%s514 + $0x1c0] sm:$0xff] %v627
                  %v629 = vld [vmem:[%s513 + $0x358] sm:$0xff]
                  %630 = vst [vmem:[%s514 + $0x1c8] sm:$0xff] %v629
                  %v631 = vld [vmem:[%s513 + $0x360] sm:$0xff]
                  %632 = vst [vmem:[%s514 + $0x1d0] sm:$0xff] %v631
                  %v633 = vld [vmem:[%s513 + $0x368] sm:$0xff]
                  %634 = vst [vmem:[%s514 + $0x1d8] sm:$0xff] %v633
                  %v635 = vld [vmem:[%s513 + $0x370] sm:$0xff]
                  %636 = vst [vmem:[%s514 + $0x1e0] sm:$0xff] %v635
                  %v637 = vld [vmem:[%s513 + $0x378] sm:$0xff]
                  %638 = vst [vmem:[%s514 + $0x1e8] sm:$0xff] %v637
                  %v639 = vld [vmem:[%s513 + $0x380] sm:$0xff]
                  %640 = vst [vmem:[%s514 + $0x1f0] sm:$0xff] %v639
                  %v641 = vld [vmem:[%s513 + $0x388] sm:$0xff]
                  %642 = vst [vmem:[%s514 + $0x1f8] sm:$0xff] %v641
                  %v643 = vld [vmem:[%s513 + $0x390] sm:$0xff]
                  %644 = vst [vmem:[%s514 + $0x200] sm:$0xff] %v643
                  %v645 = vld [vmem:[%s513 + $0x398] sm:$0xff]
                  %646 = vst [vmem:[%s514 + $0x208] sm:$0xff] %v645
                  %v647 = vld [vmem:[%s513 + $0x3a0] sm:$0xff]
                  %648 = vst [vmem:[%s514 + $0x210] sm:$0xff] %v647
                  %v649 = vld [vmem:[%s513 + $0x3a8] sm:$0xff]
                  %650 = vst [vmem:[%s514 + $0x218] sm:$0xff] %v649
                  %v651 = vld [vmem:[%s513 + $0x3b0] sm:$0xff]
                  %652 = vst [vmem:[%s514 + $0x220] sm:$0xff] %v651
                  %v653 = vld [vmem:[%s513 + $0x3b8] sm:$0xff]
                  %654 = vst [vmem:[%s514 + $0x228] sm:$0xff] %v653
                  %v655 = vld [vmem:[%s513 + $0x3c0] sm:$0xff]
                  %656 = vst [vmem:[%s514 + $0x230] sm:$0xff] %v655
                  %v657 = vld [vmem:[%s513 + $0x3c8] sm:$0xff]
                  %658 = vst [vmem:[%s514 + $0x238] sm:$0xff] %v657
                  %v659 = vld [vmem:[%s513 + $0x3d0] sm:$0xff]
                  %660 = vst [vmem:[%s514 + $0x240] sm:$0xff] %v659
                  %v661 = vld [vmem:[%s513 + $0x3d8] sm:$0xff]
                  %662 = vst [vmem:[%s514 + $0x248] sm:$0xff] %v661
                  %v663 = vld [vmem:[%s513 + $0x3e0] sm:$0xff]
                  %664 = vst [vmem:[%s514 + $0x250] sm:$0xff] %v663
                  %v665 = vld [vmem:[%s513 + $0x4b0] sm:$0xff]
                  %666 = vst [vmem:[%s514 + $0x258] sm:$0xff] %v665
                  %v667 = vld [vmem:[%s513 + $0x4b8] sm:$0xff]
                  %668 = vst [vmem:[%s514 + $0x260] sm:$0xff] %v667
                  %v669 = vld [vmem:[%s513 + $0x4c0] sm:$0xff]
                  %670 = vst [vmem:[%s514 + $0x268] sm:$0xff] %v669
                  %v671 = vld [vmem:[%s513 + $0x4c8] sm:$0xff]
                  %672 = vst [vmem:[%s514 + $0x270] sm:$0xff] %v671
                  %v673 = vld [vmem:[%s513 + $0x4d0] sm:$0xff]
                  %674 = vst [vmem:[%s514 + $0x278] sm:$0xff] %v673
                  %v675 = vld [vmem:[%s513 + $0x4d8] sm:$0xff]
                  %676 = vst [vmem:[%s514 + $0x280] sm:$0xff] %v675
                  %v677 = vld [vmem:[%s513 + $0x4e0] sm:$0xff]
                  %678 = vst [vmem:[%s514 + $0x288] sm:$0xff] %v677
                  %v679 = vld [vmem:[%s513 + $0x4e8] sm:$0xff]
                  %680 = vst [vmem:[%s514 + $0x290] sm:$0xff] %v679
                  %v681 = vld [vmem:[%s513 + $0x4f0] sm:$0xff]
                  %682 = vst [vmem:[%s514 + $0x298] sm:$0xff] %v681
                  %v683 = vld [vmem:[%s513 + $0x4f8] sm:$0xff]
                  %684 = vst [vmem:[%s514 + $0x2a0] sm:$0xff] %v683
                  %v685 = vld [vmem:[%s513 + $0x500] sm:$0xff]
                  %686 = vst [vmem:[%s514 + $0x2a8] sm:$0xff] %v685
                  %v687 = vld [vmem:[%s513 + $0x508] sm:$0xff]
                  %688 = vst [vmem:[%s514 + $0x2b0] sm:$0xff] %v687
                  %v689 = vld [vmem:[%s513 + $0x510] sm:$0xff]
                  %690 = vst [vmem:[%s514 + $0x2b8] sm:$0xff] %v689
                  %v691 = vld [vmem:[%s513 + $0x518] sm:$0xff]
                  %692 = vst [vmem:[%s514 + $0x2c0] sm:$0xff] %v691
                  %v693 = vld [vmem:[%s513 + $0x520] sm:$0xff]
                  %694 = vst [vmem:[%s514 + $0x2c8] sm:$0xff] %v693
                  %v695 = vld [vmem:[%s513 + $0x528] sm:$0xff]
                  %696 = vst [vmem:[%s514 + $0x2d0] sm:$0xff] %v695
                  %v697 = vld [vmem:[%s513 + $0x530] sm:$0xff]
                  %698 = vst [vmem:[%s514 + $0x2d8] sm:$0xff] %v697
                  %v699 = vld [vmem:[%s513 + $0x538] sm:$0xff]
                  %700 = vst [vmem:[%s514 + $0x2e0] sm:$0xff] %v699
                  %v701 = vld [vmem:[%s513 + $0x540] sm:$0xff]
                  %702 = vst [vmem:[%s514 + $0x2e8] sm:$0xff] %v701
                  %v703 = vld [vmem:[%s513 + $0x548] sm:$0xff]
                  %704 = vst [vmem:[%s514 + $0x2f0] sm:$0xff] %v703
                  %v705 = vld [vmem:[%s513 + $0x550] sm:$0xff]
                  %706 = vst [vmem:[%s514 + $0x2f8] sm:$0xff] %v705
                  %v707 = vld [vmem:[%s513 + $0x558] sm:$0xff]
                  %708 = vst [vmem:[%s514 + $0x300] sm:$0xff] %v707
                  %v709 = vld [vmem:[%s513 + $0x560] sm:$0xff]
                  %710 = vst [vmem:[%s514 + $0x308] sm:$0xff] %v709
                  %v711 = vld [vmem:[%s513 + $0x568] sm:$0xff]
                  %712 = vst [vmem:[%s514 + $0x310] sm:$0xff] %v711
                  %v713 = vld [vmem:[%s513 + $0x570] sm:$0xff]
                  %714 = vst [vmem:[%s514 + $0x318] sm:$0xff] %v713
                $region80: #{cnn_net_32_forward.3} parent=74 // loop_footer
                  %s512 = sadd.s32 1, %s508
                $region81: #{cnn_net_32_forward.3} parent=74 // loop_footer_branch
                  %507 = sbr.rel target = $region77
                $region82: #{cnn_net_32_forward.3} parent=74 // loop_exit
                  _
              $region75: #{cnn_net_32_forward.3} parent=59 // pred_fallthru
                _
              // Predicated region
              $region83: #{cnn_net_32_forward.3} parent=59 // pred_check
                _
              $region84: #{cnn_net_32_forward.3} parent=59 // pred_check_branch
                %716 = sbr.rel target = $region86
              $region85: #{cnn_net_32_forward.3} parent=59 // pred_region
                _
              $region86: #{cnn_net_32_forward.3} parent=59 // pred_fallthru
                _
            $region60: #{cnn_net_32_forward.3} parent=55 // pred_fallthru
              _
            // Predicated region
            $region61: #{cnn_net_32_forward.3} parent=55 // pred_check
              _
            $region62: #{cnn_net_32_forward.3} parent=55 // pred_check_branch
              %294 = sbr.rel target = $region64
            $region63: #{cnn_net_32_forward.3} parent=55 // pred_region
              %s296 = ssub.s32 256, 1
              loop: start=0, step=1, limit=1
              $region65: #{cnn_net_32_forward.3} parent=63 // loop_pre_header
                _
              $region66: #{cnn_net_32_forward.3} parent=63 // loop_header
                %s298 = sphi 0, %s302
                %p299 = scmp.ge.s32.totalorder %s298, 1
                %s303 = sphi %s288, %s288
                %s304 = sphi %s284, %s284
              $region67: #{cnn_net_32_forward.3} parent=63 // loop_header_branch
                %301 = sbr.rel (%p299) target = $region71
              $region68: #{cnn_net_32_forward.3} parent=63 // loop_body
                %v305 = vld [vmem:[%s303] sm:%s296]
                %306 = vst [vmem:[%s304] sm:%s296] %v305
                %v307 = vld [vmem:[%s303 + $0x8] sm:%s296]
                %308 = vst [vmem:[%s304 + $0x8] sm:%s296] %v307
                %v309 = vld [vmem:[%s303 + $0x10] sm:%s296]
                %310 = vst [vmem:[%s304 + $0x10] sm:%s296] %v309
                %v311 = vld [vmem:[%s303 + $0x18] sm:%s296]
                %312 = vst [vmem:[%s304 + $0x18] sm:%s296] %v311
                %v313 = vld [vmem:[%s303 + $0x20] sm:%s296]
                %314 = vst [vmem:[%s304 + $0x20] sm:%s296] %v313
                %v315 = vld [vmem:[%s303 + $0x28] sm:%s296]
                %316 = vst [vmem:[%s304 + $0x28] sm:%s296] %v315
                %v317 = vld [vmem:[%s303 + $0x30] sm:%s296]
                %318 = vst [vmem:[%s304 + $0x30] sm:%s296] %v317
                %v319 = vld [vmem:[%s303 + $0x38] sm:%s296]
                %320 = vst [vmem:[%s304 + $0x38] sm:%s296] %v319
                %v321 = vld [vmem:[%s303 + $0x40] sm:%s296]
                %322 = vst [vmem:[%s304 + $0x40] sm:%s296] %v321
                %v323 = vld [vmem:[%s303 + $0x48] sm:%s296]
                %324 = vst [vmem:[%s304 + $0x48] sm:%s296] %v323
                %v325 = vld [vmem:[%s303 + $0x50] sm:%s296]
                %326 = vst [vmem:[%s304 + $0x50] sm:%s296] %v325
                %v327 = vld [vmem:[%s303 + $0x58] sm:%s296]
                %328 = vst [vmem:[%s304 + $0x58] sm:%s296] %v327
                %v329 = vld [vmem:[%s303 + $0x60] sm:%s296]
                %330 = vst [vmem:[%s304 + $0x60] sm:%s296] %v329
                %v331 = vld [vmem:[%s303 + $0x68] sm:%s296]
                %332 = vst [vmem:[%s304 + $0x68] sm:%s296] %v331
                %v333 = vld [vmem:[%s303 + $0x70] sm:%s296]
                %334 = vst [vmem:[%s304 + $0x70] sm:%s296] %v333
                %v335 = vld [vmem:[%s303 + $0x78] sm:%s296]
                %336 = vst [vmem:[%s304 + $0x78] sm:%s296] %v335
                %v337 = vld [vmem:[%s303 + $0x80] sm:%s296]
                %338 = vst [vmem:[%s304 + $0x80] sm:%s296] %v337
                %v339 = vld [vmem:[%s303 + $0x88] sm:%s296]
                %340 = vst [vmem:[%s304 + $0x88] sm:%s296] %v339
                %v341 = vld [vmem:[%s303 + $0x90] sm:%s296]
                %342 = vst [vmem:[%s304 + $0x90] sm:%s296] %v341
                %v343 = vld [vmem:[%s303 + $0x98] sm:%s296]
                %344 = vst [vmem:[%s304 + $0x98] sm:%s296] %v343
                %v345 = vld [vmem:[%s303 + $0xa0] sm:%s296]
                %346 = vst [vmem:[%s304 + $0xa0] sm:%s296] %v345
                %v347 = vld [vmem:[%s303 + $0xa8] sm:%s296]
                %348 = vst [vmem:[%s304 + $0xa8] sm:%s296] %v347
                %v349 = vld [vmem:[%s303 + $0xb0] sm:%s296]
                %350 = vst [vmem:[%s304 + $0xb0] sm:%s296] %v349
                %v351 = vld [vmem:[%s303 + $0xb8] sm:%s296]
                %352 = vst [vmem:[%s304 + $0xb8] sm:%s296] %v351
                %v353 = vld [vmem:[%s303 + $0xc0] sm:%s296]
                %354 = vst [vmem:[%s304 + $0xc0] sm:%s296] %v353
                %v355 = vld [vmem:[%s303 + $0x190] sm:%s296]
                %356 = vst [vmem:[%s304 + $0xc8] sm:%s296] %v355
                %v357 = vld [vmem:[%s303 + $0x198] sm:%s296]
                %358 = vst [vmem:[%s304 + $0xd0] sm:%s296] %v357
                %v359 = vld [vmem:[%s303 + $0x1a0] sm:%s296]
                %360 = vst [vmem:[%s304 + $0xd8] sm:%s296] %v359
                %v361 = vld [vmem:[%s303 + $0x1a8] sm:%s296]
                %362 = vst [vmem:[%s304 + $0xe0] sm:%s296] %v361
                %v363 = vld [vmem:[%s303 + $0x1b0] sm:%s296]
                %364 = vst [vmem:[%s304 + $0xe8] sm:%s296] %v363
                %v365 = vld [vmem:[%s303 + $0x1b8] sm:%s296]
                %366 = vst [vmem:[%s304 + $0xf0] sm:%s296] %v365
                %v367 = vld [vmem:[%s303 + $0x1c0] sm:%s296]
                %368 = vst [vmem:[%s304 + $0xf8] sm:%s296] %v367
                %v369 = vld [vmem:[%s303 + $0x1c8] sm:%s296]
                %370 = vst [vmem:[%s304 + $0x100] sm:%s296] %v369
                %v371 = vld [vmem:[%s303 + $0x1d0] sm:%s296]
                %372 = vst [vmem:[%s304 + $0x108] sm:%s296] %v371
                %v373 = vld [vmem:[%s303 + $0x1d8] sm:%s296]
                %374 = vst [vmem:[%s304 + $0x110] sm:%s296] %v373
                %v375 = vld [vmem:[%s303 + $0x1e0] sm:%s296]
                %376 = vst [vmem:[%s304 + $0x118] sm:%s296] %v375
                %v377 = vld [vmem:[%s303 + $0x1e8] sm:%s296]
                %378 = vst [vmem:[%s304 + $0x120] sm:%s296] %v377
                %v379 = vld [vmem:[%s303 + $0x1f0] sm:%s296]
                %380 = vst [vmem:[%s304 + $0x128] sm:%s296] %v379
                %v381 = vld [vmem:[%s303 + $0x1f8] sm:%s296]
                %382 = vst [vmem:[%s304 + $0x130] sm:%s296] %v381
                %v383 = vld [vmem:[%s303 + $0x200] sm:%s296]
                %384 = vst [vmem:[%s304 + $0x138] sm:%s296] %v383
                %v385 = vld [vmem:[%s303 + $0x208] sm:%s296]
                %386 = vst [vmem:[%s304 + $0x140] sm:%s296] %v385
                %v387 = vld [vmem:[%s303 + $0x210] sm:%s296]
                %388 = vst [vmem:[%s304 + $0x148] sm:%s296] %v387
                %v389 = vld [vmem:[%s303 + $0x218] sm:%s296]
                %390 = vst [vmem:[%s304 + $0x150] sm:%s296] %v389
                %v391 = vld [vmem:[%s303 + $0x220] sm:%s296]
                %392 = vst [vmem:[%s304 + $0x158] sm:%s296] %v391
                %v393 = vld [vmem:[%s303 + $0x228] sm:%s296]
                %394 = vst [vmem:[%s304 + $0x160] sm:%s296] %v393
                %v395 = vld [vmem:[%s303 + $0x230] sm:%s296]
                %396 = vst [vmem:[%s304 + $0x168] sm:%s296] %v395
                %v397 = vld [vmem:[%s303 + $0x238] sm:%s296]
                %398 = vst [vmem:[%s304 + $0x170] sm:%s296] %v397
                %v399 = vld [vmem:[%s303 + $0x240] sm:%s296]
                %400 = vst [vmem:[%s304 + $0x178] sm:%s296] %v399
                %v401 = vld [vmem:[%s303 + $0x248] sm:%s296]
                %402 = vst [vmem:[%s304 + $0x180] sm:%s296] %v401
                %v403 = vld [vmem:[%s303 + $0x250] sm:%s296]
                %404 = vst [vmem:[%s304 + $0x188] sm:%s296] %v403
                %v405 = vld [vmem:[%s303 + $0x320] sm:%s296]
                %406 = vst [vmem:[%s304 + $0x190] sm:%s296] %v405
                %v407 = vld [vmem:[%s303 + $0x328] sm:%s296]
                %408 = vst [vmem:[%s304 + $0x198] sm:%s296] %v407
                %v409 = vld [vmem:[%s303 + $0x330] sm:%s296]
                %410 = vst [vmem:[%s304 + $0x1a0] sm:%s296] %v409
                %v411 = vld [vmem:[%s303 + $0x338] sm:%s296]
                %412 = vst [vmem:[%s304 + $0x1a8] sm:%s296] %v411
                %v413 = vld [vmem:[%s303 + $0x340] sm:%s296]
                %414 = vst [vmem:[%s304 + $0x1b0] sm:%s296] %v413
                %v415 = vld [vmem:[%s303 + $0x348] sm:%s296]
                %416 = vst [vmem:[%s304 + $0x1b8] sm:%s296] %v415
                %v417 = vld [vmem:[%s303 + $0x350] sm:%s296]
                %418 = vst [vmem:[%s304 + $0x1c0] sm:%s296] %v417
                %v419 = vld [vmem:[%s303 + $0x358] sm:%s296]
                %420 = vst [vmem:[%s304 + $0x1c8] sm:%s296] %v419
                %v421 = vld [vmem:[%s303 + $0x360] sm:%s296]
                %422 = vst [vmem:[%s304 + $0x1d0] sm:%s296] %v421
                %v423 = vld [vmem:[%s303 + $0x368] sm:%s296]
                %424 = vst [vmem:[%s304 + $0x1d8] sm:%s296] %v423
                %v425 = vld [vmem:[%s303 + $0x370] sm:%s296]
                %426 = vst [vmem:[%s304 + $0x1e0] sm:%s296] %v425
                %v427 = vld [vmem:[%s303 + $0x378] sm:%s296]
                %428 = vst [vmem:[%s304 + $0x1e8] sm:%s296] %v427
                %v429 = vld [vmem:[%s303 + $0x380] sm:%s296]
                %430 = vst [vmem:[%s304 + $0x1f0] sm:%s296] %v429
                %v431 = vld [vmem:[%s303 + $0x388] sm:%s296]
                %432 = vst [vmem:[%s304 + $0x1f8] sm:%s296] %v431
                %v433 = vld [vmem:[%s303 + $0x390] sm:%s296]
                %434 = vst [vmem:[%s304 + $0x200] sm:%s296] %v433
                %v435 = vld [vmem:[%s303 + $0x398] sm:%s296]
                %436 = vst [vmem:[%s304 + $0x208] sm:%s296] %v435
                %v437 = vld [vmem:[%s303 + $0x3a0] sm:%s296]
                %438 = vst [vmem:[%s304 + $0x210] sm:%s296] %v437
                %v439 = vld [vmem:[%s303 + $0x3a8] sm:%s296]
                %440 = vst [vmem:[%s304 + $0x218] sm:%s296] %v439
                %v441 = vld [vmem:[%s303 + $0x3b0] sm:%s296]
                %442 = vst [vmem:[%s304 + $0x220] sm:%s296] %v441
                %v443 = vld [vmem:[%s303 + $0x3b8] sm:%s296]
                %444 = vst [vmem:[%s304 + $0x228] sm:%s296] %v443
                %v445 = vld [vmem:[%s303 + $0x3c0] sm:%s296]
                %446 = vst [vmem:[%s304 + $0x230] sm:%s296] %v445
                %v447 = vld [vmem:[%s303 + $0x3c8] sm:%s296]
                %448 = vst [vmem:[%s304 + $0x238] sm:%s296] %v447
                %v449 = vld [vmem:[%s303 + $0x3d0] sm:%s296]
                %450 = vst [vmem:[%s304 + $0x240] sm:%s296] %v449
                %v451 = vld [vmem:[%s303 + $0x3d8] sm:%s296]
                %452 = vst [vmem:[%s304 + $0x248] sm:%s296] %v451
                %v453 = vld [vmem:[%s303 + $0x3e0] sm:%s296]
                %454 = vst [vmem:[%s304 + $0x250] sm:%s296] %v453
                %v455 = vld [vmem:[%s303 + $0x4b0] sm:%s296]
                %456 = vst [vmem:[%s304 + $0x258] sm:%s296] %v455
                %v457 = vld [vmem:[%s303 + $0x4b8] sm:%s296]
                %458 = vst [vmem:[%s304 + $0x260] sm:%s296] %v457
                %v459 = vld [vmem:[%s303 + $0x4c0] sm:%s296]
                %460 = vst [vmem:[%s304 + $0x268] sm:%s296] %v459
                %v461 = vld [vmem:[%s303 + $0x4c8] sm:%s296]
                %462 = vst [vmem:[%s304 + $0x270] sm:%s296] %v461
                %v463 = vld [vmem:[%s303 + $0x4d0] sm:%s296]
                %464 = vst [vmem:[%s304 + $0x278] sm:%s296] %v463
                %v465 = vld [vmem:[%s303 + $0x4d8] sm:%s296]
                %466 = vst [vmem:[%s304 + $0x280] sm:%s296] %v465
                %v467 = vld [vmem:[%s303 + $0x4e0] sm:%s296]
                %468 = vst [vmem:[%s304 + $0x288] sm:%s296] %v467
                %v469 = vld [vmem:[%s303 + $0x4e8] sm:%s296]
                %470 = vst [vmem:[%s304 + $0x290] sm:%s296] %v469
                %v471 = vld [vmem:[%s303 + $0x4f0] sm:%s296]
                %472 = vst [vmem:[%s304 + $0x298] sm:%s296] %v471
                %v473 = vld [vmem:[%s303 + $0x4f8] sm:%s296]
                %474 = vst [vmem:[%s304 + $0x2a0] sm:%s296] %v473
                %v475 = vld [vmem:[%s303 + $0x500] sm:%s296]
                %476 = vst [vmem:[%s304 + $0x2a8] sm:%s296] %v475
                %v477 = vld [vmem:[%s303 + $0x508] sm:%s296]
                %478 = vst [vmem:[%s304 + $0x2b0] sm:%s296] %v477
                %v479 = vld [vmem:[%s303 + $0x510] sm:%s296]
                %480 = vst [vmem:[%s304 + $0x2b8] sm:%s296] %v479
                %v481 = vld [vmem:[%s303 + $0x518] sm:%s296]
                %482 = vst [vmem:[%s304 + $0x2c0] sm:%s296] %v481
                %v483 = vld [vmem:[%s303 + $0x520] sm:%s296]
                %484 = vst [vmem:[%s304 + $0x2c8] sm:%s296] %v483
                %v485 = vld [vmem:[%s303 + $0x528] sm:%s296]
                %486 = vst [vmem:[%s304 + $0x2d0] sm:%s296] %v485
                %v487 = vld [vmem:[%s303 + $0x530] sm:%s296]
                %488 = vst [vmem:[%s304 + $0x2d8] sm:%s296] %v487
                %v489 = vld [vmem:[%s303 + $0x538] sm:%s296]
                %490 = vst [vmem:[%s304 + $0x2e0] sm:%s296] %v489
                %v491 = vld [vmem:[%s303 + $0x540] sm:%s296]
                %492 = vst [vmem:[%s304 + $0x2e8] sm:%s296] %v491
                %v493 = vld [vmem:[%s303 + $0x548] sm:%s296]
                %494 = vst [vmem:[%s304 + $0x2f0] sm:%s296] %v493
                %v495 = vld [vmem:[%s303 + $0x550] sm:%s296]
                %496 = vst [vmem:[%s304 + $0x2f8] sm:%s296] %v495
                %v497 = vld [vmem:[%s303 + $0x558] sm:%s296]
                %498 = vst [vmem:[%s304 + $0x300] sm:%s296] %v497
                %v499 = vld [vmem:[%s303 + $0x560] sm:%s296]
                %500 = vst [vmem:[%s304 + $0x308] sm:%s296] %v499
                %v501 = vld [vmem:[%s303 + $0x568] sm:%s296]
                %502 = vst [vmem:[%s304 + $0x310] sm:%s296] %v501
                %v503 = vld [vmem:[%s303 + $0x570] sm:%s296]
                %504 = vst [vmem:[%s304 + $0x318] sm:%s296] %v503
              $region69: #{cnn_net_32_forward.3} parent=63 // loop_footer
                %s302 = sadd.s32 1, %s298
              $region70: #{cnn_net_32_forward.3} parent=63 // loop_footer_branch
                %297 = sbr.rel target = $region66
              $region71: #{cnn_net_32_forward.3} parent=63 // loop_exit
                _
            $region64: #{cnn_net_32_forward.3} parent=55 // pred_fallthru
              _
          $region56: #{cnn_net_32_forward.3} parent=51 // pred_fallthru
            _
          %717 = vnop
        $region52: #{cnn_net_32_forward.3} parent=47 // pred_fallthru
          _
      $region48: #{cnn_net_32_forward.3} parent=5 // pred_fallthru
        _
      %p718 = scmp.le.s32.totalorder 1, %s15
      %p719 = scmp.lt.s32.totalorder %s15, 3
      %p720 = pnand %p718, %p719
      %p721 = pneg %p720
      // Predicated region
      $region87: #{cnn_net_32_forward.3} parent=5 // pred_check
        _
      $region88: #{cnn_net_32_forward.3} parent=5 // pred_check_branch
        %723 = sbr.rel (%p720) target = $region90
      $region89: #{cnn_net_32_forward.3} parent=5 // pred_region
        %s724 = ssub.s32 %s15, 1
        %s725 = sand.u32 %s28, 1
        %s726 = sand.u32 %s28, 1
        %s727 = smul.addr %s726, 800
        %s728 = scalar_lea.vmem [#allocation2], %s727
        // Predicated region
        $region91: #{cnn_net_32_forward.3} parent=89 // pred_check
          %p729 = pneg %p41
        $region92: #{cnn_net_32_forward.3} parent=89 // pred_check_branch
          %731 = sbr.rel (%p729) target = $region94
        $region93: #{cnn_net_32_forward.3} parent=89 // pred_region
          _
        $region94: #{cnn_net_32_forward.3} parent=89 // pred_fallthru
          _
        %s732 = sand.u32 %s28, 1
        %s733 = sand.u32 %s28, 1
        %s734 = smul.addr %s733, 800
        %s735 = scalar_lea.vmem [#allocation2], %s734
        %p736 = pneg %p41
        %p737 = pneg %p38
        %p738 = pneg %p62
        %p739 = pneg %p59
        %p740 = pneg %p83
        %p741 = pneg %p80
        %p742 = pneg %p104
        %p743 = pneg %p101
        %p744 = pneg %p125
        %p745 = pneg %p122
        %p746 = pneg %p146
        %p747 = pneg %p143
        %p748 = pneg %p167
        %p749 = pneg %p164
        %p750 = pneg %p188
        %p751 = pneg %p185
        %p752 = pneg %p209
        %p753 = pneg %p206
        %p754 = pneg %p235
        %p755 = pneg %p232
        %p756 = scmp.lt.s32.totalorder %s20, 1
        %s757 = scalar_select %p756, %s20, 1
        %s758 = smul.addr %s757, 8
        %s759 = scalar_lea.vmem %s9, %s758
        %s760 = smul.u32 25, %s20
        %p761 = scmp.lt.s32.totalorder %s20, 1
        %s762 = scalar_select %p761, %s20, 1
        %s763 = smul.addr %s762, 8
        %s764 = scalar_lea.vmem %s9, %s763
        %v766 = vld [vmem:[%s728] sm:$0xff]
        %v767 = vld [vmem:[%s728 + $0x8] sm:$0xff]
        %v768 = vld [vmem:[%s728 + $0x10] sm:$0xff]
        %v769 = vld [vmem:[%s728 + $0x18] sm:$0xff]
        %v770 = vld [vmem:[%s728 + $0x20] sm:$0xff]
        %v771 = vld [vmem:[%s728 + $0x28] sm:$0xff]
        %v772 = vld [vmem:[%s728 + $0x30] sm:$0xff]
        %v773 = vld [vmem:[%s728 + $0x38] sm:$0xff]
        %v774 = vld [vmem:[%s728 + $0x40] sm:$0xff]
        %v775 = vld [vmem:[%s728 + $0x48] sm:$0xff]
        %v776 = vld [vmem:[%s728 + $0x50] sm:$0xff]
        %v777 = vld [vmem:[%s728 + $0x58] sm:$0xff]
        %v778 = vld [vmem:[%s728 + $0x60] sm:$0xff]
        %v779 = vld [vmem:[%s728 + $0x68] sm:$0xff]
        %v780 = vld [vmem:[%s728 + $0x70] sm:$0xff]
        %v781 = vld [vmem:[%s728 + $0x78] sm:$0xff]
        %v782 = vld [vmem:[%s728 + $0x80] sm:$0xff]
        %v783 = vld [vmem:[%s728 + $0x88] sm:$0xff]
        %v784 = vld [vmem:[%s728 + $0x90] sm:$0xff]
        %v785 = vld [vmem:[%s728 + $0x98] sm:$0xff]
        %v786 = vld [vmem:[%s728 + $0xa0] sm:$0xff]
        %v787 = vld [vmem:[%s728 + $0xa8] sm:$0xff]
        %v788 = vld [vmem:[%s728 + $0xb0] sm:$0xff]
        %v789 = vld [vmem:[%s728 + $0xb8] sm:$0xff]
        %v790 = vld [vmem:[%s728 + $0xc0] sm:$0xff]
        %v791 = vld [vmem:[%s1] sm:$0xf]
        %v792 = vld [vmem:[%s1 + $0x4] sm:$0xf]
        %v793 = vld [vmem:[%s1 + $0x8] sm:$0xf]
        %v794 = vld [vmem:[%s1 + $0xc] sm:$0xf]
        %v795 = vld [vmem:[%s1 + $0x10] sm:$0xf]
        %v796 = vld [vmem:[%s1 + $0x14] sm:$0xf]
        %v797 = vld [vmem:[%s1 + $0x18] sm:$0xf]
        %v798 = vld [vmem:[%s1 + $0x1c] sm:$0xf]
        %v799 = vld [vmem:[%s1 + $0x20] sm:$0xf]
        %v800 = vld [vmem:[%s1 + $0x24] sm:$0xf]
        %v801 = vld [vmem:[%s1 + $0x28] sm:$0xf]
        %v802 = vld [vmem:[%s1 + $0x2c] sm:$0xf]
        %v803 = vld [vmem:[%s1 + $0x30] sm:$0xf]
        %v804 = vld [vmem:[%s1 + $0x34] sm:$0xf]
        %v805 = vld [vmem:[%s1 + $0x38] sm:$0xf]
        %v806 = vld [vmem:[%s1 + $0x3c] sm:$0xf]
        %v807 = vld [vmem:[%s1 + $0x40] sm:$0xf]
        %v808 = vld [vmem:[%s1 + $0x44] sm:$0xf]
        %v809 = vld [vmem:[%s1 + $0x48] sm:$0x7]
        %v835 = vunpack.c.l.b16 %v766
        %v836 = vunpack.c.h.b16 %v766
        %v837 = vunpack.c.l.b16 %v767
        %v838 = vunpack.c.h.b16 %v767
        %v839 = vunpack.c.l.b16 %v768
        %v840 = vunpack.c.h.b16 %v768
        %v841 = vunpack.c.l.b16 %v769
        %v842 = vunpack.c.h.b16 %v769
        %v843 = vunpack.c.l.b16 %v770
        %v844 = vunpack.c.h.b16 %v770
        %v845 = vunpack.c.l.b16 %v771
        %v846 = vunpack.c.h.b16 %v771
        %v847 = vunpack.c.l.b16 %v772
        %v848 = vunpack.c.h.b16 %v772
        %v849 = vunpack.c.l.b16 %v773
        %v850 = vunpack.c.h.b16 %v773
        %v851 = vunpack.c.l.b16 %v774
        %v852 = vunpack.c.h.b16 %v774
        %v853 = vunpack.c.l.b16 %v775
        %v854 = vunpack.c.h.b16 %v775
        %v855 = vunpack.c.l.b16 %v776
        %v856 = vunpack.c.h.b16 %v776
        %v857 = vunpack.c.l.b16 %v777
        %v858 = vunpack.c.h.b16 %v777
        %v859 = vunpack.c.l.b16 %v778
        %v860 = vunpack.c.h.b16 %v778
        %v861 = vunpack.c.l.b16 %v779
        %v862 = vunpack.c.h.b16 %v779
        %v863 = vunpack.c.l.b16 %v780
        %v864 = vunpack.c.h.b16 %v780
        %v865 = vunpack.c.l.b16 %v781
        %v866 = vunpack.c.h.b16 %v781
        %v867 = vunpack.c.l.b16 %v782
        %v868 = vunpack.c.h.b16 %v782
        %v869 = vunpack.c.l.b16 %v783
        %v870 = vunpack.c.h.b16 %v783
        %v871 = vunpack.c.l.b16 %v784
        %v872 = vunpack.c.h.b16 %v784
        %v873 = vunpack.c.l.b16 %v785
        %v874 = vunpack.c.h.b16 %v785
        %v875 = vunpack.c.l.b16 %v786
        %v876 = vunpack.c.h.b16 %v786
        %v877 = vunpack.c.l.b16 %v787
        %v878 = vunpack.c.h.b16 %v787
        %v879 = vunpack.c.l.b16 %v788
        %v880 = vunpack.c.h.b16 %v788
        %v881 = vunpack.c.l.b16 %v789
        %v882 = vunpack.c.h.b16 %v789
        %v883 = vunpack.c.l.b16 %v790
        %v884 = vunpack.c.h.b16 %v790
        %v885 = vpack.c.b16 %v837, %v835
        %v886 = vpack.c.b16 %v838, %v836
        %v887 = vpack.c.b16 %v841, %v839
        %v888 = vpack.c.b16 %v842, %v840
        %v889 = vpack.c.b16 %v845, %v843
        %v890 = vpack.c.b16 %v846, %v844
        %v891 = vpack.c.b16 %v849, %v847
        %v892 = vpack.c.b16 %v850, %v848
        %v893 = vpack.c.b16 %v853, %v851
        %v894 = vpack.c.b16 %v854, %v852
        %v895 = vpack.c.b16 %v857, %v855
        %v896 = vpack.c.b16 %v858, %v856
        %v897 = vpack.c.b16 %v861, %v859
        %v898 = vpack.c.b16 %v862, %v860
        %v899 = vpack.c.b16 %v865, %v863
        %v900 = vpack.c.b16 %v866, %v864
        %v901 = vpack.c.b16 %v869, %v867
        %v902 = vpack.c.b16 %v870, %v868
        %v903 = vpack.c.b16 %v873, %v871
        %v904 = vpack.c.b16 %v874, %v872
        %v905 = vpack.c.b16 %v877, %v875
        %v906 = vpack.c.b16 %v878, %v876
        %v907 = vpack.c.b16 %v881, %v879
        %v908 = vpack.c.b16 %v882, %v880
        %v909 = vpack.c.b16 %v883, %v883
        %v910 = vpack.c.b16 %v884, %v884
        %v943 = vunpack.c.l.b16 %v791
        %v944 = vunpack.c.l.b16 %v792
        %v945 = vunpack.c.l.b16 %v793
        %v946 = vunpack.c.l.b16 %v794
        %v947 = vunpack.c.l.b16 %v795
        %v948 = vunpack.c.l.b16 %v796
        %v949 = vunpack.c.l.b16 %v797
        %v950 = vunpack.c.l.b16 %v798
        %v951 = vunpack.c.l.b16 %v799
        %v952 = vunpack.c.l.b16 %v800
        %v953 = vunpack.c.l.b16 %v801
        %v954 = vunpack.c.l.b16 %v802
        %v955 = vunpack.c.l.b16 %v803
        %v956 = vunpack.c.l.b16 %v804
        %v957 = vunpack.c.l.b16 %v805
        %v958 = vunpack.c.l.b16 %v806
        %v959 = vunpack.c.l.b16 %v807
        %v960 = vunpack.c.l.b16 %v808
        %v961 = vunpack.c.l.b16 %v809
        %v962 = vpack.c.b16 %v944, %v943
        %v963 = vpack.c.b16 %v946, %v945
        %v964 = vpack.c.b16 %v948, %v947
        %v965 = vpack.c.b16 %v950, %v949
        %v966 = vpack.c.b16 %v952, %v951
        %v967 = vpack.c.b16 %v954, %v953
        %v968 = vpack.c.b16 %v956, %v955
        %v969 = vpack.c.b16 %v958, %v957
        %v970 = vpack.c.b16 %v960, %v959
        %v971 = vpack.c.b16 %v961, %v961
        %vm981 = vcmask 179200
        %v983 = vsel %vm981, %v886, 0
        %v986 = vsel %vm981, %v888, 0
        %v989 = vsel %vm981, %v890, 0
        %v992 = vsel %vm981, %v892, 0
        %v995 = vsel %vm981, %v894, 0
        %v998 = vsel %vm981, %v896, 0
        %v1001 = vsel %vm981, %v898, 0
        %v1004 = vsel %vm981, %v900, 0
        %v1007 = vsel %vm981, %v902, 0
        %v1010 = vsel %vm981, %v904, 0
        %v1013 = vsel %vm981, %v906, 0
        %v1016 = vsel %vm981, %v908, 0
        %v1019 = vsel %vm981, %v910, 0
        %vm1021 = vcmask 1042432
        %v1023 = vsel %vm1021, %v971, 0
        %1025 = vmatprep.subr.bf16.mxu0 0
        %1026 = vmatpush1.bf16.msra.mxu0 %v969
        %1027 = vmatprep.subr.bf16.mxu0 0
        %1028 = vmatpush1.bf16.msra.mxu0 %v968
        %1029 = vmatprep.subr.bf16.mxu0 0
        %1030 = vmatpush1.bf16.msra.mxu0 %v967
        %1031 = vmatprep.subr.bf16.mxu0 0
        %1032 = vmatpush1.bf16.msra.mxu0 %v966
        %1033 = vmatprep.subr.bf16.mxu0 0
        %1034 = vmatpush1.bf16.msra.mxu0 %v965
        %1035 = vmatprep.subr.bf16.mxu0 0
        %1036 = vmatpush1.bf16.msra.mxu0 %v964
        %1037 = vmatprep.subr.bf16.mxu0 0
        %1038 = vmatpush1.bf16.msra.mxu0 %v963
        %1039 = vmatprep.subr.bf16.mxu0 0
        %1040 = vmatpush1.bf16.msra.mxu0 %v962
        %1041 = vmatprep.subr.bf16.mxu0 0
        %1042 = vmatpush2.bf16.msra.mxu0 0
        %1043 = vmatprep.subr.bf16.mxu0 0
        %1044 = vmatpush2.bf16.msra.mxu0 0
        %1045 = vmatprep.subr.bf16.mxu0 0
        %1046 = vmatpush2.bf16.msra.mxu0 0
        %1047 = vmatprep.subr.bf16.mxu0 0
        %1048 = vmatpush2.bf16.msra.mxu0 0
        %1049 = vmatprep.subr.bf16.mxu0 0
        %1050 = vmatpush2.bf16.msra.mxu0 0
        %1051 = vmatprep.subr.bf16.mxu0 0
        %1052 = vmatpush2.bf16.msra.mxu0 0
        %1053 = vmatprep.subr.bf16.mxu0 0
        %1054 = vmatpush2.bf16.msra.mxu0 %v1023
        %1055 = vmatprep.subr.bf16.mxu0 0
        %1056 = vmatpush2.bf16.msra.mxu0 %v970
        %1057 = vmatprep.mubr.bf16.mxu0 %v983
        %1058 = vmatmul.mubr.bf16.gmra.mxu0 %v885
        %v1059 = vpop.f32.mrf.mxu0
        %v1060 = vadd.f32 0.0, %v1059
        %v1061 = vpop.f32.mrf.mxu0
        %v1062 = vpop.f32.mrf.mxu0
        %v1063 = vadd.f32 0.0, %v1062
        %v1064 = vpop.f32.mrf.mxu0
        %1065 = vmatprep.mubr.bf16.mxu0 %v986
        %1066 = vmatmul.mubr.bf16.gmra.mxu0 %v887
        %v1067 = vpop.f32.mrf.mxu0
        %v1068 = vadd.f32 0.0, %v1067
        %v1069 = vpop.f32.mrf.mxu0
        %v1070 = vpop.f32.mrf.mxu0
        %v1071 = vadd.f32 0.0, %v1070
        %v1072 = vpop.f32.mrf.mxu0
        %1073 = vmatprep.mubr.bf16.mxu0 %v989
        %1074 = vmatmul.mubr.bf16.gmra.mxu0 %v889
        %v1075 = vpop.f32.mrf.mxu0
        %v1076 = vadd.f32 0.0, %v1075
        %v1077 = vpop.f32.mrf.mxu0
        %v1078 = vpop.f32.mrf.mxu0
        %v1079 = vadd.f32 0.0, %v1078
        %v1080 = vpop.f32.mrf.mxu0
        %1081 = vmatprep.mubr.bf16.mxu0 %v992
        %1082 = vmatmul.mubr.bf16.gmra.mxu0 %v891
        %v1083 = vpop.f32.mrf.mxu0
        %v1084 = vadd.f32 0.0, %v1083
        %v1085 = vpop.f32.mrf.mxu0
        %v1086 = vpop.f32.mrf.mxu0
        %v1087 = vadd.f32 0.0, %v1086
        %v1088 = vpop.f32.mrf.mxu0
        %1089 = vmatprep.mubr.bf16.mxu0 %v995
        %1090 = vmatmul.mubr.bf16.gmra.mxu0 %v893
        %v1091 = vpop.f32.mrf.mxu0
        %v1092 = vadd.f32 0.0, %v1091
        %v1093 = vpop.f32.mrf.mxu0
        %v1094 = vpop.f32.mrf.mxu0
        %v1095 = vadd.f32 0.0, %v1094
        %v1096 = vpop.f32.mrf.mxu0
        %1097 = vmatprep.mubr.bf16.mxu0 %v998
        %1098 = vmatmul.mubr.bf16.gmra.mxu0 %v895
        %v1099 = vpop.f32.mrf.mxu0
        %v1100 = vadd.f32 0.0, %v1099
        %v1101 = vpop.f32.mrf.mxu0
        %v1102 = vpop.f32.mrf.mxu0
        %v1103 = vadd.f32 0.0, %v1102
        %v1104 = vpop.f32.mrf.mxu0
        %1105 = vmatprep.mubr.bf16.mxu0 %v1001
        %1106 = vmatmul.mubr.bf16.gmra.mxu0 %v897
        %v1107 = vpop.f32.mrf.mxu0
        %v1108 = vadd.f32 0.0, %v1107
        %v1109 = vpop.f32.mrf.mxu0
        %v1110 = vpop.f32.mrf.mxu0
        %v1111 = vadd.f32 0.0, %v1110
        %v1112 = vpop.f32.mrf.mxu0
        %1113 = vmatprep.mubr.bf16.mxu0 %v1004
        %1114 = vmatmul.mubr.bf16.gmra.mxu0 %v899
        %v1115 = vpop.f32.mrf.mxu0
        %v1116 = vadd.f32 0.0, %v1115
        %v1117 = vpop.f32.mrf.mxu0
        %v1118 = vpop.f32.mrf.mxu0
        %v1119 = vadd.f32 0.0, %v1118
        %v1120 = vpop.f32.mrf.mxu0
        %1121 = vmatprep.mubr.bf16.mxu0 %v1007
        %1122 = vmatmul.mubr.bf16.gmra.mxu0 %v901
        %v1123 = vpop.f32.mrf.mxu0
        %v1124 = vadd.f32 0.0, %v1123
        %v1125 = vpop.f32.mrf.mxu0
        %v1126 = vpop.f32.mrf.mxu0
        %v1127 = vadd.f32 0.0, %v1126
        %v1128 = vpop.f32.mrf.mxu0
        %1129 = vmatprep.mubr.bf16.mxu0 %v1010
        %1130 = vmatmul.mubr.bf16.gmra.mxu0 %v903
        %v1131 = vpop.f32.mrf.mxu0
        %v1132 = vadd.f32 0.0, %v1131
        %v1133 = vpop.f32.mrf.mxu0
        %v1134 = vpop.f32.mrf.mxu0
        %v1135 = vadd.f32 0.0, %v1134
        %v1136 = vpop.f32.mrf.mxu0
        %1137 = vmatprep.mubr.bf16.mxu0 %v1013
        %1138 = vmatmul.mubr.bf16.gmra.mxu0 %v905
        %v1139 = vpop.f32.mrf.mxu0
        %v1140 = vadd.f32 0.0, %v1139
        %v1141 = vpop.f32.mrf.mxu0
        %v1142 = vpop.f32.mrf.mxu0
        %v1143 = vadd.f32 0.0, %v1142
        %v1144 = vpop.f32.mrf.mxu0
        %1145 = vmatprep.mubr.bf16.mxu0 %v1016
        %1146 = vmatmul.mubr.bf16.gmra.mxu0 %v907
        %v1147 = vpop.f32.mrf.mxu0
        %v1148 = vadd.f32 0.0, %v1147
        %v1149 = vpop.f32.mrf.mxu0
        %v1150 = vpop.f32.mrf.mxu0
        %v1151 = vadd.f32 0.0, %v1150
        %v1152 = vpop.f32.mrf.mxu0
        %1153 = vmatprep.mubr.bf16.mxu0 %v1019
        %1154 = vmatmul.mubr.bf16.gmra.mxu0 %v909
        %v1155 = vpop.f32.mrf.mxu0
        %v1156 = vadd.f32 0.0, %v1155
        %v1157 = vpop.f32.mrf.mxu0
        %v1158 = vpop.f32.mrf.mxu0
        %v1159 = vpop.f32.mrf.mxu0
        %1160 = vdwg.mxu0
        %s1161 = scalar_lea.vmem %s728, 200 [#allocation2]
        %v1162 = vld [vmem:[%s1161] sm:$0xff]
        %v1163 = vld [vmem:[%s1161 + $0x8] sm:$0xff]
        %v1164 = vld [vmem:[%s1161 + $0x10] sm:$0xff]
        %v1165 = vld [vmem:[%s1161 + $0x18] sm:$0xff]
        %v1166 = vld [vmem:[%s1161 + $0x20] sm:$0xff]
        %v1167 = vld [vmem:[%s1161 + $0x28] sm:$0xff]
        %v1168 = vld [vmem:[%s1161 + $0x30] sm:$0xff]
        %v1169 = vld [vmem:[%s1161 + $0x38] sm:$0xff]
        %v1170 = vld [vmem:[%s1161 + $0x40] sm:$0xff]
        %v1171 = vld [vmem:[%s1161 + $0x48] sm:$0xff]
        %v1172 = vld [vmem:[%s1161 + $0x50] sm:$0xff]
        %v1173 = vld [vmem:[%s1161 + $0x58] sm:$0xff]
        %v1174 = vld [vmem:[%s1161 + $0x60] sm:$0xff]
        %v1175 = vld [vmem:[%s1161 + $0x68] sm:$0xff]
        %v1176 = vld [vmem:[%s1161 + $0x70] sm:$0xff]
        %v1177 = vld [vmem:[%s1161 + $0x78] sm:$0xff]
        %v1178 = vld [vmem:[%s1161 + $0x80] sm:$0xff]
        %v1179 = vld [vmem:[%s1161 + $0x88] sm:$0xff]
        %v1180 = vld [vmem:[%s1161 + $0x90] sm:$0xff]
        %v1181 = vld [vmem:[%s1161 + $0x98] sm:$0xff]
        %v1182 = vld [vmem:[%s1161 + $0xa0] sm:$0xff]
        %v1183 = vld [vmem:[%s1161 + $0xa8] sm:$0xff]
        %v1184 = vld [vmem:[%s1161 + $0xb0] sm:$0xff]
        %v1185 = vld [vmem:[%s1161 + $0xb8] sm:$0xff]
        %v1186 = vld [vmem:[%s1161 + $0xc0] sm:$0xff]
        %v1212 = vunpack.c.l.b16 %v1162
        %v1213 = vunpack.c.h.b16 %v1162
        %v1214 = vunpack.c.l.b16 %v1163
        %v1215 = vunpack.c.h.b16 %v1163
        %v1216 = vunpack.c.l.b16 %v1164
        %v1217 = vunpack.c.h.b16 %v1164
        %v1218 = vunpack.c.l.b16 %v1165
        %v1219 = vunpack.c.h.b16 %v1165
        %v1220 = vunpack.c.l.b16 %v1166
        %v1221 = vunpack.c.h.b16 %v1166
        %v1222 = vunpack.c.l.b16 %v1167
        %v1223 = vunpack.c.h.b16 %v1167
        %v1224 = vunpack.c.l.b16 %v1168
        %v1225 = vunpack.c.h.b16 %v1168
        %v1226 = vunpack.c.l.b16 %v1169
        %v1227 = vunpack.c.h.b16 %v1169
        %v1228 = vunpack.c.l.b16 %v1170
        %v1229 = vunpack.c.h.b16 %v1170
        %v1230 = vunpack.c.l.b16 %v1171
        %v1231 = vunpack.c.h.b16 %v1171
        %v1232 = vunpack.c.l.b16 %v1172
        %v1233 = vunpack.c.h.b16 %v1172
        %v1234 = vunpack.c.l.b16 %v1173
        %v1235 = vunpack.c.h.b16 %v1173
        %v1236 = vunpack.c.l.b16 %v1174
        %v1237 = vunpack.c.h.b16 %v1174
        %v1238 = vunpack.c.l.b16 %v1175
        %v1239 = vunpack.c.h.b16 %v1175
        %v1240 = vunpack.c.l.b16 %v1176
        %v1241 = vunpack.c.h.b16 %v1176
        %v1242 = vunpack.c.l.b16 %v1177
        %v1243 = vunpack.c.h.b16 %v1177
        %v1244 = vunpack.c.l.b16 %v1178
        %v1245 = vunpack.c.h.b16 %v1178
        %v1246 = vunpack.c.l.b16 %v1179
        %v1247 = vunpack.c.h.b16 %v1179
        %v1248 = vunpack.c.l.b16 %v1180
        %v1249 = vunpack.c.h.b16 %v1180
        %v1250 = vunpack.c.l.b16 %v1181
        %v1251 = vunpack.c.h.b16 %v1181
        %v1252 = vunpack.c.l.b16 %v1182
        %v1253 = vunpack.c.h.b16 %v1182
        %v1254 = vunpack.c.l.b16 %v1183
        %v1255 = vunpack.c.h.b16 %v1183
        %v1256 = vunpack.c.l.b16 %v1184
        %v1257 = vunpack.c.h.b16 %v1184
        %v1258 = vunpack.c.l.b16 %v1185
        %v1259 = vunpack.c.h.b16 %v1185
        %v1260 = vunpack.c.l.b16 %v1186
        %v1261 = vunpack.c.h.b16 %v1186
        %v1262 = vpack.c.b16 %v1214, %v1212
        %v1263 = vpack.c.b16 %v1215, %v1213
        %v1264 = vpack.c.b16 %v1218, %v1216
        %v1265 = vpack.c.b16 %v1219, %v1217
        %v1266 = vpack.c.b16 %v1222, %v1220
        %v1267 = vpack.c.b16 %v1223, %v1221
        %v1268 = vpack.c.b16 %v1226, %v1224
        %v1269 = vpack.c.b16 %v1227, %v1225
        %v1270 = vpack.c.b16 %v1230, %v1228
        %v1271 = vpack.c.b16 %v1231, %v1229
        %v1272 = vpack.c.b16 %v1234, %v1232
        %v1273 = vpack.c.b16 %v1235, %v1233
        %v1274 = vpack.c.b16 %v1238, %v1236
        %v1275 = vpack.c.b16 %v1239, %v1237
        %v1276 = vpack.c.b16 %v1242, %v1240
        %v1277 = vpack.c.b16 %v1243, %v1241
        %v1278 = vpack.c.b16 %v1246, %v1244
        %v1279 = vpack.c.b16 %v1247, %v1245
        %v1280 = vpack.c.b16 %v1250, %v1248
        %v1281 = vpack.c.b16 %v1251, %v1249
        %v1282 = vpack.c.b16 %v1254, %v1252
        %v1283 = vpack.c.b16 %v1255, %v1253
        %v1284 = vpack.c.b16 %v1258, %v1256
        %v1285 = vpack.c.b16 %v1259, %v1257
        %v1286 = vpack.c.b16 %v1260, %v1260
        %v1287 = vpack.c.b16 %v1261, %v1261
        %v1302 = vsel %vm981, %v1263, 0
        %v1305 = vsel %vm981, %v1265, 0
        %v1308 = vsel %vm981, %v1267, 0
        %v1311 = vsel %vm981, %v1269, 0
        %v1314 = vsel %vm981, %v1271, 0
        %v1317 = vsel %vm981, %v1273, 0
        %v1320 = vsel %vm981, %v1275, 0
        %v1323 = vsel %vm981, %v1277, 0
        %v1326 = vsel %vm981, %v1279, 0
        %v1329 = vsel %vm981, %v1281, 0
        %v1332 = vsel %vm981, %v1283, 0
        %v1335 = vsel %vm981, %v1285, 0
        %v1338 = vsel %vm981, %v1287, 0
        %1340 = vmatprep.subr.bf16.mxu0 0
        %1341 = vmatpush1.bf16.msra.mxu0 %v969
        %1342 = vmatprep.subr.bf16.mxu0 0
        %1343 = vmatpush1.bf16.msra.mxu0 %v968
        %1344 = vmatprep.subr.bf16.mxu0 0
        %1345 = vmatpush1.bf16.msra.mxu0 %v967
        %1346 = vmatprep.subr.bf16.mxu0 0
        %1347 = vmatpush1.bf16.msra.mxu0 %v966
        %1348 = vmatprep.subr.bf16.mxu0 0
        %1349 = vmatpush1.bf16.msra.mxu0 %v965
        %1350 = vmatprep.subr.bf16.mxu0 0
        %1351 = vmatpush1.bf16.msra.mxu0 %v964
        %1352 = vmatprep.subr.bf16.mxu0 0
        %1353 = vmatpush1.bf16.msra.mxu0 %v963
        %1354 = vmatprep.subr.bf16.mxu0 0
        %1355 = vmatpush1.bf16.msra.mxu0 %v962
        %1356 = vmatprep.subr.bf16.mxu0 0
        %1357 = vmatpush2.bf16.msra.mxu0 0
        %1358 = vmatprep.subr.bf16.mxu0 0
        %1359 = vmatpush2.bf16.msra.mxu0 0
        %1360 = vmatprep.subr.bf16.mxu0 0
        %1361 = vmatpush2.bf16.msra.mxu0 0
        %1362 = vmatprep.subr.bf16.mxu0 0
        %1363 = vmatpush2.bf16.msra.mxu0 0
        %1364 = vmatprep.subr.bf16.mxu0 0
        %1365 = vmatpush2.bf16.msra.mxu0 0
        %1366 = vmatprep.subr.bf16.mxu0 0
        %1367 = vmatpush2.bf16.msra.mxu0 0
        %1368 = vmatprep.subr.bf16.mxu0 0
        %1369 = vmatpush2.bf16.msra.mxu0 %v1023
        %1370 = vmatprep.subr.bf16.mxu0 0
        %1371 = vmatpush2.bf16.msra.mxu0 %v970
        %1372 = vmatprep.mubr.bf16.mxu0 %v1302
        %1373 = vmatmul.mubr.bf16.gmra.mxu0 %v1262
        %v1374 = vpop.f32.mrf.mxu0
        %v1375 = vadd.f32 0.0, %v1374
        %v1376 = vpop.f32.mrf.mxu0
        %v1377 = vpop.f32.mrf.mxu0
        %v1378 = vadd.f32 0.0, %v1377
        %v1379 = vpop.f32.mrf.mxu0
        %1380 = vmatprep.mubr.bf16.mxu0 %v1305
        %1381 = vmatmul.mubr.bf16.gmra.mxu0 %v1264
        %v1382 = vpop.f32.mrf.mxu0
        %v1383 = vadd.f32 0.0, %v1382
        %v1384 = vpop.f32.mrf.mxu0
        %v1385 = vpop.f32.mrf.mxu0
        %v1386 = vadd.f32 0.0, %v1385
        %v1387 = vpop.f32.mrf.mxu0
        %1388 = vmatprep.mubr.bf16.mxu0 %v1308
        %1389 = vmatmul.mubr.bf16.gmra.mxu0 %v1266
        %v1390 = vpop.f32.mrf.mxu0
        %v1391 = vadd.f32 0.0, %v1390
        %v1392 = vpop.f32.mrf.mxu0
        %v1393 = vpop.f32.mrf.mxu0
        %v1394 = vadd.f32 0.0, %v1393
        %v1395 = vpop.f32.mrf.mxu0
        %1396 = vmatprep.mubr.bf16.mxu0 %v1311
        %1397 = vmatmul.mubr.bf16.gmra.mxu0 %v1268
        %v1398 = vpop.f32.mrf.mxu0
        %v1399 = vadd.f32 0.0, %v1398
        %v1400 = vpop.f32.mrf.mxu0
        %v1401 = vpop.f32.mrf.mxu0
        %v1402 = vadd.f32 0.0, %v1401
        %v1403 = vpop.f32.mrf.mxu0
        %1404 = vmatprep.mubr.bf16.mxu0 %v1314
        %1405 = vmatmul.mubr.bf16.gmra.mxu0 %v1270
        %v1406 = vpop.f32.mrf.mxu0
        %v1407 = vadd.f32 0.0, %v1406
        %v1408 = vpop.f32.mrf.mxu0
        %v1409 = vpop.f32.mrf.mxu0
        %v1410 = vadd.f32 0.0, %v1409
        %v1411 = vpop.f32.mrf.mxu0
        %1412 = vmatprep.mubr.bf16.mxu0 %v1317
        %1413 = vmatmul.mubr.bf16.gmra.mxu0 %v1272
        %v1414 = vpop.f32.mrf.mxu0
        %v1415 = vadd.f32 0.0, %v1414
        %v1416 = vpop.f32.mrf.mxu0
        %v1417 = vpop.f32.mrf.mxu0
        %v1418 = vadd.f32 0.0, %v1417
        %v1419 = vpop.f32.mrf.mxu0
        %1420 = vmatprep.mubr.bf16.mxu0 %v1320
        %1421 = vmatmul.mubr.bf16.gmra.mxu0 %v1274
        %v1422 = vpop.f32.mrf.mxu0
        %v1423 = vadd.f32 0.0, %v1422
        %v1424 = vpop.f32.mrf.mxu0
        %v1425 = vpop.f32.mrf.mxu0
        %v1426 = vadd.f32 0.0, %v1425
        %v1427 = vpop.f32.mrf.mxu0
        %1428 = vmatprep.mubr.bf16.mxu0 %v1323
        %1429 = vmatmul.mubr.bf16.gmra.mxu0 %v1276
        %v1430 = vpop.f32.mrf.mxu0
        %v1431 = vadd.f32 0.0, %v1430
        %v1432 = vpop.f32.mrf.mxu0
        %v1433 = vpop.f32.mrf.mxu0
        %v1434 = vadd.f32 0.0, %v1433
        %v1435 = vpop.f32.mrf.mxu0
        %1436 = vmatprep.mubr.bf16.mxu0 %v1326
        %1437 = vmatmul.mubr.bf16.gmra.mxu0 %v1278
        %v1438 = vpop.f32.mrf.mxu0
        %v1439 = vadd.f32 0.0, %v1438
        %v1440 = vpop.f32.mrf.mxu0
        %v1441 = vpop.f32.mrf.mxu0
        %v1442 = vadd.f32 0.0, %v1441
        %v1443 = vpop.f32.mrf.mxu0
        %1444 = vmatprep.mubr.bf16.mxu0 %v1329
        %1445 = vmatmul.mubr.bf16.gmra.mxu0 %v1280
        %v1446 = vpop.f32.mrf.mxu0
        %v1447 = vadd.f32 0.0, %v1446
        %v1448 = vpop.f32.mrf.mxu0
        %v1449 = vpop.f32.mrf.mxu0
        %v1450 = vadd.f32 0.0, %v1449
        %v1451 = vpop.f32.mrf.mxu0
        %1452 = vmatprep.mubr.bf16.mxu0 %v1332
        %1453 = vmatmul.mubr.bf16.gmra.mxu0 %v1282
        %v1454 = vpop.f32.mrf.mxu0
        %v1455 = vadd.f32 0.0, %v1454
        %v1456 = vpop.f32.mrf.mxu0
        %v1457 = vpop.f32.mrf.mxu0
        %v1458 = vadd.f32 0.0, %v1457
        %v1459 = vpop.f32.mrf.mxu0
        %1460 = vmatprep.mubr.bf16.mxu0 %v1335
        %1461 = vmatmul.mubr.bf16.gmra.mxu0 %v1284
        %v1462 = vpop.f32.mrf.mxu0
        %v1463 = vadd.f32 0.0, %v1462
        %v1464 = vpop.f32.mrf.mxu0
        %v1465 = vpop.f32.mrf.mxu0
        %v1466 = vadd.f32 0.0, %v1465
        %v1467 = vpop.f32.mrf.mxu0
        %1468 = vmatprep.mubr.bf16.mxu0 %v1338
        %1469 = vmatmul.mubr.bf16.gmra.mxu0 %v1286
        %v1470 = vpop.f32.mrf.mxu0
        %v1471 = vadd.f32 0.0, %v1470
        %v1472 = vpop.f32.mrf.mxu0
        %v1473 = vpop.f32.mrf.mxu0
        %v1474 = vpop.f32.mrf.mxu0
        %1475 = vdwg.mxu0
        %v1476 = vmax.f32 %v1060, %v1375
        %v1477 = vmax.f32 %v1063, %v1378
        %v1478 = vmax.f32 %v1068, %v1383
        %v1479 = vmax.f32 %v1071, %v1386
        %v1480 = vmax.f32 %v1076, %v1391
        %v1481 = vmax.f32 %v1079, %v1394
        %v1482 = vmax.f32 %v1084, %v1399
        %v1483 = vmax.f32 %v1087, %v1402
        %v1484 = vmax.f32 %v1092, %v1407
        %v1485 = vmax.f32 %v1095, %v1410
        %v1486 = vmax.f32 %v1100, %v1415
        %v1487 = vmax.f32 %v1103, %v1418
        %v1488 = vmax.f32 %v1108, %v1423
        %v1489 = vmax.f32 %v1111, %v1426
        %v1490 = vmax.f32 %v1116, %v1431
        %v1491 = vmax.f32 %v1119, %v1434
        %v1492 = vmax.f32 %v1124, %v1439
        %v1493 = vmax.f32 %v1127, %v1442
        %v1494 = vmax.f32 %v1132, %v1447
        %v1495 = vmax.f32 %v1135, %v1450
        %v1496 = vmax.f32 %v1140, %v1455
        %v1497 = vmax.f32 %v1143, %v1458
        %v1498 = vmax.f32 %v1148, %v1463
        %v1499 = vmax.f32 %v1151, %v1466
        %v1500 = vmax.f32 %v1156, %v1471
        %s1501 = scalar_lea.vmem %s728, 400 [#allocation2]
        %v1502 = vld [vmem:[%s1501] sm:$0xff]
        %v1503 = vld [vmem:[%s1501 + $0x8] sm:$0xff]
        %v1504 = vld [vmem:[%s1501 + $0x10] sm:$0xff]
        %v1505 = vld [vmem:[%s1501 + $0x18] sm:$0xff]
        %v1506 = vld [vmem:[%s1501 + $0x20] sm:$0xff]
        %v1507 = vld [vmem:[%s1501 + $0x28] sm:$0xff]
        %v1508 = vld [vmem:[%s1501 + $0x30] sm:$0xff]
        %v1509 = vld [vmem:[%s1501 + $0x38] sm:$0xff]
        %v1510 = vld [vmem:[%s1501 + $0x40] sm:$0xff]
        %v1511 = vld [vmem:[%s1501 + $0x48] sm:$0xff]
        %v1512 = vld [vmem:[%s1501 + $0x50] sm:$0xff]
        %v1513 = vld [vmem:[%s1501 + $0x58] sm:$0xff]
        %v1514 = vld [vmem:[%s1501 + $0x60] sm:$0xff]
        %v1515 = vld [vmem:[%s1501 + $0x68] sm:$0xff]
        %v1516 = vld [vmem:[%s1501 + $0x70] sm:$0xff]
        %v1517 = vld [vmem:[%s1501 + $0x78] sm:$0xff]
        %v1518 = vld [vmem:[%s1501 + $0x80] sm:$0xff]
        %v1519 = vld [vmem:[%s1501 + $0x88] sm:$0xff]
        %v1520 = vld [vmem:[%s1501 + $0x90] sm:$0xff]
        %v1521 = vld [vmem:[%s1501 + $0x98] sm:$0xff]
        %v1522 = vld [vmem:[%s1501 + $0xa0] sm:$0xff]
        %v1523 = vld [vmem:[%s1501 + $0xa8] sm:$0xff]
        %v1524 = vld [vmem:[%s1501 + $0xb0] sm:$0xff]
        %v1525 = vld [vmem:[%s1501 + $0xb8] sm:$0xff]
        %v1526 = vld [vmem:[%s1501 + $0xc0] sm:$0xff]
        %v1552 = vunpack.c.l.b16 %v1502
        %v1553 = vunpack.c.h.b16 %v1502
        %v1554 = vunpack.c.l.b16 %v1503
        %v1555 = vunpack.c.h.b16 %v1503
        %v1556 = vunpack.c.l.b16 %v1504
        %v1557 = vunpack.c.h.b16 %v1504
        %v1558 = vunpack.c.l.b16 %v1505
        %v1559 = vunpack.c.h.b16 %v1505
        %v1560 = vunpack.c.l.b16 %v1506
        %v1561 = vunpack.c.h.b16 %v1506
        %v1562 = vunpack.c.l.b16 %v1507
        %v1563 = vunpack.c.h.b16 %v1507
        %v1564 = vunpack.c.l.b16 %v1508
        %v1565 = vunpack.c.h.b16 %v1508
        %v1566 = vunpack.c.l.b16 %v1509
        %v1567 = vunpack.c.h.b16 %v1509
        %v1568 = vunpack.c.l.b16 %v1510
        %v1569 = vunpack.c.h.b16 %v1510
        %v1570 = vunpack.c.l.b16 %v1511
        %v1571 = vunpack.c.h.b16 %v1511
        %v1572 = vunpack.c.l.b16 %v1512
        %v1573 = vunpack.c.h.b16 %v1512
        %v1574 = vunpack.c.l.b16 %v1513
        %v1575 = vunpack.c.h.b16 %v1513
        %v1576 = vunpack.c.l.b16 %v1514
        %v1577 = vunpack.c.h.b16 %v1514
        %v1578 = vunpack.c.l.b16 %v1515
        %v1579 = vunpack.c.h.b16 %v1515
        %v1580 = vunpack.c.l.b16 %v1516
        %v1581 = vunpack.c.h.b16 %v1516
        %v1582 = vunpack.c.l.b16 %v1517
        %v1583 = vunpack.c.h.b16 %v1517
        %v1584 = vunpack.c.l.b16 %v1518
        %v1585 = vunpack.c.h.b16 %v1518
        %v1586 = vunpack.c.l.b16 %v1519
        %v1587 = vunpack.c.h.b16 %v1519
        %v1588 = vunpack.c.l.b16 %v1520
        %v1589 = vunpack.c.h.b16 %v1520
        %v1590 = vunpack.c.l.b16 %v1521
        %v1591 = vunpack.c.h.b16 %v1521
        %v1592 = vunpack.c.l.b16 %v1522
        %v1593 = vunpack.c.h.b16 %v1522
        %v1594 = vunpack.c.l.b16 %v1523
        %v1595 = vunpack.c.h.b16 %v1523
        %v1596 = vunpack.c.l.b16 %v1524
        %v1597 = vunpack.c.h.b16 %v1524
        %v1598 = vunpack.c.l.b16 %v1525
        %v1599 = vunpack.c.h.b16 %v1525
        %v1600 = vunpack.c.l.b16 %v1526
        %v1601 = vunpack.c.h.b16 %v1526
        %v1602 = vpack.c.b16 %v1554, %v1552
        %v1603 = vpack.c.b16 %v1555, %v1553
        %v1604 = vpack.c.b16 %v1558, %v1556
        %v1605 = vpack.c.b16 %v1559, %v1557
        %v1606 = vpack.c.b16 %v1562, %v1560
        %v1607 = vpack.c.b16 %v1563, %v1561
        %v1608 = vpack.c.b16 %v1566, %v1564
        %v1609 = vpack.c.b16 %v1567, %v1565
        %v1610 = vpack.c.b16 %v1570, %v1568
        %v1611 = vpack.c.b16 %v1571, %v1569
        %v1612 = vpack.c.b16 %v1574, %v1572
        %v1613 = vpack.c.b16 %v1575, %v1573
        %v1614 = vpack.c.b16 %v1578, %v1576
        %v1615 = vpack.c.b16 %v1579, %v1577
        %v1616 = vpack.c.b16 %v1582, %v1580
        %v1617 = vpack.c.b16 %v1583, %v1581
        %v1618 = vpack.c.b16 %v1586, %v1584
        %v1619 = vpack.c.b16 %v1587, %v1585
        %v1620 = vpack.c.b16 %v1590, %v1588
        %v1621 = vpack.c.b16 %v1591, %v1589
        %v1622 = vpack.c.b16 %v1594, %v1592
        %v1623 = vpack.c.b16 %v1595, %v1593
        %v1624 = vpack.c.b16 %v1598, %v1596
        %v1625 = vpack.c.b16 %v1599, %v1597
        %v1626 = vpack.c.b16 %v1600, %v1600
        %v1627 = vpack.c.b16 %v1601, %v1601
        %v1642 = vsel %vm981, %v1603, 0
        %v1645 = vsel %vm981, %v1605, 0
        %v1648 = vsel %vm981, %v1607, 0
        %v1651 = vsel %vm981, %v1609, 0
        %v1654 = vsel %vm981, %v1611, 0
        %v1657 = vsel %vm981, %v1613, 0
        %v1660 = vsel %vm981, %v1615, 0
        %v1663 = vsel %vm981, %v1617, 0
        %v1666 = vsel %vm981, %v1619, 0
        %v1669 = vsel %vm981, %v1621, 0
        %v1672 = vsel %vm981, %v1623, 0
        %v1675 = vsel %vm981, %v1625, 0
        %v1678 = vsel %vm981, %v1627, 0
        %1680 = vmatprep.subr.bf16.mxu0 0
        %1681 = vmatpush1.bf16.msra.mxu0 %v969
        %1682 = vmatprep.subr.bf16.mxu0 0
        %1683 = vmatpush1.bf16.msra.mxu0 %v968
        %1684 = vmatprep.subr.bf16.mxu0 0
        %1685 = vmatpush1.bf16.msra.mxu0 %v967
        %1686 = vmatprep.subr.bf16.mxu0 0
        %1687 = vmatpush1.bf16.msra.mxu0 %v966
        %1688 = vmatprep.subr.bf16.mxu0 0
        %1689 = vmatpush1.bf16.msra.mxu0 %v965
        %1690 = vmatprep.subr.bf16.mxu0 0
        %1691 = vmatpush1.bf16.msra.mxu0 %v964
        %1692 = vmatprep.subr.bf16.mxu0 0
        %1693 = vmatpush1.bf16.msra.mxu0 %v963
        %1694 = vmatprep.subr.bf16.mxu0 0
        %1695 = vmatpush1.bf16.msra.mxu0 %v962
        %1696 = vmatprep.subr.bf16.mxu0 0
        %1697 = vmatpush2.bf16.msra.mxu0 0
        %1698 = vmatprep.subr.bf16.mxu0 0
        %1699 = vmatpush2.bf16.msra.mxu0 0
        %1700 = vmatprep.subr.bf16.mxu0 0
        %1701 = vmatpush2.bf16.msra.mxu0 0
        %1702 = vmatprep.subr.bf16.mxu0 0
        %1703 = vmatpush2.bf16.msra.mxu0 0
        %1704 = vmatprep.subr.bf16.mxu0 0
        %1705 = vmatpush2.bf16.msra.mxu0 0
        %1706 = vmatprep.subr.bf16.mxu0 0
        %1707 = vmatpush2.bf16.msra.mxu0 0
        %1708 = vmatprep.subr.bf16.mxu0 0
        %1709 = vmatpush2.bf16.msra.mxu0 %v1023
        %1710 = vmatprep.subr.bf16.mxu0 0
        %1711 = vmatpush2.bf16.msra.mxu0 %v970
        %1712 = vmatprep.mubr.bf16.mxu0 %v1642
        %1713 = vmatmul.mubr.bf16.gmra.mxu0 %v1602
        %v1714 = vpop.f32.mrf.mxu0
        %v1715 = vadd.f32 0.0, %v1714
        %v1716 = vpop.f32.mrf.mxu0
        %v1717 = vpop.f32.mrf.mxu0
        %v1718 = vadd.f32 0.0, %v1717
        %v1719 = vpop.f32.mrf.mxu0
        %1720 = vmatprep.mubr.bf16.mxu0 %v1645
        %1721 = vmatmul.mubr.bf16.gmra.mxu0 %v1604
        %v1722 = vpop.f32.mrf.mxu0
        %v1723 = vadd.f32 0.0, %v1722
        %v1724 = vpop.f32.mrf.mxu0
        %v1725 = vpop.f32.mrf.mxu0
        %v1726 = vadd.f32 0.0, %v1725
        %v1727 = vpop.f32.mrf.mxu0
        %1728 = vmatprep.mubr.bf16.mxu0 %v1648
        %1729 = vmatmul.mubr.bf16.gmra.mxu0 %v1606
        %v1730 = vpop.f32.mrf.mxu0
        %v1731 = vadd.f32 0.0, %v1730
        %v1732 = vpop.f32.mrf.mxu0
        %v1733 = vpop.f32.mrf.mxu0
        %v1734 = vadd.f32 0.0, %v1733
        %v1735 = vpop.f32.mrf.mxu0
        %1736 = vmatprep.mubr.bf16.mxu0 %v1651
        %1737 = vmatmul.mubr.bf16.gmra.mxu0 %v1608
        %v1738 = vpop.f32.mrf.mxu0
        %v1739 = vadd.f32 0.0, %v1738
        %v1740 = vpop.f32.mrf.mxu0
        %v1741 = vpop.f32.mrf.mxu0
        %v1742 = vadd.f32 0.0, %v1741
        %v1743 = vpop.f32.mrf.mxu0
        %1744 = vmatprep.mubr.bf16.mxu0 %v1654
        %1745 = vmatmul.mubr.bf16.gmra.mxu0 %v1610
        %v1746 = vpop.f32.mrf.mxu0
        %v1747 = vadd.f32 0.0, %v1746
        %v1748 = vpop.f32.mrf.mxu0
        %v1749 = vpop.f32.mrf.mxu0
        %v1750 = vadd.f32 0.0, %v1749
        %v1751 = vpop.f32.mrf.mxu0
        %1752 = vmatprep.mubr.bf16.mxu0 %v1657
        %1753 = vmatmul.mubr.bf16.gmra.mxu0 %v1612
        %v1754 = vpop.f32.mrf.mxu0
        %v1755 = vadd.f32 0.0, %v1754
        %v1756 = vpop.f32.mrf.mxu0
        %v1757 = vpop.f32.mrf.mxu0
        %v1758 = vadd.f32 0.0, %v1757
        %v1759 = vpop.f32.mrf.mxu0
        %1760 = vmatprep.mubr.bf16.mxu0 %v1660
        %1761 = vmatmul.mubr.bf16.gmra.mxu0 %v1614
        %v1762 = vpop.f32.mrf.mxu0
        %v1763 = vadd.f32 0.0, %v1762
        %v1764 = vpop.f32.mrf.mxu0
        %v1765 = vpop.f32.mrf.mxu0
        %v1766 = vadd.f32 0.0, %v1765
        %v1767 = vpop.f32.mrf.mxu0
        %1768 = vmatprep.mubr.bf16.mxu0 %v1663
        %1769 = vmatmul.mubr.bf16.gmra.mxu0 %v1616
        %v1770 = vpop.f32.mrf.mxu0
        %v1771 = vadd.f32 0.0, %v1770
        %v1772 = vpop.f32.mrf.mxu0
        %v1773 = vpop.f32.mrf.mxu0
        %v1774 = vadd.f32 0.0, %v1773
        %v1775 = vpop.f32.mrf.mxu0
        %1776 = vmatprep.mubr.bf16.mxu0 %v1666
        %1777 = vmatmul.mubr.bf16.gmra.mxu0 %v1618
        %v1778 = vpop.f32.mrf.mxu0
        %v1779 = vadd.f32 0.0, %v1778
        %v1780 = vpop.f32.mrf.mxu0
        %v1781 = vpop.f32.mrf.mxu0
        %v1782 = vadd.f32 0.0, %v1781
        %v1783 = vpop.f32.mrf.mxu0
        %1784 = vmatprep.mubr.bf16.mxu0 %v1669
        %1785 = vmatmul.mubr.bf16.gmra.mxu0 %v1620
        %v1786 = vpop.f32.mrf.mxu0
        %v1787 = vadd.f32 0.0, %v1786
        %v1788 = vpop.f32.mrf.mxu0
        %v1789 = vpop.f32.mrf.mxu0
        %v1790 = vadd.f32 0.0, %v1789
        %v1791 = vpop.f32.mrf.mxu0
        %1792 = vmatprep.mubr.bf16.mxu0 %v1672
        %1793 = vmatmul.mubr.bf16.gmra.mxu0 %v1622
        %v1794 = vpop.f32.mrf.mxu0
        %v1795 = vadd.f32 0.0, %v1794
        %v1796 = vpop.f32.mrf.mxu0
        %v1797 = vpop.f32.mrf.mxu0
        %v1798 = vadd.f32 0.0, %v1797
        %v1799 = vpop.f32.mrf.mxu0
        %1800 = vmatprep.mubr.bf16.mxu0 %v1675
        %1801 = vmatmul.mubr.bf16.gmra.mxu0 %v1624
        %v1802 = vpop.f32.mrf.mxu0
        %v1803 = vadd.f32 0.0, %v1802
        %v1804 = vpop.f32.mrf.mxu0
        %v1805 = vpop.f32.mrf.mxu0
        %v1806 = vadd.f32 0.0, %v1805
        %v1807 = vpop.f32.mrf.mxu0
        %1808 = vmatprep.mubr.bf16.mxu0 %v1678
        %1809 = vmatmul.mubr.bf16.gmra.mxu0 %v1626
        %v1810 = vpop.f32.mrf.mxu0
        %v1811 = vadd.f32 0.0, %v1810
        %v1812 = vpop.f32.mrf.mxu0
        %v1813 = vpop.f32.mrf.mxu0
        %v1814 = vpop.f32.mrf.mxu0
        %1815 = vdwg.mxu0
        %v1816 = vmax.f32 %v1476, %v1715
        %v1817 = vmax.f32 %v1477, %v1718
        %v1818 = vmax.f32 %v1478, %v1723
        %v1819 = vmax.f32 %v1479, %v1726
        %v1820 = vmax.f32 %v1480, %v1731
        %v1821 = vmax.f32 %v1481, %v1734
        %v1822 = vmax.f32 %v1482, %v1739
        %v1823 = vmax.f32 %v1483, %v1742
        %v1824 = vmax.f32 %v1484, %v1747
        %v1825 = vmax.f32 %v1485, %v1750
        %v1826 = vmax.f32 %v1486, %v1755
        %v1827 = vmax.f32 %v1487, %v1758
        %v1828 = vmax.f32 %v1488, %v1763
        %v1829 = vmax.f32 %v1489, %v1766
        %v1830 = vmax.f32 %v1490, %v1771
        %v1831 = vmax.f32 %v1491, %v1774
        %v1832 = vmax.f32 %v1492, %v1779
        %v1833 = vmax.f32 %v1493, %v1782
        %v1834 = vmax.f32 %v1494, %v1787
        %v1835 = vmax.f32 %v1495, %v1790
        %v1836 = vmax.f32 %v1496, %v1795
        %v1837 = vmax.f32 %v1497, %v1798
        %v1838 = vmax.f32 %v1498, %v1803
        %v1839 = vmax.f32 %v1499, %v1806
        %v1840 = vmax.f32 %v1500, %v1811
        %s1841 = scalar_lea.vmem %s728, 600 [#allocation2]
        %v1842 = vld [vmem:[%s1841] sm:$0xff]
        %v1843 = vld [vmem:[%s1841 + $0x8] sm:$0xff]
        %v1844 = vld [vmem:[%s1841 + $0x10] sm:$0xff]
        %v1845 = vld [vmem:[%s1841 + $0x18] sm:$0xff]
        %v1846 = vld [vmem:[%s1841 + $0x20] sm:$0xff]
        %v1847 = vld [vmem:[%s1841 + $0x28] sm:$0xff]
        %v1848 = vld [vmem:[%s1841 + $0x30] sm:$0xff]
        %v1849 = vld [vmem:[%s1841 + $0x38] sm:$0xff]
        %v1850 = vld [vmem:[%s1841 + $0x40] sm:$0xff]
        %v1851 = vld [vmem:[%s1841 + $0x48] sm:$0xff]
        %v1852 = vld [vmem:[%s1841 + $0x50] sm:$0xff]
        %v1853 = vld [vmem:[%s1841 + $0x58] sm:$0xff]
        %v1854 = vld [vmem:[%s1841 + $0x60] sm:$0xff]
        %v1855 = vld [vmem:[%s1841 + $0x68] sm:$0xff]
        %v1856 = vld [vmem:[%s1841 + $0x70] sm:$0xff]
        %v1857 = vld [vmem:[%s1841 + $0x78] sm:$0xff]
        %v1858 = vld [vmem:[%s1841 + $0x80] sm:$0xff]
        %v1859 = vld [vmem:[%s1841 + $0x88] sm:$0xff]
        %v1860 = vld [vmem:[%s1841 + $0x90] sm:$0xff]
        %v1861 = vld [vmem:[%s1841 + $0x98] sm:$0xff]
        %v1862 = vld [vmem:[%s1841 + $0xa0] sm:$0xff]
        %v1863 = vld [vmem:[%s1841 + $0xa8] sm:$0xff]
        %v1864 = vld [vmem:[%s1841 + $0xb0] sm:$0xff]
        %v1865 = vld [vmem:[%s1841 + $0xb8] sm:$0xff]
        %v1866 = vld [vmem:[%s1841 + $0xc0] sm:$0xff]
        %v1892 = vunpack.c.l.b16 %v1842
        %v1893 = vunpack.c.h.b16 %v1842
        %v1894 = vunpack.c.l.b16 %v1843
        %v1895 = vunpack.c.h.b16 %v1843
        %v1896 = vunpack.c.l.b16 %v1844
        %v1897 = vunpack.c.h.b16 %v1844
        %v1898 = vunpack.c.l.b16 %v1845
        %v1899 = vunpack.c.h.b16 %v1845
        %v1900 = vunpack.c.l.b16 %v1846
        %v1901 = vunpack.c.h.b16 %v1846
        %v1902 = vunpack.c.l.b16 %v1847
        %v1903 = vunpack.c.h.b16 %v1847
        %v1904 = vunpack.c.l.b16 %v1848
        %v1905 = vunpack.c.h.b16 %v1848
        %v1906 = vunpack.c.l.b16 %v1849
        %v1907 = vunpack.c.h.b16 %v1849
        %v1908 = vunpack.c.l.b16 %v1850
        %v1909 = vunpack.c.h.b16 %v1850
        %v1910 = vunpack.c.l.b16 %v1851
        %v1911 = vunpack.c.h.b16 %v1851
        %v1912 = vunpack.c.l.b16 %v1852
        %v1913 = vunpack.c.h.b16 %v1852
        %v1914 = vunpack.c.l.b16 %v1853
        %v1915 = vunpack.c.h.b16 %v1853
        %v1916 = vunpack.c.l.b16 %v1854
        %v1917 = vunpack.c.h.b16 %v1854
        %v1918 = vunpack.c.l.b16 %v1855
        %v1919 = vunpack.c.h.b16 %v1855
        %v1920 = vunpack.c.l.b16 %v1856
        %v1921 = vunpack.c.h.b16 %v1856
        %v1922 = vunpack.c.l.b16 %v1857
        %v1923 = vunpack.c.h.b16 %v1857
        %v1924 = vunpack.c.l.b16 %v1858
        %v1925 = vunpack.c.h.b16 %v1858
        %v1926 = vunpack.c.l.b16 %v1859
        %v1927 = vunpack.c.h.b16 %v1859
        %v1928 = vunpack.c.l.b16 %v1860
        %v1929 = vunpack.c.h.b16 %v1860
        %v1930 = vunpack.c.l.b16 %v1861
        %v1931 = vunpack.c.h.b16 %v1861
        %v1932 = vunpack.c.l.b16 %v1862
        %v1933 = vunpack.c.h.b16 %v1862
        %v1934 = vunpack.c.l.b16 %v1863
        %v1935 = vunpack.c.h.b16 %v1863
        %v1936 = vunpack.c.l.b16 %v1864
        %v1937 = vunpack.c.h.b16 %v1864
        %v1938 = vunpack.c.l.b16 %v1865
        %v1939 = vunpack.c.h.b16 %v1865
        %v1940 = vunpack.c.l.b16 %v1866
        %v1941 = vunpack.c.h.b16 %v1866
        %v1942 = vpack.c.b16 %v1894, %v1892
        %v1943 = vpack.c.b16 %v1895, %v1893
        %v1944 = vpack.c.b16 %v1898, %v1896
        %v1945 = vpack.c.b16 %v1899, %v1897
        %v1946 = vpack.c.b16 %v1902, %v1900
        %v1947 = vpack.c.b16 %v1903, %v1901
        %v1948 = vpack.c.b16 %v1906, %v1904
        %v1949 = vpack.c.b16 %v1907, %v1905
        %v1950 = vpack.c.b16 %v1910, %v1908
        %v1951 = vpack.c.b16 %v1911, %v1909
        %v1952 = vpack.c.b16 %v1914, %v1912
        %v1953 = vpack.c.b16 %v1915, %v1913
        %v1954 = vpack.c.b16 %v1918, %v1916
        %v1955 = vpack.c.b16 %v1919, %v1917
        %v1956 = vpack.c.b16 %v1922, %v1920
        %v1957 = vpack.c.b16 %v1923, %v1921
        %v1958 = vpack.c.b16 %v1926, %v1924
        %v1959 = vpack.c.b16 %v1927, %v1925
        %v1960 = vpack.c.b16 %v1930, %v1928
        %v1961 = vpack.c.b16 %v1931, %v1929
        %v1962 = vpack.c.b16 %v1934, %v1932
        %v1963 = vpack.c.b16 %v1935, %v1933
        %v1964 = vpack.c.b16 %v1938, %v1936
        %v1965 = vpack.c.b16 %v1939, %v1937
        %v1966 = vpack.c.b16 %v1940, %v1940
        %v1967 = vpack.c.b16 %v1941, %v1941
        %v1982 = vsel %vm981, %v1943, 0
        %v1985 = vsel %vm981, %v1945, 0
        %v1988 = vsel %vm981, %v1947, 0
        %v1991 = vsel %vm981, %v1949, 0
        %v1994 = vsel %vm981, %v1951, 0
        %v1997 = vsel %vm981, %v1953, 0
        %v2000 = vsel %vm981, %v1955, 0
        %v2003 = vsel %vm981, %v1957, 0
        %v2006 = vsel %vm981, %v1959, 0
        %v2009 = vsel %vm981, %v1961, 0
        %v2012 = vsel %vm981, %v1963, 0
        %v2015 = vsel %vm981, %v1965, 0
        %v2018 = vsel %vm981, %v1967, 0
        %2020 = vmatprep.subr.bf16.mxu0 0
        %2021 = vmatpush1.bf16.msra.mxu0 %v969
        %2022 = vmatprep.subr.bf16.mxu0 0
        %2023 = vmatpush1.bf16.msra.mxu0 %v968
        %2024 = vmatprep.subr.bf16.mxu0 0
        %2025 = vmatpush1.bf16.msra.mxu0 %v967
        %2026 = vmatprep.subr.bf16.mxu0 0
        %2027 = vmatpush1.bf16.msra.mxu0 %v966
        %2028 = vmatprep.subr.bf16.mxu0 0
        %2029 = vmatpush1.bf16.msra.mxu0 %v965
        %2030 = vmatprep.subr.bf16.mxu0 0
        %2031 = vmatpush1.bf16.msra.mxu0 %v964
        %2032 = vmatprep.subr.bf16.mxu0 0
        %2033 = vmatpush1.bf16.msra.mxu0 %v963
        %2034 = vmatprep.subr.bf16.mxu0 0
        %2035 = vmatpush1.bf16.msra.mxu0 %v962
        %2036 = vmatprep.subr.bf16.mxu0 0
        %2037 = vmatpush2.bf16.msra.mxu0 0
        %2038 = vmatprep.subr.bf16.mxu0 0
        %2039 = vmatpush2.bf16.msra.mxu0 0
        %2040 = vmatprep.subr.bf16.mxu0 0
        %2041 = vmatpush2.bf16.msra.mxu0 0
        %2042 = vmatprep.subr.bf16.mxu0 0
        %2043 = vmatpush2.bf16.msra.mxu0 0
        %2044 = vmatprep.subr.bf16.mxu0 0
        %2045 = vmatpush2.bf16.msra.mxu0 0
        %2046 = vmatprep.subr.bf16.mxu0 0
        %2047 = vmatpush2.bf16.msra.mxu0 0
        %2048 = vmatprep.subr.bf16.mxu0 0
        %2049 = vmatpush2.bf16.msra.mxu0 %v1023
        %2050 = vmatprep.subr.bf16.mxu0 0
        %2051 = vmatpush2.bf16.msra.mxu0 %v970
        %2052 = vmatprep.mubr.bf16.mxu0 %v1982
        %2053 = vmatmul.mubr.bf16.gmra.mxu0 %v1942
        %v2054 = vpop.f32.mrf.mxu0
        %v2055 = vadd.f32 0.0, %v2054
        %v2056 = vpop.f32.mrf.mxu0
        %v2057 = vpop.f32.mrf.mxu0
        %v2058 = vadd.f32 0.0, %v2057
        %v2059 = vpop.f32.mrf.mxu0
        %2060 = vmatprep.mubr.bf16.mxu0 %v1985
        %2061 = vmatmul.mubr.bf16.gmra.mxu0 %v1944
        %v2062 = vpop.f32.mrf.mxu0
        %v2063 = vadd.f32 0.0, %v2062
        %v2064 = vpop.f32.mrf.mxu0
        %v2065 = vpop.f32.mrf.mxu0
        %v2066 = vadd.f32 0.0, %v2065
        %v2067 = vpop.f32.mrf.mxu0
        %2068 = vmatprep.mubr.bf16.mxu0 %v1988
        %2069 = vmatmul.mubr.bf16.gmra.mxu0 %v1946
        %v2070 = vpop.f32.mrf.mxu0
        %v2071 = vadd.f32 0.0, %v2070
        %v2072 = vpop.f32.mrf.mxu0
        %v2073 = vpop.f32.mrf.mxu0
        %v2074 = vadd.f32 0.0, %v2073
        %v2075 = vpop.f32.mrf.mxu0
        %2076 = vmatprep.mubr.bf16.mxu0 %v1991
        %2077 = vmatmul.mubr.bf16.gmra.mxu0 %v1948
        %v2078 = vpop.f32.mrf.mxu0
        %v2079 = vadd.f32 0.0, %v2078
        %v2080 = vpop.f32.mrf.mxu0
        %v2081 = vpop.f32.mrf.mxu0
        %v2082 = vadd.f32 0.0, %v2081
        %v2083 = vpop.f32.mrf.mxu0
        %2084 = vmatprep.mubr.bf16.mxu0 %v1994
        %2085 = vmatmul.mubr.bf16.gmra.mxu0 %v1950
        %v2086 = vpop.f32.mrf.mxu0
        %v2087 = vadd.f32 0.0, %v2086
        %v2088 = vpop.f32.mrf.mxu0
        %v2089 = vpop.f32.mrf.mxu0
        %v2090 = vadd.f32 0.0, %v2089
        %v2091 = vpop.f32.mrf.mxu0
        %2092 = vmatprep.mubr.bf16.mxu0 %v1997
        %2093 = vmatmul.mubr.bf16.gmra.mxu0 %v1952
        %v2094 = vpop.f32.mrf.mxu0
        %v2095 = vadd.f32 0.0, %v2094
        %v2096 = vpop.f32.mrf.mxu0
        %v2097 = vpop.f32.mrf.mxu0
        %v2098 = vadd.f32 0.0, %v2097
        %v2099 = vpop.f32.mrf.mxu0
        %2100 = vmatprep.mubr.bf16.mxu0 %v2000
        %2101 = vmatmul.mubr.bf16.gmra.mxu0 %v1954
        %v2102 = vpop.f32.mrf.mxu0
        %v2103 = vadd.f32 0.0, %v2102
        %v2104 = vpop.f32.mrf.mxu0
        %v2105 = vpop.f32.mrf.mxu0
        %v2106 = vadd.f32 0.0, %v2105
        %v2107 = vpop.f32.mrf.mxu0
        %2108 = vmatprep.mubr.bf16.mxu0 %v2003
        %2109 = vmatmul.mubr.bf16.gmra.mxu0 %v1956
        %v2110 = vpop.f32.mrf.mxu0
        %v2111 = vadd.f32 0.0, %v2110
        %v2112 = vpop.f32.mrf.mxu0
        %v2113 = vpop.f32.mrf.mxu0
        %v2114 = vadd.f32 0.0, %v2113
        %v2115 = vpop.f32.mrf.mxu0
        %2116 = vmatprep.mubr.bf16.mxu0 %v2006
        %2117 = vmatmul.mubr.bf16.gmra.mxu0 %v1958
        %v2118 = vpop.f32.mrf.mxu0
        %v2119 = vadd.f32 0.0, %v2118
        %v2120 = vpop.f32.mrf.mxu0
        %v2121 = vpop.f32.mrf.mxu0
        %v2122 = vadd.f32 0.0, %v2121
        %v2123 = vpop.f32.mrf.mxu0
        %2124 = vmatprep.mubr.bf16.mxu0 %v2009
        %2125 = vmatmul.mubr.bf16.gmra.mxu0 %v1960
        %v2126 = vpop.f32.mrf.mxu0
        %v2127 = vadd.f32 0.0, %v2126
        %v2128 = vpop.f32.mrf.mxu0
        %v2129 = vpop.f32.mrf.mxu0
        %v2130 = vadd.f32 0.0, %v2129
        %v2131 = vpop.f32.mrf.mxu0
        %2132 = vmatprep.mubr.bf16.mxu0 %v2012
        %2133 = vmatmul.mubr.bf16.gmra.mxu0 %v1962
        %v2134 = vpop.f32.mrf.mxu0
        %v2135 = vadd.f32 0.0, %v2134
        %v2136 = vpop.f32.mrf.mxu0
        %v2137 = vpop.f32.mrf.mxu0
        %v2138 = vadd.f32 0.0, %v2137
        %v2139 = vpop.f32.mrf.mxu0
        %2140 = vmatprep.mubr.bf16.mxu0 %v2015
        %2141 = vmatmul.mubr.bf16.gmra.mxu0 %v1964
        %v2142 = vpop.f32.mrf.mxu0
        %v2143 = vadd.f32 0.0, %v2142
        %v2144 = vpop.f32.mrf.mxu0
        %v2145 = vpop.f32.mrf.mxu0
        %v2146 = vadd.f32 0.0, %v2145
        %v2147 = vpop.f32.mrf.mxu0
        %2148 = vmatprep.mubr.bf16.mxu0 %v2018
        %2149 = vmatmul.mubr.bf16.gmra.mxu0 %v1966
        %v2150 = vpop.f32.mrf.mxu0
        %v2151 = vadd.f32 0.0, %v2150
        %v2152 = vpop.f32.mrf.mxu0
        %v2153 = vpop.f32.mrf.mxu0
        %v2154 = vpop.f32.mrf.mxu0
        %2155 = vdwg.mxu0
        %v2156 = vmax.f32 %v1816, %v2055
        %v2157 = vmax.f32 %v1817, %v2058
        %v2158 = vmax.f32 %v1818, %v2063
        %v2159 = vmax.f32 %v1819, %v2066
        %v2160 = vmax.f32 %v1820, %v2071
        %v2161 = vmax.f32 %v1821, %v2074
        %v2162 = vmax.f32 %v1822, %v2079
        %v2163 = vmax.f32 %v1823, %v2082
        %v2164 = vmax.f32 %v1824, %v2087
        %v2165 = vmax.f32 %v1825, %v2090
        %v2166 = vmax.f32 %v1826, %v2095
        %v2167 = vmax.f32 %v1827, %v2098
        %v2168 = vmax.f32 %v1828, %v2103
        %v2169 = vmax.f32 %v1829, %v2106
        %v2170 = vmax.f32 %v1830, %v2111
        %v2171 = vmax.f32 %v1831, %v2114
        %v2172 = vmax.f32 %v1832, %v2119
        %v2173 = vmax.f32 %v1833, %v2122
        %v2174 = vmax.f32 %v1834, %v2127
        %v2175 = vmax.f32 %v1835, %v2130
        %v2176 = vmax.f32 %v1836, %v2135
        %v2177 = vmax.f32 %v1837, %v2138
        %v2178 = vmax.f32 %v1838, %v2143
        %v2179 = vmax.f32 %v1839, %v2146
        %v2180 = vmax.f32 %v1840, %v2151
        %v2181 = vld [vmem:[%s2] sm:$0x1]
        %v2183 = vlaneseq
        %v2184 = vshrl.u32 %v2183, 7
        %v2185 = vsub.s32 0, %v2184
        %v2186 = vrot.slane %v2181, %v2185
        %v2188 = vadd.f32 %v2156, %v2186
        %v2189 = vadd.f32 %v2157, %v2186
        %v2190 = vadd.f32 %v2158, %v2186
        %v2191 = vadd.f32 %v2159, %v2186
        %v2192 = vadd.f32 %v2160, %v2186
        %v2193 = vadd.f32 %v2161, %v2186
        %v2194 = vadd.f32 %v2162, %v2186
        %v2195 = vadd.f32 %v2163, %v2186
        %v2196 = vadd.f32 %v2164, %v2186
        %v2197 = vadd.f32 %v2165, %v2186
        %v2198 = vadd.f32 %v2166, %v2186
        %v2199 = vadd.f32 %v2167, %v2186
        %v2200 = vadd.f32 %v2168, %v2186
        %v2201 = vadd.f32 %v2169, %v2186
        %v2202 = vadd.f32 %v2170, %v2186
        %v2203 = vadd.f32 %v2171, %v2186
        %v2204 = vadd.f32 %v2172, %v2186
        %v2205 = vadd.f32 %v2173, %v2186
        %v2206 = vadd.f32 %v2174, %v2186
        %v2207 = vadd.f32 %v2175, %v2186
        %v2208 = vadd.f32 %v2176, %v2186
        %v2209 = vadd.f32 %v2177, %v2186
        %v2210 = vadd.f32 %v2178, %v2186
        %v2211 = vadd.f32 %v2179, %v2186
        %v2212 = vadd.f32 %v2180, %v2186
        %v2213 = vmax.f32 %v2188, 0.0
        %v2214 = vmax.f32 %v2189, 0.0
        %v2215 = vmax.f32 %v2190, 0.0
        %v2216 = vmax.f32 %v2191, 0.0
        %v2217 = vmax.f32 %v2192, 0.0
        %v2218 = vmax.f32 %v2193, 0.0
        %v2219 = vmax.f32 %v2194, 0.0
        %v2220 = vmax.f32 %v2195, 0.0
        %v2221 = vmax.f32 %v2196, 0.0
        %v2222 = vmax.f32 %v2197, 0.0
        %v2223 = vmax.f32 %v2198, 0.0
        %v2224 = vmax.f32 %v2199, 0.0
        %v2225 = vmax.f32 %v2200, 0.0
        %v2226 = vmax.f32 %v2201, 0.0
        %v2227 = vmax.f32 %v2202, 0.0
        %v2228 = vmax.f32 %v2203, 0.0
        %v2229 = vmax.f32 %v2204, 0.0
        %v2230 = vmax.f32 %v2205, 0.0
        %v2231 = vmax.f32 %v2206, 0.0
        %v2232 = vmax.f32 %v2207, 0.0
        %v2233 = vmax.f32 %v2208, 0.0
        %v2234 = vmax.f32 %v2209, 0.0
        %v2235 = vmax.f32 %v2210, 0.0
        %v2236 = vmax.f32 %v2211, 0.0
        %v2237 = vmax.f32 %v2212, 0.0
        %v2238 = vpack.c.bf16 %v2213, %v2213
        %v2239 = vpack.c.bf16 %v2214, %v2214
        %v2240 = vpack.c.bf16 %v2215, %v2215
        %v2241 = vpack.c.bf16 %v2216, %v2216
        %v2242 = vpack.c.bf16 %v2217, %v2217
        %v2243 = vpack.c.bf16 %v2218, %v2218
        %v2244 = vpack.c.bf16 %v2219, %v2219
        %v2245 = vpack.c.bf16 %v2220, %v2220
        %v2246 = vpack.c.bf16 %v2221, %v2221
        %v2247 = vpack.c.bf16 %v2222, %v2222
        %v2248 = vpack.c.bf16 %v2223, %v2223
        %v2249 = vpack.c.bf16 %v2224, %v2224
        %v2250 = vpack.c.bf16 %v2225, %v2225
        %v2251 = vpack.c.bf16 %v2226, %v2226
        %v2252 = vpack.c.bf16 %v2227, %v2227
        %v2253 = vpack.c.bf16 %v2228, %v2228
        %v2254 = vpack.c.bf16 %v2229, %v2229
        %v2255 = vpack.c.bf16 %v2230, %v2230
        %v2256 = vpack.c.bf16 %v2231, %v2231
        %v2257 = vpack.c.bf16 %v2232, %v2232
        %v2258 = vpack.c.bf16 %v2233, %v2233
        %v2259 = vpack.c.bf16 %v2234, %v2234
        %v2260 = vpack.c.bf16 %v2235, %v2235
        %v2261 = vpack.c.bf16 %v2236, %v2236
        %v2262 = vpack.c.bf16 %v2237, %v2237
        %v2263 = vld [vmem:[%s3] sm:$0xf]
        %v2264 = vld [vmem:[%s3 + $0x4] sm:$0xf]
        %v2265 = vld [vmem:[%s3 + $0x8] sm:$0xf]
        %v2266 = vld [vmem:[%s3 + $0xc] sm:$0xf]
        %v2267 = vld [vmem:[%s3 + $0x10] sm:$0xf]
        %v2268 = vld [vmem:[%s3 + $0x14] sm:$0xf]
        %v2269 = vld [vmem:[%s3 + $0x18] sm:$0xf]
        %v2270 = vld [vmem:[%s3 + $0x1c] sm:$0xf]
        %v2271 = vld [vmem:[%s3 + $0x20] sm:$0xf]
        %v2272 = vld [vmem:[%s3 + $0x24] sm:$0xf]
        %v2273 = vld [vmem:[%s3 + $0x28] sm:$0xf]
        %v2274 = vld [vmem:[%s3 + $0x2c] sm:$0xf]
        %v2275 = vld [vmem:[%s3 + $0x30] sm:$0xf]
        %v2276 = vld [vmem:[%s3 + $0x34] sm:$0xf]
        %v2277 = vld [vmem:[%s3 + $0x38] sm:$0xf]
        %v2278 = vld [vmem:[%s3 + $0x3c] sm:$0xf]
        %v2279 = vld [vmem:[%s3 + $0x40] sm:$0xf]
        %v2280 = vld [vmem:[%s3 + $0x44] sm:$0xf]
        %v2281 = vld [vmem:[%s3 + $0x48] sm:$0xf]
        %v2282 = vld [vmem:[%s3 + $0x4c] sm:$0xf]
        %v2283 = vld [vmem:[%s3 + $0x50] sm:$0xf]
        %v2284 = vld [vmem:[%s3 + $0x54] sm:$0xf]
        %v2285 = vld [vmem:[%s3 + $0x58] sm:$0xf]
        %v2286 = vld [vmem:[%s3 + $0x5c] sm:$0xf]
        %v2287 = vld [vmem:[%s3 + $0x60] sm:$0xf]
        %v2288 = vld [vmem:[%s3 + $0x64] sm:$0xf]
        %v2289 = vld [vmem:[%s3 + $0x68] sm:$0xf]
        %v2290 = vld [vmem:[%s3 + $0x6c] sm:$0xf]
        %v2291 = vld [vmem:[%s3 + $0x70] sm:$0xf]
        %v2292 = vld [vmem:[%s3 + $0x74] sm:$0xf]
        %v2293 = vld [vmem:[%s3 + $0x78] sm:$0xf]
        %v2294 = vld [vmem:[%s3 + $0x7c] sm:$0xf]
        %v2295 = vld [vmem:[%s3 + $0x80] sm:$0xf]
        %v2296 = vld [vmem:[%s3 + $0x84] sm:$0xf]
        %v2297 = vld [vmem:[%s3 + $0x88] sm:$0xf]
        %v2298 = vld [vmem:[%s3 + $0x8c] sm:$0xf]
        %v2299 = vld [vmem:[%s3 + $0x90] sm:$0xf]
        %v2300 = vld [vmem:[%s3 + $0x94] sm:$0xf]
        %v2301 = vld [vmem:[%s3 + $0x98] sm:$0xf]
        %v2302 = vld [vmem:[%s3 + $0x9c] sm:$0xf]
        %v2303 = vld [vmem:[%s3 + $0xa0] sm:$0xf]
        %v2304 = vld [vmem:[%s3 + $0xa4] sm:$0xf]
        %v2305 = vld [vmem:[%s3 + $0xa8] sm:$0xf]
        %v2306 = vld [vmem:[%s3 + $0xac] sm:$0xf]
        %v2307 = vld [vmem:[%s3 + $0xb0] sm:$0xf]
        %v2308 = vld [vmem:[%s3 + $0xb4] sm:$0xf]
        %v2309 = vld [vmem:[%s3 + $0xb8] sm:$0xf]
        %v2310 = vld [vmem:[%s3 + $0xbc] sm:$0xf]
        %v2311 = vld [vmem:[%s3 + $0xc0] sm:$0xf]
        %v2312 = vld [vmem:[%s3 + $0xc4] sm:$0xf]
        %v2313 = vld [vmem:[%s3 + $0xc8] sm:$0xf]
        %v2314 = vld [vmem:[%s3 + $0xcc] sm:$0xf]
        %v2315 = vld [vmem:[%s3 + $0xd0] sm:$0xf]
        %v2316 = vld [vmem:[%s3 + $0xd4] sm:$0xf]
        %v2317 = vld [vmem:[%s3 + $0xd8] sm:$0xf]
        %v2318 = vld [vmem:[%s3 + $0xdc] sm:$0xf]
        %v2319 = vld [vmem:[%s3 + $0xe0] sm:$0xf]
        %v2320 = vld [vmem:[%s3 + $0xe4] sm:$0xf]
        %v2321 = vld [vmem:[%s3 + $0xe8] sm:$0xf]
        %v2322 = vld [vmem:[%s3 + $0xec] sm:$0xf]
        %v2323 = vld [vmem:[%s3 + $0xf0] sm:$0xf]
        %v2324 = vld [vmem:[%s3 + $0xf4] sm:$0xf]
        %v2325 = vld [vmem:[%s3 + $0xf8] sm:$0xf]
        %v2326 = vld [vmem:[%s3 + $0xfc] sm:$0xf]
        %v2327 = vld [vmem:[%s3 + $0x100] sm:$0xf]
        %v2328 = vld [vmem:[%s3 + $0x104] sm:$0xf]
        %v2329 = vld [vmem:[%s3 + $0x108] sm:$0xf]
        %v2330 = vld [vmem:[%s3 + $0x10c] sm:$0xf]
        %v2331 = vld [vmem:[%s3 + $0x110] sm:$0xf]
        %v2332 = vld [vmem:[%s3 + $0x114] sm:$0xf]
        %v2333 = vld [vmem:[%s3 + $0x118] sm:$0xf]
        %v2334 = vld [vmem:[%s3 + $0x11c] sm:$0xf]
        %v2335 = vld [vmem:[%s3 + $0x120] sm:$0xf]
        %v2336 = vld [vmem:[%s3 + $0x124] sm:$0xf]
        %v2337 = vld [vmem:[%s3 + $0x128] sm:$0xf]
        %v2338 = vld [vmem:[%s3 + $0x12c] sm:$0xf]
        %v2339 = vld [vmem:[%s3 + $0x130] sm:$0xf]
        %v2340 = vld [vmem:[%s3 + $0x134] sm:$0xf]
        %v2341 = vld [vmem:[%s3 + $0x138] sm:$0xf]
        %v2342 = vld [vmem:[%s3 + $0x13c] sm:$0xf]
        %v2343 = vld [vmem:[%s3 + $0x140] sm:$0xf]
        %v2344 = vld [vmem:[%s3 + $0x144] sm:$0xf]
        %v2345 = vld [vmem:[%s3 + $0x148] sm:$0xf]
        %v2346 = vld [vmem:[%s3 + $0x14c] sm:$0xf]
        %v2347 = vld [vmem:[%s3 + $0x150] sm:$0xf]
        %v2348 = vld [vmem:[%s3 + $0x154] sm:$0xf]
        %v2349 = vld [vmem:[%s3 + $0x158] sm:$0xf]
        %v2350 = vld [vmem:[%s3 + $0x15c] sm:$0xf]
        %v2351 = vld [vmem:[%s3 + $0x160] sm:$0xf]
        %v2352 = vld [vmem:[%s3 + $0x164] sm:$0xf]
        %v2353 = vld [vmem:[%s3 + $0x168] sm:$0xf]
        %v2354 = vld [vmem:[%s3 + $0x16c] sm:$0xf]
        %v2355 = vld [vmem:[%s3 + $0x170] sm:$0xf]
        %v2356 = vld [vmem:[%s3 + $0x174] sm:$0xf]
        %v2357 = vld [vmem:[%s3 + $0x178] sm:$0xf]
        %v2358 = vld [vmem:[%s3 + $0x17c] sm:$0xf]
        %v2359 = vld [vmem:[%s3 + $0x180] sm:$0xf]
        %v2360 = vld [vmem:[%s3 + $0x184] sm:$0xf]
        %v2361 = vld [vmem:[%s3 + $0x188] sm:$0xf]
        %v2362 = vld [vmem:[%s3 + $0x18c] sm:$0xf]
        %v2363 = vld [vmem:[%s3 + $0x190] sm:$0xf]
        %v2364 = vld [vmem:[%s3 + $0x194] sm:$0xf]
        %v2365 = vld [vmem:[%s3 + $0x198] sm:$0xf]
        %v2366 = vld [vmem:[%s3 + $0x19c] sm:$0xf]
        %v2367 = vld [vmem:[%s3 + $0x1a0] sm:$0xf]
        %v2368 = vld [vmem:[%s3 + $0x1a4] sm:$0xf]
        %v2369 = vld [vmem:[%s3 + $0x1a8] sm:$0xf]
        %v2370 = vld [vmem:[%s3 + $0x1ac] sm:$0xf]
        %v2371 = vld [vmem:[%s3 + $0x1b0] sm:$0xf]
        %v2372 = vld [vmem:[%s3 + $0x1b4] sm:$0xf]
        %v2373 = vld [vmem:[%s3 + $0x1b8] sm:$0xf]
        %v2374 = vld [vmem:[%s3 + $0x1bc] sm:$0xf]
        %v2375 = vld [vmem:[%s3 + $0x1c0] sm:$0xf]
        %v2376 = vld [vmem:[%s3 + $0x1c4] sm:$0xf]
        %v2377 = vld [vmem:[%s3 + $0x1c8] sm:$0xf]
        %v2378 = vld [vmem:[%s3 + $0x1cc] sm:$0xf]
        %v2379 = vld [vmem:[%s3 + $0x1d0] sm:$0xf]
        %v2380 = vld [vmem:[%s3 + $0x1d4] sm:$0xf]
        %v2381 = vld [vmem:[%s3 + $0x1d8] sm:$0xf]
        %v2382 = vld [vmem:[%s3 + $0x1dc] sm:$0xf]
        %v2383 = vld [vmem:[%s3 + $0x1e0] sm:$0xf]
        %v2384 = vld [vmem:[%s3 + $0x1e4] sm:$0xf]
        %v2385 = vld [vmem:[%s3 + $0x1e8] sm:$0xf]
        %v2386 = vld [vmem:[%s3 + $0x1ec] sm:$0xf]
        %v2387 = vld [vmem:[%s3 + $0x1f0] sm:$0xf]
        %v2388 = vld [vmem:[%s3 + $0x1f4] sm:$0xf]
        %v2389 = vld [vmem:[%s3 + $0x1f8] sm:$0xf]
        %v2390 = vld [vmem:[%s3 + $0x1fc] sm:$0xf]
        %v2391 = vld [vmem:[%s3 + $0x200] sm:$0xf]
        %v2392 = vld [vmem:[%s3 + $0x204] sm:$0xf]
        %v2393 = vld [vmem:[%s3 + $0x208] sm:$0xf]
        %v2394 = vld [vmem:[%s3 + $0x20c] sm:$0xf]
        %v2395 = vld [vmem:[%s3 + $0x210] sm:$0xf]
        %v2396 = vld [vmem:[%s3 + $0x214] sm:$0xf]
        %v2397 = vld [vmem:[%s3 + $0x218] sm:$0xf]
        %v2398 = vld [vmem:[%s3 + $0x21c] sm:$0xf]
        %v2399 = vld [vmem:[%s3 + $0x220] sm:$0xf]
        %v2400 = vld [vmem:[%s3 + $0x224] sm:$0xf]
        %v2401 = vld [vmem:[%s3 + $0x228] sm:$0xf]
        %v2402 = vld [vmem:[%s3 + $0x22c] sm:$0xf]
        %v2403 = vld [vmem:[%s3 + $0x230] sm:$0xf]
        %v2404 = vld [vmem:[%s3 + $0x234] sm:$0xf]
        %v2405 = vld [vmem:[%s3 + $0x238] sm:$0xf]
        %v2406 = vld [vmem:[%s3 + $0x23c] sm:$0xf]
        %v2407 = vld [vmem:[%s3 + $0x240] sm:$0xf]
        %v2408 = vld [vmem:[%s3 + $0x244] sm:$0xf]
        %v2409 = vld [vmem:[%s3 + $0x248] sm:$0xf]
        %v2410 = vld [vmem:[%s3 + $0x24c] sm:$0xf]
        %v2411 = vld [vmem:[%s3 + $0x250] sm:$0xf]
        %v2412 = vld [vmem:[%s3 + $0x254] sm:$0xf]
        %v2413 = vld [vmem:[%s3 + $0x258] sm:$0xf]
        %v2414 = vld [vmem:[%s3 + $0x25c] sm:$0xf]
        %v2415 = vld [vmem:[%s3 + $0x260] sm:$0xf]
        %v2416 = vld [vmem:[%s3 + $0x264] sm:$0xf]
        %v2417 = vld [vmem:[%s3 + $0x268] sm:$0xf]
        %v2418 = vld [vmem:[%s3 + $0x26c] sm:$0xf]
        %v2419 = vld [vmem:[%s3 + $0x270] sm:$0xf]
        %v2420 = vld [vmem:[%s3 + $0x274] sm:$0xf]
        %v2421 = vld [vmem:[%s3 + $0x278] sm:$0xf]
        %v2422 = vld [vmem:[%s3 + $0x27c] sm:$0xf]
        %v2423 = vld [vmem:[%s3 + $0x280] sm:$0xf]
        %v2424 = vld [vmem:[%s3 + $0x284] sm:$0xf]
        %v2425 = vld [vmem:[%s3 + $0x288] sm:$0xf]
        %v2426 = vld [vmem:[%s3 + $0x28c] sm:$0xf]
        %v2427 = vld [vmem:[%s3 + $0x290] sm:$0xf]
        %v2428 = vld [vmem:[%s3 + $0x294] sm:$0xf]
        %v2429 = vld [vmem:[%s3 + $0x298] sm:$0xf]
        %v2430 = vld [vmem:[%s3 + $0x29c] sm:$0xf]
        %v2431 = vld [vmem:[%s3 + $0x2a0] sm:$0xf]
        %v2432 = vld [vmem:[%s3 + $0x2a4] sm:$0xf]
        %v2433 = vld [vmem:[%s3 + $0x2a8] sm:$0xf]
        %v2434 = vld [vmem:[%s3 + $0x2ac] sm:$0xf]
        %v2435 = vld [vmem:[%s3 + $0x2b0] sm:$0xf]
        %v2436 = vld [vmem:[%s3 + $0x2b4] sm:$0xf]
        %v2437 = vld [vmem:[%s3 + $0x2b8] sm:$0xf]
        %v2438 = vld [vmem:[%s3 + $0x2bc] sm:$0xf]
        %v2439 = vld [vmem:[%s3 + $0x2c0] sm:$0xf]
        %v2440 = vld [vmem:[%s3 + $0x2c4] sm:$0xf]
        %v2441 = vld [vmem:[%s3 + $0x2c8] sm:$0xf]
        %v2442 = vld [vmem:[%s3 + $0x2cc] sm:$0xf]
        %v2443 = vld [vmem:[%s3 + $0x2d0] sm:$0xf]
        %v2444 = vld [vmem:[%s3 + $0x2d4] sm:$0xf]
        %v2445 = vld [vmem:[%s3 + $0x2d8] sm:$0xf]
        %v2446 = vld [vmem:[%s3 + $0x2dc] sm:$0xf]
        %v2447 = vld [vmem:[%s3 + $0x2e0] sm:$0xf]
        %v2448 = vld [vmem:[%s3 + $0x2e4] sm:$0xf]
        %v2449 = vld [vmem:[%s3 + $0x2e8] sm:$0xf]
        %v2450 = vld [vmem:[%s3 + $0x2ec] sm:$0xf]
        %v2451 = vld [vmem:[%s3 + $0x2f0] sm:$0xf]
        %v2452 = vld [vmem:[%s3 + $0x2f4] sm:$0xf]
        %v2453 = vld [vmem:[%s3 + $0x2f8] sm:$0xf]
        %v2454 = vld [vmem:[%s3 + $0x2fc] sm:$0xf]
        %v2455 = vld [vmem:[%s3 + $0x300] sm:$0xf]
        %v2456 = vld [vmem:[%s3 + $0x304] sm:$0xf]
        %v2457 = vld [vmem:[%s3 + $0x308] sm:$0xf]
        %v2458 = vld [vmem:[%s3 + $0x30c] sm:$0xf]
        %v2459 = vld [vmem:[%s3 + $0x310] sm:$0xf]
        %v2460 = vld [vmem:[%s3 + $0x314] sm:$0xf]
        %v2461 = vld [vmem:[%s3 + $0x318] sm:$0xf]
        %v2462 = vld [vmem:[%s3 + $0x31c] sm:$0xf]
        %v2463 = vld [vmem:[%s3 + $0x320] sm:$0xf]
        %v2464 = vld [vmem:[%s3 + $0x324] sm:$0xf]
        %v2465 = vld [vmem:[%s3 + $0x328] sm:$0xf]
        %v2466 = vld [vmem:[%s3 + $0x32c] sm:$0xf]
        %v2467 = vld [vmem:[%s3 + $0x330] sm:$0xf]
        %v2468 = vld [vmem:[%s3 + $0x334] sm:$0xf]
        %v2469 = vld [vmem:[%s3 + $0x338] sm:$0xf]
        %v2470 = vld [vmem:[%s3 + $0x33c] sm:$0xf]
        %v2471 = vld [vmem:[%s3 + $0x340] sm:$0xf]
        %v2472 = vld [vmem:[%s3 + $0x344] sm:$0xf]
        %v2473 = vld [vmem:[%s3 + $0x348] sm:$0xf]
        %v2474 = vld [vmem:[%s3 + $0x34c] sm:$0xf]
        %v2475 = vld [vmem:[%s3 + $0x350] sm:$0xf]
        %v2476 = vld [vmem:[%s3 + $0x354] sm:$0xf]
        %v2477 = vld [vmem:[%s3 + $0x358] sm:$0xf]
        %v2478 = vld [vmem:[%s3 + $0x35c] sm:$0xf]
        %v2479 = vld [vmem:[%s3 + $0x360] sm:$0xf]
        %v2480 = vld [vmem:[%s3 + $0x364] sm:$0xf]
        %v2481 = vld [vmem:[%s3 + $0x368] sm:$0xf]
        %v2482 = vld [vmem:[%s3 + $0x36c] sm:$0xf]
        %v2483 = vld [vmem:[%s3 + $0x370] sm:$0xf]
        %v2484 = vld [vmem:[%s3 + $0x374] sm:$0xf]
        %v2485 = vld [vmem:[%s3 + $0x378] sm:$0xf]
        %v2486 = vld [vmem:[%s3 + $0x37c] sm:$0xf]
        %v2487 = vld [vmem:[%s3 + $0x380] sm:$0xf]
        %v2488 = vld [vmem:[%s3 + $0x384] sm:$0xf]
        %v2489 = vld [vmem:[%s3 + $0x388] sm:$0xf]
        %v2490 = vld [vmem:[%s3 + $0x38c] sm:$0xf]
        %v2491 = vld [vmem:[%s3 + $0x390] sm:$0xf]
        %v2492 = vld [vmem:[%s3 + $0x394] sm:$0xf]
        %v2493 = vld [vmem:[%s3 + $0x398] sm:$0xf]
        %v2494 = vld [vmem:[%s3 + $0x39c] sm:$0xf]
        %v2495 = vld [vmem:[%s3 + $0x3a0] sm:$0xf]
        %v2496 = vld [vmem:[%s3 + $0x3a4] sm:$0xf]
        %v2497 = vld [vmem:[%s3 + $0x3a8] sm:$0xf]
        %v2498 = vld [vmem:[%s3 + $0x3ac] sm:$0xf]
        %v2499 = vld [vmem:[%s3 + $0x3b0] sm:$0xf]
        %v2500 = vld [vmem:[%s3 + $0x3b4] sm:$0xf]
        %v2501 = vld [vmem:[%s3 + $0x3b8] sm:$0xf]
        %v2502 = vld [vmem:[%s3 + $0x3bc] sm:$0xf]
        %v2503 = vld [vmem:[%s3 + $0x3c0] sm:$0xf]
        %v2504 = vld [vmem:[%s3 + $0x3c4] sm:$0xf]
        %v2505 = vld [vmem:[%s3 + $0x3c8] sm:$0xf]
        %v2506 = vld [vmem:[%s3 + $0x3cc] sm:$0xf]
        %v2507 = vld [vmem:[%s3 + $0x3d0] sm:$0xf]
        %v2508 = vld [vmem:[%s3 + $0x3d4] sm:$0xf]
        %v2509 = vld [vmem:[%s3 + $0x3d8] sm:$0xf]
        %v2510 = vld [vmem:[%s3 + $0x3dc] sm:$0xf]
        %v2511 = vld [vmem:[%s3 + $0x3e0] sm:$0xf]
        %v2512 = vld [vmem:[%s3 + $0x3e4] sm:$0xf]
        %v2513 = vld [vmem:[%s3 + $0x3e8] sm:$0xf]
        %v2514 = vld [vmem:[%s3 + $0x3ec] sm:$0xf]
        %v2515 = vld [vmem:[%s3 + $0x3f0] sm:$0xf]
        %v2516 = vld [vmem:[%s3 + $0x3f4] sm:$0xf]
        %v2517 = vld [vmem:[%s3 + $0x3f8] sm:$0xf]
        %v2518 = vld [vmem:[%s3 + $0x3fc] sm:$0xf]
        %v2519 = vld [vmem:[%s3 + $0x400] sm:$0xf]
        %v2520 = vld [vmem:[%s3 + $0x404] sm:$0xf]
        %v2521 = vld [vmem:[%s3 + $0x408] sm:$0xf]
        %v2522 = vld [vmem:[%s3 + $0x40c] sm:$0xf]
        %v2523 = vld [vmem:[%s3 + $0x410] sm:$0xf]
        %v2524 = vld [vmem:[%s3 + $0x414] sm:$0xf]
        %v2525 = vld [vmem:[%s3 + $0x418] sm:$0xf]
        %v2526 = vld [vmem:[%s3 + $0x41c] sm:$0xf]
        %v2527 = vld [vmem:[%s3 + $0x420] sm:$0xf]
        %v2528 = vld [vmem:[%s3 + $0x424] sm:$0xf]
        %v2529 = vld [vmem:[%s3 + $0x428] sm:$0xf]
        %v2530 = vld [vmem:[%s3 + $0x42c] sm:$0xf]
        %v2531 = vld [vmem:[%s3 + $0x430] sm:$0xf]
        %v2532 = vld [vmem:[%s3 + $0x434] sm:$0xf]
        %v2533 = vld [vmem:[%s3 + $0x438] sm:$0xf]
        %v2534 = vld [vmem:[%s3 + $0x43c] sm:$0xf]
        %v2535 = vld [vmem:[%s3 + $0x440] sm:$0xf]
        %v2536 = vld [vmem:[%s3 + $0x444] sm:$0xf]
        %v2537 = vld [vmem:[%s3 + $0x448] sm:$0xf]
        %v2538 = vld [vmem:[%s3 + $0x44c] sm:$0xf]
        %v2539 = vld [vmem:[%s3 + $0x450] sm:$0xf]
        %v2540 = vld [vmem:[%s3 + $0x454] sm:$0xf]
        %v2541 = vld [vmem:[%s3 + $0x458] sm:$0xf]
        %v2542 = vld [vmem:[%s3 + $0x45c] sm:$0xf]
        %v2543 = vld [vmem:[%s3 + $0x460] sm:$0xf]
        %v2544 = vld [vmem:[%s3 + $0x464] sm:$0xf]
        %v2545 = vld [vmem:[%s3 + $0x468] sm:$0xf]
        %v2546 = vld [vmem:[%s3 + $0x46c] sm:$0xf]
        %v2547 = vld [vmem:[%s3 + $0x470] sm:$0xf]
        %v2548 = vld [vmem:[%s3 + $0x474] sm:$0xf]
        %v2549 = vld [vmem:[%s3 + $0x478] sm:$0xf]
        %v2550 = vld [vmem:[%s3 + $0x47c] sm:$0xf]
        %v2551 = vld [vmem:[%s3 + $0x480] sm:$0xf]
        %v2552 = vld [vmem:[%s3 + $0x484] sm:$0xf]
        %v2553 = vld [vmem:[%s3 + $0x488] sm:$0xf]
        %v2554 = vld [vmem:[%s3 + $0x48c] sm:$0xf]
        %v2555 = vld [vmem:[%s3 + $0x490] sm:$0xf]
        %v2556 = vld [vmem:[%s3 + $0x494] sm:$0xf]
        %v2557 = vld [vmem:[%s3 + $0x498] sm:$0xf]
        %v2558 = vld [vmem:[%s3 + $0x49c] sm:$0xf]
        %v2559 = vld [vmem:[%s3 + $0x4a0] sm:$0xf]
        %v2560 = vld [vmem:[%s3 + $0x4a4] sm:$0xf]
        %v2561 = vld [vmem:[%s3 + $0x4a8] sm:$0xf]
        %v2562 = vld [vmem:[%s3 + $0x4ac] sm:$0xf]
        %v2563 = vld [vmem:[%s3 + $0x4b0] sm:$0xf]
        %v2564 = vld [vmem:[%s3 + $0x4b4] sm:$0xf]
        %v2565 = vld [vmem:[%s3 + $0x4b8] sm:$0xf]
        %v2566 = vld [vmem:[%s3 + $0x4bc] sm:$0xf]
        %v2567 = vld [vmem:[%s3 + $0x4c0] sm:$0xf]
        %v2568 = vld [vmem:[%s3 + $0x4c4] sm:$0xf]
        %v2569 = vld [vmem:[%s3 + $0x4c8] sm:$0xf]
        %v2570 = vld [vmem:[%s3 + $0x4cc] sm:$0xf]
        %v2571 = vld [vmem:[%s3 + $0x4d0] sm:$0xf]
        %v2572 = vld [vmem:[%s3 + $0x4d4] sm:$0xf]
        %v2573 = vld [vmem:[%s3 + $0x4d8] sm:$0xf]
        %v2574 = vld [vmem:[%s3 + $0x4dc] sm:$0xf]
        %v2575 = vld [vmem:[%s3 + $0x4e0] sm:$0xf]
        %v2576 = vld [vmem:[%s3 + $0x4e4] sm:$0xf]
        %v2577 = vld [vmem:[%s3 + $0x4e8] sm:$0xf]
        %v2578 = vld [vmem:[%s3 + $0x4ec] sm:$0xf]
        %v2579 = vld [vmem:[%s3 + $0x4f0] sm:$0xf]
        %v2580 = vld [vmem:[%s3 + $0x4f4] sm:$0xf]
        %v2581 = vld [vmem:[%s3 + $0x4f8] sm:$0xf]
        %v2582 = vld [vmem:[%s3 + $0x4fc] sm:$0xf]
        %v2583 = vld [vmem:[%s3 + $0x500] sm:$0xf]
        %v2584 = vld [vmem:[%s3 + $0x504] sm:$0xf]
        %v2585 = vld [vmem:[%s3 + $0x508] sm:$0xf]
        %v2586 = vld [vmem:[%s3 + $0x50c] sm:$0xf]
        %v2587 = vld [vmem:[%s3 + $0x510] sm:$0xf]
        %v2588 = vld [vmem:[%s3 + $0x514] sm:$0xf]
        %v2589 = vld [vmem:[%s3 + $0x518] sm:$0xf]
        %v2590 = vld [vmem:[%s3 + $0x51c] sm:$0xf]
        %v2591 = vld [vmem:[%s3 + $0x520] sm:$0xf]
        %v2592 = vld [vmem:[%s3 + $0x524] sm:$0xf]
        %v2593 = vld [vmem:[%s3 + $0x528] sm:$0xf]
        %v2594 = vld [vmem:[%s3 + $0x52c] sm:$0xf]
        %v2595 = vld [vmem:[%s3 + $0x530] sm:$0xf]
        %v2596 = vld [vmem:[%s3 + $0x534] sm:$0xf]
        %v2597 = vld [vmem:[%s3 + $0x538] sm:$0xf]
        %v2598 = vld [vmem:[%s3 + $0x53c] sm:$0xf]
        %v2599 = vld [vmem:[%s3 + $0x540] sm:$0xf]
        %v2600 = vld [vmem:[%s3 + $0x544] sm:$0xf]
        %v2601 = vld [vmem:[%s3 + $0x548] sm:$0xf]
        %v2602 = vld [vmem:[%s3 + $0x54c] sm:$0xf]
        %v2603 = vld [vmem:[%s3 + $0x550] sm:$0xf]
        %v2604 = vld [vmem:[%s3 + $0x554] sm:$0xf]
        %v2605 = vld [vmem:[%s3 + $0x558] sm:$0xf]
        %v2606 = vld [vmem:[%s3 + $0x55c] sm:$0xf]
        %v2607 = vld [vmem:[%s3 + $0x560] sm:$0xf]
        %v2608 = vld [vmem:[%s3 + $0x564] sm:$0xf]
        %v2609 = vld [vmem:[%s3 + $0x568] sm:$0xf]
        %v2610 = vld [vmem:[%s3 + $0x56c] sm:$0xf]
        %v2611 = vld [vmem:[%s3 + $0x570] sm:$0xf]
        %v2612 = vld [vmem:[%s3 + $0x574] sm:$0xf]
        %v2613 = vld [vmem:[%s3 + $0x578] sm:$0xf]
        %v2614 = vld [vmem:[%s3 + $0x57c] sm:$0xf]
        %v2615 = vld [vmem:[%s3 + $0x580] sm:$0xf]
        %v2616 = vld [vmem:[%s3 + $0x584] sm:$0xf]
        %v2617 = vld [vmem:[%s3 + $0x588] sm:$0xf]
        %v2618 = vld [vmem:[%s3 + $0x58c] sm:$0xf]
        %v2619 = vld [vmem:[%s3 + $0x590] sm:$0xf]
        %v2620 = vld [vmem:[%s3 + $0x594] sm:$0xf]
        %v2621 = vld [vmem:[%s3 + $0x598] sm:$0xf]
        %v2622 = vld [vmem:[%s3 + $0x59c] sm:$0xf]
        %v2623 = vld [vmem:[%s3 + $0x5a0] sm:$0xf]
        %v2624 = vld [vmem:[%s3 + $0x5a4] sm:$0xf]
        %v2625 = vld [vmem:[%s3 + $0x5a8] sm:$0xf]
        %v2626 = vld [vmem:[%s3 + $0x5ac] sm:$0xf]
        %v2627 = vld [vmem:[%s3 + $0x5b0] sm:$0xf]
        %v2628 = vld [vmem:[%s3 + $0x5b4] sm:$0xf]
        %v2629 = vld [vmem:[%s3 + $0x5b8] sm:$0xf]
        %v2630 = vld [vmem:[%s3 + $0x5bc] sm:$0xf]
        %v2631 = vld [vmem:[%s3 + $0x5c0] sm:$0xf]
        %v2632 = vld [vmem:[%s3 + $0x5c4] sm:$0xf]
        %v2633 = vld [vmem:[%s3 + $0x5c8] sm:$0xf]
        %v2634 = vld [vmem:[%s3 + $0x5cc] sm:$0xf]
        %v2635 = vld [vmem:[%s3 + $0x5d0] sm:$0xf]
        %v2636 = vld [vmem:[%s3 + $0x5d4] sm:$0xf]
        %v2637 = vld [vmem:[%s3 + $0x5d8] sm:$0xf]
        %v2638 = vld [vmem:[%s3 + $0x5dc] sm:$0xf]
        %v2639 = vld [vmem:[%s3 + $0x5e0] sm:$0xf]
        %v2640 = vld [vmem:[%s3 + $0x5e4] sm:$0xf]
        %v2641 = vld [vmem:[%s3 + $0x5e8] sm:$0xf]
        %v2642 = vld [vmem:[%s3 + $0x5ec] sm:$0xf]
        %v2643 = vld [vmem:[%s3 + $0x5f0] sm:$0xf]
        %v2644 = vld [vmem:[%s3 + $0x5f4] sm:$0xf]
        %v2645 = vld [vmem:[%s3 + $0x5f8] sm:$0xf]
        %v2646 = vld [vmem:[%s3 + $0x5fc] sm:$0xf]
        %v2647 = vld [vmem:[%s3 + $0x600] sm:$0xf]
        %v2648 = vld [vmem:[%s3 + $0x604] sm:$0xf]
        %v2649 = vld [vmem:[%s3 + $0x608] sm:$0xf]
        %v2650 = vld [vmem:[%s3 + $0x60c] sm:$0xf]
        %v2651 = vld [vmem:[%s3 + $0x610] sm:$0xf]
        %v2652 = vld [vmem:[%s3 + $0x614] sm:$0xf]
        %v2653 = vld [vmem:[%s3 + $0x618] sm:$0xf]
        %v2654 = vld [vmem:[%s3 + $0x61c] sm:$0xf]
        %v2655 = vld [vmem:[%s3 + $0x620] sm:$0xf]
        %v2656 = vld [vmem:[%s3 + $0x624] sm:$0xf]
        %v2657 = vld [vmem:[%s3 + $0x628] sm:$0xf]
        %v2658 = vld [vmem:[%s3 + $0x62c] sm:$0xf]
        %v2659 = vld [vmem:[%s3 + $0x630] sm:$0xf]
        %v2660 = vld [vmem:[%s3 + $0x634] sm:$0xf]
        %v2661 = vld [vmem:[%s3 + $0x638] sm:$0xf]
        %v2662 = vld [vmem:[%s3 + $0x63c] sm:$0xf]
        %v2663 = vld [vmem:[%s4] sm:$0x1]
        %v2665 = vlaneseq
        %v2666 = vshrl.u32 %v2665, 7
        %v2667 = vsub.s32 0, %v2666
        %v2668 = vrot.slane %v2663, %v2667
        %v3070 = vunpack.c.l.b16 %v2263
        %v3071 = vunpack.c.l.b16 %v2264
        %v3072 = vunpack.c.l.b16 %v2265
        %v3073 = vunpack.c.l.b16 %v2266
        %v3074 = vunpack.c.l.b16 %v2267
        %v3075 = vunpack.c.l.b16 %v2268
        %v3076 = vunpack.c.l.b16 %v2269
        %v3077 = vunpack.c.l.b16 %v2270
        %v3078 = vunpack.c.l.b16 %v2271
        %v3079 = vunpack.c.l.b16 %v2272
        %v3080 = vunpack.c.l.b16 %v2273
        %v3081 = vunpack.c.l.b16 %v2274
        %v3082 = vunpack.c.l.b16 %v2275
        %v3083 = vunpack.c.l.b16 %v2276
        %v3084 = vunpack.c.l.b16 %v2277
        %v3085 = vunpack.c.l.b16 %v2278
        %v3086 = vunpack.c.l.b16 %v2279
        %v3087 = vunpack.c.l.b16 %v2280
        %v3088 = vunpack.c.l.b16 %v2281
        %v3089 = vunpack.c.l.b16 %v2282
        %v3090 = vunpack.c.l.b16 %v2283
        %v3091 = vunpack.c.l.b16 %v2284
        %v3092 = vunpack.c.l.b16 %v2285
        %v3093 = vunpack.c.l.b16 %v2286
        %v3094 = vunpack.c.l.b16 %v2287
        %v3095 = vunpack.c.l.b16 %v2288
        %v3096 = vunpack.c.l.b16 %v2289
        %v3097 = vunpack.c.l.b16 %v2290
        %v3098 = vunpack.c.l.b16 %v2291
        %v3099 = vunpack.c.l.b16 %v2292
        %v3100 = vunpack.c.l.b16 %v2293
        %v3101 = vunpack.c.l.b16 %v2294
        %v3102 = vunpack.c.l.b16 %v2295
        %v3103 = vunpack.c.l.b16 %v2296
        %v3104 = vunpack.c.l.b16 %v2297
        %v3105 = vunpack.c.l.b16 %v2298
        %v3106 = vunpack.c.l.b16 %v2299
        %v3107 = vunpack.c.l.b16 %v2300
        %v3108 = vunpack.c.l.b16 %v2301
        %v3109 = vunpack.c.l.b16 %v2302
        %v3110 = vunpack.c.l.b16 %v2303
        %v3111 = vunpack.c.l.b16 %v2304
        %v3112 = vunpack.c.l.b16 %v2305
        %v3113 = vunpack.c.l.b16 %v2306
        %v3114 = vunpack.c.l.b16 %v2307
        %v3115 = vunpack.c.l.b16 %v2308
        %v3116 = vunpack.c.l.b16 %v2309
        %v3117 = vunpack.c.l.b16 %v2310
        %v3118 = vunpack.c.l.b16 %v2311
        %v3119 = vunpack.c.l.b16 %v2312
        %v3120 = vunpack.c.l.b16 %v2313
        %v3121 = vunpack.c.l.b16 %v2314
        %v3122 = vunpack.c.l.b16 %v2315
        %v3123 = vunpack.c.l.b16 %v2316
        %v3124 = vunpack.c.l.b16 %v2317
        %v3125 = vunpack.c.l.b16 %v2318
        %v3126 = vunpack.c.l.b16 %v2319
        %v3127 = vunpack.c.l.b16 %v2320
        %v3128 = vunpack.c.l.b16 %v2321
        %v3129 = vunpack.c.l.b16 %v2322
        %v3130 = vunpack.c.l.b16 %v2323
        %v3131 = vunpack.c.l.b16 %v2324
        %v3132 = vunpack.c.l.b16 %v2325
        %v3133 = vunpack.c.l.b16 %v2326
        %v3134 = vunpack.c.l.b16 %v2327
        %v3135 = vunpack.c.l.b16 %v2328
        %v3136 = vunpack.c.l.b16 %v2329
        %v3137 = vunpack.c.l.b16 %v2330
        %v3138 = vunpack.c.l.b16 %v2331
        %v3139 = vunpack.c.l.b16 %v2332
        %v3140 = vunpack.c.l.b16 %v2333
        %v3141 = vunpack.c.l.b16 %v2334
        %v3142 = vunpack.c.l.b16 %v2335
        %v3143 = vunpack.c.l.b16 %v2336
        %v3144 = vunpack.c.l.b16 %v2337
        %v3145 = vunpack.c.l.b16 %v2338
        %v3146 = vunpack.c.l.b16 %v2339
        %v3147 = vunpack.c.l.b16 %v2340
        %v3148 = vunpack.c.l.b16 %v2341
        %v3149 = vunpack.c.l.b16 %v2342
        %v3150 = vunpack.c.l.b16 %v2343
        %v3151 = vunpack.c.l.b16 %v2344
        %v3152 = vunpack.c.l.b16 %v2345
        %v3153 = vunpack.c.l.b16 %v2346
        %v3154 = vunpack.c.l.b16 %v2347
        %v3155 = vunpack.c.l.b16 %v2348
        %v3156 = vunpack.c.l.b16 %v2349
        %v3157 = vunpack.c.l.b16 %v2350
        %v3158 = vunpack.c.l.b16 %v2351
        %v3159 = vunpack.c.l.b16 %v2352
        %v3160 = vunpack.c.l.b16 %v2353
        %v3161 = vunpack.c.l.b16 %v2354
        %v3162 = vunpack.c.l.b16 %v2355
        %v3163 = vunpack.c.l.b16 %v2356
        %v3164 = vunpack.c.l.b16 %v2357
        %v3165 = vunpack.c.l.b16 %v2358
        %v3166 = vunpack.c.l.b16 %v2359
        %v3167 = vunpack.c.l.b16 %v2360
        %v3168 = vunpack.c.l.b16 %v2361
        %v3169 = vunpack.c.l.b16 %v2362
        %v3170 = vunpack.c.l.b16 %v2363
        %v3171 = vunpack.c.l.b16 %v2364
        %v3172 = vunpack.c.l.b16 %v2365
        %v3173 = vunpack.c.l.b16 %v2366
        %v3174 = vunpack.c.l.b16 %v2367
        %v3175 = vunpack.c.l.b16 %v2368
        %v3176 = vunpack.c.l.b16 %v2369
        %v3177 = vunpack.c.l.b16 %v2370
        %v3178 = vunpack.c.l.b16 %v2371
        %v3179 = vunpack.c.l.b16 %v2372
        %v3180 = vunpack.c.l.b16 %v2373
        %v3181 = vunpack.c.l.b16 %v2374
        %v3182 = vunpack.c.l.b16 %v2375
        %v3183 = vunpack.c.l.b16 %v2376
        %v3184 = vunpack.c.l.b16 %v2377
        %v3185 = vunpack.c.l.b16 %v2378
        %v3186 = vunpack.c.l.b16 %v2379
        %v3187 = vunpack.c.l.b16 %v2380
        %v3188 = vunpack.c.l.b16 %v2381
        %v3189 = vunpack.c.l.b16 %v2382
        %v3190 = vunpack.c.l.b16 %v2383
        %v3191 = vunpack.c.l.b16 %v2384
        %v3192 = vunpack.c.l.b16 %v2385
        %v3193 = vunpack.c.l.b16 %v2386
        %v3194 = vunpack.c.l.b16 %v2387
        %v3195 = vunpack.c.l.b16 %v2388
        %v3196 = vunpack.c.l.b16 %v2389
        %v3197 = vunpack.c.l.b16 %v2390
        %v3198 = vunpack.c.l.b16 %v2391
        %v3199 = vunpack.c.l.b16 %v2392
        %v3200 = vunpack.c.l.b16 %v2393
        %v3201 = vunpack.c.l.b16 %v2394
        %v3202 = vunpack.c.l.b16 %v2395
        %v3203 = vunpack.c.l.b16 %v2396
        %v3204 = vunpack.c.l.b16 %v2397
        %v3205 = vunpack.c.l.b16 %v2398
        %v3206 = vunpack.c.l.b16 %v2399
        %v3207 = vunpack.c.l.b16 %v2400
        %v3208 = vunpack.c.l.b16 %v2401
        %v3209 = vunpack.c.l.b16 %v2402
        %v3210 = vunpack.c.l.b16 %v2403
        %v3211 = vunpack.c.l.b16 %v2404
        %v3212 = vunpack.c.l.b16 %v2405
        %v3213 = vunpack.c.l.b16 %v2406
        %v3214 = vunpack.c.l.b16 %v2407
        %v3215 = vunpack.c.l.b16 %v2408
        %v3216 = vunpack.c.l.b16 %v2409
        %v3217 = vunpack.c.l.b16 %v2410
        %v3218 = vunpack.c.l.b16 %v2411
        %v3219 = vunpack.c.l.b16 %v2412
        %v3220 = vunpack.c.l.b16 %v2413
        %v3221 = vunpack.c.l.b16 %v2414
        %v3222 = vunpack.c.l.b16 %v2415
        %v3223 = vunpack.c.l.b16 %v2416
        %v3224 = vunpack.c.l.b16 %v2417
        %v3225 = vunpack.c.l.b16 %v2418
        %v3226 = vunpack.c.l.b16 %v2419
        %v3227 = vunpack.c.l.b16 %v2420
        %v3228 = vunpack.c.l.b16 %v2421
        %v3229 = vunpack.c.l.b16 %v2422
        %v3230 = vunpack.c.l.b16 %v2423
        %v3231 = vunpack.c.l.b16 %v2424
        %v3232 = vunpack.c.l.b16 %v2425
        %v3233 = vunpack.c.l.b16 %v2426
        %v3234 = vunpack.c.l.b16 %v2427
        %v3235 = vunpack.c.l.b16 %v2428
        %v3236 = vunpack.c.l.b16 %v2429
        %v3237 = vunpack.c.l.b16 %v2430
        %v3238 = vunpack.c.l.b16 %v2431
        %v3239 = vunpack.c.l.b16 %v2432
        %v3240 = vunpack.c.l.b16 %v2433
        %v3241 = vunpack.c.l.b16 %v2434
        %v3242 = vunpack.c.l.b16 %v2435
        %v3243 = vunpack.c.l.b16 %v2436
        %v3244 = vunpack.c.l.b16 %v2437
        %v3245 = vunpack.c.l.b16 %v2438
        %v3246 = vunpack.c.l.b16 %v2439
        %v3247 = vunpack.c.l.b16 %v2440
        %v3248 = vunpack.c.l.b16 %v2441
        %v3249 = vunpack.c.l.b16 %v2442
        %v3250 = vunpack.c.l.b16 %v2443
        %v3251 = vunpack.c.l.b16 %v2444
        %v3252 = vunpack.c.l.b16 %v2445
        %v3253 = vunpack.c.l.b16 %v2446
        %v3254 = vunpack.c.l.b16 %v2447
        %v3255 = vunpack.c.l.b16 %v2448
        %v3256 = vunpack.c.l.b16 %v2449
        %v3257 = vunpack.c.l.b16 %v2450
        %v3258 = vunpack.c.l.b16 %v2451
        %v3259 = vunpack.c.l.b16 %v2452
        %v3260 = vunpack.c.l.b16 %v2453
        %v3261 = vunpack.c.l.b16 %v2454
        %v3262 = vunpack.c.l.b16 %v2455
        %v3263 = vunpack.c.l.b16 %v2456
        %v3264 = vunpack.c.l.b16 %v2457
        %v3265 = vunpack.c.l.b16 %v2458
        %v3266 = vunpack.c.l.b16 %v2459
        %v3267 = vunpack.c.l.b16 %v2460
        %v3268 = vunpack.c.l.b16 %v2461
        %v3269 = vunpack.c.l.b16 %v2462
        %v3270 = vunpack.c.l.b16 %v2463
        %v3271 = vunpack.c.l.b16 %v2464
        %v3272 = vunpack.c.l.b16 %v2465
        %v3273 = vunpack.c.l.b16 %v2466
        %v3274 = vunpack.c.l.b16 %v2467
        %v3275 = vunpack.c.l.b16 %v2468
        %v3276 = vunpack.c.l.b16 %v2469
        %v3277 = vunpack.c.l.b16 %v2470
        %v3278 = vunpack.c.l.b16 %v2471
        %v3279 = vunpack.c.l.b16 %v2472
        %v3280 = vunpack.c.l.b16 %v2473
        %v3281 = vunpack.c.l.b16 %v2474
        %v3282 = vunpack.c.l.b16 %v2475
        %v3283 = vunpack.c.l.b16 %v2476
        %v3284 = vunpack.c.l.b16 %v2477
        %v3285 = vunpack.c.l.b16 %v2478
        %v3286 = vunpack.c.l.b16 %v2479
        %v3287 = vunpack.c.l.b16 %v2480
        %v3288 = vunpack.c.l.b16 %v2481
        %v3289 = vunpack.c.l.b16 %v2482
        %v3290 = vunpack.c.l.b16 %v2483
        %v3291 = vunpack.c.l.b16 %v2484
        %v3292 = vunpack.c.l.b16 %v2485
        %v3293 = vunpack.c.l.b16 %v2486
        %v3294 = vunpack.c.l.b16 %v2487
        %v3295 = vunpack.c.l.b16 %v2488
        %v3296 = vunpack.c.l.b16 %v2489
        %v3297 = vunpack.c.l.b16 %v2490
        %v3298 = vunpack.c.l.b16 %v2491
        %v3299 = vunpack.c.l.b16 %v2492
        %v3300 = vunpack.c.l.b16 %v2493
        %v3301 = vunpack.c.l.b16 %v2494
        %v3302 = vunpack.c.l.b16 %v2495
        %v3303 = vunpack.c.l.b16 %v2496
        %v3304 = vunpack.c.l.b16 %v2497
        %v3305 = vunpack.c.l.b16 %v2498
        %v3306 = vunpack.c.l.b16 %v2499
        %v3307 = vunpack.c.l.b16 %v2500
        %v3308 = vunpack.c.l.b16 %v2501
        %v3309 = vunpack.c.l.b16 %v2502
        %v3310 = vunpack.c.l.b16 %v2503
        %v3311 = vunpack.c.l.b16 %v2504
        %v3312 = vunpack.c.l.b16 %v2505
        %v3313 = vunpack.c.l.b16 %v2506
        %v3314 = vunpack.c.l.b16 %v2507
        %v3315 = vunpack.c.l.b16 %v2508
        %v3316 = vunpack.c.l.b16 %v2509
        %v3317 = vunpack.c.l.b16 %v2510
        %v3318 = vunpack.c.l.b16 %v2511
        %v3319 = vunpack.c.l.b16 %v2512
        %v3320 = vunpack.c.l.b16 %v2513
        %v3321 = vunpack.c.l.b16 %v2514
        %v3322 = vunpack.c.l.b16 %v2515
        %v3323 = vunpack.c.l.b16 %v2516
        %v3324 = vunpack.c.l.b16 %v2517
        %v3325 = vunpack.c.l.b16 %v2518
        %v3326 = vunpack.c.l.b16 %v2519
        %v3327 = vunpack.c.l.b16 %v2520
        %v3328 = vunpack.c.l.b16 %v2521
        %v3329 = vunpack.c.l.b16 %v2522
        %v3330 = vunpack.c.l.b16 %v2523
        %v3331 = vunpack.c.l.b16 %v2524
        %v3332 = vunpack.c.l.b16 %v2525
        %v3333 = vunpack.c.l.b16 %v2526
        %v3334 = vunpack.c.l.b16 %v2527
        %v3335 = vunpack.c.l.b16 %v2528
        %v3336 = vunpack.c.l.b16 %v2529
        %v3337 = vunpack.c.l.b16 %v2530
        %v3338 = vunpack.c.l.b16 %v2531
        %v3339 = vunpack.c.l.b16 %v2532
        %v3340 = vunpack.c.l.b16 %v2533
        %v3341 = vunpack.c.l.b16 %v2534
        %v3342 = vunpack.c.l.b16 %v2535
        %v3343 = vunpack.c.l.b16 %v2536
        %v3344 = vunpack.c.l.b16 %v2537
        %v3345 = vunpack.c.l.b16 %v2538
        %v3346 = vunpack.c.l.b16 %v2539
        %v3347 = vunpack.c.l.b16 %v2540
        %v3348 = vunpack.c.l.b16 %v2541
        %v3349 = vunpack.c.l.b16 %v2542
        %v3350 = vunpack.c.l.b16 %v2543
        %v3351 = vunpack.c.l.b16 %v2544
        %v3352 = vunpack.c.l.b16 %v2545
        %v3353 = vunpack.c.l.b16 %v2546
        %v3354 = vunpack.c.l.b16 %v2547
        %v3355 = vunpack.c.l.b16 %v2548
        %v3356 = vunpack.c.l.b16 %v2549
        %v3357 = vunpack.c.l.b16 %v2550
        %v3358 = vunpack.c.l.b16 %v2551
        %v3359 = vunpack.c.l.b16 %v2552
        %v3360 = vunpack.c.l.b16 %v2553
        %v3361 = vunpack.c.l.b16 %v2554
        %v3362 = vunpack.c.l.b16 %v2555
        %v3363 = vunpack.c.l.b16 %v2556
        %v3364 = vunpack.c.l.b16 %v2557
        %v3365 = vunpack.c.l.b16 %v2558
        %v3366 = vunpack.c.l.b16 %v2559
        %v3367 = vunpack.c.l.b16 %v2560
        %v3368 = vunpack.c.l.b16 %v2561
        %v3369 = vunpack.c.l.b16 %v2562
        %v3370 = vunpack.c.l.b16 %v2563
        %v3371 = vunpack.c.l.b16 %v2564
        %v3372 = vunpack.c.l.b16 %v2565
        %v3373 = vunpack.c.l.b16 %v2566
        %v3374 = vunpack.c.l.b16 %v2567
        %v3375 = vunpack.c.l.b16 %v2568
        %v3376 = vunpack.c.l.b16 %v2569
        %v3377 = vunpack.c.l.b16 %v2570
        %v3378 = vunpack.c.l.b16 %v2571
        %v3379 = vunpack.c.l.b16 %v2572
        %v3380 = vunpack.c.l.b16 %v2573
        %v3381 = vunpack.c.l.b16 %v2574
        %v3382 = vunpack.c.l.b16 %v2575
        %v3383 = vunpack.c.l.b16 %v2576
        %v3384 = vunpack.c.l.b16 %v2577
        %v3385 = vunpack.c.l.b16 %v2578
        %v3386 = vunpack.c.l.b16 %v2579
        %v3387 = vunpack.c.l.b16 %v2580
        %v3388 = vunpack.c.l.b16 %v2581
        %v3389 = vunpack.c.l.b16 %v2582
        %v3390 = vunpack.c.l.b16 %v2583
        %v3391 = vunpack.c.l.b16 %v2584
        %v3392 = vunpack.c.l.b16 %v2585
        %v3393 = vunpack.c.l.b16 %v2586
        %v3394 = vunpack.c.l.b16 %v2587
        %v3395 = vunpack.c.l.b16 %v2588
        %v3396 = vunpack.c.l.b16 %v2589
        %v3397 = vunpack.c.l.b16 %v2590
        %v3398 = vunpack.c.l.b16 %v2591
        %v3399 = vunpack.c.l.b16 %v2592
        %v3400 = vunpack.c.l.b16 %v2593
        %v3401 = vunpack.c.l.b16 %v2594
        %v3402 = vunpack.c.l.b16 %v2595
        %v3403 = vunpack.c.l.b16 %v2596
        %v3404 = vunpack.c.l.b16 %v2597
        %v3405 = vunpack.c.l.b16 %v2598
        %v3406 = vunpack.c.l.b16 %v2599
        %v3407 = vunpack.c.l.b16 %v2600
        %v3408 = vunpack.c.l.b16 %v2601
        %v3409 = vunpack.c.l.b16 %v2602
        %v3410 = vunpack.c.l.b16 %v2603
        %v3411 = vunpack.c.l.b16 %v2604
        %v3412 = vunpack.c.l.b16 %v2605
        %v3413 = vunpack.c.l.b16 %v2606
        %v3414 = vunpack.c.l.b16 %v2607
        %v3415 = vunpack.c.l.b16 %v2608
        %v3416 = vunpack.c.l.b16 %v2609
        %v3417 = vunpack.c.l.b16 %v2610
        %v3418 = vunpack.c.l.b16 %v2611
        %v3419 = vunpack.c.l.b16 %v2612
        %v3420 = vunpack.c.l.b16 %v2613
        %v3421 = vunpack.c.l.b16 %v2614
        %v3422 = vunpack.c.l.b16 %v2615
        %v3423 = vunpack.c.l.b16 %v2616
        %v3424 = vunpack.c.l.b16 %v2617
        %v3425 = vunpack.c.l.b16 %v2618
        %v3426 = vunpack.c.l.b16 %v2619
        %v3427 = vunpack.c.l.b16 %v2620
        %v3428 = vunpack.c.l.b16 %v2621
        %v3429 = vunpack.c.l.b16 %v2622
        %v3430 = vunpack.c.l.b16 %v2623
        %v3431 = vunpack.c.l.b16 %v2624
        %v3432 = vunpack.c.l.b16 %v2625
        %v3433 = vunpack.c.l.b16 %v2626
        %v3434 = vunpack.c.l.b16 %v2627
        %v3435 = vunpack.c.l.b16 %v2628
        %v3436 = vunpack.c.l.b16 %v2629
        %v3437 = vunpack.c.l.b16 %v2630
        %v3438 = vunpack.c.l.b16 %v2631
        %v3439 = vunpack.c.l.b16 %v2632
        %v3440 = vunpack.c.l.b16 %v2633
        %v3441 = vunpack.c.l.b16 %v2634
        %v3442 = vunpack.c.l.b16 %v2635
        %v3443 = vunpack.c.l.b16 %v2636
        %v3444 = vunpack.c.l.b16 %v2637
        %v3445 = vunpack.c.l.b16 %v2638
        %v3446 = vunpack.c.l.b16 %v2639
        %v3447 = vunpack.c.l.b16 %v2640
        %v3448 = vunpack.c.l.b16 %v2641
        %v3449 = vunpack.c.l.b16 %v2642
        %v3450 = vunpack.c.l.b16 %v2643
        %v3451 = vunpack.c.l.b16 %v2644
        %v3452 = vunpack.c.l.b16 %v2645
        %v3453 = vunpack.c.l.b16 %v2646
        %v3454 = vunpack.c.l.b16 %v2647
        %v3455 = vunpack.c.l.b16 %v2648
        %v3456 = vunpack.c.l.b16 %v2649
        %v3457 = vunpack.c.l.b16 %v2650
        %v3458 = vunpack.c.l.b16 %v2651
        %v3459 = vunpack.c.l.b16 %v2652
        %v3460 = vunpack.c.l.b16 %v2653
        %v3461 = vunpack.c.l.b16 %v2654
        %v3462 = vunpack.c.l.b16 %v2655
        %v3463 = vunpack.c.l.b16 %v2656
        %v3464 = vunpack.c.l.b16 %v2657
        %v3465 = vunpack.c.l.b16 %v2658
        %v3466 = vunpack.c.l.b16 %v2659
        %v3467 = vunpack.c.l.b16 %v2660
        %v3468 = vunpack.c.l.b16 %v2661
        %v3469 = vunpack.c.l.b16 %v2662
        %v3470 = vpack.c.b16 %v3071, %v3070
        %v3471 = vpack.c.b16 %v3073, %v3072
        %v3472 = vpack.c.b16 %v3075, %v3074
        %v3473 = vpack.c.b16 %v3077, %v3076
        %v3474 = vpack.c.b16 %v3079, %v3078
        %v3475 = vpack.c.b16 %v3081, %v3080
        %v3476 = vpack.c.b16 %v3083, %v3082
        %v3477 = vpack.c.b16 %v3085, %v3084
        %v3478 = vpack.c.b16 %v3087, %v3086
        %v3479 = vpack.c.b16 %v3089, %v3088
        %v3480 = vpack.c.b16 %v3091, %v3090
        %v3481 = vpack.c.b16 %v3093, %v3092
        %v3482 = vpack.c.b16 %v3095, %v3094
        %v3483 = vpack.c.b16 %v3097, %v3096
        %v3484 = vpack.c.b16 %v3099, %v3098
        %v3485 = vpack.c.b16 %v3101, %v3100
        %v3486 = vpack.c.b16 %v3103, %v3102
        %v3487 = vpack.c.b16 %v3105, %v3104
        %v3488 = vpack.c.b16 %v3107, %v3106
        %v3489 = vpack.c.b16 %v3109, %v3108
        %v3490 = vpack.c.b16 %v3111, %v3110
        %v3491 = vpack.c.b16 %v3113, %v3112
        %v3492 = vpack.c.b16 %v3115, %v3114
        %v3493 = vpack.c.b16 %v3117, %v3116
        %v3494 = vpack.c.b16 %v3119, %v3118
        %v3495 = vpack.c.b16 %v3121, %v3120
        %v3496 = vpack.c.b16 %v3123, %v3122
        %v3497 = vpack.c.b16 %v3125, %v3124
        %v3498 = vpack.c.b16 %v3127, %v3126
        %v3499 = vpack.c.b16 %v3129, %v3128
        %v3500 = vpack.c.b16 %v3131, %v3130
        %v3501 = vpack.c.b16 %v3133, %v3132
        %v3502 = vpack.c.b16 %v3135, %v3134
        %v3503 = vpack.c.b16 %v3137, %v3136
        %v3504 = vpack.c.b16 %v3139, %v3138
        %v3505 = vpack.c.b16 %v3141, %v3140
        %v3506 = vpack.c.b16 %v3143, %v3142
        %v3507 = vpack.c.b16 %v3145, %v3144
        %v3508 = vpack.c.b16 %v3147, %v3146
        %v3509 = vpack.c.b16 %v3149, %v3148
        %v3510 = vpack.c.b16 %v3151, %v3150
        %v3511 = vpack.c.b16 %v3153, %v3152
        %v3512 = vpack.c.b16 %v3155, %v3154
        %v3513 = vpack.c.b16 %v3157, %v3156
        %v3514 = vpack.c.b16 %v3159, %v3158
        %v3515 = vpack.c.b16 %v3161, %v3160
        %v3516 = vpack.c.b16 %v3163, %v3162
        %v3517 = vpack.c.b16 %v3165, %v3164
        %v3518 = vpack.c.b16 %v3167, %v3166
        %v3519 = vpack.c.b16 %v3169, %v3168
        %v3520 = vpack.c.b16 %v3171, %v3170
        %v3521 = vpack.c.b16 %v3173, %v3172
        %v3522 = vpack.c.b16 %v3175, %v3174
        %v3523 = vpack.c.b16 %v3177, %v3176
        %v3524 = vpack.c.b16 %v3179, %v3178
        %v3525 = vpack.c.b16 %v3181, %v3180
        %v3526 = vpack.c.b16 %v3183, %v3182
        %v3527 = vpack.c.b16 %v3185, %v3184
        %v3528 = vpack.c.b16 %v3187, %v3186
        %v3529 = vpack.c.b16 %v3189, %v3188
        %v3530 = vpack.c.b16 %v3191, %v3190
        %v3531 = vpack.c.b16 %v3193, %v3192
        %v3532 = vpack.c.b16 %v3195, %v3194
        %v3533 = vpack.c.b16 %v3197, %v3196
        %v3534 = vpack.c.b16 %v3199, %v3198
        %v3535 = vpack.c.b16 %v3201, %v3200
        %v3536 = vpack.c.b16 %v3203, %v3202
        %v3537 = vpack.c.b16 %v3205, %v3204
        %v3538 = vpack.c.b16 %v3207, %v3206
        %v3539 = vpack.c.b16 %v3209, %v3208
        %v3540 = vpack.c.b16 %v3211, %v3210
        %v3541 = vpack.c.b16 %v3213, %v3212
        %v3542 = vpack.c.b16 %v3215, %v3214
        %v3543 = vpack.c.b16 %v3217, %v3216
        %v3544 = vpack.c.b16 %v3219, %v3218
        %v3545 = vpack.c.b16 %v3221, %v3220
        %v3546 = vpack.c.b16 %v3223, %v3222
        %v3547 = vpack.c.b16 %v3225, %v3224
        %v3548 = vpack.c.b16 %v3227, %v3226
        %v3549 = vpack.c.b16 %v3229, %v3228
        %v3550 = vpack.c.b16 %v3231, %v3230
        %v3551 = vpack.c.b16 %v3233, %v3232
        %v3552 = vpack.c.b16 %v3235, %v3234
        %v3553 = vpack.c.b16 %v3237, %v3236
        %v3554 = vpack.c.b16 %v3239, %v3238
        %v3555 = vpack.c.b16 %v3241, %v3240
        %v3556 = vpack.c.b16 %v3243, %v3242
        %v3557 = vpack.c.b16 %v3245, %v3244
        %v3558 = vpack.c.b16 %v3247, %v3246
        %v3559 = vpack.c.b16 %v3249, %v3248
        %v3560 = vpack.c.b16 %v3251, %v3250
        %v3561 = vpack.c.b16 %v3253, %v3252
        %v3562 = vpack.c.b16 %v3255, %v3254
        %v3563 = vpack.c.b16 %v3257, %v3256
        %v3564 = vpack.c.b16 %v3259, %v3258
        %v3565 = vpack.c.b16 %v3261, %v3260
        %v3566 = vpack.c.b16 %v3263, %v3262
        %v3567 = vpack.c.b16 %v3265, %v3264
        %v3568 = vpack.c.b16 %v3267, %v3266
        %v3569 = vpack.c.b16 %v3269, %v3268
        %v3570 = vpack.c.b16 %v3271, %v3270
        %v3571 = vpack.c.b16 %v3273, %v3272
        %v3572 = vpack.c.b16 %v3275, %v3274
        %v3573 = vpack.c.b16 %v3277, %v3276
        %v3574 = vpack.c.b16 %v3279, %v3278
        %v3575 = vpack.c.b16 %v3281, %v3280
        %v3576 = vpack.c.b16 %v3283, %v3282
        %v3577 = vpack.c.b16 %v3285, %v3284
        %v3578 = vpack.c.b16 %v3287, %v3286
        %v3579 = vpack.c.b16 %v3289, %v3288
        %v3580 = vpack.c.b16 %v3291, %v3290
        %v3581 = vpack.c.b16 %v3293, %v3292
        %v3582 = vpack.c.b16 %v3295, %v3294
        %v3583 = vpack.c.b16 %v3297, %v3296
        %v3584 = vpack.c.b16 %v3299, %v3298
        %v3585 = vpack.c.b16 %v3301, %v3300
        %v3586 = vpack.c.b16 %v3303, %v3302
        %v3587 = vpack.c.b16 %v3305, %v3304
        %v3588 = vpack.c.b16 %v3307, %v3306
        %v3589 = vpack.c.b16 %v3309, %v3308
        %v3590 = vpack.c.b16 %v3311, %v3310
        %v3591 = vpack.c.b16 %v3313, %v3312
        %v3592 = vpack.c.b16 %v3315, %v3314
        %v3593 = vpack.c.b16 %v3317, %v3316
        %v3594 = vpack.c.b16 %v3319, %v3318
        %v3595 = vpack.c.b16 %v3321, %v3320
        %v3596 = vpack.c.b16 %v3323, %v3322
        %v3597 = vpack.c.b16 %v3325, %v3324
        %v3598 = vpack.c.b16 %v3327, %v3326
        %v3599 = vpack.c.b16 %v3329, %v3328
        %v3600 = vpack.c.b16 %v3331, %v3330
        %v3601 = vpack.c.b16 %v3333, %v3332
        %v3602 = vpack.c.b16 %v3335, %v3334
        %v3603 = vpack.c.b16 %v3337, %v3336
        %v3604 = vpack.c.b16 %v3339, %v3338
        %v3605 = vpack.c.b16 %v3341, %v3340
        %v3606 = vpack.c.b16 %v3343, %v3342
        %v3607 = vpack.c.b16 %v3345, %v3344
        %v3608 = vpack.c.b16 %v3347, %v3346
        %v3609 = vpack.c.b16 %v3349, %v3348
        %v3610 = vpack.c.b16 %v3351, %v3350
        %v3611 = vpack.c.b16 %v3353, %v3352
        %v3612 = vpack.c.b16 %v3355, %v3354
        %v3613 = vpack.c.b16 %v3357, %v3356
        %v3614 = vpack.c.b16 %v3359, %v3358
        %v3615 = vpack.c.b16 %v3361, %v3360
        %v3616 = vpack.c.b16 %v3363, %v3362
        %v3617 = vpack.c.b16 %v3365, %v3364
        %v3618 = vpack.c.b16 %v3367, %v3366
        %v3619 = vpack.c.b16 %v3369, %v3368
        %v3620 = vpack.c.b16 %v3371, %v3370
        %v3621 = vpack.c.b16 %v3373, %v3372
        %v3622 = vpack.c.b16 %v3375, %v3374
        %v3623 = vpack.c.b16 %v3377, %v3376
        %v3624 = vpack.c.b16 %v3379, %v3378
        %v3625 = vpack.c.b16 %v3381, %v3380
        %v3626 = vpack.c.b16 %v3383, %v3382
        %v3627 = vpack.c.b16 %v3385, %v3384
        %v3628 = vpack.c.b16 %v3387, %v3386
        %v3629 = vpack.c.b16 %v3389, %v3388
        %v3630 = vpack.c.b16 %v3391, %v3390
        %v3631 = vpack.c.b16 %v3393, %v3392
        %v3632 = vpack.c.b16 %v3395, %v3394
        %v3633 = vpack.c.b16 %v3397, %v3396
        %v3634 = vpack.c.b16 %v3399, %v3398
        %v3635 = vpack.c.b16 %v3401, %v3400
        %v3636 = vpack.c.b16 %v3403, %v3402
        %v3637 = vpack.c.b16 %v3405, %v3404
        %v3638 = vpack.c.b16 %v3407, %v3406
        %v3639 = vpack.c.b16 %v3409, %v3408
        %v3640 = vpack.c.b16 %v3411, %v3410
        %v3641 = vpack.c.b16 %v3413, %v3412
        %v3642 = vpack.c.b16 %v3415, %v3414
        %v3643 = vpack.c.b16 %v3417, %v3416
        %v3644 = vpack.c.b16 %v3419, %v3418
        %v3645 = vpack.c.b16 %v3421, %v3420
        %v3646 = vpack.c.b16 %v3423, %v3422
        %v3647 = vpack.c.b16 %v3425, %v3424
        %v3648 = vpack.c.b16 %v3427, %v3426
        %v3649 = vpack.c.b16 %v3429, %v3428
        %v3650 = vpack.c.b16 %v3431, %v3430
        %v3651 = vpack.c.b16 %v3433, %v3432
        %v3652 = vpack.c.b16 %v3435, %v3434
        %v3653 = vpack.c.b16 %v3437, %v3436
        %v3654 = vpack.c.b16 %v3439, %v3438
        %v3655 = vpack.c.b16 %v3441, %v3440
        %v3656 = vpack.c.b16 %v3443, %v3442
        %v3657 = vpack.c.b16 %v3445, %v3444
        %v3658 = vpack.c.b16 %v3447, %v3446
        %v3659 = vpack.c.b16 %v3449, %v3448
        %v3660 = vpack.c.b16 %v3451, %v3450
        %v3661 = vpack.c.b16 %v3453, %v3452
        %v3662 = vpack.c.b16 %v3455, %v3454
        %v3663 = vpack.c.b16 %v3457, %v3456
        %v3664 = vpack.c.b16 %v3459, %v3458
        %v3665 = vpack.c.b16 %v3461, %v3460
        %v3666 = vpack.c.b16 %v3463, %v3462
        %v3667 = vpack.c.b16 %v3465, %v3464
        %v3668 = vpack.c.b16 %v3467, %v3466
        %v3669 = vpack.c.b16 %v3469, %v3468
        %3870 = vmatprep.subr.bf16.mxu0 0
        %3871 = vmatpush1.bf16.msra.mxu0 %v3477
        %3872 = vmatprep.subr.bf16.mxu0 0
        %3873 = vmatpush1.bf16.msra.mxu0 %v3476
        %3874 = vmatprep.subr.bf16.mxu0 0
        %3875 = vmatpush1.bf16.msra.mxu0 %v3475
        %3876 = vmatprep.subr.bf16.mxu0 0
        %3877 = vmatpush1.bf16.msra.mxu0 %v3474
        %3878 = vmatprep.subr.bf16.mxu0 0
        %3879 = vmatpush1.bf16.msra.mxu0 %v3473
        %3880 = vmatprep.subr.bf16.mxu0 0
        %3881 = vmatpush1.bf16.msra.mxu0 %v3472
        %3882 = vmatprep.subr.bf16.mxu0 0
        %3883 = vmatpush1.bf16.msra.mxu0 %v3471
        %3884 = vmatprep.subr.bf16.mxu0 0
        %3885 = vmatpush1.bf16.msra.mxu0 %v3470
        %3886 = vmatprep.subr.bf16.mxu0 0
        %3887 = vmatpush2.bf16.msra.mxu0 %v3485
        %3888 = vmatprep.subr.bf16.mxu0 0
        %3889 = vmatpush2.bf16.msra.mxu0 %v3484
        %3890 = vmatprep.subr.bf16.mxu0 0
        %3891 = vmatpush2.bf16.msra.mxu0 %v3483
        %3892 = vmatprep.subr.bf16.mxu0 0
        %3893 = vmatpush2.bf16.msra.mxu0 %v3482
        %3894 = vmatprep.subr.bf16.mxu0 0
        %3895 = vmatpush2.bf16.msra.mxu0 %v3481
        %3896 = vmatprep.subr.bf16.mxu0 0
        %3897 = vmatpush2.bf16.msra.mxu0 %v3480
        %3898 = vmatprep.subr.bf16.mxu0 0
        %3899 = vmatpush2.bf16.msra.mxu0 %v3479
        %3900 = vmatprep.subr.bf16.mxu0 0
        %3901 = vmatpush2.bf16.msra.mxu0 %v3478
        %3902 = vmatprep.mubr.bf16.mxu0 %v2239
        %3903 = vmatmul.mubr.bf16.gmra.mxu0 %v2238
        %v3904 = vpop.f32.mrf.mxu0
        %v3905 = vadd.f32 %v2668, %v3904
        %v3906 = vpop.f32.mrf.mxu0
        %v3907 = vpop.f32.mrf.mxu0
        %v3908 = vpop.f32.mrf.mxu0
        %3909 = vdwg.mxu0
        %3910 = vmatprep.subr.bf16.mxu0 0
        %3911 = vmatpush1.bf16.msra.mxu0 %v3493
        %3912 = vmatprep.subr.bf16.mxu0 0
        %3913 = vmatpush1.bf16.msra.mxu0 %v3492
        %3914 = vmatprep.subr.bf16.mxu0 0
        %3915 = vmatpush1.bf16.msra.mxu0 %v3491
        %3916 = vmatprep.subr.bf16.mxu0 0
        %3917 = vmatpush1.bf16.msra.mxu0 %v3490
        %3918 = vmatprep.subr.bf16.mxu0 0
        %3919 = vmatpush1.bf16.msra.mxu0 %v3489
        %3920 = vmatprep.subr.bf16.mxu0 0
        %3921 = vmatpush1.bf16.msra.mxu0 %v3488
        %3922 = vmatprep.subr.bf16.mxu0 0
        %3923 = vmatpush1.bf16.msra.mxu0 %v3487
        %3924 = vmatprep.subr.bf16.mxu0 0
        %3925 = vmatpush1.bf16.msra.mxu0 %v3486
        %3926 = vmatprep.subr.bf16.mxu0 0
        %3927 = vmatpush2.bf16.msra.mxu0 %v3501
        %3928 = vmatprep.subr.bf16.mxu0 0
        %3929 = vmatpush2.bf16.msra.mxu0 %v3500
        %3930 = vmatprep.subr.bf16.mxu0 0
        %3931 = vmatpush2.bf16.msra.mxu0 %v3499
        %3932 = vmatprep.subr.bf16.mxu0 0
        %3933 = vmatpush2.bf16.msra.mxu0 %v3498
        %3934 = vmatprep.subr.bf16.mxu0 0
        %3935 = vmatpush2.bf16.msra.mxu0 %v3497
        %3936 = vmatprep.subr.bf16.mxu0 0
        %3937 = vmatpush2.bf16.msra.mxu0 %v3496
        %3938 = vmatprep.subr.bf16.mxu0 0
        %3939 = vmatpush2.bf16.msra.mxu0 %v3495
        %3940 = vmatprep.subr.bf16.mxu0 0
        %3941 = vmatpush2.bf16.msra.mxu0 %v3494
        %3942 = vmatprep.mubr.bf16.mxu0 %v2241
        %3943 = vmatmul.mubr.bf16.gmra.mxu0 %v2240
        %v3944 = vpop.f32.mrf.mxu0
        %v3945 = vadd.f32 %v3905, %v3944
        %v3946 = vpop.f32.mrf.mxu0
        %v3947 = vpop.f32.mrf.mxu0
        %v3948 = vpop.f32.mrf.mxu0
        %3949 = vdwg.mxu0
        %3950 = vmatprep.subr.bf16.mxu0 0
        %3951 = vmatpush1.bf16.msra.mxu0 %v3509
        %3952 = vmatprep.subr.bf16.mxu0 0
        %3953 = vmatpush1.bf16.msra.mxu0 %v3508
        %3954 = vmatprep.subr.bf16.mxu0 0
        %3955 = vmatpush1.bf16.msra.mxu0 %v3507
        %3956 = vmatprep.subr.bf16.mxu0 0
        %3957 = vmatpush1.bf16.msra.mxu0 %v3506
        %3958 = vmatprep.subr.bf16.mxu0 0
        %3959 = vmatpush1.bf16.msra.mxu0 %v3505
        %3960 = vmatprep.subr.bf16.mxu0 0
        %3961 = vmatpush1.bf16.msra.mxu0 %v3504
        %3962 = vmatprep.subr.bf16.mxu0 0
        %3963 = vmatpush1.bf16.msra.mxu0 %v3503
        %3964 = vmatprep.subr.bf16.mxu0 0
        %3965 = vmatpush1.bf16.msra.mxu0 %v3502
        %3966 = vmatprep.subr.bf16.mxu0 0
        %3967 = vmatpush2.bf16.msra.mxu0 %v3517
        %3968 = vmatprep.subr.bf16.mxu0 0
        %3969 = vmatpush2.bf16.msra.mxu0 %v3516
        %3970 = vmatprep.subr.bf16.mxu0 0
        %3971 = vmatpush2.bf16.msra.mxu0 %v3515
        %3972 = vmatprep.subr.bf16.mxu0 0
        %3973 = vmatpush2.bf16.msra.mxu0 %v3514
        %3974 = vmatprep.subr.bf16.mxu0 0
        %3975 = vmatpush2.bf16.msra.mxu0 %v3513
        %3976 = vmatprep.subr.bf16.mxu0 0
        %3977 = vmatpush2.bf16.msra.mxu0 %v3512
        %3978 = vmatprep.subr.bf16.mxu0 0
        %3979 = vmatpush2.bf16.msra.mxu0 %v3511
        %3980 = vmatprep.subr.bf16.mxu0 0
        %3981 = vmatpush2.bf16.msra.mxu0 %v3510
        %3982 = vmatprep.mubr.bf16.mxu0 %v2243
        %3983 = vmatmul.mubr.bf16.gmra.mxu0 %v2242
        %v3984 = vpop.f32.mrf.mxu0
        %v3985 = vadd.f32 %v3945, %v3984
        %v3986 = vpop.f32.mrf.mxu0
        %v3987 = vpop.f32.mrf.mxu0
        %v3988 = vpop.f32.mrf.mxu0
        %3989 = vdwg.mxu0
        %3990 = vmatprep.subr.bf16.mxu0 0
        %3991 = vmatpush1.bf16.msra.mxu0 %v3525
        %3992 = vmatprep.subr.bf16.mxu0 0
        %3993 = vmatpush1.bf16.msra.mxu0 %v3524
        %3994 = vmatprep.subr.bf16.mxu0 0
        %3995 = vmatpush1.bf16.msra.mxu0 %v3523
        %3996 = vmatprep.subr.bf16.mxu0 0
        %3997 = vmatpush1.bf16.msra.mxu0 %v3522
        %3998 = vmatprep.subr.bf16.mxu0 0
        %3999 = vmatpush1.bf16.msra.mxu0 %v3521
        %4000 = vmatprep.subr.bf16.mxu0 0
        %4001 = vmatpush1.bf16.msra.mxu0 %v3520
        %4002 = vmatprep.subr.bf16.mxu0 0
        %4003 = vmatpush1.bf16.msra.mxu0 %v3519
        %4004 = vmatprep.subr.bf16.mxu0 0
        %4005 = vmatpush1.bf16.msra.mxu0 %v3518
        %4006 = vmatprep.subr.bf16.mxu0 0
        %4007 = vmatpush2.bf16.msra.mxu0 %v3533
        %4008 = vmatprep.subr.bf16.mxu0 0
        %4009 = vmatpush2.bf16.msra.mxu0 %v3532
        %4010 = vmatprep.subr.bf16.mxu0 0
        %4011 = vmatpush2.bf16.msra.mxu0 %v3531
        %4012 = vmatprep.subr.bf16.mxu0 0
        %4013 = vmatpush2.bf16.msra.mxu0 %v3530
        %4014 = vmatprep.subr.bf16.mxu0 0
        %4015 = vmatpush2.bf16.msra.mxu0 %v3529
        %4016 = vmatprep.subr.bf16.mxu0 0
        %4017 = vmatpush2.bf16.msra.mxu0 %v3528
        %4018 = vmatprep.subr.bf16.mxu0 0
        %4019 = vmatpush2.bf16.msra.mxu0 %v3527
        %4020 = vmatprep.subr.bf16.mxu0 0
        %4021 = vmatpush2.bf16.msra.mxu0 %v3526
        %4022 = vmatprep.mubr.bf16.mxu0 %v2245
        %4023 = vmatmul.mubr.bf16.gmra.mxu0 %v2244
        %v4024 = vpop.f32.mrf.mxu0
        %v4025 = vadd.f32 %v3985, %v4024
        %v4026 = vpop.f32.mrf.mxu0
        %v4027 = vpop.f32.mrf.mxu0
        %v4028 = vpop.f32.mrf.mxu0
        %4029 = vdwg.mxu0
        %4030 = vmatprep.subr.bf16.mxu0 0
        %4031 = vmatpush1.bf16.msra.mxu0 %v3541
        %4032 = vmatprep.subr.bf16.mxu0 0
        %4033 = vmatpush1.bf16.msra.mxu0 %v3540
        %4034 = vmatprep.subr.bf16.mxu0 0
        %4035 = vmatpush1.bf16.msra.mxu0 %v3539
        %4036 = vmatprep.subr.bf16.mxu0 0
        %4037 = vmatpush1.bf16.msra.mxu0 %v3538
        %4038 = vmatprep.subr.bf16.mxu0 0
        %4039 = vmatpush1.bf16.msra.mxu0 %v3537
        %4040 = vmatprep.subr.bf16.mxu0 0
        %4041 = vmatpush1.bf16.msra.mxu0 %v3536
        %4042 = vmatprep.subr.bf16.mxu0 0
        %4043 = vmatpush1.bf16.msra.mxu0 %v3535
        %4044 = vmatprep.subr.bf16.mxu0 0
        %4045 = vmatpush1.bf16.msra.mxu0 %v3534
        %4046 = vmatprep.subr.bf16.mxu0 0
        %4047 = vmatpush2.bf16.msra.mxu0 %v3549
        %4048 = vmatprep.subr.bf16.mxu0 0
        %4049 = vmatpush2.bf16.msra.mxu0 %v3548
        %4050 = vmatprep.subr.bf16.mxu0 0
        %4051 = vmatpush2.bf16.msra.mxu0 %v3547
        %4052 = vmatprep.subr.bf16.mxu0 0
        %4053 = vmatpush2.bf16.msra.mxu0 %v3546
        %4054 = vmatprep.subr.bf16.mxu0 0
        %4055 = vmatpush2.bf16.msra.mxu0 %v3545
        %4056 = vmatprep.subr.bf16.mxu0 0
        %4057 = vmatpush2.bf16.msra.mxu0 %v3544
        %4058 = vmatprep.subr.bf16.mxu0 0
        %4059 = vmatpush2.bf16.msra.mxu0 %v3543
        %4060 = vmatprep.subr.bf16.mxu0 0
        %4061 = vmatpush2.bf16.msra.mxu0 %v3542
        %4062 = vmatprep.mubr.bf16.mxu0 %v2247
        %4063 = vmatmul.mubr.bf16.gmra.mxu0 %v2246
        %v4064 = vpop.f32.mrf.mxu0
        %v4065 = vadd.f32 %v4025, %v4064
        %v4066 = vpop.f32.mrf.mxu0
        %v4067 = vpop.f32.mrf.mxu0
        %v4068 = vpop.f32.mrf.mxu0
        %4069 = vdwg.mxu0
        %4070 = vmatprep.subr.bf16.mxu0 0
        %4071 = vmatpush1.bf16.msra.mxu0 %v3557
        %4072 = vmatprep.subr.bf16.mxu0 0
        %4073 = vmatpush1.bf16.msra.mxu0 %v3556
        %4074 = vmatprep.subr.bf16.mxu0 0
        %4075 = vmatpush1.bf16.msra.mxu0 %v3555
        %4076 = vmatprep.subr.bf16.mxu0 0
        %4077 = vmatpush1.bf16.msra.mxu0 %v3554
        %4078 = vmatprep.subr.bf16.mxu0 0
        %4079 = vmatpush1.bf16.msra.mxu0 %v3553
        %4080 = vmatprep.subr.bf16.mxu0 0
        %4081 = vmatpush1.bf16.msra.mxu0 %v3552
        %4082 = vmatprep.subr.bf16.mxu0 0
        %4083 = vmatpush1.bf16.msra.mxu0 %v3551
        %4084 = vmatprep.subr.bf16.mxu0 0
        %4085 = vmatpush1.bf16.msra.mxu0 %v3550
        %4086 = vmatprep.subr.bf16.mxu0 0
        %4087 = vmatpush2.bf16.msra.mxu0 %v3565
        %4088 = vmatprep.subr.bf16.mxu0 0
        %4089 = vmatpush2.bf16.msra.mxu0 %v3564
        %4090 = vmatprep.subr.bf16.mxu0 0
        %4091 = vmatpush2.bf16.msra.mxu0 %v3563
        %4092 = vmatprep.subr.bf16.mxu0 0
        %4093 = vmatpush2.bf16.msra.mxu0 %v3562
        %4094 = vmatprep.subr.bf16.mxu0 0
        %4095 = vmatpush2.bf16.msra.mxu0 %v3561
        %4096 = vmatprep.subr.bf16.mxu0 0
        %4097 = vmatpush2.bf16.msra.mxu0 %v3560
        %4098 = vmatprep.subr.bf16.mxu0 0
        %4099 = vmatpush2.bf16.msra.mxu0 %v3559
        %4100 = vmatprep.subr.bf16.mxu0 0
        %4101 = vmatpush2.bf16.msra.mxu0 %v3558
        %4102 = vmatprep.mubr.bf16.mxu0 %v2249
        %4103 = vmatmul.mubr.bf16.gmra.mxu0 %v2248
        %v4104 = vpop.f32.mrf.mxu0
        %v4105 = vadd.f32 %v4065, %v4104
        %v4106 = vpop.f32.mrf.mxu0
        %v4107 = vpop.f32.mrf.mxu0
        %v4108 = vpop.f32.mrf.mxu0
        %4109 = vdwg.mxu0
        %4110 = vmatprep.subr.bf16.mxu0 0
        %4111 = vmatpush1.bf16.msra.mxu0 %v3573
        %4112 = vmatprep.subr.bf16.mxu0 0
        %4113 = vmatpush1.bf16.msra.mxu0 %v3572
        %4114 = vmatprep.subr.bf16.mxu0 0
        %4115 = vmatpush1.bf16.msra.mxu0 %v3571
        %4116 = vmatprep.subr.bf16.mxu0 0
        %4117 = vmatpush1.bf16.msra.mxu0 %v3570
        %4118 = vmatprep.subr.bf16.mxu0 0
        %4119 = vmatpush1.bf16.msra.mxu0 %v3569
        %4120 = vmatprep.subr.bf16.mxu0 0
        %4121 = vmatpush1.bf16.msra.mxu0 %v3568
        %4122 = vmatprep.subr.bf16.mxu0 0
        %4123 = vmatpush1.bf16.msra.mxu0 %v3567
        %4124 = vmatprep.subr.bf16.mxu0 0
        %4125 = vmatpush1.bf16.msra.mxu0 %v3566
        %4126 = vmatprep.subr.bf16.mxu0 0
        %4127 = vmatpush2.bf16.msra.mxu0 %v3581
        %4128 = vmatprep.subr.bf16.mxu0 0
        %4129 = vmatpush2.bf16.msra.mxu0 %v3580
        %4130 = vmatprep.subr.bf16.mxu0 0
        %4131 = vmatpush2.bf16.msra.mxu0 %v3579
        %4132 = vmatprep.subr.bf16.mxu0 0
        %4133 = vmatpush2.bf16.msra.mxu0 %v3578
        %4134 = vmatprep.subr.bf16.mxu0 0
        %4135 = vmatpush2.bf16.msra.mxu0 %v3577
        %4136 = vmatprep.subr.bf16.mxu0 0
        %4137 = vmatpush2.bf16.msra.mxu0 %v3576
        %4138 = vmatprep.subr.bf16.mxu0 0
        %4139 = vmatpush2.bf16.msra.mxu0 %v3575
        %4140 = vmatprep.subr.bf16.mxu0 0
        %4141 = vmatpush2.bf16.msra.mxu0 %v3574
        %4142 = vmatprep.mubr.bf16.mxu0 %v2251
        %4143 = vmatmul.mubr.bf16.gmra.mxu0 %v2250
        %v4144 = vpop.f32.mrf.mxu0
        %v4145 = vadd.f32 %v4105, %v4144
        %v4146 = vpop.f32.mrf.mxu0
        %v4147 = vpop.f32.mrf.mxu0
        %v4148 = vpop.f32.mrf.mxu0
        %4149 = vdwg.mxu0
        %4150 = vmatprep.subr.bf16.mxu0 0
        %4151 = vmatpush1.bf16.msra.mxu0 %v3589
        %4152 = vmatprep.subr.bf16.mxu0 0
        %4153 = vmatpush1.bf16.msra.mxu0 %v3588
        %4154 = vmatprep.subr.bf16.mxu0 0
        %4155 = vmatpush1.bf16.msra.mxu0 %v3587
        %4156 = vmatprep.subr.bf16.mxu0 0
        %4157 = vmatpush1.bf16.msra.mxu0 %v3586
        %4158 = vmatprep.subr.bf16.mxu0 0
        %4159 = vmatpush1.bf16.msra.mxu0 %v3585
        %4160 = vmatprep.subr.bf16.mxu0 0
        %4161 = vmatpush1.bf16.msra.mxu0 %v3584
        %4162 = vmatprep.subr.bf16.mxu0 0
        %4163 = vmatpush1.bf16.msra.mxu0 %v3583
        %4164 = vmatprep.subr.bf16.mxu0 0
        %4165 = vmatpush1.bf16.msra.mxu0 %v3582
        %4166 = vmatprep.subr.bf16.mxu0 0
        %4167 = vmatpush2.bf16.msra.mxu0 %v3597
        %4168 = vmatprep.subr.bf16.mxu0 0
        %4169 = vmatpush2.bf16.msra.mxu0 %v3596
        %4170 = vmatprep.subr.bf16.mxu0 0
        %4171 = vmatpush2.bf16.msra.mxu0 %v3595
        %4172 = vmatprep.subr.bf16.mxu0 0
        %4173 = vmatpush2.bf16.msra.mxu0 %v3594
        %4174 = vmatprep.subr.bf16.mxu0 0
        %4175 = vmatpush2.bf16.msra.mxu0 %v3593
        %4176 = vmatprep.subr.bf16.mxu0 0
        %4177 = vmatpush2.bf16.msra.mxu0 %v3592
        %4178 = vmatprep.subr.bf16.mxu0 0
        %4179 = vmatpush2.bf16.msra.mxu0 %v3591
        %4180 = vmatprep.subr.bf16.mxu0 0
        %4181 = vmatpush2.bf16.msra.mxu0 %v3590
        %4182 = vmatprep.mubr.bf16.mxu0 %v2253
        %4183 = vmatmul.mubr.bf16.gmra.mxu0 %v2252
        %v4184 = vpop.f32.mrf.mxu0
        %v4185 = vadd.f32 %v4145, %v4184
        %v4186 = vpop.f32.mrf.mxu0
        %v4187 = vpop.f32.mrf.mxu0
        %v4188 = vpop.f32.mrf.mxu0
        %4189 = vdwg.mxu0
        %4190 = vmatprep.subr.bf16.mxu0 0
        %4191 = vmatpush1.bf16.msra.mxu0 %v3605
        %4192 = vmatprep.subr.bf16.mxu0 0
        %4193 = vmatpush1.bf16.msra.mxu0 %v3604
        %4194 = vmatprep.subr.bf16.mxu0 0
        %4195 = vmatpush1.bf16.msra.mxu0 %v3603
        %4196 = vmatprep.subr.bf16.mxu0 0
        %4197 = vmatpush1.bf16.msra.mxu0 %v3602
        %4198 = vmatprep.subr.bf16.mxu0 0
        %4199 = vmatpush1.bf16.msra.mxu0 %v3601
        %4200 = vmatprep.subr.bf16.mxu0 0
        %4201 = vmatpush1.bf16.msra.mxu0 %v3600
        %4202 = vmatprep.subr.bf16.mxu0 0
        %4203 = vmatpush1.bf16.msra.mxu0 %v3599
        %4204 = vmatprep.subr.bf16.mxu0 0
        %4205 = vmatpush1.bf16.msra.mxu0 %v3598
        %4206 = vmatprep.subr.bf16.mxu0 0
        %4207 = vmatpush2.bf16.msra.mxu0 %v3613
        %4208 = vmatprep.subr.bf16.mxu0 0
        %4209 = vmatpush2.bf16.msra.mxu0 %v3612
        %4210 = vmatprep.subr.bf16.mxu0 0
        %4211 = vmatpush2.bf16.msra.mxu0 %v3611
        %4212 = vmatprep.subr.bf16.mxu0 0
        %4213 = vmatpush2.bf16.msra.mxu0 %v3610
        %4214 = vmatprep.subr.bf16.mxu0 0
        %4215 = vmatpush2.bf16.msra.mxu0 %v3609
        %4216 = vmatprep.subr.bf16.mxu0 0
        %4217 = vmatpush2.bf16.msra.mxu0 %v3608
        %4218 = vmatprep.subr.bf16.mxu0 0
        %4219 = vmatpush2.bf16.msra.mxu0 %v3607
        %4220 = vmatprep.subr.bf16.mxu0 0
        %4221 = vmatpush2.bf16.msra.mxu0 %v3606
        %4222 = vmatprep.mubr.bf16.mxu0 %v2255
        %4223 = vmatmul.mubr.bf16.gmra.mxu0 %v2254
        %v4224 = vpop.f32.mrf.mxu0
        %v4225 = vadd.f32 %v4185, %v4224
        %v4226 = vpop.f32.mrf.mxu0
        %v4227 = vpop.f32.mrf.mxu0
        %v4228 = vpop.f32.mrf.mxu0
        %4229 = vdwg.mxu0
        %4230 = vmatprep.subr.bf16.mxu0 0
        %4231 = vmatpush1.bf16.msra.mxu0 %v3621
        %4232 = vmatprep.subr.bf16.mxu0 0
        %4233 = vmatpush1.bf16.msra.mxu0 %v3620
        %4234 = vmatprep.subr.bf16.mxu0 0
        %4235 = vmatpush1.bf16.msra.mxu0 %v3619
        %4236 = vmatprep.subr.bf16.mxu0 0
        %4237 = vmatpush1.bf16.msra.mxu0 %v3618
        %4238 = vmatprep.subr.bf16.mxu0 0
        %4239 = vmatpush1.bf16.msra.mxu0 %v3617
        %4240 = vmatprep.subr.bf16.mxu0 0
        %4241 = vmatpush1.bf16.msra.mxu0 %v3616
        %4242 = vmatprep.subr.bf16.mxu0 0
        %4243 = vmatpush1.bf16.msra.mxu0 %v3615
        %4244 = vmatprep.subr.bf16.mxu0 0
        %4245 = vmatpush1.bf16.msra.mxu0 %v3614
        %4246 = vmatprep.subr.bf16.mxu0 0
        %4247 = vmatpush2.bf16.msra.mxu0 %v3629
        %4248 = vmatprep.subr.bf16.mxu0 0
        %4249 = vmatpush2.bf16.msra.mxu0 %v3628
        %4250 = vmatprep.subr.bf16.mxu0 0
        %4251 = vmatpush2.bf16.msra.mxu0 %v3627
        %4252 = vmatprep.subr.bf16.mxu0 0
        %4253 = vmatpush2.bf16.msra.mxu0 %v3626
        %4254 = vmatprep.subr.bf16.mxu0 0
        %4255 = vmatpush2.bf16.msra.mxu0 %v3625
        %4256 = vmatprep.subr.bf16.mxu0 0
        %4257 = vmatpush2.bf16.msra.mxu0 %v3624
        %4258 = vmatprep.subr.bf16.mxu0 0
        %4259 = vmatpush2.bf16.msra.mxu0 %v3623
        %4260 = vmatprep.subr.bf16.mxu0 0
        %4261 = vmatpush2.bf16.msra.mxu0 %v3622
        %4262 = vmatprep.mubr.bf16.mxu0 %v2257
        %4263 = vmatmul.mubr.bf16.gmra.mxu0 %v2256
        %v4264 = vpop.f32.mrf.mxu0
        %v4265 = vadd.f32 %v4225, %v4264
        %v4266 = vpop.f32.mrf.mxu0
        %v4267 = vpop.f32.mrf.mxu0
        %v4268 = vpop.f32.mrf.mxu0
        %4269 = vdwg.mxu0
        %4270 = vmatprep.subr.bf16.mxu0 0
        %4271 = vmatpush1.bf16.msra.mxu0 %v3637
        %4272 = vmatprep.subr.bf16.mxu0 0
        %4273 = vmatpush1.bf16.msra.mxu0 %v3636
        %4274 = vmatprep.subr.bf16.mxu0 0
        %4275 = vmatpush1.bf16.msra.mxu0 %v3635
        %4276 = vmatprep.subr.bf16.mxu0 0
        %4277 = vmatpush1.bf16.msra.mxu0 %v3634
        %4278 = vmatprep.subr.bf16.mxu0 0
        %4279 = vmatpush1.bf16.msra.mxu0 %v3633
        %4280 = vmatprep.subr.bf16.mxu0 0
        %4281 = vmatpush1.bf16.msra.mxu0 %v3632
        %4282 = vmatprep.subr.bf16.mxu0 0
        %4283 = vmatpush1.bf16.msra.mxu0 %v3631
        %4284 = vmatprep.subr.bf16.mxu0 0
        %4285 = vmatpush1.bf16.msra.mxu0 %v3630
        %4286 = vmatprep.subr.bf16.mxu0 0
        %4287 = vmatpush2.bf16.msra.mxu0 %v3645
        %4288 = vmatprep.subr.bf16.mxu0 0
        %4289 = vmatpush2.bf16.msra.mxu0 %v3644
        %4290 = vmatprep.subr.bf16.mxu0 0
        %4291 = vmatpush2.bf16.msra.mxu0 %v3643
        %4292 = vmatprep.subr.bf16.mxu0 0
        %4293 = vmatpush2.bf16.msra.mxu0 %v3642
        %4294 = vmatprep.subr.bf16.mxu0 0
        %4295 = vmatpush2.bf16.msra.mxu0 %v3641
        %4296 = vmatprep.subr.bf16.mxu0 0
        %4297 = vmatpush2.bf16.msra.mxu0 %v3640
        %4298 = vmatprep.subr.bf16.mxu0 0
        %4299 = vmatpush2.bf16.msra.mxu0 %v3639
        %4300 = vmatprep.subr.bf16.mxu0 0
        %4301 = vmatpush2.bf16.msra.mxu0 %v3638
        %4302 = vmatprep.mubr.bf16.mxu0 %v2259
        %4303 = vmatmul.mubr.bf16.gmra.mxu0 %v2258
        %v4304 = vpop.f32.mrf.mxu0
        %v4305 = vadd.f32 %v4265, %v4304
        %v4306 = vpop.f32.mrf.mxu0
        %v4307 = vpop.f32.mrf.mxu0
        %v4308 = vpop.f32.mrf.mxu0
        %4309 = vdwg.mxu0
        %4310 = vmatprep.subr.bf16.mxu0 0
        %4311 = vmatpush1.bf16.msra.mxu0 %v3653
        %4312 = vmatprep.subr.bf16.mxu0 0
        %4313 = vmatpush1.bf16.msra.mxu0 %v3652
        %4314 = vmatprep.subr.bf16.mxu0 0
        %4315 = vmatpush1.bf16.msra.mxu0 %v3651
        %4316 = vmatprep.subr.bf16.mxu0 0
        %4317 = vmatpush1.bf16.msra.mxu0 %v3650
        %4318 = vmatprep.subr.bf16.mxu0 0
        %4319 = vmatpush1.bf16.msra.mxu0 %v3649
        %4320 = vmatprep.subr.bf16.mxu0 0
        %4321 = vmatpush1.bf16.msra.mxu0 %v3648
        %4322 = vmatprep.subr.bf16.mxu0 0
        %4323 = vmatpush1.bf16.msra.mxu0 %v3647
        %4324 = vmatprep.subr.bf16.mxu0 0
        %4325 = vmatpush1.bf16.msra.mxu0 %v3646
        %4326 = vmatprep.subr.bf16.mxu0 0
        %4327 = vmatpush2.bf16.msra.mxu0 %v3661
        %4328 = vmatprep.subr.bf16.mxu0 0
        %4329 = vmatpush2.bf16.msra.mxu0 %v3660
        %4330 = vmatprep.subr.bf16.mxu0 0
        %4331 = vmatpush2.bf16.msra.mxu0 %v3659
        %4332 = vmatprep.subr.bf16.mxu0 0
        %4333 = vmatpush2.bf16.msra.mxu0 %v3658
        %4334 = vmatprep.subr.bf16.mxu0 0
        %4335 = vmatpush2.bf16.msra.mxu0 %v3657
        %4336 = vmatprep.subr.bf16.mxu0 0
        %4337 = vmatpush2.bf16.msra.mxu0 %v3656
        %4338 = vmatprep.subr.bf16.mxu0 0
        %4339 = vmatpush2.bf16.msra.mxu0 %v3655
        %4340 = vmatprep.subr.bf16.mxu0 0
        %4341 = vmatpush2.bf16.msra.mxu0 %v3654
        %4342 = vmatprep.mubr.bf16.mxu0 %v2261
        %4343 = vmatmul.mubr.bf16.gmra.mxu0 %v2260
        %v4344 = vpop.f32.mrf.mxu0
        %v4345 = vadd.f32 %v4305, %v4344
        %v4346 = vpop.f32.mrf.mxu0
        %v4347 = vpop.f32.mrf.mxu0
        %v4348 = vpop.f32.mrf.mxu0
        %4349 = vdwg.mxu0
        %4350 = vmatprep.subr.bf16.mxu0 0
        %4351 = vmatpush1.bf16.msra.mxu0 %v3669
        %4352 = vmatprep.subr.bf16.mxu0 0
        %4353 = vmatpush1.bf16.msra.mxu0 %v3668
        %4354 = vmatprep.subr.bf16.mxu0 0
        %4355 = vmatpush1.bf16.msra.mxu0 %v3667
        %4356 = vmatprep.subr.bf16.mxu0 0
        %4357 = vmatpush1.bf16.msra.mxu0 %v3666
        %4358 = vmatprep.subr.bf16.mxu0 0
        %4359 = vmatpush1.bf16.msra.mxu0 %v3665
        %4360 = vmatprep.subr.bf16.mxu0 0
        %4361 = vmatpush1.bf16.msra.mxu0 %v3664
        %4362 = vmatprep.subr.bf16.mxu0 0
        %4363 = vmatpush1.bf16.msra.mxu0 %v3663
        %4364 = vmatprep.subr.bf16.mxu0 0
        %4365 = vmatpush1.bf16.msra.mxu0 %v3662
        %4366 = vmatprep.subr.bf16.mxu0 0
        %4367 = vmatpush2.bf16.msra.mxu0 0
        %4368 = vmatprep.subr.bf16.mxu0 0
        %4369 = vmatpush2.bf16.msra.mxu0 0
        %4370 = vmatprep.subr.bf16.mxu0 0
        %4371 = vmatpush2.bf16.msra.mxu0 0
        %4372 = vmatprep.subr.bf16.mxu0 0
        %4373 = vmatpush2.bf16.msra.mxu0 0
        %4374 = vmatprep.subr.bf16.mxu0 0
        %4375 = vmatpush2.bf16.msra.mxu0 0
        %4376 = vmatprep.subr.bf16.mxu0 0
        %4377 = vmatpush2.bf16.msra.mxu0 0
        %4378 = vmatprep.subr.bf16.mxu0 0
        %4379 = vmatpush2.bf16.msra.mxu0 0
        %4380 = vmatprep.subr.bf16.mxu0 0
        %4381 = vmatpush2.bf16.msra.mxu0 0
        %4382 = vmatprep.mubr.bf16.mxu0 0
        %4383 = vmatmul.mubr.bf16.gmra.mxu0 %v2262
        %v4384 = vpop.f32.mrf.mxu0
        %v4385 = vadd.f32 %v4345, %v4384
        %v4386 = vpop.f32.mrf.mxu0
        %v4387 = vpop.f32.mrf.mxu0
        %v4388 = vpop.f32.mrf.mxu0
        %4389 = vdwg.mxu0
        %v4390 = vmax.f32 %v4385, 0.0
        %v4391 = vpack.c.bf16 %v4390, %v4390
        %v4392 = vld [vmem:[%s5] sm:$0xf]
        %v4393 = vld [vmem:[%s5 + $0x4] sm:$0xf]
        %v4394 = vld [vmem:[%s5 + $0x8] sm:$0xf]
        %v4395 = vld [vmem:[%s5 + $0xc] sm:$0xf]
        %v4396 = vld [vmem:[%s5 + $0x10] sm:$0xf]
        %v4397 = vld [vmem:[%s5 + $0x14] sm:$0xf]
        %v4398 = vld [vmem:[%s5 + $0x18] sm:$0xf]
        %v4399 = vld [vmem:[%s5 + $0x1c] sm:$0xf]
        %v4400 = vld [vmem:[%s5 + $0x20] sm:$0xf]
        %v4401 = vld [vmem:[%s5 + $0x24] sm:$0xf]
        %v4402 = vld [vmem:[%s5 + $0x28] sm:$0xf]
        %v4403 = vld [vmem:[%s5 + $0x2c] sm:$0xf]
        %v4404 = vld [vmem:[%s5 + $0x30] sm:$0xf]
        %v4405 = vld [vmem:[%s5 + $0x34] sm:$0xf]
        %v4406 = vld [vmem:[%s5 + $0x38] sm:$0xf]
        %v4407 = vld [vmem:[%s5 + $0x3c] sm:$0xf]
        %v4408 = vld [vmem:[%s6] sm:$0x1]
        %v4410 = vlaneseq
        %v4411 = vshrl.u32 %v4410, 7
        %v4412 = vsub.s32 0, %v4411
        %v4413 = vrot.slane %v4408, %v4412
        %v4431 = vunpack.c.l.b16 %v4392
        %v4432 = vunpack.c.l.b16 %v4393
        %v4433 = vunpack.c.l.b16 %v4394
        %v4434 = vunpack.c.l.b16 %v4395
        %v4435 = vunpack.c.l.b16 %v4396
        %v4436 = vunpack.c.l.b16 %v4397
        %v4437 = vunpack.c.l.b16 %v4398
        %v4438 = vunpack.c.l.b16 %v4399
        %v4439 = vunpack.c.l.b16 %v4400
        %v4440 = vunpack.c.l.b16 %v4401
        %v4441 = vunpack.c.l.b16 %v4402
        %v4442 = vunpack.c.l.b16 %v4403
        %v4443 = vunpack.c.l.b16 %v4404
        %v4444 = vunpack.c.l.b16 %v4405
        %v4445 = vunpack.c.l.b16 %v4406
        %v4446 = vunpack.c.l.b16 %v4407
        %v4447 = vpack.c.b16 %v4432, %v4431
        %v4448 = vpack.c.b16 %v4434, %v4433
        %v4449 = vpack.c.b16 %v4436, %v4435
        %v4450 = vpack.c.b16 %v4438, %v4437
        %v4451 = vpack.c.b16 %v4440, %v4439
        %v4452 = vpack.c.b16 %v4442, %v4441
        %v4453 = vpack.c.b16 %v4444, %v4443
        %v4454 = vpack.c.b16 %v4446, %v4445
        %4463 = vmatprep.subr.bf16.mxu0 0
        %4464 = vmatpush1.bf16.msra.mxu0 %v4454
        %4465 = vmatprep.subr.bf16.mxu0 0
        %4466 = vmatpush1.bf16.msra.mxu0 %v4453
        %4467 = vmatprep.subr.bf16.mxu0 0
        %4468 = vmatpush1.bf16.msra.mxu0 %v4452
        %4469 = vmatprep.subr.bf16.mxu0 0
        %4470 = vmatpush1.bf16.msra.mxu0 %v4451
        %4471 = vmatprep.subr.bf16.mxu0 0
        %4472 = vmatpush1.bf16.msra.mxu0 %v4450
        %4473 = vmatprep.subr.bf16.mxu0 0
        %4474 = vmatpush1.bf16.msra.mxu0 %v4449
        %4475 = vmatprep.subr.bf16.mxu0 0
        %4476 = vmatpush1.bf16.msra.mxu0 %v4448
        %4477 = vmatprep.subr.bf16.mxu0 0
        %4478 = vmatpush1.bf16.msra.mxu0 %v4447
        %4479 = vmatprep.subr.bf16.mxu0 0
        %4480 = vmatpush2.bf16.msra.mxu0 0
        %4481 = vmatprep.subr.bf16.mxu0 0
        %4482 = vmatpush2.bf16.msra.mxu0 0
        %4483 = vmatprep.subr.bf16.mxu0 0
        %4484 = vmatpush2.bf16.msra.mxu0 0
        %4485 = vmatprep.subr.bf16.mxu0 0
        %4486 = vmatpush2.bf16.msra.mxu0 0
        %4487 = vmatprep.subr.bf16.mxu0 0
        %4488 = vmatpush2.bf16.msra.mxu0 0
        %4489 = vmatprep.subr.bf16.mxu0 0
        %4490 = vmatpush2.bf16.msra.mxu0 0
        %4491 = vmatprep.subr.bf16.mxu0 0
        %4492 = vmatpush2.bf16.msra.mxu0 0
        %4493 = vmatprep.subr.bf16.mxu0 0
        %4494 = vmatpush2.bf16.msra.mxu0 0
        %4495 = vmatprep.mubr.bf16.mxu0 0
        %4496 = vmatmul.mubr.bf16.gmra.mxu0 %v4391
        %v4497 = vpop.f32.mrf.mxu0
        %v4498 = vadd.f32 %v4413, %v4497
        %v4499 = vpop.f32.mrf.mxu0
        %v4500 = vpop.f32.mrf.mxu0
        %v4501 = vpop.f32.mrf.mxu0
        %4502 = vdwg.mxu0
        %v4503 = vmax.f32 %v4498, 0.0
        %v4504 = vpack.c.bf16 %v4503, %v4503
        %v4505 = vld [vmem:[%s7] sm:$0xf]
        %v4506 = vld [vmem:[%s7 + $0x4] sm:$0xf]
        %v4507 = vld [vmem:[%s7 + $0x8] sm:$0xf]
        %v4508 = vld [vmem:[%s7 + $0xc] sm:$0xf]
        %v4509 = vld [vmem:[%s7 + $0x10] sm:$0xf]
        %v4510 = vld [vmem:[%s7 + $0x14] sm:$0xf]
        %v4511 = vld [vmem:[%s7 + $0x18] sm:$0xf]
        %v4512 = vld [vmem:[%s7 + $0x1c] sm:$0xf]
        %v4513 = vld [vmem:[%s7 + $0x20] sm:$0xf]
        %v4514 = vld [vmem:[%s7 + $0x24] sm:$0xf]
        %v4515 = vld [vmem:[%s7 + $0x28] sm:$0xf]
        %v4516 = vld [vmem:[%s7 + $0x2c] sm:$0xf]
        %v4517 = vld [vmem:[%s7 + $0x30] sm:$0xf]
        %v4518 = vld [vmem:[%s7 + $0x34] sm:$0xf]
        %v4519 = vld [vmem:[%s7 + $0x38] sm:$0xf]
        %v4520 = vld [vmem:[%s7 + $0x3c] sm:$0xf]
        %v4521 = vld [vmem:[%s8] sm:$0x1]
        %v4523 = vlaneseq
        %v4524 = vshrl.u32 %v4523, 7
        %v4525 = vsub.s32 0, %v4524
        %v4526 = vrot.slane %v4521, %v4525
        %v4544 = vunpack.c.l.b16 %v4505
        %v4545 = vunpack.c.l.b16 %v4506
        %v4546 = vunpack.c.l.b16 %v4507
        %v4547 = vunpack.c.l.b16 %v4508
        %v4548 = vunpack.c.l.b16 %v4509
        %v4549 = vunpack.c.l.b16 %v4510
        %v4550 = vunpack.c.l.b16 %v4511
        %v4551 = vunpack.c.l.b16 %v4512
        %v4552 = vunpack.c.l.b16 %v4513
        %v4553 = vunpack.c.l.b16 %v4514
        %v4554 = vunpack.c.l.b16 %v4515
        %v4555 = vunpack.c.l.b16 %v4516
        %v4556 = vunpack.c.l.b16 %v4517
        %v4557 = vunpack.c.l.b16 %v4518
        %v4558 = vunpack.c.l.b16 %v4519
        %v4559 = vunpack.c.l.b16 %v4520
        %v4560 = vpack.c.b16 %v4545, %v4544
        %v4561 = vpack.c.b16 %v4547, %v4546
        %v4562 = vpack.c.b16 %v4549, %v4548
        %v4563 = vpack.c.b16 %v4551, %v4550
        %v4564 = vpack.c.b16 %v4553, %v4552
        %v4565 = vpack.c.b16 %v4555, %v4554
        %v4566 = vpack.c.b16 %v4557, %v4556
        %v4567 = vpack.c.b16 %v4559, %v4558
        %4576 = vmatprep.subr.bf16.mxu0 0
        %4577 = vmatpush1.bf16.msra.mxu0 %v4567
        %4578 = vmatprep.subr.bf16.mxu0 0
        %4579 = vmatpush1.bf16.msra.mxu0 %v4566
        %4580 = vmatprep.subr.bf16.mxu0 0
        %4581 = vmatpush1.bf16.msra.mxu0 %v4565
        %4582 = vmatprep.subr.bf16.mxu0 0
        %4583 = vmatpush1.bf16.msra.mxu0 %v4564
        %4584 = vmatprep.subr.bf16.mxu0 0
        %4585 = vmatpush1.bf16.msra.mxu0 %v4563
        %4586 = vmatprep.subr.bf16.mxu0 0
        %4587 = vmatpush1.bf16.msra.mxu0 %v4562
        %4588 = vmatprep.subr.bf16.mxu0 0
        %4589 = vmatpush1.bf16.msra.mxu0 %v4561
        %4590 = vmatprep.subr.bf16.mxu0 0
        %4591 = vmatpush1.bf16.msra.mxu0 %v4560
        %4592 = vmatprep.subr.bf16.mxu0 0
        %4593 = vmatpush2.bf16.msra.mxu0 0
        %4594 = vmatprep.subr.bf16.mxu0 0
        %4595 = vmatpush2.bf16.msra.mxu0 0
        %4596 = vmatprep.subr.bf16.mxu0 0
        %4597 = vmatpush2.bf16.msra.mxu0 0
        %4598 = vmatprep.subr.bf16.mxu0 0
        %4599 = vmatpush2.bf16.msra.mxu0 0
        %4600 = vmatprep.subr.bf16.mxu0 0
        %4601 = vmatpush2.bf16.msra.mxu0 0
        %4602 = vmatprep.subr.bf16.mxu0 0
        %4603 = vmatpush2.bf16.msra.mxu0 0
        %4604 = vmatprep.subr.bf16.mxu0 0
        %4605 = vmatpush2.bf16.msra.mxu0 0
        %4606 = vmatprep.subr.bf16.mxu0 0
        %4607 = vmatpush2.bf16.msra.mxu0 0
        %4608 = vmatprep.mubr.bf16.mxu0 0
        %4609 = vmatmul.mubr.bf16.gmra.mxu0 %v4504
        %v4610 = vpop.f32.mrf.mxu0
        %v4611 = vadd.f32 %v4526, %v4610
        %v4612 = vpop.f32.mrf.mxu0
        %v4613 = vpop.f32.mrf.mxu0
        %v4614 = vpop.f32.mrf.mxu0
        %4615 = vdwg.mxu0
        %4616 = vst [vmem:[%s764] sm:$0xff] %v4611
        %p4617 = scmp.lt.s32.totalorder %s20, 1
        %s4618 = scalar_select %p4617, %s20, 1
        %s4619 = smul.addr %s4618, 8
        %s4620 = scalar_lea.vmem %s9, %s4619
        // Predicated region
        $region95: #{cnn_net_32_forward.3} parent=89 // pred_check
          %p4621 = pneg %p232
        $region96: #{cnn_net_32_forward.3} parent=89 // pred_check_branch
          %4623 = sbr.rel (%p4621) target = $region98
        $region97: #{cnn_net_32_forward.3} parent=89 // pred_region
          _
        $region98: #{cnn_net_32_forward.3} parent=89 // pred_fallthru
          _
      $region90: #{cnn_net_32_forward.3} parent=5 // pred_fallthru
        _
      %p4624 = scmp.le.s32.totalorder 2, %s15
      // Predicated region
      $region99: #{cnn_net_32_forward.3} parent=5 // pred_check
        %p4625 = pneg %p4624
      $region100: #{cnn_net_32_forward.3} parent=5 // pred_check_branch
        %4627 = sbr.rel (%p4625) target = $region102
      $region101: #{cnn_net_32_forward.3} parent=5 // pred_region
        %s4628 = ssub.s32 %s15, 2
        // Predicated region
        $region103: #{cnn_net_32_forward.3} parent=101 // pred_check
          %p4629 = pneg %p238
        $region104: #{cnn_net_32_forward.3} parent=101 // pred_check_branch
          %4631 = sbr.rel (%p4629) target = $region106
        $region105: #{cnn_net_32_forward.3} parent=101 // pred_region
          %p4632 = scmp.lt.s32.totalorder %s21, 1
          %s4633 = scalar_select %p4632, %s21, 1
          %s4634 = smul.addr %s4633, 8
          %s4635 = scalar_lea.vmem %s9, %s4634
        $region106: #{cnn_net_32_forward.3} parent=101 // pred_fallthru
          _
      $region102: #{cnn_net_32_forward.3} parent=5 // pred_fallthru
        _
    $region6: #{cnn_net_32_forward.3} parent=1 // loop_footer
      %s19 = sadd.s32 1, %s15
    $region7: #{cnn_net_32_forward.3} parent=1 // loop_footer_branch
      %14 = sbr.rel target = $region3
    $region8: #{cnn_net_32_forward.3} parent=1 // loop_exit
      _

</llo_original>
